<compile_context>
chip_gen: v7x
topology: tpu7x:2x2x1
jax: 0.10.0
libtpu: 0.0.40
codegen_flags: <defaults>
</compile_context>

<pallas_src>
import jax
import jax.numpy as jnp
from jax import lax
from jax.experimental import pallas as pl
from jax.experimental.pallas import tpu as pltpu

COMPUTE_DTYPE = jnp.bfloat16
LPAD = 128  # in-kernel zero pad; must cover the +/-(Wp+1) within-plane tap reach


# -----------------------------------------------------------------------------
# Geometry / packing / masks
# -----------------------------------------------------------------------------
def _plane_geometry(D, H, W):
    Dp, Hp, Wp = D + 2, H + 2, W + 2
    PL = ((Hp * Wp + 127) // 128) * 128  # lane-padded plane stride (>=128)
    return Dp, Hp, Wp, PL


def pack_volume(x, PL):
    """(B, C, D, H, W) -> (B, C, Dp*PL): 1-voxel zero halo, plane padded to PL."""
    B, C, D, H, W = x.shape
    Hp, Wp = H + 2, W + 2
    xp = jnp.pad(x, ((0, 0), (0, 0), (1, 1), (1, 1), (1, 1)))
    xp = xp.reshape(B, C, D + 2, Hp * Wp)
    xp = jnp.pad(xp, ((0, 0), (0, 0), (0, 0), (0, PL - Hp * Wp)))
    return xp.reshape(B, C, (D + 2) * PL)


def build_masks(D, H, W, slab_planes):
    """Interior mask (1, Dp*PL) bf16 and slab-invariant parity masks (8, S*PL) f32."""
    Dp, Hp, Wp, PL = _plane_geometry(D, H, W)
    h = jnp.arange(Hp)[:, None]
    w = jnp.arange(Wp)[None, :]
    hw_ok = ((h >= 1) & (h <= H) & (w >= 1) & (w <= W)).astype(jnp.float32)
    hw_flat = jnp.pad(hw_ok.reshape(-1), (0, PL - Hp * Wp))
    d_ok = ((jnp.arange(Dp) >= 1) & (jnp.arange(Dp) <= D)).astype(jnp.float32)
    interior = (d_ok[:, None] * hw_flat[None, :]).reshape(1, Dp * PL)
    interior = interior.astype(COMPUTE_DTYPE)

    # Parity of the unpadded coordinate (d-1, h-1, w-1); since the slab size is
    # even, the D-parity only depends on the local plane index -> one mask set
    # is valid for every slab (the D-halo planes carry zero activations anyway).
    S = slab_planes
    j = jnp.arange(S)
    rows = []
    for kd in range(2):
        pd = ((j - 1) % 2 == kd).astype(jnp.float32)
        for kh in range(2):
            for kw in range(2):
                ph = ((h - 1) % 2 == kh) & (h >= 1) & (h <= H)
                pw = ((w - 1) % 2 == kw) & (w >= 1) & (w <= W)
                phw = jnp.pad((ph & pw).astype(jnp.float32).reshape(-1),
                              (0, PL - Hp * Wp))
                rows.append((pd[:, None] * phw[None, :]).reshape(S * PL))
    pmask = jnp.stack(rows, axis=0)  # (8, S*PL), lane-major
    return interior, pmask


# -----------------------------------------------------------------------------
# VMEM sizing / compiler params
# -----------------------------------------------------------------------------
def _vmem_capacity():
    try:
        info = pltpu.get_tpu_info()
        cap = int(getattr(info, "vmem_capacity_bytes", 0))
        if cap > 0:
            return cap
    except Exception:
        pass
    return 64 << 20  # conservative: v7x per-TensorCore VMEM


def _default_vmem_budget():
    return int(_vmem_capacity() * 0.5)


def _conv_vmem_bytes(cin, cout, S, PL):
    win, cen, a = (S + 4) * PL, S * PL, 2
    b = 2 * cin * win * a            # double-buffered x lead/cur/trail blocks
    b += 2 * 8 * cen * a             # central mask block (8-sublane padded)
    b += 2 * cout * cen * a          # output block
    b += 3 * cout * 9 * cin * a + cout * 4
    b += cin * win * a               # assembled window
    b += 2 * 9 * cin * cen * a       # per-group im2col (2 groups live)
    b += 2 * cout * cen * 4          # f32 accumulator + epilogue
    return b


def _resblock_vmem_bytes(cin, cout, S, PL):
    win, cen, a = (S + 4) * PL, S * PL, 2
    hw = (S + 2) * PL + 2 * LPAD
    b = 2 * cin * win * a            # x blocks (double-buffered)
    b += 2 * 8 * win * a             # mask blocks
    b += 2 * cout * cen * a          # output block
    b += cin * (win + 4 * LPAD) * a  # zero-padded window
    b += 2 * 9 * cin * hw * a        # conv1 im2col (2 groups live)
    b += cout * hw * 4               # conv1 f32 accumulator
    b += cout * hw * a               # h (bf16)
    b += 2 * 9 * cout * cen * a      # conv2 im2col
    b += 3 * cout * cen * 4          # acc2 + identity + y (f32)
    b += 3 * cout * 9 * (cin + cout) * a
    return b


def choose_slab_planes(Dp, PL, budget_bytes):
    """Largest even divisor of Dp whose res2 working set fits the VMEM budget."""
    best = 2
    for S in range(2, Dp + 1, 2):
        if Dp % S:
            continue
        if _resblock_vmem_bytes(16, 32, S, PL) <= budget_bytes:
            best = S
    return best


def _compiler_params(estimate_bytes):
    cap = _vmem_capacity()
    limit = max(8 << 20, min(int(1.5 * estimate_bytes) + (2 << 20),
                             int(cap * 0.9)))
    return pltpu.CompilerParams(dimension_semantics=("parallel", "parallel"),
                                vmem_limit_bytes=limit)


# -----------------------------------------------------------------------------
# Kernels
# -----------------------------------------------------------------------------
def _make_conv_kernel(PL, Wp, S, relu):
    """Conv3d(3, pad=1) + folded-BN shift [+ReLU] + halo mask on one slab."""
    HALF = 2 * PL
    CEN = S * PL
    inplane = tuple(dh * Wp + dw for dh in (-1, 0, 1) for dw in (-1, 0, 1))

    def kernel(xl_ref, xc_ref, xt_ref, mc_ref, w_ref, shift_ref, o_ref):
        xw = jnp.concatenate([xl_ref[0], xc_ref[0], xt_ref[0]], axis=-1)
        acc = None
        for g in range(3):                       # kd-groups: 3 x (9*Cin)-deep matmul
            base = HALF + (g - 1) * PL
            cols = jnp.concatenate(
                [xw[:, base + o: base + o + CEN] for o in inplane], axis=0)
            part = jnp.dot(w_ref[g], cols, preferred_element_type=jnp.float32)
            acc = part if acc is None else acc + part
        y = acc + shift_ref[...]
        if relu:
            y = jnp.maximum(y, 0.0)
        o_ref[0] = (y * mc_ref[...]).astype(o_ref.dtype)

    return kernel


def _make_resblock_kernel(PL, Wp, S, with_gap):
    """Whole ResBlock on one slab: conv1+BN+ReLU, 1x1 downsample+BN, conv2+BN,
    +identity, ReLU.  If with_gap: also emit the fused Pool(k=2,s=2)+GAP
    per-parity partial sums (Cout, 8) instead of the activation slab."""
    CEN = S * PL
    HW = (S + 2) * PL + 2 * LPAD             # conv1 output region (central +-1 plane +-LPAD)
    inplane = tuple(dh * Wp + dw for dh in (-1, 0, 1) for dw in (-1, 0, 1))

    def kernel(xl_ref, xc_ref, xt_ref, ml_ref, mc_ref, mt_ref,
               w1_ref, t1_ref, wds_ref, tds_ref, w2_ref, t2_ref, *rest):
        if with_gap:
            pm_ref, o_ref = rest
        else:
            (o_ref,) = rest
        cin = xc_ref.shape[1]
        zpad = jnp.zeros((cin, 2 * LPAD), xc_ref.dtype)
        xw = jnp.concatenate([zpad, xl_ref[0], xc_ref[0], xt_ref[0], zpad],
                             axis=-1)                       # (Cin, (S+4)*PL + 4*LPAD)
        mwin = jnp.concatenate([ml_ref[...], mc_ref[...], mt_ref[...]],
                               axis=-1)                     # (1, (S+4)*PL)

        # conv1 -> +shift -> ReLU -> halo mask  (over the central +-1 plane region)
        acc = None
        for g in range(3):
            base = LPAD + g * PL
            cols = jnp.concatenate(
                [xw[:, base + o: base + o + HW] for o in inplane], axis=0)
            part = jnp.dot(w1_ref[g], cols, preferred_element_type=jnp.float32)
            acc = part if acc is None else acc + part
        hmask = mwin[:, PL - LPAD:(S + 3) * PL + LPAD]
        h = (jnp.maximum(acc + t1_ref[...], 0.0) * hmask).astype(xc_ref.dtype)

        # downsample path: 1x1 conv (+ folded-BN shift) on the central slab
        ident = jnp.dot(wds_ref[...], xc_ref[0],
                        preferred_element_type=jnp.float32) + tds_ref[...]

        # conv2 -> +shift -> +identity -> ReLU -> mask (central slab only)
        acc2 = None
        for g in range(3):
            base = LPAD + g * PL
            cols = jnp.concatenate(
                [h[:, base + o: base + o + CEN] for o in inplane], axis=0)
            part = jnp.dot(w2_ref[g], cols, preferred_element_type=jnp.float32)
            acc2 = part if acc2 is None else acc2 + part
        y = jnp.maximum(acc2 + t2_ref[...] + ident, 0.0) * mc_ref[...]

        if with_gap:
            # fused Pool(k=2,s=2)+GAP: per-parity spatial partial sums (Cout, 8)
            o_ref[0, 0] = lax.dot_general(
                y, pm_ref[...], (((1,), (1,)), ((), ())),
                preferred_element_type=jnp.float32)
        else:
            o_ref[0] = y.astype(o_ref.dtype)

    return kernel


def _make_head_kernel(inv_npool):
    """g = pooled/GAP vector from parity sums; both feature branches; head."""
    def kernel(p_ref, f_ref, wpool_ref, bpool_ref, wfb_ref, bfb_ref,
               wbfb_ref, bbfb_ref, wc1a_ref, wc1b_ref, bc1_ref,
               wc2_ref, bc2_ref, o_ref):
        g = (jnp.dot(p_ref[...], wpool_ref[...],
                     preferred_element_type=jnp.float32) * inv_npool
             + bpool_ref[...])
        feat = jnp.maximum(
            jnp.dot(g, wfb_ref[...], preferred_element_type=jnp.float32)
            + bfb_ref[...], 0.0)
        bfeat = jnp.maximum(
            jnp.dot(f_ref[...], wbfb_ref[...], preferred_element_type=jnp.float32)
            + bbfb_ref[...], 0.0)
        hc = jnp.maximum(
            jnp.dot(feat, wc1a_ref[...], preferred_element_type=jnp.float32)
            + jnp.dot(bfeat, wc1b_ref[...], preferred_element_type=jnp.float32)
            + bc1_ref[...], 0.0)
        o_ref[...] = (jnp.dot(hc, wc2_ref[...],
                              preferred_element_type=jnp.float32) + bc2_ref[...])
    return kernel


# -----------------------------------------------------------------------------
# pallas_call wrappers
# -----------------------------------------------------------------------------
def _slab_specs(Cin, S, PL, Dp):
    half = S // 2
    nhalo = Dp // 2 - 1
    x_lead = pl.BlockSpec((1, Cin, 2 * PL),
                          lambda b, s: (b, 0, jnp.maximum(s * half - 1, 0)))
    x_cur = pl.BlockSpec((1, Cin, S * PL), lambda b, s: (b, 0, s))
    x_trail = pl.BlockSpec((1, Cin, 2 * PL),
                           lambda b, s: (b, 0, jnp.minimum(s * half + half, nhalo)))
    m_lead = pl.BlockSpec((1, 2 * PL),
                          lambda b, s: (0, jnp.maximum(s * half - 1, 0)))
    m_cur = pl.BlockSpec((1, S * PL), lambda b, s: (0, s))
    m_trail = pl.BlockSpec((1, 2 * PL),
                           lambda b, s: (0, jnp.minimum(s * half + half, nhalo)))
    return (x_lead, x_cur, x_trail), (m_lead, m_cur, m_trail)


def conv3x3_bn_act(x, p, interior, S, PL, Wp, *, relu=True):
    B, Cin, Mp = x.shape
    Dp = Mp // PL
    n_slabs = Dp // S
    Cout = p["w"].shape[1]
    (xl, xc, xt), (_, mc, _) = _slab_specs(Cin, S, PL, Dp)
    win, cen = (S + 4) * PL, S * PL
    cost = pl.CostEstimate(
        flops=2 * B * n_slabs * cen * 27 * Cin * Cout, transcendentals=0,
        bytes_accessed=int(B * n_slabs * (Cin * win + cen) * 2
                           + B * n_slabs * Cout * cen * 2
                           + 3 * Cout * 9 * Cin * 2 + Cout * 4))
    return pl.pallas_call(
        _make_conv_kernel(PL, Wp, S, relu),
        out_shape=jax.ShapeDtypeStruct((B, Cout, Mp), x.dtype),
        grid=(B, n_slabs),
        in_specs=[xl, xc, xt, mc,
                  pl.BlockSpec((3, Cout, 9 * Cin), lambda b, s: (0, 0, 0)),
                  pl.BlockSpec((Cout, 1), lambda b, s: (0, 0))],
        out_specs=pl.BlockSpec((1, Cout, S * PL), lambda b, s: (b, 0, s)),
        compiler_params=_compiler_params(_conv_vmem_bytes(Cin, Cout, S, PL)),
        cost_estimate=cost,
    )(x, x, x, interior, p["w"], p["shift"])


def resblock(x, rp, interior, S, PL, Wp, *, pmask=None):
    B, Cin, Mp = x.shape
    Dp = Mp // PL
    n_slabs = Dp // S
    Cout = rp["c1"]["w"].shape[1]
    with_gap = pmask is not None
    (xl, xc, xt), (ml, mc, mt) = _slab_specs(Cin, S, PL, Dp)
    win, cen = (S + 4) * PL, S * PL
    hw = (S + 2) * PL + 2 * LPAD
    flops = 2 * B * n_slabs * (hw * 27 * Cin * Cout
                               + cen * (27 * Cout * Cout + Cin * Cout))
    cost = pl.CostEstimate(
        flops=int(flops), transcendentals=0,
        bytes_accessed=int(B * n_slabs * ((Cin + 1) * win * 2)
                           + B * n_slabs * Cout * (cen if not with_gap else 8) * 2
                           + (3 * Cout * 9 * (Cin + Cout) + Cout * Cin) * 2))

    in_specs = [xl, xc, xt, ml, mc, mt,
                pl.BlockSpec((3, Cout, 9 * Cin), lambda b, s: (0, 0, 0)),
                pl.BlockSpec((Cout, 1), lambda b, s: (0, 0)),
                pl.BlockSpec((Cout, Cin), lambda b, s: (0, 0)),
                pl.BlockSpec((Cout, 1), lambda b, s: (0, 0)),
                pl.BlockSpec((3, Cout, 9 * Cout), lambda b, s: (0, 0, 0)),
                pl.BlockSpec((Cout, 1), lambda b, s: (0, 0))]
    args = [x, x, x, interior, interior, interior,
            rp["c1"]["w"], rp["c1"]["shift"], rp["ds"]["w"], rp["ds"]["shift"],
            rp["c2"]["w"], rp["c2"]["shift"]]
    if with_gap:
        in_specs.append(pl.BlockSpec((8, S * PL), lambda b, s: (0, 0)))
        args.append(pmask)
        out_shape = jax.ShapeDtypeStruct((B, n_slabs, Cout, 8), jnp.float32)
        out_specs = pl.BlockSpec((1, 1, Cout, 8), lambda b, s: (b, s, 0, 0))
    else:
        out_shape = jax.ShapeDtypeStruct((B, Cout, Mp), x.dtype)
        out_specs = pl.BlockSpec((1, Cout, S * PL), lambda b, s: (b, 0, s))

    return pl.pallas_call(
        _make_resblock_kernel(PL, Wp, S, with_gap),
        out_shape=out_shape,
        grid=(B, n_slabs),
        in_specs=in_specs,
        out_specs=out_specs,
        compiler_params=_compiler_params(_resblock_vmem_bytes(Cin, Cout, S, PL)),
        cost_estimate=cost,
    )(*args)


def head_forward(pflat, features, prm, n_pool):
    B = pflat.shape[0]
    out = pl.pallas_call(
        _make_head_kernel(1.0 / float(n_pool)),
        out_shape=jax.ShapeDtypeStruct((B, 1), jnp.float32),
    )(pflat, features.astype(jnp.float32),
      prm["pool_wt"], prm["pool_b"], prm["fb_wt"], prm["fb_b"],
      prm["bfb_wt"], prm["bfb_b"], prm["c1a_wt"], prm["c1b_wt"], prm["c1_b"],
      prm["c2_wt"], prm["c2_b"])
    return out[:, 0]


# -----------------------------------------------------------------------------
# Parameters
# -----------------------------------------------------------------------------
def init_raw_params(key):
    ks = iter(jax.random.split(key, 64))

    def conv_w(cin, cout, k):
        w = jax.random.normal(next(ks), (cout, cin, k, k, k), jnp.float32) * 0.1
        b = jax.random.normal(next(ks), (cout,), jnp.float32) * 0.05
        return w, b

    def bn_fold(c, bias):
        gamma = 1.0 + 0.1 * jax.random.normal(next(ks), (c,), jnp.float32)
        beta = 0.05 * jax.random.normal(next(ks), (c,), jnp.float32)
        mean = 0.05 * jax.random.normal(next(ks), (c,), jnp.float32)
        var = jax.random.uniform(next(ks), (c,), jnp.float32, minval=0.5, maxval=1.5)
        scale = gamma * jax.lax.rsqrt(var + 1e-5)
        shift = beta - mean * scale + bias * scale
        return scale, shift

    def conv_bn(cin, cout, k):
        w, b = conv_w(cin, cout, k)
        scale, shift = bn_fold(cout, b)
        return {"w": w, "scale": scale, "shift": shift}

    def linear(cin, cout):
        w = jax.random.normal(next(ks), (cout, cin), jnp.float32) * 0.1
        b = jax.random.normal(next(ks), (cout,), jnp.float32) * 0.05
        return {"w": w, "b": b}

    raw = {
        "initial": conv_bn(1, 8, 3),
        "res1": {"c1": conv_bn(8, 16, 3), "c2": conv_bn(16, 16, 3),
                 "ds": conv_bn(8, 16, 1)},
        "res2": {"c1": conv_bn(16, 32, 3), "c2": conv_bn(32, 32, 3),
                 "ds": conv_bn(16, 32, 1)},
    }
    wp, bp = conv_w(32, 32, 2)
    raw["pool"] = {"w": wp, "scale": jnp.ones((32,), jnp.float32), "shift": bp}
    raw["fb"] = linear(32, 16)
    raw["bfb"] = linear(25, 16)
    raw["c1"] = linear(32, 16)
    raw["c2"] = linear(16, 1)
    return raw


def prepare_params(raw, compute_dtype=COMPUTE_DTYPE):
    def conv3(p):
        co, ci = p["w"].shape[:2]
        wf = p["w"] * p["scale"][:, None, None, None, None]      # fold BN scale
        wg = jnp.transpose(wf, (2, 0, 3, 4, 1)).reshape(3, co, 9 * ci)
        return {"w": wg.astype(compute_dtype),
                "shift": p["shift"].reshape(co, 1).astype(jnp.float32)}

    def conv1(p):
        co, ci = p["w"].shape[:2]
        wf = p["w"].reshape(co, ci) * p["scale"][:, None]
        return {"w": wf.astype(compute_dtype),
                "shift": p["shift"].reshape(co, 1).astype(jnp.float32)}

    prm = {
        "initial": conv3(raw["initial"]),
        "res1": {"c1": conv3(raw["res1"]["c1"]), "c2": conv3(raw["res1"]["c2"]),
                 "ds": conv1(raw["res1"]["ds"])},
        "res2": {"c1": conv3(raw["res2"]["c1"]), "c2": conv3(raw["res2"]["c2"]),
                 "ds": conv1(raw["res2"]["ds"])},
    }
    wp = raw["pool"]["w"]                                   # (32, 32, 2, 2, 2)
    co, ci = wp.shape[:2]
    prm["pool_wt"] = (jnp.transpose(wp, (2, 3, 4, 1, 0))
                      .reshape(8 * ci, co).astype(jnp.float32))
    prm["pool_b"] = raw["pool"]["shift"].reshape(1, -1).astype(jnp.float32)
    prm["fb_wt"] = raw["fb"]["w"].T.astype(jnp.float32)
    prm["fb_b"] = raw["fb"]["b"].reshape(1, -1).astype(jnp.float32)
    prm["bfb_wt"] = raw["bfb"]["w"].T.astype(jnp.float32)
    prm["bfb_b"] = raw["bfb"]["b"].reshape(1, -1).astype(jnp.float32)
    wc1 = raw["c1"]["w"]
    prm["c1a_wt"] = wc1[:, :16].T.astype(jnp.float32)
    prm["c1b_wt"] = wc1[:, 16:].T.astype(jnp.float32)
    prm["c1_b"] = raw["c1"]["b"].reshape(1, -1).astype(jnp.float32)
    prm["c2_wt"] = raw["c2"]["w"].T.astype(jnp.float32)
    prm["c2_b"] = raw["c2"]["b"].reshape(1, -1).astype(jnp.float32)
    return prm


# -----------------------------------------------------------------------------
# Forward pass (mirrors BrainAgeCNN.forward, eval mode)
# -----------------------------------------------------------------------------
def brain_age_forward(x, features, prm, *, slab_planes=None,
                      vmem_budget_bytes=None, return_pooled=False):
    """x: (B, 1, D, H, W) float32; features: (B, 25). Returns (B,) predictions."""
    if x.ndim > 5:
        x = jnp.squeeze(x, -1)
    B, Cin0, D, H, W = x.shape
    assert Cin0 == 1
    assert D % 2 == 0 and H % 2 == 0 and W % 2 == 0
    Dp, Hp, Wp, PL = _plane_geometry(D, H, W)
    # halo/pad safety: one-plane conv reach must fit the 2-plane slab halo and
    # the in-kernel LPAD zero pad.
    assert PL + Wp + 1 <= 2 * PL and Wp + 1 <= LPAD and PL >= LPAD

    if vmem_budget_bytes is None:
        vmem_budget_bytes = _default_vmem_budget()
    if slab_planes is None:
        slab_planes = choose_slab_planes(Dp, PL, vmem_budget_bytes)
    S = slab_planes
    assert S >= 2 and S % 2 == 0 and Dp % S == 0

    interior, pmask = build_masks(D, H, W, S)
    xf = pack_volume(x, PL).astype(COMPUTE_DTYPE)            # (B, 1, Dp*PL)

    y = conv3x3_bn_act(xf, prm["initial"], interior, S, PL, Wp, relu=True)
    y = resblock(y, prm["res1"], interior, S, PL, Wp)        # 8  -> 16 channels
    gap = resblock(y, prm["res2"], interior, S, PL, Wp,      # 16 -> 32, fused GAP
                   pmask=pmask)                              # (B, n_slabs, 32, 8)

    p_total = gap.sum(axis=1)                                # (B, 32, 8)
    C = p_total.shape[1]
    pflat = jnp.transpose(p_total, (0, 2, 1)).reshape(B, 8 * C)
    n_pool = (D // 2) * (H // 2) * (W // 2)
    pred = head_forward(pflat, features, prm, n_pool)
    if return_pooled:
        g = jnp.dot(pflat, prm["pool_wt"]) / float(n_pool) + prm["pool_b"]
        return pred, g
    return pred


# -----------------------------------------------------------------------------
# Pure-JAX reference (f32) for the sanity check
# -----------------------------------------------------------------------------
def reference_forward(x, features, raw, return_pooled=False):
    if x.ndim > 5:
        x = jnp.squeeze(x, -1)

    def conv_bn(h, p, relu=True, stride=1, padding=1):
        y = jax.lax.conv_general_dilated(
            h, p["w"], window_strides=(stride,) * 3,
            padding=[(padding, padding)] * 3,
            dimension_numbers=("NCDHW", "OIDHW", "NCDHW"))
        y = (y * p["scale"][None, :, None, None, None]
             + p["shift"][None, :, None, None, None])
        return jnp.maximum(y, 0.0) if relu else y

    def res_block(h, rp):
        out = conv_bn(h, rp["c1"], relu=True)
        identity = conv_bn(h, rp["ds"], relu=False, padding=0)
        out = conv_bn(out, rp["c2"], relu=False)
        return jnp.maximum(out + identity, 0.0)

    y = conv_bn(x, raw["initial"])
    y = res_block(y, raw["res1"])
    y = res_block(y, raw["res2"])
    y = conv_bn(y, raw["pool"], relu=False, stride=2, padding=0)
    g = jnp.mean(y, axis=(2, 3, 4))
    feat = jnp.maximum(g @ raw["fb"]["w"].T + raw["fb"]["b"], 0.0)
    bfeat = jnp.maximum(features @ raw["bfb"]["w"].T + raw["bfb"]["b"], 0.0)
    comb = jnp.concatenate([feat, bfeat], axis=1)
    h2 = jnp.maximum(comb @ raw["c1"]["w"].T + raw["c1"]["b"], 0.0)
    out = (h2 @ raw["c2"]["w"].T + raw["c2"]["b"])[:, 0]
    if return_pooled:
        return out, g
    return out


# -----------------------------------------------------------------------------
if __name__ == "__main__":
    key = jax.random.PRNGKey(0)
    k_x, k_f, k_p = jax.random.split(key, 3)

    B, D = 2, 8
    x = jax.random.normal(k_x, (B, 1, D, D, D), jnp.float32)
    features = jax.random.normal(k_f, (B, 25), jnp.float32)

    raw = init_raw_params(k_p)
    prm = prepare_params(raw)

    def fwd(xx, ff, pp):
        # slab_planes=2 -> 5 slabs per layer: exercises the multi-slab pipeline
        # (edge-slab halo clamping included) even at this toy 8^3 shape.
        return brain_age_forward(xx, ff, pp, slab_planes=2, return_pooled=True)

    out, g = jax.block_until_ready(jax.jit(fwd)(x, features, prm))
    assert out.shape == (B,), out.shape
    assert bool(jnp.all(jnp.isfinite(out)))

    # check the fused conv-stack + Pool + GAP path and the final prediction
    ref_out, ref_g = reference_forward(x, features, raw, return_pooled=True)
    err_g = float(jnp.max(jnp.abs(g - ref_g)))
    sc_g = float(jnp.max(jnp.abs(ref_g)))
    assert err_g <= 0.05 + 0.05 * sc_g, ("pooled-feature mismatch", err_g, sc_g)

    err = float(jnp.max(jnp.abs(out - ref_out)))
    sc = float(jnp.max(jnp.abs(ref_out)))
    assert err <= 0.05 + 0.05 * sc, ("output mismatch", err, sc, out, ref_out)

    print("KERNEL_OK")
</pallas_src>

<mosaic_0001>
module attributes {stable_mosaic.version = 11 : i64} {
  func.func @kernel(%arg0: i32, %arg1: i32, %arg2: memref<1x1x256xbf16, #tpu.memory_space<vmem>>, %arg3: memref<1x1x256xbf16, #tpu.memory_space<vmem>>, %arg4: memref<1x1x256xbf16, #tpu.memory_space<vmem>>, %arg5: memref<1x256xbf16, #tpu.memory_space<vmem>>, %arg6: memref<3x8x9xbf16, #tpu.memory_space<vmem>>, %arg7: memref<8x1xf32, #tpu.memory_space<vmem>>, %arg8: memref<1x8x256xbf16, #tpu.memory_space<vmem>>) attributes {dimension_semantics = [#tpu.dimension_semantics<parallel>, #tpu.dimension_semantics<parallel>], iteration_bounds = array<i64: 2, 5>, scalar_prefetch = 0 : i64, scratch_operands = 0 : i64, tpu.core_type = #tpu.core_type<tc>, window_params = [{transform_indices = @transform_0, window_bounds = array<i64: 1, 1, 256>}, {transform_indices = @transform_1, window_bounds = array<i64: 1, 1, 256>}, {transform_indices = @transform_2, window_bounds = array<i64: 1, 1, 256>}, {transform_indices = @transform_3, window_bounds = array<i64: 1, 256>}, {pipeline_mode = #tpu.pipeline_mode<synchronous>, transform_indices = @transform_4, window_bounds = array<i64: 3, 8, 9>}, {pipeline_mode = #tpu.pipeline_mode<synchronous>, transform_indices = @transform_5, window_bounds = array<i64: 8, 1>}, {transform_indices = @transform_6, window_bounds = array<i64: 1, 8, 256>}]} {
    %c0 = arith.constant 0 : index
    %c0_0 = arith.constant 0 : index
    %c0_1 = arith.constant 0 : index
    %0 = vector.load %arg2[%c0, %c0_0, %c0_1] : memref<1x1x256xbf16, #tpu.memory_space<vmem>>, vector<1x1x256xbf16>
    %1 = vector.shape_cast %0 : vector<1x1x256xbf16> to vector<1x256xbf16>
    %c0_2 = arith.constant 0 : index
    %c0_3 = arith.constant 0 : index
    %c0_4 = arith.constant 0 : index
    %2 = vector.load %arg3[%c0_2, %c0_3, %c0_4] : memref<1x1x256xbf16, #tpu.memory_space<vmem>>, vector<1x1x256xbf16>
    %3 = vector.shape_cast %2 : vector<1x1x256xbf16> to vector<1x256xbf16>
    %c0_5 = arith.constant 0 : index
    %c0_6 = arith.constant 0 : index
    %c0_7 = arith.constant 0 : index
    %4 = vector.load %arg4[%c0_5, %c0_6, %c0_7] : memref<1x1x256xbf16, #tpu.memory_space<vmem>>, vector<1x1x256xbf16>
    %5 = vector.shape_cast %4 : vector<1x1x256xbf16> to vector<1x256xbf16>
    %6 = tpu.concatenate %1, %3, %5 in 1 : vector<1x256xbf16>, vector<1x256xbf16>, vector<1x256xbf16> -> vector<1x768xbf16>
    %7 = vector.extract_strided_slice %6 {offsets = [0, 117], sizes = [1, 256], strides = [1, 1]} : vector<1x768xbf16> to vector<1x256xbf16>
    %8 = vector.extract_strided_slice %6 {offsets = [0, 118], sizes = [1, 256], strides = [1, 1]} : vector<1x768xbf16> to vector<1x256xbf16>
    %9 = vector.extract_strided_slice %6 {offsets = [0, 119], sizes = [1, 256], strides = [1, 1]} : vector<1x768xbf16> to vector<1x256xbf16>
    %10 = vector.extract_strided_slice %6 {offsets = [0, 127], sizes = [1, 256], strides = [1, 1]} : vector<1x768xbf16> to vector<1x256xbf16>
    %11 = vector.extract_strided_slice %6 {offsets = [0, 128], sizes = [1, 256], strides = [1, 1]} : vector<1x768xbf16> to vector<1x256xbf16>
    %12 = vector.extract_strided_slice %6 {offsets = [0, 129], sizes = [1, 256], strides = [1, 1]} : vector<1x768xbf16> to vector<1x256xbf16>
    %13 = vector.extract_strided_slice %6 {offsets = [0, 137], sizes = [1, 256], strides = [1, 1]} : vector<1x768xbf16> to vector<1x256xbf16>
    %14 = vector.extract_strided_slice %6 {offsets = [0, 138], sizes = [1, 256], strides = [1, 1]} : vector<1x768xbf16> to vector<1x256xbf16>
    %15 = vector.extract_strided_slice %6 {offsets = [0, 139], sizes = [1, 256], strides = [1, 1]} : vector<1x768xbf16> to vector<1x256xbf16>
    %16 = tpu.concatenate %7, %8, %9, %10, %11, %12, %13, %14, %15 in 0 : vector<1x256xbf16>, vector<1x256xbf16>, vector<1x256xbf16>, vector<1x256xbf16>, vector<1x256xbf16>, vector<1x256xbf16>, vector<1x256xbf16>, vector<1x256xbf16>, vector<1x256xbf16> -> vector<9x256xbf16>
    %c0_8 = arith.constant 0 : index
    %c0_9 = arith.constant 0 : index
    %c0_10 = arith.constant 0 : index
    %17 = vector.load %arg6[%c0_8, %c0_9, %c0_10] : memref<3x8x9xbf16, #tpu.memory_space<vmem>>, vector<1x8x9xbf16>
    %18 = vector.shape_cast %17 : vector<1x8x9xbf16> to vector<8x9xbf16>
    %cst = arith.constant dense<0.000000e+00> : vector<8x256xf32>
    %19 = tpu.matmul %18, %16, %cst {dimension_numbers = #tpu.dot_dimension_numbers<[1], [0], [0], [1], [0, 0, 1, 1], [], []>} : vector<8x9xbf16>, vector<9x256xbf16>, vector<8x256xf32> -> vector<8x256xf32>
    %20 = vector.extract_strided_slice %6 {offsets = [0, 245], sizes = [1, 256], strides = [1, 1]} : vector<1x768xbf16> to vector<1x256xbf16>
    %21 = vector.extract_strided_slice %6 {offsets = [0, 246], sizes = [1, 256], strides = [1, 1]} : vector<1x768xbf16> to vector<1x256xbf16>
    %22 = vector.extract_strided_slice %6 {offsets = [0, 247], sizes = [1, 256], strides = [1, 1]} : vector<1x768xbf16> to vector<1x256xbf16>
    %23 = vector.extract_strided_slice %6 {offsets = [0, 255], sizes = [1, 256], strides = [1, 1]} : vector<1x768xbf16> to vector<1x256xbf16>
    %24 = vector.extract_strided_slice %6 {offsets = [0, 256], sizes = [1, 256], strides = [1, 1]} : vector<1x768xbf16> to vector<1x256xbf16>
    %25 = vector.extract_strided_slice %6 {offsets = [0, 257], sizes = [1, 256], strides = [1, 1]} : vector<1x768xbf16> to vector<1x256xbf16>
    %26 = vector.extract_strided_slice %6 {offsets = [0, 265], sizes = [1, 256], strides = [1, 1]} : vector<1x768xbf16> to vector<1x256xbf16>
    %27 = vector.extract_strided_slice %6 {offsets = [0, 266], sizes = [1, 256], strides = [1, 1]} : vector<1x768xbf16> to vector<1x256xbf16>
    %28 = vector.extract_strided_slice %6 {offsets = [0, 267], sizes = [1, 256], strides = [1, 1]} : vector<1x768xbf16> to vector<1x256xbf16>
    %29 = tpu.concatenate %20, %21, %22, %23, %24, %25, %26, %27, %28 in 0 : vector<1x256xbf16>, vector<1x256xbf16>, vector<1x256xbf16>, vector<1x256xbf16>, vector<1x256xbf16>, vector<1x256xbf16>, vector<1x256xbf16>, vector<1x256xbf16>, vector<1x256xbf16> -> vector<9x256xbf16>
    %c1 = arith.constant 1 : index
    %c0_11 = arith.constant 0 : index
    %c0_12 = arith.constant 0 : index
    %30 = vector.load %arg6[%c1, %c0_11, %c0_12] : memref<3x8x9xbf16, #tpu.memory_space<vmem>>, vector<1x8x9xbf16>
    %31 = vector.shape_cast %30 : vector<1x8x9xbf16> to vector<8x9xbf16>
    %cst_13 = arith.constant dense<0.000000e+00> : vector<8x256xf32>
    %32 = tpu.matmul %31, %29, %cst_13 {dimension_numbers = #tpu.dot_dimension_numbers<[1], [0], [0], [1], [0, 0, 1, 1], [], []>} : vector<8x9xbf16>, vector<9x256xbf16>, vector<8x256xf32> -> vector<8x256xf32>
    %33 = arith.addf %19, %32 : vector<8x256xf32>
    %34 = vector.extract_strided_slice %6 {offsets = [0, 373], sizes = [1, 256], strides = [1, 1]} : vector<1x768xbf16> to vector<1x256xbf16>
    %35 = vector.extract_strided_slice %6 {offsets = [0, 374], sizes = [1, 256], strides = [1, 1]} : vector<1x768xbf16> to vector<1x256xbf16>
    %36 = vector.extract_strided_slice %6 {offsets = [0, 375], sizes = [1, 256], strides = [1, 1]} : vector<1x768xbf16> to vector<1x256xbf16>
    %37 = vector.extract_strided_slice %6 {offsets = [0, 383], sizes = [1, 256], strides = [1, 1]} : vector<1x768xbf16> to vector<1x256xbf16>
    %38 = vector.extract_strided_slice %6 {offsets = [0, 384], sizes = [1, 256], strides = [1, 1]} : vector<1x768xbf16> to vector<1x256xbf16>
    %39 = vector.extract_strided_slice %6 {offsets = [0, 385], sizes = [1, 256], strides = [1, 1]} : vector<1x768xbf16> to vector<1x256xbf16>
    %40 = vector.extract_strided_slice %6 {offsets = [0, 393], sizes = [1, 256], strides = [1, 1]} : vector<1x768xbf16> to vector<1x256xbf16>
    %41 = vector.extract_strided_slice %6 {offsets = [0, 394], sizes = [1, 256], strides = [1, 1]} : vector<1x768xbf16> to vector<1x256xbf16>
    %42 = vector.extract_strided_slice %6 {offsets = [0, 395], sizes = [1, 256], strides = [1, 1]} : vector<1x768xbf16> to vector<1x256xbf16>
    %43 = tpu.concatenate %34, %35, %36, %37, %38, %39, %40, %41, %42 in 0 : vector<1x256xbf16>, vector<1x256xbf16>, vector<1x256xbf16>, vector<1x256xbf16>, vector<1x256xbf16>, vector<1x256xbf16>, vector<1x256xbf16>, vector<1x256xbf16>, vector<1x256xbf16> -> vector<9x256xbf16>
    %c2 = arith.constant 2 : index
    %c0_14 = arith.constant 0 : index
    %c0_15 = arith.constant 0 : index
    %44 = vector.load %arg6[%c2, %c0_14, %c0_15] : memref<3x8x9xbf16, #tpu.memory_space<vmem>>, vector<1x8x9xbf16>
    %45 = vector.shape_cast %44 : vector<1x8x9xbf16> to vector<8x9xbf16>
    %cst_16 = arith.constant dense<0.000000e+00> : vector<8x256xf32>
    %46 = tpu.matmul %45, %43, %cst_16 {dimension_numbers = #tpu.dot_dimension_numbers<[1], [0], [0], [1], [0, 0, 1, 1], [], []>} : vector<8x9xbf16>, vector<9x256xbf16>, vector<8x256xf32> -> vector<8x256xf32>
    %47 = arith.addf %33, %46 : vector<8x256xf32>
    %c0_17 = arith.constant 0 : index
    %c0_18 = arith.constant 0 : index
    %48 = vector.load %arg7[%c0_17, %c0_18] : memref<8x1xf32, #tpu.memory_space<vmem>>, vector<8x1xf32>
    %49 = vector.broadcast %48 : vector<8x1xf32> to vector<8x256xf32>
    %50 = arith.addf %47, %49 : vector<8x256xf32>
    %cst_19 = arith.constant 0.000000e+00 : f32
    %51 = vector.broadcast %cst_19 : f32 to vector<8x256xf32>
    %52 = arith.maximumf %50, %51 : vector<8x256xf32>
    %c0_20 = arith.constant 0 : index
    %c0_21 = arith.constant 0 : index
    %53 = vector.load %arg5[%c0_20, %c0_21] : memref<1x256xbf16, #tpu.memory_space<vmem>>, vector<1x256xbf16>
    %54 = arith.extf %53 : vector<1x256xbf16> to vector<1x256xf32>
    %55 = vector.broadcast %54 : vector<1x256xf32> to vector<8x256xf32>
    %56 = arith.mulf %52, %55 : vector<8x256xf32>
    %57 = arith.truncf %56 : vector<8x256xf32> to vector<8x256xbf16>
    %c0_22 = arith.constant 0 : index
    %c0_23 = arith.constant 0 : index
    %c0_24 = arith.constant 0 : index
    %58 = vector.load %arg8[%c0_22, %c0_23, %c0_24] : memref<1x8x256xbf16, #tpu.memory_space<vmem>>, vector<1x8x256xbf16>
    %59 = vector.shape_cast %58 : vector<1x8x256xbf16> to vector<8x256xbf16>
    %60 = vector.shape_cast %57 : vector<8x256xbf16> to vector<1x8x256xbf16>
    tpu.vector_store %arg8[%c0_22, %c0_23, %c0_24], %60 {strides = array<i32>} : memref<1x8x256xbf16, #tpu.memory_space<vmem>>, vector<1x8x256xbf16>,
    return
  }
  func.func @transform_0(%arg0: i32, %arg1: i32) -> (i32, i32, i32) {
    %c1_i32 = arith.constant 1 : i32
    %0 = arith.muli %arg1, %c1_i32 : i32
    %c1_i32_0 = arith.constant 1 : i32
    %1 = arith.subi %0, %c1_i32_0 : i32
    %c0_i32 = arith.constant 0 : i32
    %2 = arith.maxsi %1, %c0_i32 : i32
    %c0_i32_1 = arith.constant 0 : i32
    %c0_i32_2 = arith.constant 0 : i32
    return %arg0, %c0_i32_1, %2 : i32, i32, i32
  }
  func.func @transform_1(%arg0: i32, %arg1: i32) -> (i32, i32, i32) {
    %c0_i32 = arith.constant 0 : i32
    %c0_i32_0 = arith.constant 0 : i32
    return %arg0, %c0_i32, %arg1 : i32, i32, i32
  }
  func.func @transform_2(%arg0: i32, %arg1: i32) -> (i32, i32, i32) {
    %c1_i32 = arith.constant 1 : i32
    %0 = arith.muli %arg1, %c1_i32 : i32
    %c1_i32_0 = arith.constant 1 : i32
    %1 = arith.addi %0, %c1_i32_0 : i32
    %c4_i32 = arith.constant 4 : i32
    %2 = arith.minsi %1, %c4_i32 : i32
    %c0_i32 = arith.constant 0 : i32
    %c0_i32_1 = arith.constant 0 : i32
    return %arg0, %c0_i32, %2 : i32, i32, i32
  }
  func.func @transform_3(%arg0: i32, %arg1: i32) -> (i32, i32) {
    %c0_i32 = arith.constant 0 : i32
    %c0_i32_0 = arith.constant 0 : i32
    return %c0_i32, %arg1 : i32, i32
  }
  func.func @transform_4(%arg0: i32, %arg1: i32) -> (i32, i32, i32) {
    %c0_i32 = arith.constant 0 : i32
    %c0_i32_0 = arith.constant 0 : i32
    %c0_i32_1 = arith.constant 0 : i32
    %c0_i32_2 = arith.constant 0 : i32
    return %c0_i32, %c0_i32_0, %c0_i32_1 : i32, i32, i32
  }
  func.func @transform_5(%arg0: i32, %arg1: i32) -> (i32, i32) {
    %c0_i32 = arith.constant 0 : i32
    %c0_i32_0 = arith.constant 0 : i32
    %c0_i32_1 = arith.constant 0 : i32
    return %c0_i32, %c0_i32_0 : i32, i32
  }
  func.func @transform_6(%arg0: i32, %arg1: i32) -> (i32, i32, i32) {
    %c0_i32 = arith.constant 0 : i32
    %c0_i32_0 = arith.constant 0 : i32
    return %arg0, %c0_i32, %arg1 : i32, i32, i32
  }
}

module attributes {stable_mosaic.version = 11 : i64} {
  func.func @kernel(%arg0: i32, %arg1: i32, %arg2: memref<1x8x256xbf16, #tpu.memory_space<vmem>>, %arg3: memref<1x8x256xbf16, #tpu.memory_space<vmem>>, %arg4: memref<1x8x256xbf16, #tpu.memory_space<vmem>>, %arg5: memref<1x256xbf16, #tpu.memory_space<vmem>>, %arg6: memref<1x256xbf16, #tpu.memory_space<vmem>>, %arg7: memref<1x256xbf16, #tpu.memory_space<vmem>>, %arg8: memref<3x16x72xbf16, #tpu.memory_space<vmem>>, %arg9: memref<16x1xf32, #tpu.memory_space<vmem>>, %arg10: memref<16x8xbf16, #tpu.memory_space<vmem>>, %arg11: memref<16x1xf32, #tpu.memory_space<vmem>>, %arg12: memref<3x16x144xbf16, #tpu.memory_space<vmem>>, %arg13: memref<16x1xf32, #tpu.memory_space<vmem>>, %arg14: memref<1x16x256xbf16, #tpu.memory_space<vmem>>) attributes {dimension_semantics = [#tpu.dimension_semantics<parallel>, #tpu.dimension_semantics<parallel>], iteration_bounds = array<i64: 2, 5>, scalar_prefetch = 0 : i64, scratch_operands = 0 : i64, tpu.core_type = #tpu.core_type<tc>, window_params = [{transform_indices = @transform_0, window_bounds = array<i64: 1, 8, 256>}, {transform_indices = @transform_1, window_bounds = array<i64: 1, 8, 256>}, {transform_indices = @transform_2, window_bounds = array<i64: 1, 8, 256>}, {transform_indices = @transform_3, window_bounds = array<i64: 1, 256>}, {transform_indices = @transform_4, window_bounds = array<i64: 1, 256>}, {transform_indices = @transform_5, window_bounds = array<i64: 1, 256>}, {pipeline_mode = #tpu.pipeline_mode<synchronous>, transform_indices = @transform_6, window_bounds = array<i64: 3, 16, 72>}, {pipeline_mode = #tpu.pipeline_mode<synchronous>, transform_indices = @transform_7, window_bounds = array<i64: 16, 1>}, {pipeline_mode = #tpu.pipeline_mode<synchronous>, transform_indices = @transform_8, window_bounds = array<i64: 16, 8>}, {pipeline_mode = #tpu.pipeline_mode<synchronous>, transform_indices = @transform_9, window_bounds = array<i64: 16, 1>}, {pipeline_mode = #tpu.pipeline_mode<synchronous>, transform_indices = @transform_10, window_bounds = array<i64: 3, 16, 144>}, {pipeline_mode = #tpu.pipeline_mode<synchronous>, transform_indices = @transform_11, window_bounds = array<i64: 16, 1>}, {transform_indices = @transform_12, window_bounds = array<i64: 1, 16, 256>}]} {
    %cst = arith.constant 0.000000e+00 : bf16
    %0 = vector.broadcast %cst : bf16 to vector<8x256xbf16>
    %c0 = arith.constant 0 : index
    %c0_0 = arith.constant 0 : index
    %c0_1 = arith.constant 0 : index
    %1 = vector.load %arg2[%c0, %c0_0, %c0_1] : memref<1x8x256xbf16, #tpu.memory_space<vmem>>, vector<1x8x256xbf16>
    %2 = vector.shape_cast %1 : vector<1x8x256xbf16> to vector<8x256xbf16>
    %c0_2 = arith.constant 0 : index
    %c0_3 = arith.constant 0 : index
    %c0_4 = arith.constant 0 : index
    %3 = vector.load %arg3[%c0_2, %c0_3, %c0_4] : memref<1x8x256xbf16, #tpu.memory_space<vmem>>, vector<1x8x256xbf16>
    %4 = vector.shape_cast %3 : vector<1x8x256xbf16> to vector<8x256xbf16>
    %c0_5 = arith.constant 0 : index
    %c0_6 = arith.constant 0 : index
    %c0_7 = arith.constant 0 : index
    %5 = vector.load %arg4[%c0_5, %c0_6, %c0_7] : memref<1x8x256xbf16, #tpu.memory_space<vmem>>, vector<1x8x256xbf16>
    %6 = vector.shape_cast %5 : vector<1x8x256xbf16> to vector<8x256xbf16>
    %7 = tpu.concatenate %0, %2, %4, %6, %0 in 1 : vector<8x256xbf16>, vector<8x256xbf16>, vector<8x256xbf16>, vector<8x256xbf16>, vector<8x256xbf16> -> vector<8x1280xbf16>
    %c0_8 = arith.constant 0 : index
    %c0_9 = arith.constant 0 : index
    %8 = vector.load %arg5[%c0_8, %c0_9] : memref<1x256xbf16, #tpu.memory_space<vmem>>, vector<1x256xbf16>
    %c0_10 = arith.constant 0 : index
    %c0_11 = arith.constant 0 : index
    %9 = vector.load %arg6[%c0_10, %c0_11] : memref<1x256xbf16, #tpu.memory_space<vmem>>, vector<1x256xbf16>
    %c0_12 = arith.constant 0 : index
    %c0_13 = arith.constant 0 : index
    %10 = vector.load %arg7[%c0_12, %c0_13] : memref<1x256xbf16, #tpu.memory_space<vmem>>, vector<1x256xbf16>
    %11 = tpu.concatenate %8, %9, %10 in 1 : vector<1x256xbf16>, vector<1x256xbf16>, vector<1x256xbf16> -> vector<1x768xbf16>
    %12 = vector.extract_strided_slice %7 {offsets = [0, 117], sizes = [8, 768], strides = [1, 1]} : vector<8x1280xbf16> to vector<8x768xbf16>
    %13 = vector.extract_strided_slice %7 {offsets = [0, 118], sizes = [8, 768], strides = [1, 1]} : vector<8x1280xbf16> to vector<8x768xbf16>
    %14 = vector.extract_strided_slice %7 {offsets = [0, 119], sizes = [8, 768], strides = [1, 1]} : vector<8x1280xbf16> to vector<8x768xbf16>
    %15 = vector.extract_strided_slice %7 {offsets = [0, 127], sizes = [8, 768], strides = [1, 1]} : vector<8x1280xbf16> to vector<8x768xbf16>
    %16 = vector.extract_strided_slice %7 {offsets = [0, 128], sizes = [8, 768], strides = [1, 1]} : vector<8x1280xbf16> to vector<8x768xbf16>
    %17 = vector.extract_strided_slice %7 {offsets = [0, 129], sizes = [8, 768], strides = [1, 1]} : vector<8x1280xbf16> to vector<8x768xbf16>
    %18 = vector.extract_strided_slice %7 {offsets = [0, 137], sizes = [8, 768], strides = [1, 1]} : vector<8x1280xbf16> to vector<8x768xbf16>
    %19 = vector.extract_strided_slice %7 {offsets = [0, 138], sizes = [8, 768], strides = [1, 1]} : vector<8x1280xbf16> to vector<8x768xbf16>
    %20 = vector.extract_strided_slice %7 {offsets = [0, 139], sizes = [8, 768], strides = [1, 1]} : vector<8x1280xbf16> to vector<8x768xbf16>
    %21 = tpu.concatenate %12, %13, %14, %15, %16, %17, %18, %19, %20 in 0 : vector<8x768xbf16>, vector<8x768xbf16>, vector<8x768xbf16>, vector<8x768xbf16>, vector<8x768xbf16>, vector<8x768xbf16>, vector<8x768xbf16>, vector<8x768xbf16>, vector<8x768xbf16> -> vector<72x768xbf16>
    %c0_14 = arith.constant 0 : index
    %c0_15 = arith.constant 0 : index
    %c0_16 = arith.constant 0 : index
    %22 = vector.load %arg8[%c0_14, %c0_15, %c0_16] : memref<3x16x72xbf16, #tpu.memory_space<vmem>>, vector<1x16x72xbf16>
    %23 = vector.shape_cast %22 : vector<1x16x72xbf16> to vector<16x72xbf16>
    %cst_17 = arith.constant dense<0.000000e+00> : vector<16x768xf32>
    %24 = tpu.matmul %23, %21, %cst_17 {dimension_numbers = #tpu.dot_dimension_numbers<[1], [0], [0], [1], [0, 0, 1, 1], [], []>} : vector<16x72xbf16>, vector<72x768xbf16>, vector<16x768xf32> -> vector<16x768xf32>
    %25 = vector.extract_strided_slice %7 {offsets = [0, 245], sizes = [8, 768], strides = [1, 1]} : vector<8x1280xbf16> to vector<8x768xbf16>
    %26 = vector.extract_strided_slice %7 {offsets = [0, 246], sizes = [8, 768], strides = [1, 1]} : vector<8x1280xbf16> to vector<8x768xbf16>
    %27 = vector.extract_strided_slice %7 {offsets = [0, 247], sizes = [8, 768], strides = [1, 1]} : vector<8x1280xbf16> to vector<8x768xbf16>
    %28 = vector.extract_strided_slice %7 {offsets = [0, 255], sizes = [8, 768], strides = [1, 1]} : vector<8x1280xbf16> to vector<8x768xbf16>
    %29 = vector.extract_strided_slice %7 {offsets = [0, 256], sizes = [8, 768], strides = [1, 1]} : vector<8x1280xbf16> to vector<8x768xbf16>
    %30 = vector.extract_strided_slice %7 {offsets = [0, 257], sizes = [8, 768], strides = [1, 1]} : vector<8x1280xbf16> to vector<8x768xbf16>
    %31 = vector.extract_strided_slice %7 {offsets = [0, 265], sizes = [8, 768], strides = [1, 1]} : vector<8x1280xbf16> to vector<8x768xbf16>
    %32 = vector.extract_strided_slice %7 {offsets = [0, 266], sizes = [8, 768], strides = [1, 1]} : vector<8x1280xbf16> to vector<8x768xbf16>
    %33 = vector.extract_strided_slice %7 {offsets = [0, 267], sizes = [8, 768], strides = [1, 1]} : vector<8x1280xbf16> to vector<8x768xbf16>
    %34 = tpu.concatenate %25, %26, %27, %28, %29, %30, %31, %32, %33 in 0 : vector<8x768xbf16>, vector<8x768xbf16>, vector<8x768xbf16>, vector<8x768xbf16>, vector<8x768xbf16>, vector<8x768xbf16>, vector<8x768xbf16>, vector<8x768xbf16>, vector<8x768xbf16> -> vector<72x768xbf16>
    %c1 = arith.constant 1 : index
    %c0_18 = arith.constant 0 : index
    %c0_19 = arith.constant 0 : index
    %35 = vector.load %arg8[%c1, %c0_18, %c0_19] : memref<3x16x72xbf16, #tpu.memory_space<vmem>>, vector<1x16x72xbf16>
    %36 = vector.shape_cast %35 : vector<1x16x72xbf16> to vector<16x72xbf16>
    %cst_20 = arith.constant dense<0.000000e+00> : vector<16x768xf32>
    %37 = tpu.matmul %36, %34, %cst_20 {dimension_numbers = #tpu.dot_dimension_numbers<[1], [0], [0], [1], [0, 0, 1, 1], [], []>} : vector<16x72xbf16>, vector<72x768xbf16>, vector<16x768xf32> -> vector<16x768xf32>
    %38 = arith.addf %24, %37 : vector<16x768xf32>
    %39 = vector.extract_strided_slice %7 {offsets = [0, 373], sizes = [8, 768], strides = [1, 1]} : vector<8x1280xbf16> to vector<8x768xbf16>
    %40 = vector.extract_strided_slice %7 {offsets = [0, 374], sizes = [8, 768], strides = [1, 1]} : vector<8x1280xbf16> to vector<8x768xbf16>
    %41 = vector.extract_strided_slice %7 {offsets = [0, 375], sizes = [8, 768], strides = [1, 1]} : vector<8x1280xbf16> to vector<8x768xbf16>
    %42 = vector.extract_strided_slice %7 {offsets = [0, 383], sizes = [8, 768], strides = [1, 1]} : vector<8x1280xbf16> to vector<8x768xbf16>
    %43 = vector.extract_strided_slice %7 {offsets = [0, 384], sizes = [8, 768], strides = [1, 1]} : vector<8x1280xbf16> to vector<8x768xbf16>
    %44 = vector.extract_strided_slice %7 {offsets = [0, 385], sizes = [8, 768], strides = [1, 1]} : vector<8x1280xbf16> to vector<8x768xbf16>
    %45 = vector.extract_strided_slice %7 {offsets = [0, 393], sizes = [8, 768], strides = [1, 1]} : vector<8x1280xbf16> to vector<8x768xbf16>
    %46 = vector.extract_strided_slice %7 {offsets = [0, 394], sizes = [8, 768], strides = [1, 1]} : vector<8x1280xbf16> to vector<8x768xbf16>
    %47 = vector.extract_strided_slice %7 {offsets = [0, 395], sizes = [8, 768], strides = [1, 1]} : vector<8x1280xbf16> to vector<8x768xbf16>
    %48 = tpu.concatenate %39, %40, %41, %42, %43, %44, %45, %46, %47 in 0 : vector<8x768xbf16>, vector<8x768xbf16>, vector<8x768xbf16>, vector<8x768xbf16>, vector<8x768xbf16>, vector<8x768xbf16>, vector<8x768xbf16>, vector<8x768xbf16>, vector<8x768xbf16> -> vector<72x768xbf16>
    %c2 = arith.constant 2 : index
    %c0_21 = arith.constant 0 : index
    %c0_22 = arith.constant 0 : index
    %49 = vector.load %arg8[%c2, %c0_21, %c0_22] : memref<3x16x72xbf16, #tpu.memory_space<vmem>>, vector<1x16x72xbf16>
    %50 = vector.shape_cast %49 : vector<1x16x72xbf16> to vector<16x72xbf16>
    %cst_23 = arith.constant dense<0.000000e+00> : vector<16x768xf32>
    %51 = tpu.matmul %50, %48, %cst_23 {dimension_numbers = #tpu.dot_dimension_numbers<[1], [0], [0], [1], [0, 0, 1, 1], [], []>} : vector<16x72xbf16>, vector<72x768xbf16>, vector<16x768xf32> -> vector<16x768xf32>
    %52 = arith.addf %38, %51 : vector<16x768xf32>
    %c0_24 = arith.constant 0 : index
    %c0_25 = arith.constant 0 : index
    %53 = vector.load %arg9[%c0_24, %c0_25] : memref<16x1xf32, #tpu.memory_space<vmem>>, vector<16x1xf32>
    %54 = vector.broadcast %53 : vector<16x1xf32> to vector<16x768xf32>
    %55 = arith.addf %52, %54 : vector<16x768xf32>
    %cst_26 = arith.constant 0.000000e+00 : f32
    %56 = vector.broadcast %cst_26 : f32 to vector<16x768xf32>
    %57 = arith.maximumf %55, %56 : vector<16x768xf32>
    %58 = arith.extf %11 : vector<1x768xbf16> to vector<1x768xf32>
    %59 = vector.broadcast %58 : vector<1x768xf32> to vector<16x768xf32>
    %60 = arith.mulf %57, %59 : vector<16x768xf32>
    %61 = arith.truncf %60 : vector<16x768xf32> to vector<16x768xbf16>
    %c0_27 = arith.constant 0 : index
    %c0_28 = arith.constant 0 : index
    %62 = vector.load %arg10[%c0_27, %c0_28] : memref<16x8xbf16, #tpu.memory_space<vmem>>, vector<16x8xbf16>
    %c0_29 = arith.constant 0 : index
    %c0_30 = arith.constant 0 : index
    %c0_31 = arith.constant 0 : index
    %63 = vector.load %arg3[%c0_29, %c0_30, %c0_31] : memref<1x8x256xbf16, #tpu.memory_space<vmem>>, vector<1x8x256xbf16>
    %64 = vector.shape_cast %63 : vector<1x8x256xbf16> to vector<8x256xbf16>
    %cst_32 = arith.constant dense<0.000000e+00> : vector<16x256xf32>
    %65 = tpu.matmul %62, %64, %cst_32 {dimension_numbers = #tpu.dot_dimension_numbers<[1], [0], [0], [1], [0, 0, 1, 1], [], []>} : vector<16x8xbf16>, vector<8x256xbf16>, vector<16x256xf32> -> vector<16x256xf32>
    %c0_33 = arith.constant 0 : index
    %c0_34 = arith.constant 0 : index
    %66 = vector.load %arg11[%c0_33, %c0_34] : memref<16x1xf32, #tpu.memory_space<vmem>>, vector<16x1xf32>
    %67 = vector.broadcast %66 : vector<16x1xf32> to vector<16x256xf32>
    %68 = arith.addf %65, %67 : vector<16x256xf32>
    %69 = vector.extract_strided_slice %61 {offsets = [0, 117], sizes = [16, 256], strides = [1, 1]} : vector<16x768xbf16> to vector<16x256xbf16>
    %70 = vector.extract_strided_slice %61 {offsets = [0, 118], sizes = [16, 256], strides = [1, 1]} : vector<16x768xbf16> to vector<16x256xbf16>
    %71 = vector.extract_strided_slice %61 {offsets = [0, 119], sizes = [16, 256], strides = [1, 1]} : vector<16x768xbf16> to vector<16x256xbf16>
    %72 = vector.extract_strided_slice %61 {offsets = [0, 127], sizes = [16, 256], strides = [1, 1]} : vector<16x768xbf16> to vector<16x256xbf16>
    %73 = vector.extract_strided_slice %61 {offsets = [0, 128], sizes = [16, 256], strides = [1, 1]} : vector<16x768xbf16> to vector<16x256xbf16>
    %74 = vector.extract_strided_slice %61 {offsets = [0, 129], sizes = [16, 256], strides = [1, 1]} : vector<16x768xbf16> to vector<16x256xbf16>
    %75 = vector.extract_strided_slice %61 {offsets = [0, 137], sizes = [16, 256], strides = [1, 1]} : vector<16x768xbf16> to vector<16x256xbf16>
    %76 = vector.extract_strided_slice %61 {offsets = [0, 138], sizes = [16, 256], strides = [1, 1]} : vector<16x768xbf16> to vector<16x256xbf16>
    %77 = vector.extract_strided_slice %61 {offsets = [0, 139], sizes = [16, 256], strides = [1, 1]} : vector<16x768xbf16> to vector<16x256xbf16>
    %78 = tpu.concatenate %69, %70, %71, %72, %73, %74, %75, %76, %77 in 0 : vector<16x256xbf16>, vector<16x256xbf16>, vector<16x256xbf16>, vector<16x256xbf16>, vector<16x256xbf16>, vector<16x256xbf16>, vector<16x256xbf16>, vector<16x256xbf16>, vector<16x256xbf16> -> vector<144x256xbf16>
    %c0_35 = arith.constant 0 : index
    %c0_36 = arith.constant 0 : index
    %c0_37 = arith.constant 0 : index
    %79 = vector.load %arg12[%c0_35, %c0_36, %c0_37] : memref<3x16x144xbf16, #tpu.memory_space<vmem>>, vector<1x16x144xbf16>
    %80 = vector.shape_cast %79 : vector<1x16x144xbf16> to vector<16x144xbf16>
    %cst_38 = arith.constant dense<0.000000e+00> : vector<16x256xf32>
    %81 = tpu.matmul %80, %78, %cst_38 {dimension_numbers = #tpu.dot_dimension_numbers<[1], [0], [0], [1], [0, 0, 1, 1], [], []>} : vector<16x144xbf16>, vector<144x256xbf16>, vector<16x256xf32> -> vector<16x256xf32>
    %82 = vector.extract_strided_slice %61 {offsets = [0, 245], sizes = [16, 256], strides = [1, 1]} : vector<16x768xbf16> to vector<16x256xbf16>
    %83 = vector.extract_strided_slice %61 {offsets = [0, 246], sizes = [16, 256], strides = [1, 1]} : vector<16x768xbf16> to vector<16x256xbf16>
    %84 = vector.extract_strided_slice %61 {offsets = [0, 247], sizes = [16, 256], strides = [1, 1]} : vector<16x768xbf16> to vector<16x256xbf16>
    %85 = vector.extract_strided_slice %61 {offsets = [0, 255], sizes = [16, 256], strides = [1, 1]} : vector<16x768xbf16> to vector<16x256xbf16>
    %86 = vector.extract_strided_slice %61 {offsets = [0, 256], sizes = [16, 256], strides = [1, 1]} : vector<16x768xbf16> to vector<16x256xbf16>
    %87 = vector.extract_strided_slice %61 {offsets = [0, 257], sizes = [16, 256], strides = [1, 1]} : vector<16x768xbf16> to vector<16x256xbf16>
    %88 = vector.extract_strided_slice %61 {offsets = [0, 265], sizes = [16, 256], strides = [1, 1]} : vector<16x768xbf16> to vector<16x256xbf16>
    %89 = vector.extract_strided_slice %61 {offsets = [0, 266], sizes = [16, 256], strides = [1, 1]} : vector<16x768xbf16> to vector<16x256xbf16>
    %90 = vector.extract_strided_slice %61 {offsets = [0, 267], sizes = [16, 256], strides = [1, 1]} : vector<16x768xbf16> to vector<16x256xbf16>
    %91 = tpu.concatenate %82, %83, %84, %85, %86, %87, %88, %89, %90 in 0 : vector<16x256xbf16>, vector<16x256xbf16>, vector<16x256xbf16>, vector<16x256xbf16>, vector<16x256xbf16>, vector<16x256xbf16>, vector<16x256xbf16>, vector<16x256xbf16>, vector<16x256xbf16> -> vector<144x256xbf16>
    %c1_39 = arith.constant 1 : index
    %c0_40 = arith.constant 0 : index
    %c0_41 = arith.constant 0 : index
    %92 = vector.load %arg12[%c1_39, %c0_40, %c0_41] : memref<3x16x144xbf16, #tpu.memory_space<vmem>>, vector<1x16x144xbf16>
    %93 = vector.shape_cast %92 : vector<1x16x144xbf16> to vector<16x144xbf16>
    %cst_42 = arith.constant dense<0.000000e+00> : vector<16x256xf32>
    %94 = tpu.matmul %93, %91, %cst_42 {dimension_numbers = #tpu.dot_dimension_numbers<[1], [0], [0], [1], [0, 0, 1, 1], [], []>} : vector<16x144xbf16>, vector<144x256xbf16>, vector<16x256xf32> -> vector<16x256xf32>
    %95 = arith.addf %81, %94 : vector<16x256xf32>
    %96 = vector.extract_strided_slice %61 {offsets = [0, 373], sizes = [16, 256], strides = [1, 1]} : vector<16x768xbf16> to vector<16x256xbf16>
    %97 = vector.extract_strided_slice %61 {offsets = [0, 374], sizes = [16, 256], strides = [1, 1]} : vector<16x768xbf16> to vector<16x256xbf16>
    %98 = vector.extract_strided_slice %61 {offsets = [0, 375], sizes = [16, 256], strides = [1, 1]} : vector<16x768xbf16> to vector<16x256xbf16>
    %99 = vector.extract_strided_slice %61 {offsets = [0, 383], sizes = [16, 256], strides = [1, 1]} : vector<16x768xbf16> to vector<16x256xbf16>
    %100 = vector.extract_strided_slice %61 {offsets = [0, 384], sizes = [16, 256], strides = [1, 1]} : vector<16x768xbf16> to vector<16x256xbf16>
    %101 = vector.extract_strided_slice %61 {offsets = [0, 385], sizes = [16, 256], strides = [1, 1]} : vector<16x768xbf16> to vector<16x256xbf16>
    %102 = vector.extract_strided_slice %61 {offsets = [0, 393], sizes = [16, 256], strides = [1, 1]} : vector<16x768xbf16> to vector<16x256xbf16>
    %103 = vector.extract_strided_slice %61 {offsets = [0, 394], sizes = [16, 256], strides = [1, 1]} : vector<16x768xbf16> to vector<16x256xbf16>
    %104 = vector.extract_strided_slice %61 {offsets = [0, 395], sizes = [16, 256], strides = [1, 1]} : vector<16x768xbf16> to vector<16x256xbf16>
    %105 = tpu.concatenate %96, %97, %98, %99, %100, %101, %102, %103, %104 in 0 : vector<16x256xbf16>, vector<16x256xbf16>, vector<16x256xbf16>, vector<16x256xbf16>, vector<16x256xbf16>, vector<16x256xbf16>, vector<16x256xbf16>, vector<16x256xbf16>, vector<16x256xbf16> -> vector<144x256xbf16>
    %c2_43 = arith.constant 2 : index
    %c0_44 = arith.constant 0 : index
    %c0_45 = arith.constant 0 : index
    %106 = vector.load %arg12[%c2_43, %c0_44, %c0_45] : memref<3x16x144xbf16, #tpu.memory_space<vmem>>, vector<1x16x144xbf16>
    %107 = vector.shape_cast %106 : vector<1x16x144xbf16> to vector<16x144xbf16>
    %cst_46 = arith.constant dense<0.000000e+00> : vector<16x256xf32>
    %108 = tpu.matmul %107, %105, %cst_46 {dimension_numbers = #tpu.dot_dimension_numbers<[1], [0], [0], [1], [0, 0, 1, 1], [], []>} : vector<16x144xbf16>, vector<144x256xbf16>, vector<16x256xf32> -> vector<16x256xf32>
    %109 = arith.addf %95, %108 : vector<16x256xf32>
    %c0_47 = arith.constant 0 : index
    %c0_48 = arith.constant 0 : index
    %110 = vector.load %arg13[%c0_47, %c0_48] : memref<16x1xf32, #tpu.memory_space<vmem>>, vector<16x1xf32>
    %111 = vector.broadcast %110 : vector<16x1xf32> to vector<16x256xf32>
    %112 = arith.addf %109, %111 : vector<16x256xf32>
    %113 = arith.addf %112, %68 : vector<16x256xf32>
    %cst_49 = arith.constant 0.000000e+00 : f32
    %114 = vector.broadcast %cst_49 : f32 to vector<16x256xf32>
    %115 = arith.maximumf %113, %114 : vector<16x256xf32>
    %c0_50 = arith.constant 0 : index
    %c0_51 = arith.constant 0 : index
    %116 = vector.load %arg6[%c0_50, %c0_51] : memref<1x256xbf16, #tpu.memory_space<vmem>>, vector<1x256xbf16>
    %117 = arith.extf %116 : vector<1x256xbf16> to vector<1x256xf32>
    %118 = vector.broadcast %117 : vector<1x256xf32> to vector<16x256xf32>
    %119 = arith.mulf %115, %118 : vector<16x256xf32>
    %120 = arith.truncf %119 : vector<16x256xf32> to vector<16x256xbf16>
    %c0_52 = arith.constant 0 : index
    %c0_53 = arith.constant 0 : index
    %c0_54 = arith.constant 0 : index
    %121 = vector.load %arg14[%c0_52, %c0_53, %c0_54] : memref<1x16x256xbf16, #tpu.memory_space<vmem>>, vector<1x16x256xbf16>
    %122 = vector.shape_cast %121 : vector<1x16x256xbf16> to vector<16x256xbf16>
    %123 = vector.shape_cast %120 : vector<16x256xbf16> to vector<1x16x256xbf16>
    tpu.vector_store %arg14[%c0_52, %c0_53, %c0_54], %123 {strides = array<i32>} : memref<1x16x256xbf16, #tpu.memory_space<vmem>>, vector<1x16x256xbf16>,
    return
  }
  func.func @transform_0(%arg0: i32, %arg1: i32) -> (i32, i32, i32) {
    %c1_i32 = arith.constant 1 : i32
    %0 = arith.muli %arg1, %c1_i32 : i32
    %c1_i32_0 = arith.constant 1 : i32
    %1 = arith.subi %0, %c1_i32_0 : i32
    %c0_i32 = arith.constant 0 : i32
    %2 = arith.maxsi %1, %c0_i32 : i32
    %c0_i32_1 = arith.constant 0 : i32
    %c0_i32_2 = arith.constant 0 : i32
    return %arg0, %c0_i32_1, %2 : i32, i32, i32
  }
  func.func @transform_1(%arg0: i32, %arg1: i32) -> (i32, i32, i32) {
    %c0_i32 = arith.constant 0 : i32
    %c0_i32_0 = arith.constant 0 : i32
    return %arg0, %c0_i32, %arg1 : i32, i32, i32
  }
  func.func @transform_2(%arg0: i32, %arg1: i32) -> (i32, i32, i32) {
    %c1_i32 = arith.constant 1 : i32
    %0 = arith.muli %arg1, %c1_i32 : i32
    %c1_i32_0 = arith.constant 1 : i32
    %1 = arith.addi %0, %c1_i32_0 : i32
    %c4_i32 = arith.constant 4 : i32
    %2 = arith.minsi %1, %c4_i32 : i32
    %c0_i32 = arith.constant 0 : i32
    %c0_i32_1 = arith.constant 0 : i32
    return %arg0, %c0_i32, %2 : i32, i32, i32
  }
  func.func @transform_3(%arg0: i32, %arg1: i32) -> (i32, i32) {
    %c1_i32 = arith.constant 1 : i32
    %0 = arith.muli %arg1, %c1_i32 : i32
    %c1_i32_0 = arith.constant 1 : i32
    %1 = arith.subi %0, %c1_i32_0 : i32
    %c0_i32 = arith.constant 0 : i32
    %2 = arith.maxsi %1, %c0_i32 : i32
    %c0_i32_1 = arith.constant 0 : i32
    %c0_i32_2 = arith.constant 0 : i32
    return %c0_i32_1, %2 : i32, i32
  }
  func.func @transform_4(%arg0: i32, %arg1: i32) -> (i32, i32) {
    %c0_i32 = arith.constant 0 : i32
    %c0_i32_0 = arith.constant 0 : i32
    return %c0_i32, %arg1 : i32, i32
  }
  func.func @transform_5(%arg0: i32, %arg1: i32) -> (i32, i32) {
    %c1_i32 = arith.constant 1 : i32
    %0 = arith.muli %arg1, %c1_i32 : i32
    %c1_i32_0 = arith.constant 1 : i32
    %1 = arith.addi %0, %c1_i32_0 : i32
    %c4_i32 = arith.constant 4 : i32
    %2 = arith.minsi %1, %c4_i32 : i32
    %c0_i32 = arith.constant 0 : i32
    %c0_i32_1 = arith.constant 0 : i32
    return %c0_i32, %2 : i32, i32
  }
  func.func @transform_6(%arg0: i32, %arg1: i32) -> (i32, i32, i32) {
    %c0_i32 = arith.constant 0 : i32
    %c0_i32_0 = arith.constant 0 : i32
    %c0_i32_1 = arith.constant 0 : i32
    %c0_i32_2 = arith.constant 0 : i32
    return %c0_i32, %c0_i32_0, %c0_i32_1 : i32, i32, i32
  }
  func.func @transform_7(%arg0: i32, %arg1: i32) -> (i32, i32) {
    %c0_i32 = arith.constant 0 : i32
    %c0_i32_0 = arith.constant 0 : i32
    %c0_i32_1 = arith.constant 0 : i32
    return %c0_i32, %c0_i32_0 : i32, i32
  }
  func.func @transform_8(%arg0: i32, %arg1: i32) -> (i32, i32) {
    %c0_i32 = arith.constant 0 : i32
    %c0_i32_0 = arith.constant 0 : i32
    %c0_i32_1 = arith.constant 0 : i32
    return %c0_i32, %c0_i32_0 : i32, i32
  }
  func.func @transform_9(%arg0: i32, %arg1: i32) -> (i32, i32) {
    %c0_i32 = arith.constant 0 : i32
    %c0_i32_0 = arith.constant 0 : i32
    %c0_i32_1 = arith.constant 0 : i32
    return %c0_i32, %c0_i32_0 : i32, i32
  }
  func.func @transform_10(%arg0: i32, %arg1: i32) -> (i32, i32, i32) {
    %c0_i32 = arith.constant 0 : i32
    %c0_i32_0 = arith.constant 0 : i32
    %c0_i32_1 = arith.constant 0 : i32
    %c0_i32_2 = arith.constant 0 : i32
    return %c0_i32, %c0_i32_0, %c0_i32_1 : i32, i32, i32
  }
  func.func @transform_11(%arg0: i32, %arg1: i32) -> (i32, i32) {
    %c0_i32 = arith.constant 0 : i32
    %c0_i32_0 = arith.constant 0 : i32
    %c0_i32_1 = arith.constant 0 : i32
    return %c0_i32, %c0_i32_0 : i32, i32
  }
  func.func @transform_12(%arg0: i32, %arg1: i32) -> (i32, i32, i32) {
    %c0_i32 = arith.constant 0 : i32
    %c0_i32_0 = arith.constant 0 : i32
    return %arg0, %c0_i32, %arg1 : i32, i32, i32
  }
}

module attributes {stable_mosaic.version = 11 : i64} {
  func.func @kernel(%arg0: i32, %arg1: i32, %arg2: memref<1x16x256xbf16, #tpu.memory_space<vmem>>, %arg3: memref<1x16x256xbf16, #tpu.memory_space<vmem>>, %arg4: memref<1x16x256xbf16, #tpu.memory_space<vmem>>, %arg5: memref<1x256xbf16, #tpu.memory_space<vmem>>, %arg6: memref<1x256xbf16, #tpu.memory_space<vmem>>, %arg7: memref<1x256xbf16, #tpu.memory_space<vmem>>, %arg8: memref<3x32x144xbf16, #tpu.memory_space<vmem>>, %arg9: memref<32x1xf32, #tpu.memory_space<vmem>>, %arg10: memref<32x16xbf16, #tpu.memory_space<vmem>>, %arg11: memref<32x1xf32, #tpu.memory_space<vmem>>, %arg12: memref<3x32x288xbf16, #tpu.memory_space<vmem>>, %arg13: memref<32x1xf32, #tpu.memory_space<vmem>>, %arg14: memref<8x256xf32, #tpu.memory_space<vmem>>, %arg15: memref<1x1x32x8xf32, #tpu.memory_space<vmem>>) attributes {dimension_semantics = [#tpu.dimension_semantics<parallel>, #tpu.dimension_semantics<parallel>], iteration_bounds = array<i64: 2, 5>, scalar_prefetch = 0 : i64, scratch_operands = 0 : i64, tpu.core_type = #tpu.core_type<tc>, window_params = [{transform_indices = @transform_0, window_bounds = array<i64: 1, 16, 256>}, {transform_indices = @transform_1, window_bounds = array<i64: 1, 16, 256>}, {transform_indices = @transform_2, window_bounds = array<i64: 1, 16, 256>}, {transform_indices = @transform_3, window_bounds = array<i64: 1, 256>}, {transform_indices = @transform_4, window_bounds = array<i64: 1, 256>}, {transform_indices = @transform_5, window_bounds = array<i64: 1, 256>}, {pipeline_mode = #tpu.pipeline_mode<synchronous>, transform_indices = @transform_6, window_bounds = array<i64: 3, 32, 144>}, {pipeline_mode = #tpu.pipeline_mode<synchronous>, transform_indices = @transform_7, window_bounds = array<i64: 32, 1>}, {pipeline_mode = #tpu.pipeline_mode<synchronous>, transform_indices = @transform_8, window_bounds = array<i64: 32, 16>}, {pipeline_mode = #tpu.pipeline_mode<synchronous>, transform_indices = @transform_9, window_bounds = array<i64: 32, 1>}, {pipeline_mode = #tpu.pipeline_mode<synchronous>, transform_indices = @transform_10, window_bounds = array<i64: 3, 32, 288>}, {pipeline_mode = #tpu.pipeline_mode<synchronous>, transform_indices = @transform_11, window_bounds = array<i64: 32, 1>}, {pipeline_mode = #tpu.pipeline_mode<synchronous>, transform_indices = @transform_12, window_bounds = array<i64: 8, 256>}, {transform_indices = @transform_13, window_bounds = array<i64: 1, 1, 32, 8>}]} {
    %cst = arith.constant 0.000000e+00 : bf16
    %0 = vector.broadcast %cst : bf16 to vector<16x256xbf16>
    %c0 = arith.constant 0 : index
    %c0_0 = arith.constant 0 : index
    %c0_1 = arith.constant 0 : index
    %1 = vector.load %arg2[%c0, %c0_0, %c0_1] : memref<1x16x256xbf16, #tpu.memory_space<vmem>>, vector<1x16x256xbf16>
    %2 = vector.shape_cast %1 : vector<1x16x256xbf16> to vector<16x256xbf16>
    %c0_2 = arith.constant 0 : index
    %c0_3 = arith.constant 0 : index
    %c0_4 = arith.constant 0 : index
    %3 = vector.load %arg3[%c0_2, %c0_3, %c0_4] : memref<1x16x256xbf16, #tpu.memory_space<vmem>>, vector<1x16x256xbf16>
    %4 = vector.shape_cast %3 : vector<1x16x256xbf16> to vector<16x256xbf16>
    %c0_5 = arith.constant 0 : index
    %c0_6 = arith.constant 0 : index
    %c0_7 = arith.constant 0 : index
    %5 = vector.load %arg4[%c0_5, %c0_6, %c0_7] : memref<1x16x256xbf16, #tpu.memory_space<vmem>>, vector<1x16x256xbf16>
    %6 = vector.shape_cast %5 : vector<1x16x256xbf16> to vector<16x256xbf16>
    %7 = tpu.concatenate %0, %2, %4, %6, %0 in 1 : vector<16x256xbf16>, vector<16x256xbf16>, vector<16x256xbf16>, vector<16x256xbf16>, vector<16x256xbf16> -> vector<16x1280xbf16>
    %c0_8 = arith.constant 0 : index
    %c0_9 = arith.constant 0 : index
    %8 = vector.load %arg5[%c0_8, %c0_9] : memref<1x256xbf16, #tpu.memory_space<vmem>>, vector<1x256xbf16>
    %c0_10 = arith.constant 0 : index
    %c0_11 = arith.constant 0 : index
    %9 = vector.load %arg6[%c0_10, %c0_11] : memref<1x256xbf16, #tpu.memory_space<vmem>>, vector<1x256xbf16>
    %c0_12 = arith.constant 0 : index
    %c0_13 = arith.constant 0 : index
    %10 = vector.load %arg7[%c0_12, %c0_13] : memref<1x256xbf16, #tpu.memory_space<vmem>>, vector<1x256xbf16>
    %11 = tpu.concatenate %8, %9, %10 in 1 : vector<1x256xbf16>, vector<1x256xbf16>, vector<1x256xbf16> -> vector<1x768xbf16>
    %12 = vector.extract_strided_slice %7 {offsets = [0, 117], sizes = [16, 768], strides = [1, 1]} : vector<16x1280xbf16> to vector<16x768xbf16>
    %13 = vector.extract_strided_slice %7 {offsets = [0, 118], sizes = [16, 768], strides = [1, 1]} : vector<16x1280xbf16> to vector<16x768xbf16>
    %14 = vector.extract_strided_slice %7 {offsets = [0, 119], sizes = [16, 768], strides = [1, 1]} : vector<16x1280xbf16> to vector<16x768xbf16>
    %15 = vector.extract_strided_slice %7 {offsets = [0, 127], sizes = [16, 768], strides = [1, 1]} : vector<16x1280xbf16> to vector<16x768xbf16>
    %16 = vector.extract_strided_slice %7 {offsets = [0, 128], sizes = [16, 768], strides = [1, 1]} : vector<16x1280xbf16> to vector<16x768xbf16>
    %17 = vector.extract_strided_slice %7 {offsets = [0, 129], sizes = [16, 768], strides = [1, 1]} : vector<16x1280xbf16> to vector<16x768xbf16>
    %18 = vector.extract_strided_slice %7 {offsets = [0, 137], sizes = [16, 768], strides = [1, 1]} : vector<16x1280xbf16> to vector<16x768xbf16>
    %19 = vector.extract_strided_slice %7 {offsets = [0, 138], sizes = [16, 768], strides = [1, 1]} : vector<16x1280xbf16> to vector<16x768xbf16>
    %20 = vector.extract_strided_slice %7 {offsets = [0, 139], sizes = [16, 768], strides = [1, 1]} : vector<16x1280xbf16> to vector<16x768xbf16>
    %21 = tpu.concatenate %12, %13, %14, %15, %16, %17, %18, %19, %20 in 0 : vector<16x768xbf16>, vector<16x768xbf16>, vector<16x768xbf16>, vector<16x768xbf16>, vector<16x768xbf16>, vector<16x768xbf16>, vector<16x768xbf16>, vector<16x768xbf16>, vector<16x768xbf16> -> vector<144x768xbf16>
    %c0_14 = arith.constant 0 : index
    %c0_15 = arith.constant 0 : index
    %c0_16 = arith.constant 0 : index
    %22 = vector.load %arg8[%c0_14, %c0_15, %c0_16] : memref<3x32x144xbf16, #tpu.memory_space<vmem>>, vector<1x32x144xbf16>
    %23 = vector.shape_cast %22 : vector<1x32x144xbf16> to vector<32x144xbf16>
    %cst_17 = arith.constant dense<0.000000e+00> : vector<32x768xf32>
    %24 = tpu.matmul %23, %21, %cst_17 {dimension_numbers = #tpu.dot_dimension_numbers<[1], [0], [0], [1], [0, 0, 1, 1], [], []>} : vector<32x144xbf16>, vector<144x768xbf16>, vector<32x768xf32> -> vector<32x768xf32>
    %25 = vector.extract_strided_slice %7 {offsets = [0, 245], sizes = [16, 768], strides = [1, 1]} : vector<16x1280xbf16> to vector<16x768xbf16>
    %26 = vector.extract_strided_slice %7 {offsets = [0, 246], sizes = [16, 768], strides = [1, 1]} : vector<16x1280xbf16> to vector<16x768xbf16>
    %27 = vector.extract_strided_slice %7 {offsets = [0, 247], sizes = [16, 768], strides = [1, 1]} : vector<16x1280xbf16> to vector<16x768xbf16>
    %28 = vector.extract_strided_slice %7 {offsets = [0, 255], sizes = [16, 768], strides = [1, 1]} : vector<16x1280xbf16> to vector<16x768xbf16>
    %29 = vector.extract_strided_slice %7 {offsets = [0, 256], sizes = [16, 768], strides = [1, 1]} : vector<16x1280xbf16> to vector<16x768xbf16>
    %30 = vector.extract_strided_slice %7 {offsets = [0, 257], sizes = [16, 768], strides = [1, 1]} : vector<16x1280xbf16> to vector<16x768xbf16>
    %31 = vector.extract_strided_slice %7 {offsets = [0, 265], sizes = [16, 768], strides = [1, 1]} : vector<16x1280xbf16> to vector<16x768xbf16>
    %32 = vector.extract_strided_slice %7 {offsets = [0, 266], sizes = [16, 768], strides = [1, 1]} : vector<16x1280xbf16> to vector<16x768xbf16>
    %33 = vector.extract_strided_slice %7 {offsets = [0, 267], sizes = [16, 768], strides = [1, 1]} : vector<16x1280xbf16> to vector<16x768xbf16>
    %34 = tpu.concatenate %25, %26, %27, %28, %29, %30, %31, %32, %33 in 0 : vector<16x768xbf16>, vector<16x768xbf16>, vector<16x768xbf16>, vector<16x768xbf16>, vector<16x768xbf16>, vector<16x768xbf16>, vector<16x768xbf16>, vector<16x768xbf16>, vector<16x768xbf16> -> vector<144x768xbf16>
    %c1 = arith.constant 1 : index
    %c0_18 = arith.constant 0 : index
    %c0_19 = arith.constant 0 : index
    %35 = vector.load %arg8[%c1, %c0_18, %c0_19] : memref<3x32x144xbf16, #tpu.memory_space<vmem>>, vector<1x32x144xbf16>
    %36 = vector.shape_cast %35 : vector<1x32x144xbf16> to vector<32x144xbf16>
    %cst_20 = arith.constant dense<0.000000e+00> : vector<32x768xf32>
    %37 = tpu.matmul %36, %34, %cst_20 {dimension_numbers = #tpu.dot_dimension_numbers<[1], [0], [0], [1], [0, 0, 1, 1], [], []>} : vector<32x144xbf16>, vector<144x768xbf16>, vector<32x768xf32> -> vector<32x768xf32>
    %38 = arith.addf %24, %37 : vector<32x768xf32>
    %39 = vector.extract_strided_slice %7 {offsets = [0, 373], sizes = [16, 768], strides = [1, 1]} : vector<16x1280xbf16> to vector<16x768xbf16>
    %40 = vector.extract_strided_slice %7 {offsets = [0, 374], sizes = [16, 768], strides = [1, 1]} : vector<16x1280xbf16> to vector<16x768xbf16>
    %41 = vector.extract_strided_slice %7 {offsets = [0, 375], sizes = [16, 768], strides = [1, 1]} : vector<16x1280xbf16> to vector<16x768xbf16>
    %42 = vector.extract_strided_slice %7 {offsets = [0, 383], sizes = [16, 768], strides = [1, 1]} : vector<16x1280xbf16> to vector<16x768xbf16>
    %43 = vector.extract_strided_slice %7 {offsets = [0, 384], sizes = [16, 768], strides = [1, 1]} : vector<16x1280xbf16> to vector<16x768xbf16>
    %44 = vector.extract_strided_slice %7 {offsets = [0, 385], sizes = [16, 768], strides = [1, 1]} : vector<16x1280xbf16> to vector<16x768xbf16>
    %45 = vector.extract_strided_slice %7 {offsets = [0, 393], sizes = [16, 768], strides = [1, 1]} : vector<16x1280xbf16> to vector<16x768xbf16>
    %46 = vector.extract_strided_slice %7 {offsets = [0, 394], sizes = [16, 768], strides = [1, 1]} : vector<16x1280xbf16> to vector<16x768xbf16>
    %47 = vector.extract_strided_slice %7 {offsets = [0, 395], sizes = [16, 768], strides = [1, 1]} : vector<16x1280xbf16> to vector<16x768xbf16>
    %48 = tpu.concatenate %39, %40, %41, %42, %43, %44, %45, %46, %47 in 0 : vector<16x768xbf16>, vector<16x768xbf16>, vector<16x768xbf16>, vector<16x768xbf16>, vector<16x768xbf16>, vector<16x768xbf16>, vector<16x768xbf16>, vector<16x768xbf16>, vector<16x768xbf16> -> vector<144x768xbf16>
    %c2 = arith.constant 2 : index
    %c0_21 = arith.constant 0 : index
    %c0_22 = arith.constant 0 : index
    %49 = vector.load %arg8[%c2, %c0_21, %c0_22] : memref<3x32x144xbf16, #tpu.memory_space<vmem>>, vector<1x32x144xbf16>
    %50 = vector.shape_cast %49 : vector<1x32x144xbf16> to vector<32x144xbf16>
    %cst_23 = arith.constant dense<0.000000e+00> : vector<32x768xf32>
    %51 = tpu.matmul %50, %48, %cst_23 {dimension_numbers = #tpu.dot_dimension_numbers<[1], [0], [0], [1], [0, 0, 1, 1], [], []>} : vector<32x144xbf16>, vector<144x768xbf16>, vector<32x768xf32> -> vector<32x768xf32>
    %52 = arith.addf %38, %51 : vector<32x768xf32>
    %c0_24 = arith.constant 0 : index
    %c0_25 = arith.constant 0 : index
    %53 = vector.load %arg9[%c0_24, %c0_25] : memref<32x1xf32, #tpu.memory_space<vmem>>, vector<32x1xf32>
    %54 = vector.broadcast %53 : vector<32x1xf32> to vector<32x768xf32>
    %55 = arith.addf %52, %54 : vector<32x768xf32>
    %cst_26 = arith.constant 0.000000e+00 : f32
    %56 = vector.broadcast %cst_26 : f32 to vector<32x768xf32>
    %57 = arith.maximumf %55, %56 : vector<32x768xf32>
    %58 = arith.extf %11 : vector<1x768xbf16> to vector<1x768xf32>
    %59 = vector.broadcast %58 : vector<1x768xf32> to vector<32x768xf32>
    %60 = arith.mulf %57, %59 : vector<32x768xf32>
    %61 = arith.truncf %60 : vector<32x768xf32> to vector<32x768xbf16>
    %c0_27 = arith.constant 0 : index
    %c0_28 = arith.constant 0 : index
    %62 = vector.load %arg10[%c0_27, %c0_28] : memref<32x16xbf16, #tpu.memory_space<vmem>>, vector<32x16xbf16>
    %c0_29 = arith.constant 0 : index
    %c0_30 = arith.constant 0 : index
    %c0_31 = arith.constant 0 : index
    %63 = vector.load %arg3[%c0_29, %c0_30, %c0_31] : memref<1x16x256xbf16, #tpu.memory_space<vmem>>, vector<1x16x256xbf16>
    %64 = vector.shape_cast %63 : vector<1x16x256xbf16> to vector<16x256xbf16>
    %cst_32 = arith.constant dense<0.000000e+00> : vector<32x256xf32>
    %65 = tpu.matmul %62, %64, %cst_32 {dimension_numbers = #tpu.dot_dimension_numbers<[1], [0], [0], [1], [0, 0, 1, 1], [], []>} : vector<32x16xbf16>, vector<16x256xbf16>, vector<32x256xf32> -> vector<32x256xf32>
    %c0_33 = arith.constant 0 : index
    %c0_34 = arith.constant 0 : index
    %66 = vector.load %arg11[%c0_33, %c0_34] : memref<32x1xf32, #tpu.memory_space<vmem>>, vector<32x1xf32>
    %67 = vector.broadcast %66 : vector<32x1xf32> to vector<32x256xf32>
    %68 = arith.addf %65, %67 : vector<32x256xf32>
    %69 = vector.extract_strided_slice %61 {offsets = [0, 117], sizes = [32, 256], strides = [1, 1]} : vector<32x768xbf16> to vector<32x256xbf16>
    %70 = vector.extract_strided_slice %61 {offsets = [0, 118], sizes = [32, 256], strides = [1, 1]} : vector<32x768xbf16> to vector<32x256xbf16>
    %71 = vector.extract_strided_slice %61 {offsets = [0, 119], sizes = [32, 256], strides = [1, 1]} : vector<32x768xbf16> to vector<32x256xbf16>
    %72 = vector.extract_strided_slice %61 {offsets = [0, 127], sizes = [32, 256], strides = [1, 1]} : vector<32x768xbf16> to vector<32x256xbf16>
    %73 = vector.extract_strided_slice %61 {offsets = [0, 128], sizes = [32, 256], strides = [1, 1]} : vector<32x768xbf16> to vector<32x256xbf16>
    %74 = vector.extract_strided_slice %61 {offsets = [0, 129], sizes = [32, 256], strides = [1, 1]} : vector<32x768xbf16> to vector<32x256xbf16>
    %75 = vector.extract_strided_slice %61 {offsets = [0, 137], sizes = [32, 256], strides = [1, 1]} : vector<32x768xbf16> to vector<32x256xbf16>
    %76 = vector.extract_strided_slice %61 {offsets = [0, 138], sizes = [32, 256], strides = [1, 1]} : vector<32x768xbf16> to vector<32x256xbf16>
    %77 = vector.extract_strided_slice %61 {offsets = [0, 139], sizes = [32, 256], strides = [1, 1]} : vector<32x768xbf16> to vector<32x256xbf16>
    %78 = tpu.concatenate %69, %70, %71, %72, %73, %74, %75, %76, %77 in 0 : vector<32x256xbf16>, vector<32x256xbf16>, vector<32x256xbf16>, vector<32x256xbf16>, vector<32x256xbf16>, vector<32x256xbf16>, vector<32x256xbf16>, vector<32x256xbf16>, vector<32x256xbf16> -> vector<288x256xbf16>
    %c0_35 = arith.constant 0 : index
    %c0_36 = arith.constant 0 : index
    %c0_37 = arith.constant 0 : index
    %79 = vector.load %arg12[%c0_35, %c0_36, %c0_37] : memref<3x32x288xbf16, #tpu.memory_space<vmem>>, vector<1x32x288xbf16>
    %80 = vector.shape_cast %79 : vector<1x32x288xbf16> to vector<32x288xbf16>
    %cst_38 = arith.constant dense<0.000000e+00> : vector<32x256xf32>
    %81 = tpu.matmul %80, %78, %cst_38 {dimension_numbers = #tpu.dot_dimension_numbers<[1], [0], [0], [1], [0, 0, 1, 1], [], []>} : vector<32x288xbf16>, vector<288x256xbf16>, vector<32x256xf32> -> vector<32x256xf32>
    %82 = vector.extract_strided_slice %61 {offsets = [0, 245], sizes = [32, 256], strides = [1, 1]} : vector<32x768xbf16> to vector<32x256xbf16>
    %83 = vector.extract_strided_slice %61 {offsets = [0, 246], sizes = [32, 256], strides = [1, 1]} : vector<32x768xbf16> to vector<32x256xbf16>
    %84 = vector.extract_strided_slice %61 {offsets = [0, 247], sizes = [32, 256], strides = [1, 1]} : vector<32x768xbf16> to vector<32x256xbf16>
    %85 = vector.extract_strided_slice %61 {offsets = [0, 255], sizes = [32, 256], strides = [1, 1]} : vector<32x768xbf16> to vector<32x256xbf16>
    %86 = vector.extract_strided_slice %61 {offsets = [0, 256], sizes = [32, 256], strides = [1, 1]} : vector<32x768xbf16> to vector<32x256xbf16>
    %87 = vector.extract_strided_slice %61 {offsets = [0, 257], sizes = [32, 256], strides = [1, 1]} : vector<32x768xbf16> to vector<32x256xbf16>
    %88 = vector.extract_strided_slice %61 {offsets = [0, 265], sizes = [32, 256], strides = [1, 1]} : vector<32x768xbf16> to vector<32x256xbf16>
    %89 = vector.extract_strided_slice %61 {offsets = [0, 266], sizes = [32, 256], strides = [1, 1]} : vector<32x768xbf16> to vector<32x256xbf16>
    %90 = vector.extract_strided_slice %61 {offsets = [0, 267], sizes = [32, 256], strides = [1, 1]} : vector<32x768xbf16> to vector<32x256xbf16>
    %91 = tpu.concatenate %82, %83, %84, %85, %86, %87, %88, %89, %90 in 0 : vector<32x256xbf16>, vector<32x256xbf16>, vector<32x256xbf16>, vector<32x256xbf16>, vector<32x256xbf16>, vector<32x256xbf16>, vector<32x256xbf16>, vector<32x256xbf16>, vector<32x256xbf16> -> vector<288x256xbf16>
    %c1_39 = arith.constant 1 : index
    %c0_40 = arith.constant 0 : index
    %c0_41 = arith.constant 0 : index
    %92 = vector.load %arg12[%c1_39, %c0_40, %c0_41] : memref<3x32x288xbf16, #tpu.memory_space<vmem>>, vector<1x32x288xbf16>
    %93 = vector.shape_cast %92 : vector<1x32x288xbf16> to vector<32x288xbf16>
    %cst_42 = arith.constant dense<0.000000e+00> : vector<32x256xf32>
    %94 = tpu.matmul %93, %91, %cst_42 {dimension_numbers = #tpu.dot_dimension_numbers<[1], [0], [0], [1], [0, 0, 1, 1], [], []>} : vector<32x288xbf16>, vector<288x256xbf16>, vector<32x256xf32> -> vector<32x256xf32>
    %95 = arith.addf %81, %94 : vector<32x256xf32>
    %96 = vector.extract_strided_slice %61 {offsets = [0, 373], sizes = [32, 256], strides = [1, 1]} : vector<32x768xbf16> to vector<32x256xbf16>
    %97 = vector.extract_strided_slice %61 {offsets = [0, 374], sizes = [32, 256], strides = [1, 1]} : vector<32x768xbf16> to vector<32x256xbf16>
    %98 = vector.extract_strided_slice %61 {offsets = [0, 375], sizes = [32, 256], strides = [1, 1]} : vector<32x768xbf16> to vector<32x256xbf16>
    %99 = vector.extract_strided_slice %61 {offsets = [0, 383], sizes = [32, 256], strides = [1, 1]} : vector<32x768xbf16> to vector<32x256xbf16>
    %100 = vector.extract_strided_slice %61 {offsets = [0, 384], sizes = [32, 256], strides = [1, 1]} : vector<32x768xbf16> to vector<32x256xbf16>
    %101 = vector.extract_strided_slice %61 {offsets = [0, 385], sizes = [32, 256], strides = [1, 1]} : vector<32x768xbf16> to vector<32x256xbf16>
    %102 = vector.extract_strided_slice %61 {offsets = [0, 393], sizes = [32, 256], strides = [1, 1]} : vector<32x768xbf16> to vector<32x256xbf16>
    %103 = vector.extract_strided_slice %61 {offsets = [0, 394], sizes = [32, 256], strides = [1, 1]} : vector<32x768xbf16> to vector<32x256xbf16>
    %104 = vector.extract_strided_slice %61 {offsets = [0, 395], sizes = [32, 256], strides = [1, 1]} : vector<32x768xbf16> to vector<32x256xbf16>
    %105 = tpu.concatenate %96, %97, %98, %99, %100, %101, %102, %103, %104 in 0 : vector<32x256xbf16>, vector<32x256xbf16>, vector<32x256xbf16>, vector<32x256xbf16>, vector<32x256xbf16>, vector<32x256xbf16>, vector<32x256xbf16>, vector<32x256xbf16>, vector<32x256xbf16> -> vector<288x256xbf16>
    %c2_43 = arith.constant 2 : index
    %c0_44 = arith.constant 0 : index
    %c0_45 = arith.constant 0 : index
    %106 = vector.load %arg12[%c2_43, %c0_44, %c0_45] : memref<3x32x288xbf16, #tpu.memory_space<vmem>>, vector<1x32x288xbf16>
    %107 = vector.shape_cast %106 : vector<1x32x288xbf16> to vector<32x288xbf16>
    %cst_46 = arith.constant dense<0.000000e+00> : vector<32x256xf32>
    %108 = tpu.matmul %107, %105, %cst_46 {dimension_numbers = #tpu.dot_dimension_numbers<[1], [0], [0], [1], [0, 0, 1, 1], [], []>} : vector<32x288xbf16>, vector<288x256xbf16>, vector<32x256xf32> -> vector<32x256xf32>
    %109 = arith.addf %95, %108 : vector<32x256xf32>
    %c0_47 = arith.constant 0 : index
    %c0_48 = arith.constant 0 : index
    %110 = vector.load %arg13[%c0_47, %c0_48] : memref<32x1xf32, #tpu.memory_space<vmem>>, vector<32x1xf32>
    %111 = vector.broadcast %110 : vector<32x1xf32> to vector<32x256xf32>
    %112 = arith.addf %109, %111 : vector<32x256xf32>
    %113 = arith.addf %112, %68 : vector<32x256xf32>
    %cst_49 = arith.constant 0.000000e+00 : f32
    %114 = vector.broadcast %cst_49 : f32 to vector<32x256xf32>
    %115 = arith.maximumf %113, %114 : vector<32x256xf32>
    %c0_50 = arith.constant 0 : index
    %c0_51 = arith.constant 0 : index
    %116 = vector.load %arg6[%c0_50, %c0_51] : memref<1x256xbf16, #tpu.memory_space<vmem>>, vector<1x256xbf16>
    %117 = arith.extf %116 : vector<1x256xbf16> to vector<1x256xf32>
    %118 = vector.broadcast %117 : vector<1x256xf32> to vector<32x256xf32>
    %119 = arith.mulf %115, %118 : vector<32x256xf32>
    %c0_52 = arith.constant 0 : index
    %c0_53 = arith.constant 0 : index
    %120 = vector.load %arg14[%c0_52, %c0_53] : memref<8x256xf32, #tpu.memory_space<vmem>>, vector<8x256xf32>
    %cst_54 = arith.constant dense<0.000000e+00> : vector<32x8xf32>
    %121 = tpu.matmul %119, %120, %cst_54 {dimension_numbers = #tpu.dot_dimension_numbers<[1], [1], [0], [0], [0, 0, 1, 0], [], []>} : vector<32x256xf32>, vector<8x256xf32>, vector<32x8xf32> -> vector<32x8xf32>
    %c0_55 = arith.constant 0 : index
    %c0_56 = arith.constant 0 : index
    %c0_57 = arith.constant 0 : index
    %c0_58 = arith.constant 0 : index
    %122 = vector.load %arg15[%c0_55, %c0_56, %c0_57, %c0_58] : memref<1x1x32x8xf32, #tpu.memory_space<vmem>>, vector<1x1x32x8xf32>
    %123 = vector.shape_cast %122 : vector<1x1x32x8xf32> to vector<32x8xf32>
    %124 = vector.shape_cast %121 : vector<32x8xf32> to vector<1x1x32x8xf32>
    tpu.vector_store %arg15[%c0_55, %c0_56, %c0_57, %c0_58], %124 {strides = array<i32>} : memref<1x1x32x8xf32, #tpu.memory_space<vmem>>, vector<1x1x32x8xf32>,
    return
  }
  func.func @transform_0(%arg0: i32, %arg1: i32) -> (i32, i32, i32) {
    %c1_i32 = arith.constant 1 : i32
    %0 = arith.muli %arg1, %c1_i32 : i32
    %c1_i32_0 = arith.constant 1 : i32
    %1 = arith.subi %0, %c1_i32_0 : i32
    %c0_i32 = arith.constant 0 : i32
    %2 = arith.maxsi %1, %c0_i32 : i32
    %c0_i32_1 = arith.constant 0 : i32
    %c0_i32_2 = arith.constant 0 : i32
    return %arg0, %c0_i32_1, %2 : i32, i32, i32
  }
  func.func @transform_1(%arg0: i32, %arg1: i32) -> (i32, i32, i32) {
    %c0_i32 = arith.constant 0 : i32
    %c0_i32_0 = arith.constant 0 : i32
    return %arg0, %c0_i32, %arg1 : i32, i32, i32
  }
  func.func @transform_2(%arg0: i32, %arg1: i32) -> (i32, i32, i32) {
    %c1_i32 = arith.constant 1 : i32
    %0 = arith.muli %arg1, %c1_i32 : i32
    %c1_i32_0 = arith.constant 1 : i32
    %1 = arith.addi %0, %c1_i32_0 : i32
    %c4_i32 = arith.constant 4 : i32
    %2 = arith.minsi %1, %c4_i32 : i32
    %c0_i32 = arith.constant 0 : i32
    %c0_i32_1 = arith.constant 0 : i32
    return %arg0, %c0_i32, %2 : i32, i32, i32
  }
  func.func @transform_3(%arg0: i32, %arg1: i32) -> (i32, i32) {
    %c1_i32 = arith.constant 1 : i32
    %0 = arith.muli %arg1, %c1_i32 : i32
    %c1_i32_0 = arith.constant 1 : i32
    %1 = arith.subi %0, %c1_i32_0 : i32
    %c0_i32 = arith.constant 0 : i32
    %2 = arith.maxsi %1, %c0_i32 : i32
    %c0_i32_1 = arith.constant 0 : i32
    %c0_i32_2 = arith.constant 0 : i32
    return %c0_i32_1, %2 : i32, i32
  }
  func.func @transform_4(%arg0: i32, %arg1: i32) -> (i32, i32) {
    %c0_i32 = arith.constant 0 : i32
    %c0_i32_0 = arith.constant 0 : i32
    return %c0_i32, %arg1 : i32, i32
  }
  func.func @transform_5(%arg0: i32, %arg1: i32) -> (i32, i32) {
    %c1_i32 = arith.constant 1 : i32
    %0 = arith.muli %arg1, %c1_i32 : i32
    %c1_i32_0 = arith.constant 1 : i32
    %1 = arith.addi %0, %c1_i32_0 : i32
    %c4_i32 = arith.constant 4 : i32
    %2 = arith.minsi %1, %c4_i32 : i32
    %c0_i32 = arith.constant 0 : i32
    %c0_i32_1 = arith.constant 0 : i32
    return %c0_i32, %2 : i32, i32
  }
  func.func @transform_6(%arg0: i32, %arg1: i32) -> (i32, i32, i32) {
    %c0_i32 = arith.constant 0 : i32
    %c0_i32_0 = arith.constant 0 : i32
    %c0_i32_1 = arith.constant 0 : i32
    %c0_i32_2 = arith.constant 0 : i32
    return %c0_i32, %c0_i32_0, %c0_i32_1 : i32, i32, i32
  }
  func.func @transform_7(%arg0: i32, %arg1: i32) -> (i32, i32) {
    %c0_i32 = arith.constant 0 : i32
    %c0_i32_0 = arith.constant 0 : i32
    %c0_i32_1 = arith.constant 0 : i32
    return %c0_i32, %c0_i32_0 : i32, i32
  }
  func.func @transform_8(%arg0: i32, %arg1: i32) -> (i32, i32) {
    %c0_i32 = arith.constant 0 : i32
    %c0_i32_0 = arith.constant 0 : i32
    %c0_i32_1 = arith.constant 0 : i32
    return %c0_i32, %c0_i32_0 : i32, i32
  }
  func.func @transform_9(%arg0: i32, %arg1: i32) -> (i32, i32) {
    %c0_i32 = arith.constant 0 : i32
    %c0_i32_0 = arith.constant 0 : i32
    %c0_i32_1 = arith.constant 0 : i32
    return %c0_i32, %c0_i32_0 : i32, i32
  }
  func.func @transform_10(%arg0: i32, %arg1: i32) -> (i32, i32, i32) {
    %c0_i32 = arith.constant 0 : i32
    %c0_i32_0 = arith.constant 0 : i32
    %c0_i32_1 = arith.constant 0 : i32
    %c0_i32_2 = arith.constant 0 : i32
    return %c0_i32, %c0_i32_0, %c0_i32_1 : i32, i32, i32
  }
  func.func @transform_11(%arg0: i32, %arg1: i32) -> (i32, i32) {
    %c0_i32 = arith.constant 0 : i32
    %c0_i32_0 = arith.constant 0 : i32
    %c0_i32_1 = arith.constant 0 : i32
    return %c0_i32, %c0_i32_0 : i32, i32
  }
  func.func @transform_12(%arg0: i32, %arg1: i32) -> (i32, i32) {
    %c0_i32 = arith.constant 0 : i32
    %c0_i32_0 = arith.constant 0 : i32
    %c0_i32_1 = arith.constant 0 : i32
    return %c0_i32, %c0_i32_0 : i32, i32
  }
  func.func @transform_13(%arg0: i32, %arg1: i32) -> (i32, i32, i32, i32) {
    %c0_i32 = arith.constant 0 : i32
    %c0_i32_0 = arith.constant 0 : i32
    %c0_i32_1 = arith.constant 0 : i32
    return %arg0, %arg1, %c0_i32, %c0_i32_0 : i32, i32, i32, i32
  }
}

module attributes {stable_mosaic.version = 11 : i64} {
  func.func @kernel(%arg0: memref<2x256xf32, #tpu.memory_space<vmem>>, %arg1: memref<2x25xf32, #tpu.memory_space<vmem>>, %arg2: memref<256x32xf32, #tpu.memory_space<vmem>>, %arg3: memref<1x32xf32, #tpu.memory_space<vmem>>, %arg4: memref<32x16xf32, #tpu.memory_space<vmem>>, %arg5: memref<1x16xf32, #tpu.memory_space<vmem>>, %arg6: memref<25x16xf32, #tpu.memory_space<vmem>>, %arg7: memref<1x16xf32, #tpu.memory_space<vmem>>, %arg8: memref<16x16xf32, #tpu.memory_space<vmem>>, %arg9: memref<16x16xf32, #tpu.memory_space<vmem>>, %arg10: memref<1x16xf32, #tpu.memory_space<vmem>>, %arg11: memref<16x1xf32, #tpu.memory_space<vmem>>, %arg12: memref<1x1xf32, #tpu.memory_space<vmem>>, %arg13: memref<2x1xf32, #tpu.memory_space<vmem>>) attributes {dimension_semantics = [], scalar_prefetch = 0 : i64, scratch_operands = 0 : i64, tpu.core_type = #tpu.core_type<tc>} {
    %c0 = arith.constant 0 : index
    %c0_0 = arith.constant 0 : index
    %0 = vector.load %arg0[%c0, %c0_0] : memref<2x256xf32, #tpu.memory_space<vmem>>, vector<2x256xf32>
    %c0_1 = arith.constant 0 : index
    %c0_2 = arith.constant 0 : index
    %1 = vector.load %arg2[%c0_1, %c0_2] : memref<256x32xf32, #tpu.memory_space<vmem>>, vector<256x32xf32>
    %cst = arith.constant dense<0.000000e+00> : vector<2x32xf32>
    %2 = tpu.matmul %0, %1, %cst {dimension_numbers = #tpu.dot_dimension_numbers<[1], [0], [0], [1], [0, 0, 1, 1], [], []>} : vector<2x256xf32>, vector<256x32xf32>, vector<2x32xf32> -> vector<2x32xf32>
    %cst_3 = arith.constant 1.562500e-02 : f32
    %3 = vector.broadcast %cst_3 : f32 to vector<2x32xf32>
    %4 = arith.mulf %2, %3 : vector<2x32xf32>
    %c0_4 = arith.constant 0 : index
    %c0_5 = arith.constant 0 : index
    %5 = vector.load %arg3[%c0_4, %c0_5] : memref<1x32xf32, #tpu.memory_space<vmem>>, vector<1x32xf32>
    %6 = vector.broadcast %5 : vector<1x32xf32> to vector<2x32xf32>
    %7 = arith.addf %4, %6 : vector<2x32xf32>
    %c0_6 = arith.constant 0 : index
    %c0_7 = arith.constant 0 : index
    %8 = vector.load %arg4[%c0_6, %c0_7] : memref<32x16xf32, #tpu.memory_space<vmem>>, vector<32x16xf32>
    %cst_8 = arith.constant dense<0.000000e+00> : vector<2x16xf32>
    %9 = tpu.matmul %7, %8, %cst_8 {dimension_numbers = #tpu.dot_dimension_numbers<[1], [0], [0], [1], [0, 0, 1, 1], [], []>} : vector<2x32xf32>, vector<32x16xf32>, vector<2x16xf32> -> vector<2x16xf32>
    %c0_9 = arith.constant 0 : index
    %c0_10 = arith.constant 0 : index
    %10 = vector.load %arg5[%c0_9, %c0_10] : memref<1x16xf32, #tpu.memory_space<vmem>>, vector<1x16xf32>
    %11 = vector.broadcast %10 : vector<1x16xf32> to vector<2x16xf32>
    %12 = arith.addf %9, %11 : vector<2x16xf32>
    %cst_11 = arith.constant 0.000000e+00 : f32
    %13 = vector.broadcast %cst_11 : f32 to vector<2x16xf32>
    %14 = arith.maximumf %12, %13 : vector<2x16xf32>
    %c0_12 = arith.constant 0 : index
    %c0_13 = arith.constant 0 : index
    %15 = vector.load %arg1[%c0_12, %c0_13] : memref<2x25xf32, #tpu.memory_space<vmem>>, vector<2x25xf32>
    %c0_14 = arith.constant 0 : index
    %c0_15 = arith.constant 0 : index
    %16 = vector.load %arg6[%c0_14, %c0_15] : memref<25x16xf32, #tpu.memory_space<vmem>>, vector<25x16xf32>
    %cst_16 = arith.constant dense<0.000000e+00> : vector<2x16xf32>
    %17 = tpu.matmul %15, %16, %cst_16 {dimension_numbers = #tpu.dot_dimension_numbers<[1], [0], [0], [1], [0, 0, 1, 1], [], []>} : vector<2x25xf32>, vector<25x16xf32>, vector<2x16xf32> -> vector<2x16xf32>
    %c0_17 = arith.constant 0 : index
    %c0_18 = arith.constant 0 : index
    %18 = vector.load %arg7[%c0_17, %c0_18] : memref<1x16xf32, #tpu.memory_space<vmem>>, vector<1x16xf32>
    %19 = vector.broadcast %18 : vector<1x16xf32> to vector<2x16xf32>
    %20 = arith.addf %17, %19 : vector<2x16xf32>
    %cst_19 = arith.constant 0.000000e+00 : f32
    %21 = vector.broadcast %cst_19 : f32 to vector<2x16xf32>
    %22 = arith.maximumf %20, %21 : vector<2x16xf32>
    %c0_20 = arith.constant 0 : index
    %c0_21 = arith.constant 0 : index
    %23 = vector.load %arg8[%c0_20, %c0_21] : memref<16x16xf32, #tpu.memory_space<vmem>>, vector<16x16xf32>
    %cst_22 = arith.constant dense<0.000000e+00> : vector<2x16xf32>
    %24 = tpu.matmul %14, %23, %cst_22 {dimension_numbers = #tpu.dot_dimension_numbers<[1], [0], [0], [1], [0, 0, 1, 1], [], []>} : vector<2x16xf32>, vector<16x16xf32>, vector<2x16xf32> -> vector<2x16xf32>
    %c0_23 = arith.constant 0 : index
    %c0_24 = arith.constant 0 : index
    %25 = vector.load %arg9[%c0_23, %c0_24] : memref<16x16xf32, #tpu.memory_space<vmem>>, vector<16x16xf32>
    %cst_25 = arith.constant dense<0.000000e+00> : vector<2x16xf32>
    %26 = tpu.matmul %22, %25, %cst_25 {dimension_numbers = #tpu.dot_dimension_numbers<[1], [0], [0], [1], [0, 0, 1, 1], [], []>} : vector<2x16xf32>, vector<16x16xf32>, vector<2x16xf32> -> vector<2x16xf32>
    %27 = arith.addf %24, %26 : vector<2x16xf32>
    %c0_26 = arith.constant 0 : index
    %c0_27 = arith.constant 0 : index
    %28 = vector.load %arg10[%c0_26, %c0_27] : memref<1x16xf32, #tpu.memory_space<vmem>>, vector<1x16xf32>
    %29 = vector.broadcast %28 : vector<1x16xf32> to vector<2x16xf32>
    %30 = arith.addf %27, %29 : vector<2x16xf32>
    %cst_28 = arith.constant 0.000000e+00 : f32
    %31 = vector.broadcast %cst_28 : f32 to vector<2x16xf32>
    %32 = arith.maximumf %30, %31 : vector<2x16xf32>
    %c0_29 = arith.constant 0 : index
    %c0_30 = arith.constant 0 : index
    %33 = vector.load %arg11[%c0_29, %c0_30] : memref<16x1xf32, #tpu.memory_space<vmem>>, vector<16x1xf32>
    %cst_31 = arith.constant dense<0.000000e+00> : vector<2x1xf32>
    %34 = tpu.matmul %32, %33, %cst_31 {dimension_numbers = #tpu.dot_dimension_numbers<[1], [0], [0], [1], [0, 0, 1, 1], [], []>} : vector<2x16xf32>, vector<16x1xf32>, vector<2x1xf32> -> vector<2x1xf32>
    %c0_32 = arith.constant 0 : index
    %c0_33 = arith.constant 0 : index
    %35 = vector.load %arg12[%c0_32, %c0_33] : memref<1x1xf32, #tpu.memory_space<vmem>>, vector<1x1xf32>
    %36 = vector.broadcast %35 : vector<1x1xf32> to vector<2x1xf32>
    %37 = arith.addf %34, %36 : vector<2x1xf32>
    %c0_34 = arith.constant 0 : index
    %c0_35 = arith.constant 0 : index
    %38 = vector.load %arg13[%c0_34, %c0_35] : memref<2x1xf32, #tpu.memory_space<vmem>>, vector<2x1xf32>
    tpu.vector_store %arg13[%c0_34, %c0_35], %37 {strides = array<i32>} : memref<2x1xf32, #tpu.memory_space<vmem>>, vector<2x1xf32>,
    return
  }
}

</mosaic_0001>

<llo_original>
// kernel: fwd.4
$region0: #{fwd.4}
  #allocation0 [shape = 'u32[]', space=smem, size = 0x4, offset = 0x4, fixed_abs, tag = 'smem constant byte address 0x4 - core index']
  #allocation1 [shape = 'u32[144,128]{1,0:T(1,128)}', space=vmem, size = 0x12000, scoped, tag = 'internal scratch']
  %s0 = inlined_call_operand.vmem [shape: bf16[2,1,1280], index: 0, kind: input, shape index: {}, may-alias: {0,1,2}]
  %s1 = inlined_call_operand.vmem [shape: bf16[2,1,1280], index: 1, kind: input, shape index: {}, may-alias: {0,1,2}]
  %s2 = inlined_call_operand.vmem [shape: bf16[2,1,1280], index: 2, kind: input, shape index: {}, may-alias: {0,1,2}]
  %s3 = inlined_call_operand.vmem [shape: bf16[1,1280], index: 3, kind: input, shape index: {}]
  %s4 = inlined_call_operand.vmem [shape: bf16[3,8,9], index: 4, kind: input, shape index: {}]
  %s5 = inlined_call_operand.vmem [shape: f32[8,1], index: 5, kind: input, shape index: {}]
  %s6 = inlined_call_operand.vmem [shape: bf16[2,8,1280], index: 6, kind: output, shape index: {}]
  %s7 = sld [smem:[#allocation0]]
  $region57: #{fwd.4} parent=0
    _
  %s9 = ssub.s32 1, %s7
  %s10 = scalar_select 0, %s9, %s7
  loop: start=0, step=1, limit=12
  $region2: #{fwd.4} parent=0 // loop_pre_header
    _
  $region3: #{fwd.4} parent=0 // loop_header
    %s12 = sphi 0, %s16
    %p13 = scmp.ge.s32.totalorder %s12, 12
    %s19 = sphi 0, %s31
    %s20 = sphi 0, %s27
    %s21 = sphi 0, %s19
    %s22 = sphi 0, %s20
    %s23 = sphi 0, %s21
    %s24 = sphi 0, %s22
    %s42 = sphi 0, %s44
    %s45 = sphi 0, %s42
    %s46 = sphi 0, %s45
    %s62 = sphi 0, %s46
    %s70 = sphi 0, %s72
    %s73 = sphi 0, %s70
    %s74 = sphi 0, %s73
    %s90 = sphi 0, %s74
    %s104 = sphi 0, %s106
    %s107 = sphi 0, %s104
    %s108 = sphi 0, %s107
    %s124 = sphi 0, %s108
    %s130 = sphi 0, %s132
    %s133 = sphi 0, %s130
    %s134 = sphi 0, %s133
    %s150 = sphi 0, %s134
    %s154 = sphi 0, %s154
    %s156 = sphi 0, %s154
    %s157 = sphi 0, %s156
    %s171 = sphi 0, %s157
    %s175 = sphi 0, %s175
    %s177 = sphi 0, %s175
    %s178 = sphi 0, %s177
    %s192 = sphi 0, %s178
    %s200 = sphi 0, %s202
    %s203 = sphi 0, %s200
    %s204 = sphi 0, %s203
    %s220 = sphi 0, %s204
  $region4: #{fwd.4} parent=0 // loop_header_branch
    %15 = sbr.rel (%p13) target = $region8
  $region5: #{fwd.4} parent=0 // loop_body
    %s17 = ssub.s32 %s12, 1
    %s18 = ssub.s32 %s12, 2
    %s25 = sadd.s32 1, %s20
    %p26 = scmp.ge.s32.totalorder %s25, 5
    %s27 = scalar_select %p26, 0, %s25
    %s28 = sadd.s32 1, %s19
    %s29 = scalar_select %p26, %s28, %s19
    %p30 = scmp.ge.s32.totalorder %s29, 2
    %s31 = scalar_select %p30, 0, %s29
    %s32 = ssub.s32 %s20, 1
    %p33 = scmp.gt.s32.totalorder %s32, 0
    %s34 = scalar_select %p33, %s32, 0
    %s35 = ssub.s32 %s27, 1
    %p36 = scmp.gt.s32.totalorder %s35, 0
    %s37 = scalar_select %p36, %s35, 0
    %s38 = ssub.s32 %s19, %s31
    %s39 = ssub.s32 %s34, %s37
    %s40 = sor.u32 %s38, %s39
    %p41 = scmp.eq.s32.totalorder %s40, 0
    %s43 = sadd.s32 %s42, 1
    %s44 = scalar_select %p41, %s42, %s43
    %p47 = pneg %p41
    %p48 = scmp.eq.s32.totalorder %s12, 9
    %p49 = por %p47, %p48
    %p50 = scmp.ne.s32.totalorder %s42, %s45
    %p51 = scmp.eq.s32.totalorder %s12, 0
    %p52 = por %p50, %p51
    %p53 = scmp.ne.s32.totalorder %s42, %s45
    %p54 = scmp.eq.s32.totalorder %s17, 9
    %p55 = por %p53, %p54
    %p56 = scmp.ne.s32.totalorder %s45, %s46
    %p57 = scmp.eq.s32.totalorder %s17, 0
    %p58 = por %p56, %p57
    %p59 = scmp.ne.s32.totalorder %s45, %s46
    %p60 = scmp.eq.s32.totalorder %s18, 9
    %p61 = por %p59, %p60
    %p63 = scmp.ne.s32.totalorder %s46, %s62
    %p64 = scmp.eq.s32.totalorder %s18, 0
    %p65 = por %p63, %p64
    %s66 = ssub.s32 %s19, %s31
    %s67 = ssub.s32 %s20, %s27
    %s68 = sor.u32 %s66, %s67
    %p69 = scmp.eq.s32.totalorder %s68, 0
    %s71 = sadd.s32 %s70, 1
    %s72 = scalar_select %p69, %s70, %s71
    %p75 = pneg %p69
    %p76 = scmp.eq.s32.totalorder %s12, 9
    %p77 = por %p75, %p76
    %p78 = scmp.ne.s32.totalorder %s70, %s73
    %p79 = scmp.eq.s32.totalorder %s12, 0
    %p80 = por %p78, %p79
    %p81 = scmp.ne.s32.totalorder %s70, %s73
    %p82 = scmp.eq.s32.totalorder %s17, 9
    %p83 = por %p81, %p82
    %p84 = scmp.ne.s32.totalorder %s73, %s74
    %p85 = scmp.eq.s32.totalorder %s17, 0
    %p86 = por %p84, %p85
    %p87 = scmp.ne.s32.totalorder %s73, %s74
    %p88 = scmp.eq.s32.totalorder %s18, 9
    %p89 = por %p87, %p88
    %p91 = scmp.ne.s32.totalorder %s74, %s90
    %p92 = scmp.eq.s32.totalorder %s18, 0
    %p93 = por %p91, %p92
    %s94 = sadd.s32 %s20, 1
    %p95 = scmp.lt.s32.totalorder %s94, 4
    %s96 = scalar_select %p95, %s94, 4
    %s97 = sadd.s32 %s27, 1
    %p98 = scmp.lt.s32.totalorder %s97, 4
    %s99 = scalar_select %p98, %s97, 4
    %s100 = ssub.s32 %s19, %s31
    %s101 = ssub.s32 %s96, %s99
    %s102 = sor.u32 %s100, %s101
    %p103 = scmp.eq.s32.totalorder %s102, 0
    %s105 = sadd.s32 %s104, 1
    %s106 = scalar_select %p103, %s104, %s105
    %p109 = pneg %p103
    %p110 = scmp.eq.s32.totalorder %s12, 9
    %p111 = por %p109, %p110
    %p112 = scmp.ne.s32.totalorder %s104, %s107
    %p113 = scmp.eq.s32.totalorder %s12, 0
    %p114 = por %p112, %p113
    %p115 = scmp.ne.s32.totalorder %s104, %s107
    %p116 = scmp.eq.s32.totalorder %s17, 9
    %p117 = por %p115, %p116
    %p118 = scmp.ne.s32.totalorder %s107, %s108
    %p119 = scmp.eq.s32.totalorder %s17, 0
    %p120 = por %p118, %p119
    %p121 = scmp.ne.s32.totalorder %s107, %s108
    %p122 = scmp.eq.s32.totalorder %s18, 9
    %p123 = por %p121, %p122
    %p125 = scmp.ne.s32.totalorder %s108, %s124
    %p126 = scmp.eq.s32.totalorder %s18, 0
    %p127 = por %p125, %p126
    %s128 = ssub.s32 %s20, %s27
    %p129 = scmp.eq.s32.totalorder %s128, 0
    %s131 = sadd.s32 %s130, 1
    %s132 = scalar_select %p129, %s130, %s131
    %p135 = pneg %p129
    %p136 = scmp.eq.s32.totalorder %s12, 9
    %p137 = por %p135, %p136
    %p138 = scmp.ne.s32.totalorder %s130, %s133
    %p139 = scmp.eq.s32.totalorder %s12, 0
    %p140 = por %p138, %p139
    %p141 = scmp.ne.s32.totalorder %s130, %s133
    %p142 = scmp.eq.s32.totalorder %s17, 9
    %p143 = por %p141, %p142
    %p144 = scmp.ne.s32.totalorder %s133, %s134
    %p145 = scmp.eq.s32.totalorder %s17, 0
    %p146 = por %p144, %p145
    %p147 = scmp.ne.s32.totalorder %s133, %s134
    %p148 = scmp.eq.s32.totalorder %s18, 9
    %p149 = por %p147, %p148
    %p151 = scmp.ne.s32.totalorder %s134, %s150
    %p152 = scmp.eq.s32.totalorder %s18, 0
    %p153 = por %p151, %p152
    %s155 = sadd.s32 %s154, 1
    %p158 = scmp.eq.s32.totalorder %s12, 9
    %p159 = scmp.ne.s32.totalorder %s154, %s156
    %p160 = scmp.eq.s32.totalorder %s12, 0
    %p161 = por %p159, %p160
    %p162 = scmp.ne.s32.totalorder %s154, %s156
    %p163 = scmp.eq.s32.totalorder %s17, 9
    %p164 = por %p162, %p163
    %p165 = scmp.ne.s32.totalorder %s156, %s157
    %p166 = scmp.eq.s32.totalorder %s17, 0
    %p167 = por %p165, %p166
    %p168 = scmp.ne.s32.totalorder %s156, %s157
    %p169 = scmp.eq.s32.totalorder %s18, 9
    %p170 = por %p168, %p169
    %p172 = scmp.ne.s32.totalorder %s157, %s171
    %p173 = scmp.eq.s32.totalorder %s18, 0
    %p174 = por %p172, %p173
    %s176 = sadd.s32 %s175, 1
    %p179 = scmp.eq.s32.totalorder %s12, 9
    %p180 = scmp.ne.s32.totalorder %s175, %s177
    %p181 = scmp.eq.s32.totalorder %s12, 0
    %p182 = por %p180, %p181
    %p183 = scmp.ne.s32.totalorder %s175, %s177
    %p184 = scmp.eq.s32.totalorder %s17, 9
    %p185 = por %p183, %p184
    %p186 = scmp.ne.s32.totalorder %s177, %s178
    %p187 = scmp.eq.s32.totalorder %s17, 0
    %p188 = por %p186, %p187
    %p189 = scmp.ne.s32.totalorder %s177, %s178
    %p190 = scmp.eq.s32.totalorder %s18, 9
    %p191 = por %p189, %p190
    %p193 = scmp.ne.s32.totalorder %s178, %s192
    %p194 = scmp.eq.s32.totalorder %s18, 0
    %p195 = por %p193, %p194
    %s196 = ssub.s32 %s19, %s31
    %s197 = ssub.s32 %s20, %s27
    %s198 = sor.u32 %s196, %s197
    %p199 = scmp.eq.s32.totalorder %s198, 0
    %s201 = sadd.s32 %s200, 1
    %s202 = scalar_select %p199, %s200, %s201
    %p205 = pneg %p199
    %p206 = scmp.eq.s32.totalorder %s12, 9
    %p207 = por %p205, %p206
    %p208 = scmp.ne.s32.totalorder %s200, %s203
    %p209 = scmp.eq.s32.totalorder %s12, 0
    %p210 = por %p208, %p209
    %p211 = scmp.ne.s32.totalorder %s200, %s203
    %p212 = scmp.eq.s32.totalorder %s17, 9
    %p213 = por %p211, %p212
    %p214 = scmp.ne.s32.totalorder %s203, %s204
    %p215 = scmp.eq.s32.totalorder %s17, 0
    %p216 = por %p214, %p215
    %p217 = scmp.ne.s32.totalorder %s203, %s204
    %p218 = scmp.eq.s32.totalorder %s18, 9
    %p219 = por %p217, %p218
    %p221 = scmp.ne.s32.totalorder %s204, %s220
    %p222 = scmp.eq.s32.totalorder %s18, 0
    %p223 = por %p221, %p222
    %p224 = scmp.le.s32.totalorder 1, %s12
    %p225 = scmp.lt.s32.totalorder %s12, 11
    %p226 = pnand %p224, %p225
    %p227 = pneg %p226
    // Predicated region
    $region9: #{fwd.4} parent=5 // pred_check
      _
    $region10: #{fwd.4} parent=5 // pred_check_branch
      %229 = sbr.rel (%p226) target = $region12
    $region11: #{fwd.4} parent=5 // pred_region
      %s230 = ssub.s32 %s12, 1
      // Predicated region
      $region13: #{fwd.4} parent=11 // pred_check
        %p231 = pneg %p167
      $region14: #{fwd.4} parent=11 // pred_check_branch
        %233 = sbr.rel (%p231) target = $region16
      $region15: #{fwd.4} parent=11 // pred_region
        _
      $region16: #{fwd.4} parent=11 // pred_fallthru
        _
      // Predicated region
      $region17: #{fwd.4} parent=11 // pred_check
        %p234 = pneg %p188
      $region18: #{fwd.4} parent=11 // pred_check_branch
        %236 = sbr.rel (%p234) target = $region20
      $region19: #{fwd.4} parent=11 // pred_region
        _
      $region20: #{fwd.4} parent=11 // pred_fallthru
        _
    $region12: #{fwd.4} parent=5 // pred_fallthru
      _
    %p237 = scmp.lt.s32.totalorder %s12, 10
    // Predicated region
    $region21: #{fwd.4} parent=5 // pred_check
      %p238 = pneg %p237
    $region22: #{fwd.4} parent=5 // pred_check_branch
      %240 = sbr.rel (%p238) target = $region24
    $region23: #{fwd.4} parent=5 // pred_region
      // Predicated region
      $region25: #{fwd.4} parent=23 // pred_check
        %p241 = pneg %p52
      $region26: #{fwd.4} parent=23 // pred_check_branch
        %243 = sbr.rel (%p241) target = $region28
      $region27: #{fwd.4} parent=23 // pred_region
        %s244 = ssub.s32 %s20, 1
        %p245 = scmp.gt.s32.totalorder %s244, 0
        %s246 = scalar_select %p245, %s244, 0
        %s247 = smul.u32 2, %s246
        %p248 = scmp.lt.s32.totalorder %s19, 1
        %s249 = scalar_select %p248, %s19, 1
        %p250 = scmp.lt.s32.totalorder %s247, 9
        %s251 = scalar_select %p250, %s247, 9
        %s252 = smul.addr %s249, 10
        %s253 = sadd.s32 %s251, %s252
        %s254 = scalar_lea.vmem %s0, %s253
        %s255 = ssub.s32 %s20, 1
        %p256 = scmp.gt.s32.totalorder %s255, 0
        %s257 = scalar_select %p256, %s255, 0
        %s258 = smul.u32 2, %s257
      $region28: #{fwd.4} parent=23 // pred_fallthru
        _
      // Predicated region
      $region29: #{fwd.4} parent=23 // pred_check
        %p259 = pneg %p80
      $region30: #{fwd.4} parent=23 // pred_check_branch
        %261 = sbr.rel (%p259) target = $region32
      $region31: #{fwd.4} parent=23 // pred_region
        %s262 = smul.u32 2, %s20
        %p263 = scmp.lt.s32.totalorder %s19, 1
        %s264 = scalar_select %p263, %s19, 1
        %p265 = scmp.lt.s32.totalorder %s262, 9
        %s266 = scalar_select %p265, %s262, 9
        %s267 = smul.addr %s264, 10
        %s268 = sadd.s32 %s266, %s267
        %s269 = scalar_lea.vmem %s1, %s268
        %s270 = smul.u32 2, %s20
      $region32: #{fwd.4} parent=23 // pred_fallthru
        _
      // Predicated region
      $region33: #{fwd.4} parent=23 // pred_check
        %p271 = pneg %p114
      $region34: #{fwd.4} parent=23 // pred_check_branch
        %273 = sbr.rel (%p271) target = $region36
      $region35: #{fwd.4} parent=23 // pred_region
        %s274 = sadd.s32 %s20, 1
        %p275 = scmp.lt.s32.totalorder %s274, 4
        %s276 = scalar_select %p275, %s274, 4
        %s277 = smul.u32 2, %s276
        %p278 = scmp.lt.s32.totalorder %s19, 1
        %s279 = scalar_select %p278, %s19, 1
        %p280 = scmp.lt.s32.totalorder %s277, 9
        %s281 = scalar_select %p280, %s277, 9
        %s282 = smul.addr %s279, 10
        %s283 = sadd.s32 %s281, %s282
        %s284 = scalar_lea.vmem %s2, %s283
        %s285 = sadd.s32 %s20, 1
        %p286 = scmp.lt.s32.totalorder %s285, 4
        %s287 = scalar_select %p286, %s285, 4
        %s288 = smul.u32 2, %s287
      $region36: #{fwd.4} parent=23 // pred_fallthru
        _
      // Predicated region
      $region37: #{fwd.4} parent=23 // pred_check
        %p289 = pneg %p140
      $region38: #{fwd.4} parent=23 // pred_check_branch
        %291 = sbr.rel (%p289) target = $region40
      $region39: #{fwd.4} parent=23 // pred_region
        %s292 = smul.u32 2, %s20
        %p293 = scmp.lt.s32.totalorder %s292, 9
        %s294 = scalar_select %p293, %s292, 9
        %s295 = scalar_lea.vmem %s3, %s294
        %s296 = smul.u32 2, %s20
      $region40: #{fwd.4} parent=23 // pred_fallthru
        _
    $region24: #{fwd.4} parent=5 // pred_fallthru
      _
    %p297 = scmp.le.s32.totalorder 1, %s12
    %p298 = scmp.lt.s32.totalorder %s12, 11
    %p299 = pnand %p297, %p298
    %p300 = pneg %p299
    // Predicated region
    $region41: #{fwd.4} parent=5 // pred_check
      _
    $region42: #{fwd.4} parent=5 // pred_check_branch
      %302 = sbr.rel (%p299) target = $region44
    $region43: #{fwd.4} parent=5 // pred_region
      %s303 = ssub.s32 %s12, 1
      %s304 = ssub.s32 %s22, 1
      %p305 = scmp.gt.s32.totalorder %s304, 0
      %s306 = scalar_select %p305, %s304, 0
      %s307 = smul.u32 2, %s306
      %p308 = scmp.lt.s32.totalorder %s21, 1
      %s309 = scalar_select %p308, %s21, 1
      %p310 = scmp.lt.s32.totalorder %s307, 9
      %s311 = scalar_select %p310, %s307, 9
      %s312 = smul.addr %s309, 10
      %s313 = sadd.s32 %s311, %s312
      %s314 = scalar_lea.vmem %s0, %s313
      %p315 = pneg %p58
      %p316 = pneg %p55
      %s317 = smul.u32 2, %s22
      %p318 = scmp.lt.s32.totalorder %s21, 1
      %s319 = scalar_select %p318, %s21, 1
      %p320 = scmp.lt.s32.totalorder %s317, 9
      %s321 = scalar_select %p320, %s317, 9
      %s322 = smul.addr %s319, 10
      %s323 = sadd.s32 %s321, %s322
      %s324 = scalar_lea.vmem %s1, %s323
      %p325 = pneg %p86
      %p326 = pneg %p83
      %s327 = sadd.s32 %s22, 1
      %p328 = scmp.lt.s32.totalorder %s327, 4
      %s329 = scalar_select %p328, %s327, 4
      %s330 = smul.u32 2, %s329
      %p331 = scmp.lt.s32.totalorder %s21, 1
      %s332 = scalar_select %p331, %s21, 1
      %p333 = scmp.lt.s32.totalorder %s330, 9
      %s334 = scalar_select %p333, %s330, 9
      %s335 = smul.addr %s332, 10
      %s336 = sadd.s32 %s334, %s335
      %s337 = scalar_lea.vmem %s2, %s336
      %p338 = pneg %p120
      %p339 = pneg %p117
      %s340 = smul.u32 2, %s22
      %p341 = scmp.lt.s32.totalorder %s340, 9
      %s342 = scalar_select %p341, %s340, 9
      %s343 = scalar_lea.vmem %s3, %s342
      %p344 = pneg %p146
      %p345 = pneg %p143
      %p346 = pneg %p167
      %p347 = pneg %p164
      %p348 = pneg %p188
      %p349 = pneg %p185
      %p350 = pneg %p216
      %p351 = pneg %p213
      %s352 = smul.u32 2, %s22
      %p353 = scmp.lt.s32.totalorder %s21, 1
      %s354 = scalar_select %p353, %s21, 1
      %p355 = scmp.lt.s32.totalorder %s352, 9
      %s356 = scalar_select %p355, %s352, 9
      %s357 = smul.addr %s354, 10
      %s358 = sadd.s32 %s356, %s357
      %s359 = smul.addr %s358, 4
      %s360 = scalar_lea.vmem %s6, %s359
      %s361 = ssub.s32 %s22, 1
      %p362 = scmp.gt.s32.totalorder %s361, 0
      %s363 = scalar_select %p362, %s361, 0
      %s364 = smul.u32 2, %s363
      %p365 = scmp.lt.s32.totalorder %s21, 1
      %s366 = scalar_select %p365, %s21, 1
      %p367 = scmp.lt.s32.totalorder %s364, 9
      %s368 = scalar_select %p367, %s364, 9
      %s369 = smul.addr %s366, 10
      %s370 = sadd.s32 %s368, %s369
      %s371 = scalar_lea.vmem %s0, %s370
      %s372 = ssub.s32 %s22, 1
      %p373 = scmp.gt.s32.totalorder %s372, 0
      %s374 = scalar_select %p373, %s372, 0
      %s375 = smul.u32 2, %s374
      %s376 = smul.u32 2, %s22
      %p377 = scmp.lt.s32.totalorder %s21, 1
      %s378 = scalar_select %p377, %s21, 1
      %p379 = scmp.lt.s32.totalorder %s376, 9
      %s380 = scalar_select %p379, %s376, 9
      %s381 = smul.addr %s378, 10
      %s382 = sadd.s32 %s380, %s381
      %s383 = scalar_lea.vmem %s1, %s382
      %s384 = smul.u32 2, %s22
      %s385 = sadd.s32 %s22, 1
      %p386 = scmp.lt.s32.totalorder %s385, 4
      %s387 = scalar_select %p386, %s385, 4
      %s388 = smul.u32 2, %s387
      %p389 = scmp.lt.s32.totalorder %s21, 1
      %s390 = scalar_select %p389, %s21, 1
      %p391 = scmp.lt.s32.totalorder %s388, 9
      %s392 = scalar_select %p391, %s388, 9
      %s393 = smul.addr %s390, 10
      %s394 = sadd.s32 %s392, %s393
      %s395 = scalar_lea.vmem %s2, %s394
      %s396 = sadd.s32 %s22, 1
      %p397 = scmp.lt.s32.totalorder %s396, 4
      %s398 = scalar_select %p397, %s396, 4
      %s399 = smul.u32 2, %s398
      %s400 = smul.u32 2, %s22
      %p401 = scmp.lt.s32.totalorder %s400, 9
      %s402 = scalar_select %p401, %s400, 9
      %s403 = scalar_lea.vmem %s3, %s402
      %s404 = smul.u32 2, %s22
      %s405 = smul.u32 2, %s22
      %p406 = scmp.lt.s32.totalorder %s21, 1
      %s407 = scalar_select %p406, %s21, 1
      %p408 = scmp.lt.s32.totalorder %s405, 9
      %s409 = scalar_select %p408, %s405, 9
      %s410 = smul.addr %s407, 10
      %s411 = sadd.s32 %s409, %s410
      %s412 = smul.addr %s411, 4
      %s413 = scalar_lea.vmem %s6, %s412
      %s414 = smul.u32 2, %s22
      %v416 = vld [vmem:[%s371] sm:$0x3]
      %v417 = vld [vmem:[%s383] sm:$0x3]
      %v418 = vld [vmem:[%s395] sm:$0x3]
      %v421 = vunpack.c.l.s4 1966171168
      %v422 = vunpack.c.0.s8 %v421
      %v423 = vlaneseq
      %v424 = vshrl.u32 %v423, 7
      %v425 = vsub.s32 %v422, %v424
      %v426 = vrot.slane %v416, %v425
      %v427 = vcombine.high %v426, %v426
      %v429 = vunpack.c.l.s4 1966171168
      %v430 = vunpack.c.0.s8 %v429
      %v431 = vlaneseq
      %v432 = vshrl.u32 %v431, 7
      %v433 = vsub.s32 %v430, %v432
      %v434 = vrot.slane %v426, %v433
      %v436 = vunpack.c.l.s4 1966171168
      %v437 = vunpack.c.0.s8 %v436
      %v438 = vlaneseq
      %v439 = vshrl.u32 %v438, 7
      %v440 = vsub.s32 %v437, %v439
      %v441 = vrot.slane %v427, %v440
      %v446 = vunpack.c.l.s4 1966171168
      %v447 = vunpack.c.0.s8 %v446
      %v448 = vlaneseq
      %v449 = vshrl.u32 %v448, 7
      %v450 = vsub.s32 %v447, %v449
      %v451 = vrot.slane %v417, %v450
      %v452 = vcombine.high %v451, %v451
      %v454 = vunpack.c.l.s4 1966171168
      %v455 = vunpack.c.0.s8 %v454
      %v456 = vlaneseq
      %v457 = vshrl.u32 %v456, 7
      %v458 = vsub.s32 %v455, %v457
      %v459 = vrot.slane %v451, %v458
      %v461 = vunpack.c.l.s4 1966171168
      %v462 = vunpack.c.0.s8 %v461
      %v463 = vlaneseq
      %v464 = vshrl.u32 %v463, 7
      %v465 = vsub.s32 %v462, %v464
      %v466 = vrot.slane %v452, %v465
      %v471 = vunpack.c.l.s4 1966171168
      %v472 = vunpack.c.0.s8 %v471
      %v473 = vlaneseq
      %v474 = vshrl.u32 %v473, 7
      %v475 = vsub.s32 %v472, %v474
      %v476 = vrot.slane %v418, %v475
      %v477 = vcombine.high %v476, %v476
      %v479 = vunpack.c.l.s4 1966171168
      %v480 = vunpack.c.0.s8 %v479
      %v481 = vlaneseq
      %v482 = vshrl.u32 %v481, 7
      %v483 = vsub.s32 %v480, %v482
      %v484 = vrot.slane %v476, %v483
      %v486 = vunpack.c.l.s4 1966171168
      %v487 = vunpack.c.0.s8 %v486
      %v488 = vlaneseq
      %v489 = vshrl.u32 %v488, 7
      %v490 = vsub.s32 %v487, %v489
      %v491 = vrot.slane %v477, %v490
      %v494 = vshll.u32 %v434, 16
      %v497 = vshll.u32 %v441, 16
      %v500 = vshll.u32 %v459, 16
      %502 = vrot.lane.b32.xlu0 %v494, 127
      %v503 = vpop.permute.xlu0 %502
      %504 = vrot.lane.b32.xlu0 %v497, 127
      %v505 = vpop.permute.xlu0 %504
      %506 = vrot.lane.b32.xlu0 %v500, 127
      %v507 = vpop.permute.xlu0 %506
      %vm508 = vcmask 1039360
      %v509 = vsel %vm508, %v503, %v505
      %v510 = vsel %vm508, %v505, %v507
      %v514 = vrot.slane %v434, 7
      %v515 = vrot.slane %v441, 7
      %v516 = vrot.slane %v459, 7
      %517 = vrot.lane.b32.xlu0 %v514, 126
      %v518 = vpop.permute.xlu0 %517
      %519 = vrot.lane.b32.xlu0 %v515, 126
      %v520 = vpop.permute.xlu0 %519
      %521 = vrot.lane.b32.xlu0 %v516, 126
      %v522 = vpop.permute.xlu0 %521
      %vm523 = vcmask 1031168
      %v524 = vsel %vm523, %v518, %v520
      %v525 = vsel %vm523, %v520, %v522
      %v526 = vrot.slane %v494, 7
      %v527 = vrot.slane %v497, 7
      %v528 = vrot.slane %v500, 7
      %529 = vrot.lane.b32.xlu0 %v526, 118
      %v530 = vpop.permute.xlu0 %529
      %531 = vrot.lane.b32.xlu0 %v527, 118
      %v532 = vpop.permute.xlu0 %531
      %533 = vrot.lane.b32.xlu0 %v528, 118
      %v534 = vpop.permute.xlu0 %533
      %vm535 = vcmask 965632
      %v536 = vsel %vm535, %v530, %v532
      %v537 = vsel %vm535, %v532, %v534
      %v541 = vrot.slane %v441, 6
      %v542 = vrot.slane %v459, 6
      %543 = vrot.lane.b32.xlu0 %v541, 117
      %v544 = vpop.permute.xlu0 %543
      %545 = vrot.lane.b32.xlu0 %v542, 117
      %v546 = vpop.permute.xlu0 %545
      %vm547 = vcmask 957440
      %v548 = vsel %vm547, %v544, %v546
      %v549 = vrot.slane %v497, 6
      %v550 = vrot.slane %v500, 6
      %v552 = vshll.u32 %v466, 16
      %v554 = vrot.slane %v552, 6
      %555 = vrot.lane.b32.xlu0 %v549, 116
      %v556 = vpop.permute.xlu0 %555
      %557 = vrot.lane.b32.xlu0 %v550, 116
      %v558 = vpop.permute.xlu0 %557
      %559 = vrot.lane.b32.xlu0 %v554, 116
      %v560 = vpop.permute.xlu0 %559
      %vm561 = vcmask 949248
      %v562 = vsel %vm561, %v556, %v558
      %v563 = vsel %vm561, %v558, %v560
      %v567 = vrot.slane %v441, 5
      %v568 = vrot.slane %v459, 5
      %v569 = vrot.slane %v466, 5
      %570 = vrot.lane.b32.xlu0 %v567, 108
      %v571 = vpop.permute.xlu0 %570
      %572 = vrot.lane.b32.xlu0 %v568, 108
      %v573 = vpop.permute.xlu0 %572
      %574 = vrot.lane.b32.xlu0 %v569, 108
      %v575 = vpop.permute.xlu0 %574
      %vm576 = vcmask 883712
      %v577 = vsel %vm576, %v571, %v573
      %v578 = vsel %vm576, %v573, %v575
      %v579 = vrot.slane %v497, 5
      %v580 = vrot.slane %v500, 5
      %v581 = vrot.slane %v552, 5
      %582 = vrot.lane.b32.xlu0 %v579, 107
      %v583 = vpop.permute.xlu0 %582
      %584 = vrot.lane.b32.xlu0 %v580, 107
      %v585 = vpop.permute.xlu0 %584
      %586 = vrot.lane.b32.xlu0 %v581, 107
      %v587 = vpop.permute.xlu0 %586
      %vm588 = vcmask 875520
      %v589 = vsel %vm588, %v583, %v585
      %v590 = vsel %vm588, %v585, %v587
      %v594 = vrot.slane %v441, 4
      %v595 = vrot.slane %v459, 4
      %v596 = vrot.slane %v466, 4
      %597 = vrot.lane.b32.xlu0 %v594, 106
      %v598 = vpop.permute.xlu0 %597
      %599 = vrot.lane.b32.xlu0 %v595, 106
      %v600 = vpop.permute.xlu0 %599
      %601 = vrot.lane.b32.xlu0 %v596, 106
      %v602 = vpop.permute.xlu0 %601
      %vm603 = vcmask 867328
      %v604 = vsel %vm603, %v598, %v600
      %v605 = vsel %vm603, %v600, %v602
      %vm606 = vcmask 1040384
      %vm607 = vsmask.f32 256
      %vm608 = vmand %vm606, %vm607
      %v609 = vsel %vm608, %v434, %v509
      %v610 = vsel %vm608, %v441, %v510
      %v611 = vsel %vm608, %v459, %v507
      %vm612 = vcmask 1040384
      %v615 = vsel %vm612, %v609, %v524
      %v619 = vsel %vm612, %v610, %v525
      %v623 = vsel %vm612, %v611, %v522
      %vm625 = vcmask 1041408
      %vm626 = vsmask.f32 1280
      %vm627 = vmand %vm625, %vm626
      %v628 = vsel %vm627, %v615, %v536
      %v629 = vsel %vm627, %v619, %v537
      %v630 = vsel %vm627, %v623, %v534
      %vm631 = vcmask 1041408
      %v634 = vsel %vm631, %v628, %v544
      %v638 = vsel %vm631, %v629, %v548
      %v642 = vsel %vm631, %v630, %v546
      %vm644 = vcmask 1042432
      %vm645 = vsmask.f32 2304
      %vm646 = vmand %vm644, %vm645
      %v647 = vsel %vm646, %v634, %v556
      %v648 = vsel %vm646, %v638, %v562
      %v649 = vsel %vm646, %v642, %v563
      %vm650 = vcmask 1042432
      %v653 = vsel %vm650, %v647, %v571
      %v657 = vsel %vm650, %v648, %v577
      %v661 = vsel %vm650, %v649, %v578
      %vm663 = vcmask 1043456
      %vm664 = vsmask.f32 3328
      %vm665 = vmand %vm663, %vm664
      %v666 = vsel %vm665, %v653, %v583
      %v667 = vsel %vm665, %v657, %v589
      %v668 = vsel %vm665, %v661, %v590
      %vm669 = vcmask 1043456
      %v672 = vsel %vm669, %v666, %v598
      %v675 = vsel %vm669, %v667, %v604
      %v678 = vsel %vm669, %v668, %v605
      %v679 = vld [vmem:[%s4] sm:$0xf]
      %680 = vrot.lane.b32.xlu0 %v552, 127
      %v681 = vpop.permute.xlu0 %680
      %v682 = vsel %vm508, %v507, %v681
      %v685 = vrot.slane %v466, 7
      %686 = vrot.lane.b32.xlu0 %v685, 126
      %v687 = vpop.permute.xlu0 %686
      %v688 = vsel %vm523, %v522, %v687
      %v689 = vrot.slane %v552, 7
      %690 = vrot.lane.b32.xlu0 %v689, 118
      %v691 = vpop.permute.xlu0 %690
      %v692 = vsel %vm535, %v534, %v691
      %v695 = vrot.slane %v466, 6
      %696 = vrot.lane.b32.xlu0 %v695, 117
      %v697 = vpop.permute.xlu0 %696
      %v698 = vsel %vm547, %v546, %v697
      %v700 = vshll.u32 %v484, 16
      %v702 = vrot.slane %v700, 6
      %703 = vrot.lane.b32.xlu0 %v702, 116
      %v704 = vpop.permute.xlu0 %703
      %v705 = vsel %vm561, %v560, %v704
      %v708 = vrot.slane %v484, 5
      %709 = vrot.lane.b32.xlu0 %v708, 108
      %v710 = vpop.permute.xlu0 %709
      %v711 = vsel %vm576, %v575, %v710
      %v712 = vrot.slane %v700, 5
      %713 = vrot.lane.b32.xlu0 %v712, 107
      %v714 = vpop.permute.xlu0 %713
      %v715 = vsel %vm588, %v587, %v714
      %v718 = vrot.slane %v484, 4
      %719 = vrot.lane.b32.xlu0 %v718, 106
      %v720 = vpop.permute.xlu0 %719
      %v721 = vsel %vm603, %v602, %v720
      %v722 = vsel %vm608, %v459, %v682
      %v723 = vsel %vm608, %v466, %v681
      %v726 = vsel %vm612, %v722, %v688
      %v730 = vsel %vm612, %v723, %v687
      %v732 = vsel %vm627, %v726, %v692
      %v733 = vsel %vm627, %v730, %v691
      %v734 = vsel %vm631, %v629, %v546
      %v738 = vsel %vm631, %v732, %v698
      %v742 = vsel %vm631, %v733, %v697
      %v744 = vsel %vm646, %v734, %v558
      %v745 = vsel %vm646, %v738, %v563
      %v746 = vsel %vm646, %v742, %v705
      %v749 = vsel %vm650, %v744, %v573
      %v752 = vsel %vm650, %v745, %v578
      %v756 = vsel %vm650, %v746, %v711
      %v758 = vsel %vm665, %v749, %v585
      %v759 = vsel %vm665, %v752, %v590
      %v760 = vsel %vm665, %v756, %v715
      %v763 = vsel %vm669, %v758, %v600
      %v765 = vsel %vm669, %v759, %v605
      %v768 = vsel %vm669, %v760, %v721
      %s769 = scalar_lea.vmem %s4, 4
      %v770 = vld [vmem:[%s769] sm:$0xf]
      %774 = vrot.lane.b32.xlu0 %v763, 11
      %v775 = vpop.permute.xlu0 %774
      %776 = vrot.lane.b32.xlu0 %v765, 11
      %v777 = vpop.permute.xlu0 %776
      %778 = vrot.lane.b32.xlu0 %v768, 11
      %v779 = vpop.permute.xlu0 %778
      %vm780 = vcmask 89088
      %v781 = vsel %vm780, %v775, %v777
      %v782 = vsel %vm780, %v777, %v779
      %vm783 = vcmask 72704
      %v785 = vsel %vm783, %v770, 0
      %vm787 = vcmask 1044480
      %v788 = vsel %vm669, 4294967295, 65535
      %v789 = vsel %vm787, %v788, 0
      %v791 = vand.u32 %v781, %v789
      %v794 = vand.u32 %v782, %v789
      %796 = vmatprep.subr.bf16.mxu0 %v794
      %797 = vmatpush1.bf16.msra.mxu0 %v791
      %798 = vmatprep.subr.bf16.mxu0 0
      %799 = vmatpush1.bf16.msra.mxu0 0
      %800 = vmatprep.subr.bf16.mxu0 0
      %801 = vmatpush1.bf16.msra.mxu0 0
      %802 = vmatprep.subr.bf16.mxu0 0
      %803 = vmatpush1.bf16.msra.mxu0 0
      %804 = vmatprep.subr.bf16.mxu0 0
      %805 = vmatpush1.bf16.msra.mxu0 0
      %806 = vmatprep.subr.bf16.mxu0 0
      %807 = vmatpush1.bf16.msra.mxu0 0
      %808 = vmatprep.subr.bf16.mxu0 0
      %809 = vmatpush1.bf16.msra.mxu0 0
      %810 = vmatprep.subr.bf16.mxu0 0
      %811 = vmatpush1.bf16.msra.mxu0 0
      %812 = vmatprep.subr.bf16.mxu0 0
      %813 = vmatpush1.bf16.msra.mxu0 0
      %814 = vmatprep.subr.bf16.mxu0 0
      %815 = vmatpush1.bf16.msra.mxu0 0
      %816 = vmatprep.subr.bf16.mxu0 0
      %817 = vmatpush1.bf16.msra.mxu0 0
      %818 = vmatprep.subr.bf16.mxu0 0
      %819 = vmatpush1.bf16.msra.mxu0 0
      %820 = vmatprep.subr.bf16.mxu0 0
      %821 = vmatpush1.bf16.msra.mxu0 0
      %822 = vmatprep.subr.bf16.mxu0 0
      %823 = vmatpush1.bf16.msra.mxu0 0
      %824 = vmatprep.subr.bf16.mxu0 0
      %825 = vmatpush1.bf16.msra.mxu0 0
      %826 = vmatprep.subr.bf16.mxu0 0
      %827 = vmatpush1.bf16.msra.mxu0 0
      %828 = vmatprep.mubr.bf16.mxu0 0
      %829 = vmatmul.mubr.bf16.gmra.mrb[0].mxu0 %v785
      %v830 = vpop.f32.mrb[0].mxu0
      %v831 = vadd.f32 0.0, %v830
      %v832 = vpop.f32.mrb[0].mxu0
      %v833 = vadd.f32 0.0, %v832
      %v834 = vpop.f32.mrb[0].mxu0
      %v835 = vpop.f32.mrb[0].mxu0
      %836 = vdwg.mxu0
      %840 = vrot.lane.b32.xlu0 %v672, 11
      %v841 = vpop.permute.xlu0 %840
      %842 = vrot.lane.b32.xlu0 %v675, 11
      %v843 = vpop.permute.xlu0 %842
      %844 = vrot.lane.b32.xlu0 %v678, 11
      %v845 = vpop.permute.xlu0 %844
      %v846 = vsel %vm780, %v841, %v843
      %v847 = vsel %vm780, %v843, %v845
      %v849 = vsel %vm783, %v679, 0
      %v852 = vand.u32 %v846, %v789
      %v855 = vand.u32 %v847, %v789
      %857 = vmatprep.subr.bf16.mxu0 %v855
      %858 = vmatpush1.bf16.msra.mxu0 %v852
      %859 = vmatprep.subr.bf16.mxu0 0
      %860 = vmatpush1.bf16.msra.mxu0 0
      %861 = vmatprep.subr.bf16.mxu0 0
      %862 = vmatpush1.bf16.msra.mxu0 0
      %863 = vmatprep.subr.bf16.mxu0 0
      %864 = vmatpush1.bf16.msra.mxu0 0
      %865 = vmatprep.subr.bf16.mxu0 0
      %866 = vmatpush1.bf16.msra.mxu0 0
      %867 = vmatprep.subr.bf16.mxu0 0
      %868 = vmatpush1.bf16.msra.mxu0 0
      %869 = vmatprep.subr.bf16.mxu0 0
      %870 = vmatpush1.bf16.msra.mxu0 0
      %871 = vmatprep.subr.bf16.mxu0 0
      %872 = vmatpush1.bf16.msra.mxu0 0
      %873 = vmatprep.subr.bf16.mxu0 0
      %874 = vmatpush1.bf16.msra.mxu0 0
      %875 = vmatprep.subr.bf16.mxu0 0
      %876 = vmatpush1.bf16.msra.mxu0 0
      %877 = vmatprep.subr.bf16.mxu0 0
      %878 = vmatpush1.bf16.msra.mxu0 0
      %879 = vmatprep.subr.bf16.mxu0 0
      %880 = vmatpush1.bf16.msra.mxu0 0
      %881 = vmatprep.subr.bf16.mxu0 0
      %882 = vmatpush1.bf16.msra.mxu0 0
      %883 = vmatprep.subr.bf16.mxu0 0
      %884 = vmatpush1.bf16.msra.mxu0 0
      %885 = vmatprep.subr.bf16.mxu0 0
      %886 = vmatpush1.bf16.msra.mxu0 0
      %887 = vmatprep.subr.bf16.mxu0 0
      %888 = vmatpush1.bf16.msra.mxu0 0
      %889 = vmatprep.mubr.bf16.mxu0 0
      %890 = vmatmul.mubr.bf16.gmra.mrb[0].mxu0 %v849
      %v891 = vpop.f32.mrb[0].mxu0
      %v892 = vadd.f32 %v831, %v891
      %v893 = vpop.f32.mrb[0].mxu0
      %v894 = vadd.f32 %v833, %v893
      %v895 = vpop.f32.mrb[0].mxu0
      %v896 = vpop.f32.mrb[0].mxu0
      %897 = vdwg.mxu0
      %898 = vrot.lane.b32.xlu0 %v700, 127
      %v899 = vpop.permute.xlu0 %898
      %v900 = vsel %vm508, %v681, %v899
      %v903 = vrot.slane %v484, 7
      %904 = vrot.lane.b32.xlu0 %v903, 126
      %v905 = vpop.permute.xlu0 %904
      %v906 = vsel %vm523, %v687, %v905
      %v907 = vrot.slane %v700, 7
      %908 = vrot.lane.b32.xlu0 %v907, 118
      %v909 = vpop.permute.xlu0 %908
      %v910 = vsel %vm535, %v691, %v909
      %v913 = vrot.slane %v484, 6
      %914 = vrot.lane.b32.xlu0 %v913, 117
      %v915 = vpop.permute.xlu0 %914
      %v916 = vsel %vm547, %v697, %v915
      %v918 = vshll.u32 %v491, 16
      %v920 = vrot.slane %v918, 6
      %921 = vrot.lane.b32.xlu0 %v920, 116
      %v922 = vpop.permute.xlu0 %921
      %v923 = vsel %vm561, %v704, %v922
      %v926 = vrot.slane %v491, 5
      %927 = vrot.lane.b32.xlu0 %v926, 108
      %v928 = vpop.permute.xlu0 %927
      %v929 = vsel %vm576, %v710, %v928
      %v930 = vrot.slane %v918, 5
      %931 = vrot.lane.b32.xlu0 %v930, 107
      %v932 = vpop.permute.xlu0 %931
      %v933 = vsel %vm588, %v714, %v932
      %v936 = vrot.slane %v491, 4
      %937 = vrot.lane.b32.xlu0 %v936, 106
      %v938 = vpop.permute.xlu0 %937
      %v939 = vsel %vm603, %v720, %v938
      %v940 = vsel %vm608, %v466, %v900
      %v941 = vsel %vm608, %v484, %v899
      %v944 = vsel %vm612, %v940, %v906
      %v948 = vsel %vm612, %v941, %v905
      %v950 = vsel %vm627, %v944, %v910
      %v951 = vsel %vm627, %v948, %v909
      %v952 = vsel %vm631, %v732, %v697
      %v956 = vsel %vm631, %v950, %v916
      %v960 = vsel %vm631, %v951, %v915
      %v962 = vsel %vm646, %v952, %v560
      %v963 = vsel %vm646, %v956, %v705
      %v964 = vsel %vm646, %v960, %v923
      %v967 = vsel %vm650, %v962, %v575
      %v970 = vsel %vm650, %v963, %v711
      %v974 = vsel %vm650, %v964, %v929
      %v976 = vsel %vm665, %v967, %v587
      %v977 = vsel %vm665, %v970, %v715
      %v978 = vsel %vm665, %v974, %v933
      %v981 = vsel %vm669, %v976, %v602
      %v983 = vsel %vm669, %v977, %v721
      %v986 = vsel %vm669, %v978, %v939
      %s987 = scalar_lea.vmem %s4, 8
      %v988 = vld [vmem:[%s987] sm:$0xf]
      %992 = vrot.lane.b32.xlu0 %v981, 11
      %v993 = vpop.permute.xlu0 %992
      %994 = vrot.lane.b32.xlu0 %v983, 11
      %v995 = vpop.permute.xlu0 %994
      %996 = vrot.lane.b32.xlu0 %v986, 11
      %v997 = vpop.permute.xlu0 %996
      %v998 = vsel %vm780, %v993, %v995
      %v999 = vsel %vm780, %v995, %v997
      %v1001 = vsel %vm783, %v988, 0
      %v1004 = vand.u32 %v998, %v789
      %v1007 = vand.u32 %v999, %v789
      %1009 = vmatprep.subr.bf16.mxu0 %v1007
      %1010 = vmatpush1.bf16.msra.mxu0 %v1004
      %1011 = vmatprep.subr.bf16.mxu0 0
      %1012 = vmatpush1.bf16.msra.mxu0 0
      %1013 = vmatprep.subr.bf16.mxu0 0
      %1014 = vmatpush1.bf16.msra.mxu0 0
      %1015 = vmatprep.subr.bf16.mxu0 0
      %1016 = vmatpush1.bf16.msra.mxu0 0
      %1017 = vmatprep.subr.bf16.mxu0 0
      %1018 = vmatpush1.bf16.msra.mxu0 0
      %1019 = vmatprep.subr.bf16.mxu0 0
      %1020 = vmatpush1.bf16.msra.mxu0 0
      %1021 = vmatprep.subr.bf16.mxu0 0
      %1022 = vmatpush1.bf16.msra.mxu0 0
      %1023 = vmatprep.subr.bf16.mxu0 0
      %1024 = vmatpush1.bf16.msra.mxu0 0
      %1025 = vmatprep.subr.bf16.mxu0 0
      %1026 = vmatpush1.bf16.msra.mxu0 0
      %1027 = vmatprep.subr.bf16.mxu0 0
      %1028 = vmatpush1.bf16.msra.mxu0 0
      %1029 = vmatprep.subr.bf16.mxu0 0
      %1030 = vmatpush1.bf16.msra.mxu0 0
      %1031 = vmatprep.subr.bf16.mxu0 0
      %1032 = vmatpush1.bf16.msra.mxu0 0
      %1033 = vmatprep.subr.bf16.mxu0 0
      %1034 = vmatpush1.bf16.msra.mxu0 0
      %1035 = vmatprep.subr.bf16.mxu0 0
      %1036 = vmatpush1.bf16.msra.mxu0 0
      %1037 = vmatprep.subr.bf16.mxu0 0
      %1038 = vmatpush1.bf16.msra.mxu0 0
      %1039 = vmatprep.subr.bf16.mxu0 0
      %1040 = vmatpush1.bf16.msra.mxu0 0
      %1041 = vmatprep.mubr.bf16.mxu0 0
      %1042 = vmatmul.mubr.bf16.gmra.mrb[0].mxu0 %v1001
      %v1043 = vpop.f32.mrb[0].mxu0
      %v1044 = vadd.f32 0.0, %v1043
      %v1045 = vpop.f32.mrb[0].mxu0
      %v1046 = vadd.f32 0.0, %v1045
      %v1047 = vpop.f32.mrb[0].mxu0
      %v1048 = vpop.f32.mrb[0].mxu0
      %1049 = vdwg.mxu0
      %v1050 = vadd.f32 %v892, %v1044
      %v1051 = vadd.f32 %v894, %v1046
      %v1052 = vld [vmem:[%s5] sm:$0xff]
      %1054 = vset.pattern.permute.xlu0 0
      %1055 = vperm.xlu0 %1054, %v1052
      %v1056 = vpop.permute.xlu0 %1055
      %v1058 = vadd.f32 %v1050, %v1056
      %v1059 = vadd.f32 %v1051, %v1056
      %v1060 = vmax.f32 %v1058, 0.0
      %v1061 = vmax.f32 %v1059, 0.0
      %v1062 = vld [vmem:[%s403] sm:$0x3]
      %v1063 = vunpack.c.l.bf16 %v1062
      %v1065 = vlaneseq
      %v1066 = vshrl.u32 %v1065, 7
      %v1067 = vsub.s32 0, %v1066
      %v1068 = vrot.slane %v1063, %v1067
      %v1069 = vlaneseq
      %v1070 = vshrl.u32 %v1069, 7
      %v1071 = vsub.s32 2, %v1070
      %v1072 = vrot.slane %v1063, %v1071
      %v1075 = vlaneseq
      %v1076 = vshrl.u32 %v1075, 7
      %v1077 = vsub.s32 0, %v1076
      %v1078 = vrot.slane %v1068, %v1077
      %v1079 = vlaneseq
      %v1080 = vshrl.u32 %v1079, 7
      %v1081 = vsub.s32 0, %v1080
      %v1082 = vrot.slane %v1072, %v1081
      %v1083 = vmul.f32 %v1060, %v1078
      %v1084 = vmul.f32 %v1061, %v1082
      %v1085 = vpack.c.bf16 %v1083, %v1083
      %v1086 = vpack.c.bf16 %v1084, %v1084
      %v1089 = vunpack.c.l.b16 %v1085
      %v1090 = vunpack.c.l.b16 %v1086
      %v1091 = vpack.c.b16 %v1090, %v1089
      %1093 = vst [vmem:[%s413] sm:$0xff] %v1091
      %s1094 = smul.u32 2, %s22
      %p1095 = scmp.lt.s32.totalorder %s21, 1
      %s1096 = scalar_select %p1095, %s21, 1
      %p1097 = scmp.lt.s32.totalorder %s1094, 9
      %s1098 = scalar_select %p1097, %s1094, 9
      %s1099 = smul.addr %s1096, 10
      %s1100 = sadd.s32 %s1098, %s1099
      %s1101 = smul.addr %s1100, 4
      %s1102 = scalar_lea.vmem %s6, %s1101
      // Predicated region
      $region45: #{fwd.4} parent=43 // pred_check
        %p1103 = pneg %p213
      $region46: #{fwd.4} parent=43 // pred_check_branch
        %1105 = sbr.rel (%p1103) target = $region48
      $region47: #{fwd.4} parent=43 // pred_region
        %s1106 = smul.u32 2, %s22
      $region48: #{fwd.4} parent=43 // pred_fallthru
        _
    $region44: #{fwd.4} parent=5 // pred_fallthru
      _
    %p1107 = scmp.le.s32.totalorder 2, %s12
    // Predicated region
    $region49: #{fwd.4} parent=5 // pred_check
      %p1108 = pneg %p1107
    $region50: #{fwd.4} parent=5 // pred_check_branch
      %1110 = sbr.rel (%p1108) target = $region52
    $region51: #{fwd.4} parent=5 // pred_region
      %s1111 = ssub.s32 %s12, 2
      // Predicated region
      $region53: #{fwd.4} parent=51 // pred_check
        %p1112 = pneg %p219
      $region54: #{fwd.4} parent=51 // pred_check_branch
        %1114 = sbr.rel (%p1112) target = $region56
      $region55: #{fwd.4} parent=51 // pred_region
        %s1115 = smul.u32 2, %s24
        %p1116 = scmp.lt.s32.totalorder %s23, 1
        %s1117 = scalar_select %p1116, %s23, 1
        %p1118 = scmp.lt.s32.totalorder %s1115, 9
        %s1119 = scalar_select %p1118, %s1115, 9
        %s1120 = smul.addr %s1117, 10
        %s1121 = sadd.s32 %s1119, %s1120
        %s1122 = smul.addr %s1121, 4
        %s1123 = scalar_lea.vmem %s6, %s1122
      $region56: #{fwd.4} parent=51 // pred_fallthru
        _
    $region52: #{fwd.4} parent=5 // pred_fallthru
      _
  $region6: #{fwd.4} parent=0 // loop_footer
    %s16 = sadd.s32 1, %s12
  $region7: #{fwd.4} parent=0 // loop_footer_branch
    %11 = sbr.rel target = $region3
  $region8: #{fwd.4} parent=0 // loop_exit
    _

// kernel: fwd.7
$region0: #{fwd.7}
  #allocation0 [shape = 'u32[]', space=smem, size = 0x4, offset = 0x4, fixed_abs, tag = 'smem constant byte address 0x4 - core index']
  #allocation1 [shape = 'u32[144,128]{1,0:T(1,128)}', space=vmem, size = 0x12000, scoped, tag = 'internal scratch']
  #allocation2 [shape = 'f32[1,1]{1,0:T(1,128)S(1)}', space=vmem, size = 0x200, scoped, tag = 'scoped memory for fwd.7']
  %s0 = inlined_call_operand.vmem [shape: f32[2,256], index: 0, kind: input, shape index: {}]
  %s1 = inlined_call_operand.vmem [shape: f32[2,25], index: 1, kind: input, shape index: {}]
  %s2 = inlined_call_operand.vmem [shape: f32[256,32], index: 2, kind: input, shape index: {}]
  %s3 = inlined_call_operand.vmem [shape: f32[1,32], index: 3, kind: input, shape index: {}]
  %s4 = inlined_call_operand.vmem [shape: f32[32,16], index: 4, kind: input, shape index: {}]
  %s5 = inlined_call_operand.vmem [shape: f32[1,16], index: 5, kind: input, shape index: {}]
  %s6 = inlined_call_operand.vmem [shape: f32[25,16], index: 6, kind: input, shape index: {}]
  %s7 = inlined_call_operand.vmem [shape: f32[1,16], index: 7, kind: input, shape index: {}]
  %s8 = inlined_call_operand.vmem [shape: f32[16,16], index: 8, kind: input, shape index: {}]
  %s9 = inlined_call_operand.vmem [shape: f32[16,16], index: 9, kind: input, shape index: {}]
  %s10 = inlined_call_operand.vmem [shape: f32[1,16], index: 10, kind: input, shape index: {}]
  %s11 = inlined_call_operand.vmem [shape: f32[16,1], index: 11, kind: input, shape index: {}]
  %s12 = inlined_call_operand.<no memory space> [shape: f32[1,1], index: 12, kind: input, shape index: {}]
  %s13 = inlined_call_operand.vmem [shape: f32[2,1], index: 13, kind: output, shape index: {}]
  %s14 = sld [smem:[#allocation0]]
  $region62: #{fwd.7} parent=0
    _
  %s16 = ssub.s32 1, %s14
  %s17 = scalar_select 0, %s16, %s14
  %v18 = vstv %s12
  %19 = vst [vmem:[#allocation2] sm:$0x1] %v18
  // Predicated region
  $region2: #{fwd.7} parent=0 // pred_check
    _
  $region3: #{fwd.7} parent=0 // pred_check_branch
    %21 = sbr.rel (0) target = $region5
  $region4: #{fwd.7} parent=0 // pred_region
    _
  $region5: #{fwd.7} parent=0 // pred_fallthru
    _
  // Predicated region
  $region6: #{fwd.7} parent=0 // pred_check
    _
  $region7: #{fwd.7} parent=0 // pred_check_branch
    %23 = sbr.rel (0) target = $region9
  $region8: #{fwd.7} parent=0 // pred_region
    _
  $region9: #{fwd.7} parent=0 // pred_fallthru
    _
  // Predicated region
  $region10: #{fwd.7} parent=0 // pred_check
    _
  $region11: #{fwd.7} parent=0 // pred_check_branch
    %25 = sbr.rel (0) target = $region13
  $region12: #{fwd.7} parent=0 // pred_region
    _
  $region13: #{fwd.7} parent=0 // pred_fallthru
    _
  // Predicated region
  $region14: #{fwd.7} parent=0 // pred_check
    _
  $region15: #{fwd.7} parent=0 // pred_check_branch
    %27 = sbr.rel (0) target = $region17
  $region16: #{fwd.7} parent=0 // pred_region
    _
  $region17: #{fwd.7} parent=0 // pred_fallthru
    _
  // Predicated region
  $region18: #{fwd.7} parent=0 // pred_check
    _
  $region19: #{fwd.7} parent=0 // pred_check_branch
    %29 = sbr.rel (0) target = $region21
  $region20: #{fwd.7} parent=0 // pred_region
    _
  $region21: #{fwd.7} parent=0 // pred_fallthru
    _
  // Predicated region
  $region22: #{fwd.7} parent=0 // pred_check
    _
  $region23: #{fwd.7} parent=0 // pred_check_branch
    %31 = sbr.rel (0) target = $region25
  $region24: #{fwd.7} parent=0 // pred_region
    _
  $region25: #{fwd.7} parent=0 // pred_fallthru
    _
  // Predicated region
  $region26: #{fwd.7} parent=0 // pred_check
    _
  $region27: #{fwd.7} parent=0 // pred_check_branch
    %33 = sbr.rel (0) target = $region29
  $region28: #{fwd.7} parent=0 // pred_region
    _
  $region29: #{fwd.7} parent=0 // pred_fallthru
    _
  // Predicated region
  $region30: #{fwd.7} parent=0 // pred_check
    _
  $region31: #{fwd.7} parent=0 // pred_check_branch
    %35 = sbr.rel (0) target = $region33
  $region32: #{fwd.7} parent=0 // pred_region
    _
  $region33: #{fwd.7} parent=0 // pred_fallthru
    _
  // Predicated region
  $region34: #{fwd.7} parent=0 // pred_check
    _
  $region35: #{fwd.7} parent=0 // pred_check_branch
    %37 = sbr.rel (0) target = $region37
  $region36: #{fwd.7} parent=0 // pred_region
    _
  $region37: #{fwd.7} parent=0 // pred_fallthru
    _
  // Predicated region
  $region38: #{fwd.7} parent=0 // pred_check
    _
  $region39: #{fwd.7} parent=0 // pred_check_branch
    %39 = sbr.rel (0) target = $region41
  $region40: #{fwd.7} parent=0 // pred_region
    _
  $region41: #{fwd.7} parent=0 // pred_fallthru
    _
  // Predicated region
  $region42: #{fwd.7} parent=0 // pred_check
    _
  $region43: #{fwd.7} parent=0 // pred_check_branch
    %41 = sbr.rel (0) target = $region45
  $region44: #{fwd.7} parent=0 // pred_region
    _
  $region45: #{fwd.7} parent=0 // pred_fallthru
    _
  // Predicated region
  $region46: #{fwd.7} parent=0 // pred_check
    _
  $region47: #{fwd.7} parent=0 // pred_check_branch
    %43 = sbr.rel (0) target = $region49
  $region48: #{fwd.7} parent=0 // pred_region
    _
  $region49: #{fwd.7} parent=0 // pred_fallthru
    _
  // Predicated region
  $region50: #{fwd.7} parent=0 // pred_check
    _
  $region51: #{fwd.7} parent=0 // pred_check_branch
    %45 = sbr.rel (0) target = $region53
  $region52: #{fwd.7} parent=0 // pred_region
    _
  $region53: #{fwd.7} parent=0 // pred_fallthru
    _
  %v46 = vld [vmem:[%s0] sm:$0xf]
  %v47 = vld [vmem:[%s2] sm:$0xff]
  %v48 = vld [vmem:[%s2 + $0x8] sm:$0xff]
  %v49 = vld [vmem:[%s2 + $0x10] sm:$0xff]
  %v50 = vld [vmem:[%s2 + $0x18] sm:$0xff]
  %v51 = vld [vmem:[%s2 + $0x20] sm:$0xff]
  %v52 = vld [vmem:[%s2 + $0x28] sm:$0xff]
  %v53 = vld [vmem:[%s2 + $0x30] sm:$0xff]
  %v54 = vld [vmem:[%s2 + $0x38] sm:$0xff]
  %v55 = vld [vmem:[%s2 + $0x40] sm:$0xff]
  %v56 = vld [vmem:[%s2 + $0x48] sm:$0xff]
  %v57 = vld [vmem:[%s2 + $0x50] sm:$0xff]
  %v58 = vld [vmem:[%s2 + $0x58] sm:$0xff]
  %v59 = vld [vmem:[%s2 + $0x60] sm:$0xff]
  %v60 = vld [vmem:[%s2 + $0x68] sm:$0xff]
  %v61 = vld [vmem:[%s2 + $0x70] sm:$0xff]
  %v62 = vld [vmem:[%s2 + $0x78] sm:$0xff]
  %v63 = vld [vmem:[%s2 + $0x80] sm:$0xff]
  %v64 = vld [vmem:[%s2 + $0x88] sm:$0xff]
  %v65 = vld [vmem:[%s2 + $0x90] sm:$0xff]
  %v66 = vld [vmem:[%s2 + $0x98] sm:$0xff]
  %v67 = vld [vmem:[%s2 + $0xa0] sm:$0xff]
  %v68 = vld [vmem:[%s2 + $0xa8] sm:$0xff]
  %v69 = vld [vmem:[%s2 + $0xb0] sm:$0xff]
  %v70 = vld [vmem:[%s2 + $0xb8] sm:$0xff]
  %v71 = vld [vmem:[%s2 + $0xc0] sm:$0xff]
  %v72 = vld [vmem:[%s2 + $0xc8] sm:$0xff]
  %v73 = vld [vmem:[%s2 + $0xd0] sm:$0xff]
  %v74 = vld [vmem:[%s2 + $0xd8] sm:$0xff]
  %v75 = vld [vmem:[%s2 + $0xe0] sm:$0xff]
  %v76 = vld [vmem:[%s2 + $0xe8] sm:$0xff]
  %v77 = vld [vmem:[%s2 + $0xf0] sm:$0xff]
  %v78 = vld [vmem:[%s2 + $0xf8] sm:$0xff]
  %v81 = vunpack.c.l.s4 1983009808
  %v82 = vunpack.c.0.s8 %v81
  %v83 = vlaneseq
  %v84 = vshrl.u32 %v83, 7
  %v85 = vsub.s32 %v82, %v84
  %v86 = vrot.slane %v46, %v85
  %v87 = vcombine.high %v86, %v86
  %90 = vmatprep.subr.mxu0 0.0
  %91 = vmatpush1.msra.mxu0 %v47
  %92 = vmatprep.subr.mxu0 0.0
  %93 = vmatpush1.msra.mxu0 %v48
  %94 = vmatprep.subr.mxu0 0.0
  %95 = vmatpush1.msra.mxu0 %v49
  %96 = vmatprep.subr.mxu0 0.0
  %97 = vmatpush1.msra.mxu0 %v50
  %98 = vmatprep.subr.mxu0 0.0
  %99 = vmatpush1.msra.mxu0 %v51
  %100 = vmatprep.subr.mxu0 0.0
  %101 = vmatpush1.msra.mxu0 %v52
  %102 = vmatprep.subr.mxu0 0.0
  %103 = vmatpush1.msra.mxu0 %v53
  %104 = vmatprep.subr.mxu0 0.0
  %105 = vmatpush1.msra.mxu0 %v54
  %106 = vmatprep.subr.mxu0 0.0
  %107 = vmatpush1.msra.mxu0 %v55
  %108 = vmatprep.subr.mxu0 0.0
  %109 = vmatpush1.msra.mxu0 %v56
  %110 = vmatprep.subr.mxu0 0.0
  %111 = vmatpush1.msra.mxu0 %v57
  %112 = vmatprep.subr.mxu0 0.0
  %113 = vmatpush1.msra.mxu0 %v58
  %114 = vmatprep.subr.mxu0 0.0
  %115 = vmatpush1.msra.mxu0 %v59
  %116 = vmatprep.subr.mxu0 0.0
  %117 = vmatpush1.msra.mxu0 %v60
  %118 = vmatprep.subr.mxu0 0.0
  %119 = vmatpush1.msra.mxu0 %v61
  %120 = vmatprep.subr.mxu0 0.0
  %121 = vmatpush1.msra.mxu0 %v62
  %122 = vmatprep.subr.mxu0 0.0
  %123 = vmatpush1.msra.mxu0 %v63
  %124 = vmatprep.subr.mxu0 0.0
  %125 = vmatpush1.msra.mxu0 %v64
  %126 = vmatprep.subr.mxu0 0.0
  %127 = vmatpush1.msra.mxu0 %v65
  %128 = vmatprep.subr.mxu0 0.0
  %129 = vmatpush1.msra.mxu0 %v66
  %130 = vmatprep.subr.mxu0 0.0
  %131 = vmatpush1.msra.mxu0 %v67
  %132 = vmatprep.subr.mxu0 0.0
  %133 = vmatpush1.msra.mxu0 %v68
  %134 = vmatprep.subr.mxu0 0.0
  %135 = vmatpush1.msra.mxu0 %v69
  %136 = vmatprep.subr.mxu0 0.0
  %137 = vmatpush1.msra.mxu0 %v70
  %138 = vmatprep.subr.mxu0 0.0
  %139 = vmatpush1.msra.mxu0 %v71
  %140 = vmatprep.subr.mxu0 0.0
  %141 = vmatpush1.msra.mxu0 %v72
  %142 = vmatprep.subr.mxu0 0.0
  %143 = vmatpush1.msra.mxu0 %v73
  %144 = vmatprep.subr.mxu0 0.0
  %145 = vmatpush1.msra.mxu0 %v74
  %146 = vmatprep.subr.mxu0 0.0
  %147 = vmatpush1.msra.mxu0 %v75
  %148 = vmatprep.subr.mxu0 0.0
  %149 = vmatpush1.msra.mxu0 %v76
  %150 = vmatprep.subr.mxu0 0.0
  %151 = vmatpush1.msra.mxu0 %v77
  %152 = vmatprep.subr.mxu0 0.0
  %153 = vmatpush1.msra.mxu0 %v78
  %154 = vmatprep.mubr.f32.mxu0 %v87
  %155 = vmatmul.mubr.f32.gmra.mrb[0].mxu0 %v86
  %v156 = vpop.f32.mrb[0].mxu0
  %v157 = vadd.f32 0.0, %v156
  %v158 = vpop.f32.mrb[0].mxu0
  %159 = vdwg.mxu0
  %v160 = vmul.f32 %v157, 0.015625
  %v161 = vld [vmem:[%s3] sm:$0x1]
  %v163 = vlaneseq
  %v164 = vshrl.u32 %v163, 7
  %v165 = vsub.s32 0, %v164
  %v166 = vrot.slane %v161, %v165
  %v168 = vadd.f32 %v160, %v166
  %v169 = vld [vmem:[%s4] sm:$0xff]
  %v170 = vld [vmem:[%s4 + $0x8] sm:$0xff]
  %v171 = vld [vmem:[%s4 + $0x10] sm:$0xff]
  %v172 = vld [vmem:[%s4 + $0x18] sm:$0xff]
  %v173 = vld [vmem:[%s5] sm:$0x1]
  %v175 = vlaneseq
  %v176 = vshrl.u32 %v175, 7
  %v177 = vsub.s32 0, %v176
  %v178 = vrot.slane %v173, %v177
  %vm180 = vcmask 261120
  %v182 = vsel %vm180, %v168, 0
  %184 = vmatprep.subr.mxu0 0.0
  %185 = vmatpush1.msra.mxu0 %v169
  %186 = vmatprep.subr.mxu0 0.0
  %187 = vmatpush1.msra.mxu0 %v170
  %188 = vmatprep.subr.mxu0 0.0
  %189 = vmatpush1.msra.mxu0 %v171
  %190 = vmatprep.subr.mxu0 0.0
  %191 = vmatpush1.msra.mxu0 %v172
  %192 = vmatprep.subr.mxu0 0.0
  %193 = vmatpush1.msra.mxu0 0.0
  %194 = vmatprep.subr.mxu0 0.0
  %195 = vmatpush1.msra.mxu0 0.0
  %196 = vmatprep.subr.mxu0 0.0
  %197 = vmatpush1.msra.mxu0 0.0
  %198 = vmatprep.subr.mxu0 0.0
  %199 = vmatpush1.msra.mxu0 0.0
  %200 = vmatprep.subr.mxu0 0.0
  %201 = vmatpush1.msra.mxu0 0.0
  %202 = vmatprep.subr.mxu0 0.0
  %203 = vmatpush1.msra.mxu0 0.0
  %204 = vmatprep.subr.mxu0 0.0
  %205 = vmatpush1.msra.mxu0 0.0
  %206 = vmatprep.subr.mxu0 0.0
  %207 = vmatpush1.msra.mxu0 0.0
  %208 = vmatprep.subr.mxu0 0.0
  %209 = vmatpush1.msra.mxu0 0.0
  %210 = vmatprep.subr.mxu0 0.0
  %211 = vmatpush1.msra.mxu0 0.0
  %212 = vmatprep.subr.mxu0 0.0
  %213 = vmatpush1.msra.mxu0 0.0
  %214 = vmatprep.subr.mxu0 0.0
  %215 = vmatpush1.msra.mxu0 0.0
  %216 = vmatprep.subr.mxu0 0.0
  %217 = vmatpush1.msra.mxu0 0.0
  %218 = vmatprep.subr.mxu0 0.0
  %219 = vmatpush1.msra.mxu0 0.0
  %220 = vmatprep.subr.mxu0 0.0
  %221 = vmatpush1.msra.mxu0 0.0
  %222 = vmatprep.subr.mxu0 0.0
  %223 = vmatpush1.msra.mxu0 0.0
  %224 = vmatprep.subr.mxu0 0.0
  %225 = vmatpush1.msra.mxu0 0.0
  %226 = vmatprep.subr.mxu0 0.0
  %227 = vmatpush1.msra.mxu0 0.0
  %228 = vmatprep.subr.mxu0 0.0
  %229 = vmatpush1.msra.mxu0 0.0
  %230 = vmatprep.subr.mxu0 0.0
  %231 = vmatpush1.msra.mxu0 0.0
  %232 = vmatprep.subr.mxu0 0.0
  %233 = vmatpush1.msra.mxu0 0.0
  %234 = vmatprep.subr.mxu0 0.0
  %235 = vmatpush1.msra.mxu0 0.0
  %236 = vmatprep.subr.mxu0 0.0
  %237 = vmatpush1.msra.mxu0 0.0
  %238 = vmatprep.subr.mxu0 0.0
  %239 = vmatpush1.msra.mxu0 0.0
  %240 = vmatprep.subr.mxu0 0.0
  %241 = vmatpush1.msra.mxu0 0.0
  %242 = vmatprep.subr.mxu0 0.0
  %243 = vmatpush1.msra.mxu0 0.0
  %244 = vmatprep.subr.mxu0 0.0
  %245 = vmatpush1.msra.mxu0 0.0
  %246 = vmatprep.subr.mxu0 0.0
  %247 = vmatpush1.msra.mxu0 0.0
  %248 = vmatprep.mubr.f32.mxu0 0.0
  %249 = vmatmul.mubr.f32.gmra.mrb[0].mxu0 %v182
  %v250 = vpop.f32.mrb[0].mxu0
  %v251 = vadd.f32 %v178, %v250
  %v252 = vpop.f32.mrb[0].mxu0
  %253 = vdwg.mxu0
  %v254 = vmax.f32 %v251, 0.0
  %v255 = vld [vmem:[%s1] sm:$0x3]
  %v256 = vld [vmem:[%s6] sm:$0xff]
  %v257 = vld [vmem:[%s6 + $0x8] sm:$0xff]
  %v258 = vld [vmem:[%s6 + $0x10] sm:$0xff]
  %v259 = vld [vmem:[%s6 + $0x18] sm:$0x1]
  %v260 = vld [vmem:[%s7] sm:$0x1]
  %v262 = vlaneseq
  %v263 = vshrl.u32 %v262, 7
  %v264 = vsub.s32 0, %v263
  %v265 = vrot.slane %v260, %v264
  %vm267 = vcmask 203776
  %v269 = vsel %vm267, %v255, 0
  %vm271 = vcmask 1040384
  %v273 = vsel %vm271, %v259, 0
  %275 = vmatprep.subr.mxu0 0.0
  %276 = vmatpush1.msra.mxu0 %v256
  %277 = vmatprep.subr.mxu0 0.0
  %278 = vmatpush1.msra.mxu0 %v257
  %279 = vmatprep.subr.mxu0 0.0
  %280 = vmatpush1.msra.mxu0 %v258
  %281 = vmatprep.subr.mxu0 0.0
  %282 = vmatpush1.msra.mxu0 %v273
  %283 = vmatprep.subr.mxu0 0.0
  %284 = vmatpush1.msra.mxu0 0.0
  %285 = vmatprep.subr.mxu0 0.0
  %286 = vmatpush1.msra.mxu0 0.0
  %287 = vmatprep.subr.mxu0 0.0
  %288 = vmatpush1.msra.mxu0 0.0
  %289 = vmatprep.subr.mxu0 0.0
  %290 = vmatpush1.msra.mxu0 0.0
  %291 = vmatprep.subr.mxu0 0.0
  %292 = vmatpush1.msra.mxu0 0.0
  %293 = vmatprep.subr.mxu0 0.0
  %294 = vmatpush1.msra.mxu0 0.0
  %295 = vmatprep.subr.mxu0 0.0
  %296 = vmatpush1.msra.mxu0 0.0
  %297 = vmatprep.subr.mxu0 0.0
  %298 = vmatpush1.msra.mxu0 0.0
  %299 = vmatprep.subr.mxu0 0.0
  %300 = vmatpush1.msra.mxu0 0.0
  %301 = vmatprep.subr.mxu0 0.0
  %302 = vmatpush1.msra.mxu0 0.0
  %303 = vmatprep.subr.mxu0 0.0
  %304 = vmatpush1.msra.mxu0 0.0
  %305 = vmatprep.subr.mxu0 0.0
  %306 = vmatpush1.msra.mxu0 0.0
  %307 = vmatprep.subr.mxu0 0.0
  %308 = vmatpush1.msra.mxu0 0.0
  %309 = vmatprep.subr.mxu0 0.0
  %310 = vmatpush1.msra.mxu0 0.0
  %311 = vmatprep.subr.mxu0 0.0
  %312 = vmatpush1.msra.mxu0 0.0
  %313 = vmatprep.subr.mxu0 0.0
  %314 = vmatpush1.msra.mxu0 0.0
  %315 = vmatprep.subr.mxu0 0.0
  %316 = vmatpush1.msra.mxu0 0.0
  %317 = vmatprep.subr.mxu0 0.0
  %318 = vmatpush1.msra.mxu0 0.0
  %319 = vmatprep.subr.mxu0 0.0
  %320 = vmatpush1.msra.mxu0 0.0
  %321 = vmatprep.subr.mxu0 0.0
  %322 = vmatpush1.msra.mxu0 0.0
  %323 = vmatprep.subr.mxu0 0.0
  %324 = vmatpush1.msra.mxu0 0.0
  %325 = vmatprep.subr.mxu0 0.0
  %326 = vmatpush1.msra.mxu0 0.0
  %327 = vmatprep.subr.mxu0 0.0
  %328 = vmatpush1.msra.mxu0 0.0
  %329 = vmatprep.subr.mxu0 0.0
  %330 = vmatpush1.msra.mxu0 0.0
  %331 = vmatprep.subr.mxu0 0.0
  %332 = vmatpush1.msra.mxu0 0.0
  %333 = vmatprep.subr.mxu0 0.0
  %334 = vmatpush1.msra.mxu0 0.0
  %335 = vmatprep.subr.mxu0 0.0
  %336 = vmatpush1.msra.mxu0 0.0
  %337 = vmatprep.subr.mxu0 0.0
  %338 = vmatpush1.msra.mxu0 0.0
  %339 = vmatprep.mubr.f32.mxu0 0.0
  %340 = vmatmul.mubr.f32.gmra.mrb[0].mxu0 %v269
  %v341 = vpop.f32.mrb[0].mxu0
  %v342 = vadd.f32 %v265, %v341
  %v343 = vpop.f32.mrb[0].mxu0
  %344 = vdwg.mxu0
  %v345 = vmax.f32 %v342, 0.0
  %v346 = vld [vmem:[%s8] sm:$0xff]
  %v347 = vld [vmem:[%s8 + $0x8] sm:$0xff]
  %v348 = vld [vmem:[%s9] sm:$0xff]
  %v349 = vld [vmem:[%s9 + $0x8] sm:$0xff]
  %vm350 = vcmask 130048
  %v352 = vsel %vm350, %v345, 0
  %354 = vmatprep.subr.mxu0 0.0
  %355 = vmatpush1.msra.mxu0 %v348
  %356 = vmatprep.subr.mxu0 0.0
  %357 = vmatpush1.msra.mxu0 %v349
  %358 = vmatprep.subr.mxu0 0.0
  %359 = vmatpush1.msra.mxu0 0.0
  %360 = vmatprep.subr.mxu0 0.0
  %361 = vmatpush1.msra.mxu0 0.0
  %362 = vmatprep.subr.mxu0 0.0
  %363 = vmatpush1.msra.mxu0 0.0
  %364 = vmatprep.subr.mxu0 0.0
  %365 = vmatpush1.msra.mxu0 0.0
  %366 = vmatprep.subr.mxu0 0.0
  %367 = vmatpush1.msra.mxu0 0.0
  %368 = vmatprep.subr.mxu0 0.0
  %369 = vmatpush1.msra.mxu0 0.0
  %370 = vmatprep.subr.mxu0 0.0
  %371 = vmatpush1.msra.mxu0 0.0
  %372 = vmatprep.subr.mxu0 0.0
  %373 = vmatpush1.msra.mxu0 0.0
  %374 = vmatprep.subr.mxu0 0.0
  %375 = vmatpush1.msra.mxu0 0.0
  %376 = vmatprep.subr.mxu0 0.0
  %377 = vmatpush1.msra.mxu0 0.0
  %378 = vmatprep.subr.mxu0 0.0
  %379 = vmatpush1.msra.mxu0 0.0
  %380 = vmatprep.subr.mxu0 0.0
  %381 = vmatpush1.msra.mxu0 0.0
  %382 = vmatprep.subr.mxu0 0.0
  %383 = vmatpush1.msra.mxu0 0.0
  %384 = vmatprep.subr.mxu0 0.0
  %385 = vmatpush1.msra.mxu0 0.0
  %386 = vmatprep.subr.mxu0 0.0
  %387 = vmatpush1.msra.mxu0 0.0
  %388 = vmatprep.subr.mxu0 0.0
  %389 = vmatpush1.msra.mxu0 0.0
  %390 = vmatprep.subr.mxu0 0.0
  %391 = vmatpush1.msra.mxu0 0.0
  %392 = vmatprep.subr.mxu0 0.0
  %393 = vmatpush1.msra.mxu0 0.0
  %394 = vmatprep.subr.mxu0 0.0
  %395 = vmatpush1.msra.mxu0 0.0
  %396 = vmatprep.subr.mxu0 0.0
  %397 = vmatpush1.msra.mxu0 0.0
  %398 = vmatprep.subr.mxu0 0.0
  %399 = vmatpush1.msra.mxu0 0.0
  %400 = vmatprep.subr.mxu0 0.0
  %401 = vmatpush1.msra.mxu0 0.0
  %402 = vmatprep.subr.mxu0 0.0
  %403 = vmatpush1.msra.mxu0 0.0
  %404 = vmatprep.subr.mxu0 0.0
  %405 = vmatpush1.msra.mxu0 0.0
  %406 = vmatprep.subr.mxu0 0.0
  %407 = vmatpush1.msra.mxu0 0.0
  %408 = vmatprep.subr.mxu0 0.0
  %409 = vmatpush1.msra.mxu0 0.0
  %410 = vmatprep.subr.mxu0 0.0
  %411 = vmatpush1.msra.mxu0 0.0
  %412 = vmatprep.subr.mxu0 0.0
  %413 = vmatpush1.msra.mxu0 0.0
  %414 = vmatprep.subr.mxu0 0.0
  %415 = vmatpush1.msra.mxu0 0.0
  %416 = vmatprep.subr.mxu0 0.0
  %417 = vmatpush1.msra.mxu0 0.0
  %418 = vmatprep.mubr.f32.mxu0 0.0
  %419 = vmatmul.mubr.f32.gmra.mrb[0].mxu0 %v352
  %v420 = vpop.f32.mrb[0].mxu0
  %v421 = vadd.f32 0.0, %v420
  %v422 = vpop.f32.mrb[0].mxu0
  %423 = vdwg.mxu0
  %v425 = vsel %vm350, %v254, 0
  %427 = vmatprep.subr.mxu0 0.0
  %428 = vmatpush1.msra.mxu0 %v346
  %429 = vmatprep.subr.mxu0 0.0
  %430 = vmatpush1.msra.mxu0 %v347
  %431 = vmatprep.subr.mxu0 0.0
  %432 = vmatpush1.msra.mxu0 0.0
  %433 = vmatprep.subr.mxu0 0.0
  %434 = vmatpush1.msra.mxu0 0.0
  %435 = vmatprep.subr.mxu0 0.0
  %436 = vmatpush1.msra.mxu0 0.0
  %437 = vmatprep.subr.mxu0 0.0
  %438 = vmatpush1.msra.mxu0 0.0
  %439 = vmatprep.subr.mxu0 0.0
  %440 = vmatpush1.msra.mxu0 0.0
  %441 = vmatprep.subr.mxu0 0.0
  %442 = vmatpush1.msra.mxu0 0.0
  %443 = vmatprep.subr.mxu0 0.0
  %444 = vmatpush1.msra.mxu0 0.0
  %445 = vmatprep.subr.mxu0 0.0
  %446 = vmatpush1.msra.mxu0 0.0
  %447 = vmatprep.subr.mxu0 0.0
  %448 = vmatpush1.msra.mxu0 0.0
  %449 = vmatprep.subr.mxu0 0.0
  %450 = vmatpush1.msra.mxu0 0.0
  %451 = vmatprep.subr.mxu0 0.0
  %452 = vmatpush1.msra.mxu0 0.0
  %453 = vmatprep.subr.mxu0 0.0
  %454 = vmatpush1.msra.mxu0 0.0
  %455 = vmatprep.subr.mxu0 0.0
  %456 = vmatpush1.msra.mxu0 0.0
  %457 = vmatprep.subr.mxu0 0.0
  %458 = vmatpush1.msra.mxu0 0.0
  %459 = vmatprep.subr.mxu0 0.0
  %460 = vmatpush1.msra.mxu0 0.0
  %461 = vmatprep.subr.mxu0 0.0
  %462 = vmatpush1.msra.mxu0 0.0
  %463 = vmatprep.subr.mxu0 0.0
  %464 = vmatpush1.msra.mxu0 0.0
  %465 = vmatprep.subr.mxu0 0.0
  %466 = vmatpush1.msra.mxu0 0.0
  %467 = vmatprep.subr.mxu0 0.0
  %468 = vmatpush1.msra.mxu0 0.0
  %469 = vmatprep.subr.mxu0 0.0
  %470 = vmatpush1.msra.mxu0 0.0
  %471 = vmatprep.subr.mxu0 0.0
  %472 = vmatpush1.msra.mxu0 0.0
  %473 = vmatprep.subr.mxu0 0.0
  %474 = vmatpush1.msra.mxu0 0.0
  %475 = vmatprep.subr.mxu0 0.0
  %476 = vmatpush1.msra.mxu0 0.0
  %477 = vmatprep.subr.mxu0 0.0
  %478 = vmatpush1.msra.mxu0 0.0
  %479 = vmatprep.subr.mxu0 0.0
  %480 = vmatpush1.msra.mxu0 0.0
  %481 = vmatprep.subr.mxu0 0.0
  %482 = vmatpush1.msra.mxu0 0.0
  %483 = vmatprep.subr.mxu0 0.0
  %484 = vmatpush1.msra.mxu0 0.0
  %485 = vmatprep.subr.mxu0 0.0
  %486 = vmatpush1.msra.mxu0 0.0
  %487 = vmatprep.subr.mxu0 0.0
  %488 = vmatpush1.msra.mxu0 0.0
  %489 = vmatprep.subr.mxu0 0.0
  %490 = vmatpush1.msra.mxu0 0.0
  %491 = vmatprep.mubr.f32.mxu0 0.0
  %492 = vmatmul.mubr.f32.gmra.mrb[0].mxu0 %v425
  %v493 = vpop.f32.mrb[0].mxu0
  %v494 = vadd.f32 %v421, %v493
  %v495 = vpop.f32.mrb[0].mxu0
  %496 = vdwg.mxu0
  %v497 = vld [vmem:[%s10] sm:$0x1]
  %v499 = vlaneseq
  %v500 = vshrl.u32 %v499, 7
  %v501 = vsub.s32 0, %v500
  %v502 = vrot.slane %v497, %v501
  %v504 = vadd.f32 %v494, %v502
  %v505 = vmax.f32 %v504, 0.0
  %v506 = vld [vmem:[%s11] sm:$0xff]
  %v507 = vld [vmem:[%s11 + $0x8] sm:$0xff]
  %v508 = vld [vmem:[#allocation2] sm:$0x1]
  %v510 = vlaneseq
  %v511 = vshrl.u32 %v510, 7
  %v512 = vsub.s32 0, %v511
  %v513 = vrot.slane %v508, %v512
  %v516 = vsel %vm350, %v505, 0
  %518 = vmatprep.subr.mxu0 0.0
  %519 = vmatpush1.msra.mxu0 %v506
  %520 = vmatprep.subr.mxu0 0.0
  %521 = vmatpush1.msra.mxu0 %v507
  %522 = vmatprep.subr.mxu0 0.0
  %523 = vmatpush1.msra.mxu0 0.0
  %524 = vmatprep.subr.mxu0 0.0
  %525 = vmatpush1.msra.mxu0 0.0
  %526 = vmatprep.subr.mxu0 0.0
  %527 = vmatpush1.msra.mxu0 0.0
  %528 = vmatprep.subr.mxu0 0.0
  %529 = vmatpush1.msra.mxu0 0.0
  %530 = vmatprep.subr.mxu0 0.0
  %531 = vmatpush1.msra.mxu0 0.0
  %532 = vmatprep.subr.mxu0 0.0
  %533 = vmatpush1.msra.mxu0 0.0
  %534 = vmatprep.subr.mxu0 0.0
  %535 = vmatpush1.msra.mxu0 0.0
  %536 = vmatprep.subr.mxu0 0.0
  %537 = vmatpush1.msra.mxu0 0.0
  %538 = vmatprep.subr.mxu0 0.0
  %539 = vmatpush1.msra.mxu0 0.0
  %540 = vmatprep.subr.mxu0 0.0
  %541 = vmatpush1.msra.mxu0 0.0
  %542 = vmatprep.subr.mxu0 0.0
  %543 = vmatpush1.msra.mxu0 0.0
  %544 = vmatprep.subr.mxu0 0.0
  %545 = vmatpush1.msra.mxu0 0.0
  %546 = vmatprep.subr.mxu0 0.0
  %547 = vmatpush1.msra.mxu0 0.0
  %548 = vmatprep.subr.mxu0 0.0
  %549 = vmatpush1.msra.mxu0 0.0
  %550 = vmatprep.subr.mxu0 0.0
  %551 = vmatpush1.msra.mxu0 0.0
  %552 = vmatprep.subr.mxu0 0.0
  %553 = vmatpush1.msra.mxu0 0.0
  %554 = vmatprep.subr.mxu0 0.0
  %555 = vmatpush1.msra.mxu0 0.0
  %556 = vmatprep.subr.mxu0 0.0
  %557 = vmatpush1.msra.mxu0 0.0
  %558 = vmatprep.subr.mxu0 0.0
  %559 = vmatpush1.msra.mxu0 0.0
  %560 = vmatprep.subr.mxu0 0.0
  %561 = vmatpush1.msra.mxu0 0.0
  %562 = vmatprep.subr.mxu0 0.0
  %563 = vmatpush1.msra.mxu0 0.0
  %564 = vmatprep.subr.mxu0 0.0
  %565 = vmatpush1.msra.mxu0 0.0
  %566 = vmatprep.subr.mxu0 0.0
  %567 = vmatpush1.msra.mxu0 0.0
  %568 = vmatprep.subr.mxu0 0.0
  %569 = vmatpush1.msra.mxu0 0.0
  %570 = vmatprep.subr.mxu0 0.0
  %571 = vmatpush1.msra.mxu0 0.0
  %572 = vmatprep.subr.mxu0 0.0
  %573 = vmatpush1.msra.mxu0 0.0
  %574 = vmatprep.subr.mxu0 0.0
  %575 = vmatpush1.msra.mxu0 0.0
  %576 = vmatprep.subr.mxu0 0.0
  %577 = vmatpush1.msra.mxu0 0.0
  %578 = vmatprep.subr.mxu0 0.0
  %579 = vmatpush1.msra.mxu0 0.0
  %580 = vmatprep.subr.mxu0 0.0
  %581 = vmatpush1.msra.mxu0 0.0
  %582 = vmatprep.mubr.f32.mxu0 0.0
  %583 = vmatmul.mubr.f32.gmra.mrb[0].mxu0 %v516
  %v584 = vpop.f32.mrb[0].mxu0
  %v585 = vadd.f32 %v513, %v584
  %v586 = vpop.f32.mrb[0].mxu0
  %587 = vdwg.mxu0
  %vm588 = vcmask 1024
  %589 = vst.msk [vmem:[%s13] sm:$0x3] %vm588, %v585
  // Predicated region
  $region54: #{fwd.7} parent=0 // pred_check
    _
  $region55: #{fwd.7} parent=0 // pred_check_branch
    %591 = sbr.rel (0) target = $region57
  $region56: #{fwd.7} parent=0 // pred_region
    _
  $region57: #{fwd.7} parent=0 // pred_fallthru
    _
  // Predicated region
  $region58: #{fwd.7} parent=0 // pred_check
    _
  $region59: #{fwd.7} parent=0 // pred_check_branch
    %593 = sbr.rel (0) target = $region61
  $region60: #{fwd.7} parent=0 // pred_region
    _
  $region61: #{fwd.7} parent=0 // pred_fallthru
    _

// kernel: fwd.5
$region0: #{fwd.5}
  #allocation0 [shape = 'u32[]', space=smem, size = 0x4, offset = 0x4, fixed_abs, tag = 'smem constant byte address 0x4 - core index']
  #allocation1 [shape = 'u32[144,128]{1,0:T(1,128)}', space=vmem, size = 0x12000, scoped, tag = 'internal scratch']
  %s0 = inlined_call_operand.vmem [shape: bf16[2,8,1280], index: 0, kind: input, shape index: {}, may-alias: {0,1,2}]
  %s1 = inlined_call_operand.vmem [shape: bf16[2,8,1280], index: 1, kind: input, shape index: {}, may-alias: {0,1,2}]
  %s2 = inlined_call_operand.vmem [shape: bf16[2,8,1280], index: 2, kind: input, shape index: {}, may-alias: {0,1,2}]
  %s3 = inlined_call_operand.vmem [shape: bf16[1,1280], index: 3, kind: input, shape index: {}, may-alias: {3,4,5}]
  %s4 = inlined_call_operand.vmem [shape: bf16[1,1280], index: 4, kind: input, shape index: {}, may-alias: {3,4,5}]
  %s5 = inlined_call_operand.vmem [shape: bf16[1,1280], index: 5, kind: input, shape index: {}, may-alias: {3,4,5}]
  %s6 = inlined_call_operand.vmem [shape: bf16[3,16,72], index: 6, kind: input, shape index: {}]
  %s7 = inlined_call_operand.vmem [shape: f32[16,1], index: 7, kind: input, shape index: {}]
  %s8 = inlined_call_operand.vmem [shape: bf16[16,8], index: 8, kind: input, shape index: {}]
  %s9 = inlined_call_operand.vmem [shape: f32[16,1], index: 9, kind: input, shape index: {}]
  %s10 = inlined_call_operand.vmem [shape: bf16[3,16,144], index: 10, kind: input, shape index: {}]
  %s11 = inlined_call_operand.vmem [shape: f32[16,1], index: 11, kind: input, shape index: {}]
  %s12 = inlined_call_operand.vmem [shape: bf16[2,16,1280], index: 12, kind: output, shape index: {}]
  %s13 = sld [smem:[#allocation0]]
  $region115: #{fwd.5} parent=0
    _
  %s15 = ssub.s32 1, %s13
  %s16 = scalar_select 0, %s15, %s13
  $region1: #{fwd.5} parent=0
    #allocation2 [shape = 'u8[16384]{0}', space=vmem, size = 0x4000, scoped, tag = 'output window, operand 0']
    loop: start=0, step=1, limit=12
    $region2: #{fwd.5} parent=1 // loop_pre_header
      _
    $region3: #{fwd.5} parent=1 // loop_header
      %s18 = sphi 0, %s22
      %p19 = scmp.ge.s32.totalorder %s18, 12
      %s25 = sphi 0, %s37
      %s26 = sphi 0, %s33
      %s27 = sphi 0, %s25
      %s28 = sphi 0, %s26
      %s29 = sphi 0, %s27
      %s30 = sphi 0, %s28
      %s48 = sphi 0, %s50
      %s51 = sphi 0, %s48
      %s52 = sphi 0, %s51
      %s68 = sphi 0, %s52
      %s76 = sphi 0, %s78
      %s79 = sphi 0, %s76
      %s80 = sphi 0, %s79
      %s96 = sphi 0, %s80
      %s110 = sphi 0, %s112
      %s113 = sphi 0, %s110
      %s114 = sphi 0, %s113
      %s130 = sphi 0, %s114
      %s142 = sphi 0, %s144
      %s145 = sphi 0, %s142
      %s146 = sphi 0, %s145
      %s162 = sphi 0, %s146
      %s168 = sphi 0, %s170
      %s171 = sphi 0, %s168
      %s172 = sphi 0, %s171
      %s188 = sphi 0, %s172
      %s200 = sphi 0, %s202
      %s203 = sphi 0, %s200
      %s204 = sphi 0, %s203
      %s220 = sphi 0, %s204
      %s224 = sphi 0, %s224
      %s226 = sphi 0, %s224
      %s227 = sphi 0, %s226
      %s241 = sphi 0, %s227
      %s245 = sphi 0, %s245
      %s247 = sphi 0, %s245
      %s248 = sphi 0, %s247
      %s262 = sphi 0, %s248
      %s266 = sphi 0, %s266
      %s268 = sphi 0, %s266
      %s269 = sphi 0, %s268
      %s283 = sphi 0, %s269
      %s287 = sphi 0, %s287
      %s289 = sphi 0, %s287
      %s290 = sphi 0, %s289
      %s304 = sphi 0, %s290
      %s308 = sphi 0, %s308
      %s310 = sphi 0, %s308
      %s311 = sphi 0, %s310
      %s325 = sphi 0, %s311
      %s329 = sphi 0, %s329
      %s331 = sphi 0, %s329
      %s332 = sphi 0, %s331
      %s346 = sphi 0, %s332
      %s354 = sphi 0, %s356
      %s357 = sphi 0, %s354
      %s358 = sphi 0, %s357
      %s374 = sphi 0, %s358
    $region4: #{fwd.5} parent=1 // loop_header_branch
      %21 = sbr.rel (%p19) target = $region8
    $region5: #{fwd.5} parent=1 // loop_body
      %s23 = ssub.s32 %s18, 1
      %s24 = ssub.s32 %s18, 2
      %s31 = sadd.s32 1, %s26
      %p32 = scmp.ge.s32.totalorder %s31, 5
      %s33 = scalar_select %p32, 0, %s31
      %s34 = sadd.s32 1, %s25
      %s35 = scalar_select %p32, %s34, %s25
      %p36 = scmp.ge.s32.totalorder %s35, 2
      %s37 = scalar_select %p36, 0, %s35
      %s38 = ssub.s32 %s26, 1
      %p39 = scmp.gt.s32.totalorder %s38, 0
      %s40 = scalar_select %p39, %s38, 0
      %s41 = ssub.s32 %s33, 1
      %p42 = scmp.gt.s32.totalorder %s41, 0
      %s43 = scalar_select %p42, %s41, 0
      %s44 = ssub.s32 %s25, %s37
      %s45 = ssub.s32 %s40, %s43
      %s46 = sor.u32 %s44, %s45
      %p47 = scmp.eq.s32.totalorder %s46, 0
      %s49 = sadd.s32 %s48, 1
      %s50 = scalar_select %p47, %s48, %s49
      %p53 = pneg %p47
      %p54 = scmp.eq.s32.totalorder %s18, 9
      %p55 = por %p53, %p54
      %p56 = scmp.ne.s32.totalorder %s48, %s51
      %p57 = scmp.eq.s32.totalorder %s18, 0
      %p58 = por %p56, %p57
      %p59 = scmp.ne.s32.totalorder %s48, %s51
      %p60 = scmp.eq.s32.totalorder %s23, 9
      %p61 = por %p59, %p60
      %p62 = scmp.ne.s32.totalorder %s51, %s52
      %p63 = scmp.eq.s32.totalorder %s23, 0
      %p64 = por %p62, %p63
      %p65 = scmp.ne.s32.totalorder %s51, %s52
      %p66 = scmp.eq.s32.totalorder %s24, 9
      %p67 = por %p65, %p66
      %p69 = scmp.ne.s32.totalorder %s52, %s68
      %p70 = scmp.eq.s32.totalorder %s24, 0
      %p71 = por %p69, %p70
      %s72 = ssub.s32 %s25, %s37
      %s73 = ssub.s32 %s26, %s33
      %s74 = sor.u32 %s72, %s73
      %p75 = scmp.eq.s32.totalorder %s74, 0
      %s77 = sadd.s32 %s76, 1
      %s78 = scalar_select %p75, %s76, %s77
      %p81 = pneg %p75
      %p82 = scmp.eq.s32.totalorder %s18, 9
      %p83 = por %p81, %p82
      %p84 = scmp.ne.s32.totalorder %s76, %s79
      %p85 = scmp.eq.s32.totalorder %s18, 0
      %p86 = por %p84, %p85
      %p87 = scmp.ne.s32.totalorder %s76, %s79
      %p88 = scmp.eq.s32.totalorder %s23, 9
      %p89 = por %p87, %p88
      %p90 = scmp.ne.s32.totalorder %s79, %s80
      %p91 = scmp.eq.s32.totalorder %s23, 0
      %p92 = por %p90, %p91
      %p93 = scmp.ne.s32.totalorder %s79, %s80
      %p94 = scmp.eq.s32.totalorder %s24, 9
      %p95 = por %p93, %p94
      %p97 = scmp.ne.s32.totalorder %s80, %s96
      %p98 = scmp.eq.s32.totalorder %s24, 0
      %p99 = por %p97, %p98
      %s100 = sadd.s32 %s26, 1
      %p101 = scmp.lt.s32.totalorder %s100, 4
      %s102 = scalar_select %p101, %s100, 4
      %s103 = sadd.s32 %s33, 1
      %p104 = scmp.lt.s32.totalorder %s103, 4
      %s105 = scalar_select %p104, %s103, 4
      %s106 = ssub.s32 %s25, %s37
      %s107 = ssub.s32 %s102, %s105
      %s108 = sor.u32 %s106, %s107
      %p109 = scmp.eq.s32.totalorder %s108, 0
      %s111 = sadd.s32 %s110, 1
      %s112 = scalar_select %p109, %s110, %s111
      %p115 = pneg %p109
      %p116 = scmp.eq.s32.totalorder %s18, 9
      %p117 = por %p115, %p116
      %p118 = scmp.ne.s32.totalorder %s110, %s113
      %p119 = scmp.eq.s32.totalorder %s18, 0
      %p120 = por %p118, %p119
      %p121 = scmp.ne.s32.totalorder %s110, %s113
      %p122 = scmp.eq.s32.totalorder %s23, 9
      %p123 = por %p121, %p122
      %p124 = scmp.ne.s32.totalorder %s113, %s114
      %p125 = scmp.eq.s32.totalorder %s23, 0
      %p126 = por %p124, %p125
      %p127 = scmp.ne.s32.totalorder %s113, %s114
      %p128 = scmp.eq.s32.totalorder %s24, 9
      %p129 = por %p127, %p128
      %p131 = scmp.ne.s32.totalorder %s114, %s130
      %p132 = scmp.eq.s32.totalorder %s24, 0
      %p133 = por %p131, %p132
      %s134 = ssub.s32 %s26, 1
      %p135 = scmp.gt.s32.totalorder %s134, 0
      %s136 = scalar_select %p135, %s134, 0
      %s137 = ssub.s32 %s33, 1
      %p138 = scmp.gt.s32.totalorder %s137, 0
      %s139 = scalar_select %p138, %s137, 0
      %s140 = ssub.s32 %s136, %s139
      %p141 = scmp.eq.s32.totalorder %s140, 0
      %s143 = sadd.s32 %s142, 1
      %s144 = scalar_select %p141, %s142, %s143
      %p147 = pneg %p141
      %p148 = scmp.eq.s32.totalorder %s18, 9
      %p149 = por %p147, %p148
      %p150 = scmp.ne.s32.totalorder %s142, %s145
      %p151 = scmp.eq.s32.totalorder %s18, 0
      %p152 = por %p150, %p151
      %p153 = scmp.ne.s32.totalorder %s142, %s145
      %p154 = scmp.eq.s32.totalorder %s23, 9
      %p155 = por %p153, %p154
      %p156 = scmp.ne.s32.totalorder %s145, %s146
      %p157 = scmp.eq.s32.totalorder %s23, 0
      %p158 = por %p156, %p157
      %p159 = scmp.ne.s32.totalorder %s145, %s146
      %p160 = scmp.eq.s32.totalorder %s24, 9
      %p161 = por %p159, %p160
      %p163 = scmp.ne.s32.totalorder %s146, %s162
      %p164 = scmp.eq.s32.totalorder %s24, 0
      %p165 = por %p163, %p164
      %s166 = ssub.s32 %s26, %s33
      %p167 = scmp.eq.s32.totalorder %s166, 0
      %s169 = sadd.s32 %s168, 1
      %s170 = scalar_select %p167, %s168, %s169
      %p173 = pneg %p167
      %p174 = scmp.eq.s32.totalorder %s18, 9
      %p175 = por %p173, %p174
      %p176 = scmp.ne.s32.totalorder %s168, %s171
      %p177 = scmp.eq.s32.totalorder %s18, 0
      %p178 = por %p176, %p177
      %p179 = scmp.ne.s32.totalorder %s168, %s171
      %p180 = scmp.eq.s32.totalorder %s23, 9
      %p181 = por %p179, %p180
      %p182 = scmp.ne.s32.totalorder %s171, %s172
      %p183 = scmp.eq.s32.totalorder %s23, 0
      %p184 = por %p182, %p183
      %p185 = scmp.ne.s32.totalorder %s171, %s172
      %p186 = scmp.eq.s32.totalorder %s24, 9
      %p187 = por %p185, %p186
      %p189 = scmp.ne.s32.totalorder %s172, %s188
      %p190 = scmp.eq.s32.totalorder %s24, 0
      %p191 = por %p189, %p190
      %s192 = sadd.s32 %s26, 1
      %p193 = scmp.lt.s32.totalorder %s192, 4
      %s194 = scalar_select %p193, %s192, 4
      %s195 = sadd.s32 %s33, 1
      %p196 = scmp.lt.s32.totalorder %s195, 4
      %s197 = scalar_select %p196, %s195, 4
      %s198 = ssub.s32 %s194, %s197
      %p199 = scmp.eq.s32.totalorder %s198, 0
      %s201 = sadd.s32 %s200, 1
      %s202 = scalar_select %p199, %s200, %s201
      %p205 = pneg %p199
      %p206 = scmp.eq.s32.totalorder %s18, 9
      %p207 = por %p205, %p206
      %p208 = scmp.ne.s32.totalorder %s200, %s203
      %p209 = scmp.eq.s32.totalorder %s18, 0
      %p210 = por %p208, %p209
      %p211 = scmp.ne.s32.totalorder %s200, %s203
      %p212 = scmp.eq.s32.totalorder %s23, 9
      %p213 = por %p211, %p212
      %p214 = scmp.ne.s32.totalorder %s203, %s204
      %p215 = scmp.eq.s32.totalorder %s23, 0
      %p216 = por %p214, %p215
      %p217 = scmp.ne.s32.totalorder %s203, %s204
      %p218 = scmp.eq.s32.totalorder %s24, 9
      %p219 = por %p217, %p218
      %p221 = scmp.ne.s32.totalorder %s204, %s220
      %p222 = scmp.eq.s32.totalorder %s24, 0
      %p223 = por %p221, %p222
      %s225 = sadd.s32 %s224, 1
      %p228 = scmp.eq.s32.totalorder %s18, 9
      %p229 = scmp.ne.s32.totalorder %s224, %s226
      %p230 = scmp.eq.s32.totalorder %s18, 0
      %p231 = por %p229, %p230
      %p232 = scmp.ne.s32.totalorder %s224, %s226
      %p233 = scmp.eq.s32.totalorder %s23, 9
      %p234 = por %p232, %p233
      %p235 = scmp.ne.s32.totalorder %s226, %s227
      %p236 = scmp.eq.s32.totalorder %s23, 0
      %p237 = por %p235, %p236
      %p238 = scmp.ne.s32.totalorder %s226, %s227
      %p239 = scmp.eq.s32.totalorder %s24, 9
      %p240 = por %p238, %p239
      %p242 = scmp.ne.s32.totalorder %s227, %s241
      %p243 = scmp.eq.s32.totalorder %s24, 0
      %p244 = por %p242, %p243
      %s246 = sadd.s32 %s245, 1
      %p249 = scmp.eq.s32.totalorder %s18, 9
      %p250 = scmp.ne.s32.totalorder %s245, %s247
      %p251 = scmp.eq.s32.totalorder %s18, 0
      %p252 = por %p250, %p251
      %p253 = scmp.ne.s32.totalorder %s245, %s247
      %p254 = scmp.eq.s32.totalorder %s23, 9
      %p255 = por %p253, %p254
      %p256 = scmp.ne.s32.totalorder %s247, %s248
      %p257 = scmp.eq.s32.totalorder %s23, 0
      %p258 = por %p256, %p257
      %p259 = scmp.ne.s32.totalorder %s247, %s248
      %p260 = scmp.eq.s32.totalorder %s24, 9
      %p261 = por %p259, %p260
      %p263 = scmp.ne.s32.totalorder %s248, %s262
      %p264 = scmp.eq.s32.totalorder %s24, 0
      %p265 = por %p263, %p264
      %s267 = sadd.s32 %s266, 1
      %p270 = scmp.eq.s32.totalorder %s18, 9
      %p271 = scmp.ne.s32.totalorder %s266, %s268
      %p272 = scmp.eq.s32.totalorder %s18, 0
      %p273 = por %p271, %p272
      %p274 = scmp.ne.s32.totalorder %s266, %s268
      %p275 = scmp.eq.s32.totalorder %s23, 9
      %p276 = por %p274, %p275
      %p277 = scmp.ne.s32.totalorder %s268, %s269
      %p278 = scmp.eq.s32.totalorder %s23, 0
      %p279 = por %p277, %p278
      %p280 = scmp.ne.s32.totalorder %s268, %s269
      %p281 = scmp.eq.s32.totalorder %s24, 9
      %p282 = por %p280, %p281
      %p284 = scmp.ne.s32.totalorder %s269, %s283
      %p285 = scmp.eq.s32.totalorder %s24, 0
      %p286 = por %p284, %p285
      %s288 = sadd.s32 %s287, 1
      %p291 = scmp.eq.s32.totalorder %s18, 9
      %p292 = scmp.ne.s32.totalorder %s287, %s289
      %p293 = scmp.eq.s32.totalorder %s18, 0
      %p294 = por %p292, %p293
      %p295 = scmp.ne.s32.totalorder %s287, %s289
      %p296 = scmp.eq.s32.totalorder %s23, 9
      %p297 = por %p295, %p296
      %p298 = scmp.ne.s32.totalorder %s289, %s290
      %p299 = scmp.eq.s32.totalorder %s23, 0
      %p300 = por %p298, %p299
      %p301 = scmp.ne.s32.totalorder %s289, %s290
      %p302 = scmp.eq.s32.totalorder %s24, 9
      %p303 = por %p301, %p302
      %p305 = scmp.ne.s32.totalorder %s290, %s304
      %p306 = scmp.eq.s32.totalorder %s24, 0
      %p307 = por %p305, %p306
      %s309 = sadd.s32 %s308, 1
      %p312 = scmp.eq.s32.totalorder %s18, 9
      %p313 = scmp.ne.s32.totalorder %s308, %s310
      %p314 = scmp.eq.s32.totalorder %s18, 0
      %p315 = por %p313, %p314
      %p316 = scmp.ne.s32.totalorder %s308, %s310
      %p317 = scmp.eq.s32.totalorder %s23, 9
      %p318 = por %p316, %p317
      %p319 = scmp.ne.s32.totalorder %s310, %s311
      %p320 = scmp.eq.s32.totalorder %s23, 0
      %p321 = por %p319, %p320
      %p322 = scmp.ne.s32.totalorder %s310, %s311
      %p323 = scmp.eq.s32.totalorder %s24, 9
      %p324 = por %p322, %p323
      %p326 = scmp.ne.s32.totalorder %s311, %s325
      %p327 = scmp.eq.s32.totalorder %s24, 0
      %p328 = por %p326, %p327
      %s330 = sadd.s32 %s329, 1
      %p333 = scmp.eq.s32.totalorder %s18, 9
      %p334 = scmp.ne.s32.totalorder %s329, %s331
      %p335 = scmp.eq.s32.totalorder %s18, 0
      %p336 = por %p334, %p335
      %p337 = scmp.ne.s32.totalorder %s329, %s331
      %p338 = scmp.eq.s32.totalorder %s23, 9
      %p339 = por %p337, %p338
      %p340 = scmp.ne.s32.totalorder %s331, %s332
      %p341 = scmp.eq.s32.totalorder %s23, 0
      %p342 = por %p340, %p341
      %p343 = scmp.ne.s32.totalorder %s331, %s332
      %p344 = scmp.eq.s32.totalorder %s24, 9
      %p345 = por %p343, %p344
      %p347 = scmp.ne.s32.totalorder %s332, %s346
      %p348 = scmp.eq.s32.totalorder %s24, 0
      %p349 = por %p347, %p348
      %s350 = ssub.s32 %s25, %s37
      %s351 = ssub.s32 %s26, %s33
      %s352 = sor.u32 %s350, %s351
      %p353 = scmp.eq.s32.totalorder %s352, 0
      %s355 = sadd.s32 %s354, 1
      %s356 = scalar_select %p353, %s354, %s355
      %p359 = pneg %p353
      %p360 = scmp.eq.s32.totalorder %s18, 9
      %p361 = por %p359, %p360
      %p362 = scmp.ne.s32.totalorder %s354, %s357
      %p363 = scmp.eq.s32.totalorder %s18, 0
      %p364 = por %p362, %p363
      %p365 = scmp.ne.s32.totalorder %s354, %s357
      %p366 = scmp.eq.s32.totalorder %s23, 9
      %p367 = por %p365, %p366
      %p368 = scmp.ne.s32.totalorder %s357, %s358
      %p369 = scmp.eq.s32.totalorder %s23, 0
      %p370 = por %p368, %p369
      %p371 = scmp.ne.s32.totalorder %s357, %s358
      %p372 = scmp.eq.s32.totalorder %s24, 9
      %p373 = por %p371, %p372
      %p375 = scmp.ne.s32.totalorder %s358, %s374
      %p376 = scmp.eq.s32.totalorder %s24, 0
      %p377 = por %p375, %p376
      %p378 = scmp.le.s32.totalorder 1, %s18
      %p379 = scmp.lt.s32.totalorder %s18, 11
      %p380 = pnand %p378, %p379
      %p381 = pneg %p380
      // Predicated region
      $region9: #{fwd.5} parent=5 // pred_check
        _
      $region10: #{fwd.5} parent=5 // pred_check_branch
        %383 = sbr.rel (%p380) target = $region12
      $region11: #{fwd.5} parent=5 // pred_region
        %s384 = ssub.s32 %s18, 1
        // Predicated region
        $region13: #{fwd.5} parent=11 // pred_check
          %p385 = pneg %p237
        $region14: #{fwd.5} parent=11 // pred_check_branch
          %387 = sbr.rel (%p385) target = $region16
        $region15: #{fwd.5} parent=11 // pred_region
          _
        $region16: #{fwd.5} parent=11 // pred_fallthru
          _
        // Predicated region
        $region17: #{fwd.5} parent=11 // pred_check
          %p388 = pneg %p258
        $region18: #{fwd.5} parent=11 // pred_check_branch
          %390 = sbr.rel (%p388) target = $region20
        $region19: #{fwd.5} parent=11 // pred_region
          _
        $region20: #{fwd.5} parent=11 // pred_fallthru
          _
        // Predicated region
        $region21: #{fwd.5} parent=11 // pred_check
          %p391 = pneg %p279
        $region22: #{fwd.5} parent=11 // pred_check_branch
          %393 = sbr.rel (%p391) target = $region24
        $region23: #{fwd.5} parent=11 // pred_region
          _
        $region24: #{fwd.5} parent=11 // pred_fallthru
          _
        // Predicated region
        $region25: #{fwd.5} parent=11 // pred_check
          %p394 = pneg %p300
        $region26: #{fwd.5} parent=11 // pred_check_branch
          %396 = sbr.rel (%p394) target = $region28
        $region27: #{fwd.5} parent=11 // pred_region
          _
        $region28: #{fwd.5} parent=11 // pred_fallthru
          _
        // Predicated region
        $region29: #{fwd.5} parent=11 // pred_check
          %p397 = pneg %p321
        $region30: #{fwd.5} parent=11 // pred_check_branch
          %399 = sbr.rel (%p397) target = $region32
        $region31: #{fwd.5} parent=11 // pred_region
          _
        $region32: #{fwd.5} parent=11 // pred_fallthru
          _
        // Predicated region
        $region33: #{fwd.5} parent=11 // pred_check
          %p400 = pneg %p342
        $region34: #{fwd.5} parent=11 // pred_check_branch
          %402 = sbr.rel (%p400) target = $region36
        $region35: #{fwd.5} parent=11 // pred_region
          _
        $region36: #{fwd.5} parent=11 // pred_fallthru
          _
      $region12: #{fwd.5} parent=5 // pred_fallthru
        _
      %p403 = scmp.lt.s32.totalorder %s18, 10
      // Predicated region
      $region37: #{fwd.5} parent=5 // pred_check
        %p404 = pneg %p403
      $region38: #{fwd.5} parent=5 // pred_check_branch
        %406 = sbr.rel (%p404) target = $region40
      $region39: #{fwd.5} parent=5 // pred_region
        // Predicated region
        $region41: #{fwd.5} parent=39 // pred_check
          %p407 = pneg %p58
        $region42: #{fwd.5} parent=39 // pred_check_branch
          %409 = sbr.rel (%p407) target = $region44
        $region43: #{fwd.5} parent=39 // pred_region
          %s410 = ssub.s32 %s26, 1
          %p411 = scmp.gt.s32.totalorder %s410, 0
          %s412 = scalar_select %p411, %s410, 0
          %s413 = smul.u32 2, %s412
          %p414 = scmp.lt.s32.totalorder %s25, 1
          %s415 = scalar_select %p414, %s25, 1
          %p416 = scmp.lt.s32.totalorder %s413, 9
          %s417 = scalar_select %p416, %s413, 9
          %s418 = smul.addr %s415, 10
          %s419 = sadd.s32 %s417, %s418
          %s420 = smul.addr %s419, 4
          %s421 = scalar_lea.vmem %s0, %s420
          %s422 = ssub.s32 %s26, 1
          %p423 = scmp.gt.s32.totalorder %s422, 0
          %s424 = scalar_select %p423, %s422, 0
          %s425 = smul.u32 2, %s424
        $region44: #{fwd.5} parent=39 // pred_fallthru
          _
        // Predicated region
        $region45: #{fwd.5} parent=39 // pred_check
          %p426 = pneg %p86
        $region46: #{fwd.5} parent=39 // pred_check_branch
          %428 = sbr.rel (%p426) target = $region48
        $region47: #{fwd.5} parent=39 // pred_region
          %s429 = smul.u32 2, %s26
          %p430 = scmp.lt.s32.totalorder %s25, 1
          %s431 = scalar_select %p430, %s25, 1
          %p432 = scmp.lt.s32.totalorder %s429, 9
          %s433 = scalar_select %p432, %s429, 9
          %s434 = smul.addr %s431, 10
          %s435 = sadd.s32 %s433, %s434
          %s436 = smul.addr %s435, 4
          %s437 = scalar_lea.vmem %s1, %s436
          %s438 = smul.u32 2, %s26
        $region48: #{fwd.5} parent=39 // pred_fallthru
          _
        // Predicated region
        $region49: #{fwd.5} parent=39 // pred_check
          %p439 = pneg %p120
        $region50: #{fwd.5} parent=39 // pred_check_branch
          %441 = sbr.rel (%p439) target = $region52
        $region51: #{fwd.5} parent=39 // pred_region
          %s442 = sadd.s32 %s26, 1
          %p443 = scmp.lt.s32.totalorder %s442, 4
          %s444 = scalar_select %p443, %s442, 4
          %s445 = smul.u32 2, %s444
          %p446 = scmp.lt.s32.totalorder %s25, 1
          %s447 = scalar_select %p446, %s25, 1
          %p448 = scmp.lt.s32.totalorder %s445, 9
          %s449 = scalar_select %p448, %s445, 9
          %s450 = smul.addr %s447, 10
          %s451 = sadd.s32 %s449, %s450
          %s452 = smul.addr %s451, 4
          %s453 = scalar_lea.vmem %s2, %s452
          %s454 = sadd.s32 %s26, 1
          %p455 = scmp.lt.s32.totalorder %s454, 4
          %s456 = scalar_select %p455, %s454, 4
          %s457 = smul.u32 2, %s456
        $region52: #{fwd.5} parent=39 // pred_fallthru
          _
        // Predicated region
        $region53: #{fwd.5} parent=39 // pred_check
          %p458 = pneg %p152
        $region54: #{fwd.5} parent=39 // pred_check_branch
          %460 = sbr.rel (%p458) target = $region56
        $region55: #{fwd.5} parent=39 // pred_region
          %s461 = ssub.s32 %s26, 1
          %p462 = scmp.gt.s32.totalorder %s461, 0
          %s463 = scalar_select %p462, %s461, 0
          %s464 = smul.u32 2, %s463
          %p465 = scmp.lt.s32.totalorder %s464, 9
          %s466 = scalar_select %p465, %s464, 9
          %s467 = scalar_lea.vmem %s3, %s466
          %s468 = ssub.s32 %s26, 1
          %p469 = scmp.gt.s32.totalorder %s468, 0
          %s470 = scalar_select %p469, %s468, 0
          %s471 = smul.u32 2, %s470
        $region56: #{fwd.5} parent=39 // pred_fallthru
          _
        // Predicated region
        $region57: #{fwd.5} parent=39 // pred_check
          %p472 = pneg %p178
        $region58: #{fwd.5} parent=39 // pred_check_branch
          %474 = sbr.rel (%p472) target = $region60
        $region59: #{fwd.5} parent=39 // pred_region
          %s475 = smul.u32 2, %s26
          %p476 = scmp.lt.s32.totalorder %s475, 9
          %s477 = scalar_select %p476, %s475, 9
          %s478 = scalar_lea.vmem %s4, %s477
          %s479 = smul.u32 2, %s26
        $region60: #{fwd.5} parent=39 // pred_fallthru
          _
        // Predicated region
        $region61: #{fwd.5} parent=39 // pred_check
          %p480 = pneg %p210
        $region62: #{fwd.5} parent=39 // pred_check_branch
          %482 = sbr.rel (%p480) target = $region64
        $region63: #{fwd.5} parent=39 // pred_region
          %s483 = sadd.s32 %s26, 1
          %p484 = scmp.lt.s32.totalorder %s483, 4
          %s485 = scalar_select %p484, %s483, 4
          %s486 = smul.u32 2, %s485
          %p487 = scmp.lt.s32.totalorder %s486, 9
          %s488 = scalar_select %p487, %s486, 9
          %s489 = scalar_lea.vmem %s5, %s488
          %s490 = sadd.s32 %s26, 1
          %p491 = scmp.lt.s32.totalorder %s490, 4
          %s492 = scalar_select %p491, %s490, 4
          %s493 = smul.u32 2, %s492
        $region64: #{fwd.5} parent=39 // pred_fallthru
          _
      $region40: #{fwd.5} parent=5 // pred_fallthru
        _
      %p494 = scmp.le.s32.totalorder 1, %s18
      %p495 = scmp.lt.s32.totalorder %s18, 11
      %p496 = pnand %p494, %p495
      %p497 = pneg %p496
      // Predicated region
      $region65: #{fwd.5} parent=5 // pred_check
        _
      $region66: #{fwd.5} parent=5 // pred_check_branch
        %499 = sbr.rel (%p496) target = $region68
      $region67: #{fwd.5} parent=5 // pred_region
        %s500 = ssub.s32 %s18, 1
        %s501 = ssub.s32 %s28, 1
        %p502 = scmp.gt.s32.totalorder %s501, 0
        %s503 = scalar_select %p502, %s501, 0
        %s504 = smul.u32 2, %s503
        %p505 = scmp.lt.s32.totalorder %s27, 1
        %s506 = scalar_select %p505, %s27, 1
        %p507 = scmp.lt.s32.totalorder %s504, 9
        %s508 = scalar_select %p507, %s504, 9
        %s509 = smul.addr %s506, 10
        %s510 = sadd.s32 %s508, %s509
        %s511 = smul.addr %s510, 4
        %s512 = scalar_lea.vmem %s0, %s511
        %p513 = pneg %p64
        %p514 = pneg %p61
        %s515 = smul.u32 2, %s28
        %p516 = scmp.lt.s32.totalorder %s27, 1
        %s517 = scalar_select %p516, %s27, 1
        %p518 = scmp.lt.s32.totalorder %s515, 9
        %s519 = scalar_select %p518, %s515, 9
        %s520 = smul.addr %s517, 10
        %s521 = sadd.s32 %s519, %s520
        %s522 = smul.addr %s521, 4
        %s523 = scalar_lea.vmem %s1, %s522
        %p524 = pneg %p92
        %p525 = pneg %p89
        %s526 = sadd.s32 %s28, 1
        %p527 = scmp.lt.s32.totalorder %s526, 4
        %s528 = scalar_select %p527, %s526, 4
        %s529 = smul.u32 2, %s528
        %p530 = scmp.lt.s32.totalorder %s27, 1
        %s531 = scalar_select %p530, %s27, 1
        %p532 = scmp.lt.s32.totalorder %s529, 9
        %s533 = scalar_select %p532, %s529, 9
        %s534 = smul.addr %s531, 10
        %s535 = sadd.s32 %s533, %s534
        %s536 = smul.addr %s535, 4
        %s537 = scalar_lea.vmem %s2, %s536
        %p538 = pneg %p126
        %p539 = pneg %p123
        %s540 = ssub.s32 %s28, 1
        %p541 = scmp.gt.s32.totalorder %s540, 0
        %s542 = scalar_select %p541, %s540, 0
        %s543 = smul.u32 2, %s542
        %p544 = scmp.lt.s32.totalorder %s543, 9
        %s545 = scalar_select %p544, %s543, 9
        %s546 = scalar_lea.vmem %s3, %s545
        %p547 = pneg %p158
        %p548 = pneg %p155
        %s549 = smul.u32 2, %s28
        %p550 = scmp.lt.s32.totalorder %s549, 9
        %s551 = scalar_select %p550, %s549, 9
        %s552 = scalar_lea.vmem %s4, %s551
        %p553 = pneg %p184
        %p554 = pneg %p181
        %s555 = sadd.s32 %s28, 1
        %p556 = scmp.lt.s32.totalorder %s555, 4
        %s557 = scalar_select %p556, %s555, 4
        %s558 = smul.u32 2, %s557
        %p559 = scmp.lt.s32.totalorder %s558, 9
        %s560 = scalar_select %p559, %s558, 9
        %s561 = scalar_lea.vmem %s5, %s560
        %p562 = pneg %p216
        %p563 = pneg %p213
        %p564 = pneg %p237
        %p565 = pneg %p234
        %p566 = pneg %p258
        %p567 = pneg %p255
        %p568 = pneg %p279
        %p569 = pneg %p276
        %p570 = pneg %p300
        %p571 = pneg %p297
        %p572 = pneg %p321
        %p573 = pneg %p318
        %p574 = pneg %p342
        %p575 = pneg %p339
        %p576 = pneg %p370
        %p577 = pneg %p367
        %s578 = sand.u32 %s357, 1
        %s579 = sand.u32 %s357, 1
        %s580 = smul.addr %s579, 16
        %s581 = scalar_lea.vmem [#allocation2], %s580
        %s582 = ssub.s32 %s28, 1
        %p583 = scmp.gt.s32.totalorder %s582, 0
        %s584 = scalar_select %p583, %s582, 0
        %s585 = smul.u32 2, %s584
        %p586 = scmp.lt.s32.totalorder %s27, 1
        %s587 = scalar_select %p586, %s27, 1
        %p588 = scmp.lt.s32.totalorder %s585, 9
        %s589 = scalar_select %p588, %s585, 9
        %s590 = smul.addr %s587, 10
        %s591 = sadd.s32 %s589, %s590
        %s592 = smul.addr %s591, 4
        %s593 = scalar_lea.vmem %s0, %s592
        %s594 = ssub.s32 %s28, 1
        %p595 = scmp.gt.s32.totalorder %s594, 0
        %s596 = scalar_select %p595, %s594, 0
        %s597 = smul.u32 2, %s596
        %s598 = smul.u32 2, %s28
        %p599 = scmp.lt.s32.totalorder %s27, 1
        %s600 = scalar_select %p599, %s27, 1
        %p601 = scmp.lt.s32.totalorder %s598, 9
        %s602 = scalar_select %p601, %s598, 9
        %s603 = smul.addr %s600, 10
        %s604 = sadd.s32 %s602, %s603
        %s605 = smul.addr %s604, 4
        %s606 = scalar_lea.vmem %s1, %s605
        %s607 = smul.u32 2, %s28
        %s608 = sadd.s32 %s28, 1
        %p609 = scmp.lt.s32.totalorder %s608, 4
        %s610 = scalar_select %p609, %s608, 4
        %s611 = smul.u32 2, %s610
        %p612 = scmp.lt.s32.totalorder %s27, 1
        %s613 = scalar_select %p612, %s27, 1
        %p614 = scmp.lt.s32.totalorder %s611, 9
        %s615 = scalar_select %p614, %s611, 9
        %s616 = smul.addr %s613, 10
        %s617 = sadd.s32 %s615, %s616
        %s618 = smul.addr %s617, 4
        %s619 = scalar_lea.vmem %s2, %s618
        %s620 = sadd.s32 %s28, 1
        %p621 = scmp.lt.s32.totalorder %s620, 4
        %s622 = scalar_select %p621, %s620, 4
        %s623 = smul.u32 2, %s622
        %s624 = ssub.s32 %s28, 1
        %p625 = scmp.gt.s32.totalorder %s624, 0
        %s626 = scalar_select %p625, %s624, 0
        %s627 = smul.u32 2, %s626
        %p628 = scmp.lt.s32.totalorder %s627, 9
        %s629 = scalar_select %p628, %s627, 9
        %s630 = scalar_lea.vmem %s3, %s629
        %s631 = ssub.s32 %s28, 1
        %p632 = scmp.gt.s32.totalorder %s631, 0
        %s633 = scalar_select %p632, %s631, 0
        %s634 = smul.u32 2, %s633
        %s635 = smul.u32 2, %s28
        %p636 = scmp.lt.s32.totalorder %s635, 9
        %s637 = scalar_select %p636, %s635, 9
        %s638 = scalar_lea.vmem %s4, %s637
        %s639 = smul.u32 2, %s28
        %s640 = sadd.s32 %s28, 1
        %p641 = scmp.lt.s32.totalorder %s640, 4
        %s642 = scalar_select %p641, %s640, 4
        %s643 = smul.u32 2, %s642
        %p644 = scmp.lt.s32.totalorder %s643, 9
        %s645 = scalar_select %p644, %s643, 9
        %s646 = scalar_lea.vmem %s5, %s645
        %s647 = sadd.s32 %s28, 1
        %p648 = scmp.lt.s32.totalorder %s647, 4
        %s649 = scalar_select %p648, %s647, 4
        %s650 = smul.u32 2, %s649
        %s651 = smul.u32 2, %s28
        %v653 = vld [vmem:[%s593] sm:$0xff]
        %v654 = vld [vmem:[%s606] sm:$0xff]
        %v655 = vld [vmem:[%s619] sm:$0xff]
        %v657 = vunpack.c.l.b16 %v653
        %v658 = vunpack.c.h.b16 %v653
        %v659 = vpack.c.b16 %v657, %v657
        %v660 = vpack.c.b16 %v658, %v658
        %v662 = vunpack.c.l.b16 %v654
        %v663 = vunpack.c.h.b16 %v654
        %v664 = vpack.c.b16 %v662, %v662
        %v665 = vpack.c.b16 %v663, %v663
        %v667 = vunpack.c.l.b16 %v655
        %v668 = vunpack.c.h.b16 %v655
        %v669 = vpack.c.b16 %v667, %v667
        %v670 = vpack.c.b16 %v668, %v668
        %v671 = vld [vmem:[%s630] sm:$0x3]
        %v672 = vld [vmem:[%s638] sm:$0x3]
        %v673 = vld [vmem:[%s646] sm:$0x3]
        %v676 = vunpack.c.l.s4 1966171168
        %v677 = vunpack.c.0.s8 %v676
        %v678 = vlaneseq
        %v679 = vshrl.u32 %v678, 7
        %v680 = vsub.s32 %v677, %v679
        %v681 = vrot.slane %v671, %v680
        %v682 = vcombine.high %v681, %v681
        %v684 = vunpack.c.l.s4 1966171168
        %v685 = vunpack.c.0.s8 %v684
        %v686 = vlaneseq
        %v687 = vshrl.u32 %v686, 7
        %v688 = vsub.s32 %v685, %v687
        %v689 = vrot.slane %v681, %v688
        %v691 = vunpack.c.l.s4 1966171168
        %v692 = vunpack.c.0.s8 %v691
        %v693 = vlaneseq
        %v694 = vshrl.u32 %v693, 7
        %v695 = vsub.s32 %v692, %v694
        %v696 = vrot.slane %v682, %v695
        %v701 = vunpack.c.l.s4 1966171168
        %v702 = vunpack.c.0.s8 %v701
        %v703 = vlaneseq
        %v704 = vshrl.u32 %v703, 7
        %v705 = vsub.s32 %v702, %v704
        %v706 = vrot.slane %v672, %v705
        %v707 = vcombine.high %v706, %v706
        %v709 = vunpack.c.l.s4 1966171168
        %v710 = vunpack.c.0.s8 %v709
        %v711 = vlaneseq
        %v712 = vshrl.u32 %v711, 7
        %v713 = vsub.s32 %v710, %v712
        %v714 = vrot.slane %v706, %v713
        %v716 = vunpack.c.l.s4 1966171168
        %v717 = vunpack.c.0.s8 %v716
        %v718 = vlaneseq
        %v719 = vshrl.u32 %v718, 7
        %v720 = vsub.s32 %v717, %v719
        %v721 = vrot.slane %v707, %v720
        %v726 = vunpack.c.l.s4 1966171168
        %v727 = vunpack.c.0.s8 %v726
        %v728 = vlaneseq
        %v729 = vshrl.u32 %v728, 7
        %v730 = vsub.s32 %v727, %v729
        %v731 = vrot.slane %v673, %v730
        %v732 = vcombine.high %v731, %v731
        %v734 = vunpack.c.l.s4 1966171168
        %v735 = vunpack.c.0.s8 %v734
        %v736 = vlaneseq
        %v737 = vshrl.u32 %v736, 7
        %v738 = vsub.s32 %v735, %v737
        %v739 = vrot.slane %v731, %v738
        %v741 = vunpack.c.l.s4 1966171168
        %v742 = vunpack.c.0.s8 %v741
        %v743 = vlaneseq
        %v744 = vshrl.u32 %v743, 7
        %v745 = vsub.s32 %v742, %v744
        %v746 = vrot.slane %v732, %v745
        %v750 = vrot.slane 0, 4
        %v751 = vrot.slane %v659, 4
        %v752 = vrot.slane %v660, 4
        %v753 = vrot.slane %v664, 4
        %v754 = vrot.slane %v665, 4
        %v755 = vrot.slane %v669, 4
        %756 = vrot.lane.b32.xlu0 %v750, 127
        %v757 = vpop.permute.xlu0 %756
        %758 = vrot.lane.b32.xlu0 %v751, 127
        %v759 = vpop.permute.xlu0 %758
        %760 = vrot.lane.b32.xlu0 %v752, 127
        %v761 = vpop.permute.xlu0 %760
        %762 = vrot.lane.b32.xlu0 %v753, 127
        %v763 = vpop.permute.xlu0 %762
        %764 = vrot.lane.b32.xlu0 %v754, 127
        %v765 = vpop.permute.xlu0 %764
        %766 = vrot.lane.b32.xlu0 %v755, 127
        %v767 = vpop.permute.xlu0 %766
        %vm768 = vcmask 1039360
        %v769 = vsel %vm768, %v757, %v759
        %v770 = vsel %vm768, %v759, %v761
        %v771 = vsel %vm768, %v761, %v763
        %v772 = vsel %vm768, %v763, %v765
        %v773 = vsel %vm768, %v765, %v767
        %774 = vrot.lane.b32.xlu0 0, 126
        %v775 = vpop.permute.xlu0 %774
        %776 = vrot.lane.b32.xlu0 %v659, 126
        %v777 = vpop.permute.xlu0 %776
        %778 = vrot.lane.b32.xlu0 %v660, 126
        %v779 = vpop.permute.xlu0 %778
        %780 = vrot.lane.b32.xlu0 %v664, 126
        %v781 = vpop.permute.xlu0 %780
        %782 = vrot.lane.b32.xlu0 %v665, 126
        %v783 = vpop.permute.xlu0 %782
        %784 = vrot.lane.b32.xlu0 %v669, 126
        %v785 = vpop.permute.xlu0 %784
        %vm786 = vcmask 1031168
        %v787 = vsel %vm786, %v775, %v777
        %v788 = vsel %vm786, %v777, %v779
        %v789 = vsel %vm786, %v779, %v781
        %v790 = vsel %vm786, %v781, %v783
        %v791 = vsel %vm786, %v783, %v785
        %792 = vrot.lane.b32.xlu0 %v750, 118
        %v793 = vpop.permute.xlu0 %792
        %794 = vrot.lane.b32.xlu0 %v751, 118
        %v795 = vpop.permute.xlu0 %794
        %796 = vrot.lane.b32.xlu0 %v752, 118
        %v797 = vpop.permute.xlu0 %796
        %798 = vrot.lane.b32.xlu0 %v753, 118
        %v799 = vpop.permute.xlu0 %798
        %800 = vrot.lane.b32.xlu0 %v754, 118
        %v801 = vpop.permute.xlu0 %800
        %802 = vrot.lane.b32.xlu0 %v755, 118
        %v803 = vpop.permute.xlu0 %802
        %vm804 = vcmask 965632
        %v805 = vsel %vm804, %v793, %v795
        %v806 = vsel %vm804, %v795, %v797
        %v807 = vsel %vm804, %v797, %v799
        %v808 = vsel %vm804, %v799, %v801
        %v809 = vsel %vm804, %v801, %v803
        %810 = vrot.lane.b32.xlu0 0, 117
        %v811 = vpop.permute.xlu0 %810
        %812 = vrot.lane.b32.xlu0 %v659, 117
        %v813 = vpop.permute.xlu0 %812
        %814 = vrot.lane.b32.xlu0 %v660, 117
        %v815 = vpop.permute.xlu0 %814
        %816 = vrot.lane.b32.xlu0 %v664, 117
        %v817 = vpop.permute.xlu0 %816
        %818 = vrot.lane.b32.xlu0 %v665, 117
        %v819 = vpop.permute.xlu0 %818
        %820 = vrot.lane.b32.xlu0 %v669, 117
        %v821 = vpop.permute.xlu0 %820
        %vm822 = vcmask 957440
        %v823 = vsel %vm822, %v811, %v813
        %v824 = vsel %vm822, %v813, %v815
        %v825 = vsel %vm822, %v815, %v817
        %v826 = vsel %vm822, %v817, %v819
        %v827 = vsel %vm822, %v819, %v821
        %v828 = vrot.slane %v670, 4
        %829 = vrot.lane.b32.xlu0 %v750, 116
        %v830 = vpop.permute.xlu0 %829
        %831 = vrot.lane.b32.xlu0 %v751, 116
        %v832 = vpop.permute.xlu0 %831
        %833 = vrot.lane.b32.xlu0 %v752, 116
        %v834 = vpop.permute.xlu0 %833
        %835 = vrot.lane.b32.xlu0 %v753, 116
        %v836 = vpop.permute.xlu0 %835
        %837 = vrot.lane.b32.xlu0 %v754, 116
        %v838 = vpop.permute.xlu0 %837
        %839 = vrot.lane.b32.xlu0 %v755, 116
        %v840 = vpop.permute.xlu0 %839
        %841 = vrot.lane.b32.xlu0 %v828, 116
        %v842 = vpop.permute.xlu0 %841
        %vm843 = vcmask 949248
        %v844 = vsel %vm843, %v830, %v832
        %v845 = vsel %vm843, %v832, %v834
        %v846 = vsel %vm843, %v834, %v836
        %v847 = vsel %vm843, %v836, %v838
        %v848 = vsel %vm843, %v838, %v840
        %v849 = vsel %vm843, %v840, %v842
        %850 = vrot.lane.b32.xlu0 0, 108
        %v851 = vpop.permute.xlu0 %850
        %852 = vrot.lane.b32.xlu0 %v659, 108
        %v853 = vpop.permute.xlu0 %852
        %854 = vrot.lane.b32.xlu0 %v660, 108
        %v855 = vpop.permute.xlu0 %854
        %856 = vrot.lane.b32.xlu0 %v664, 108
        %v857 = vpop.permute.xlu0 %856
        %858 = vrot.lane.b32.xlu0 %v665, 108
        %v859 = vpop.permute.xlu0 %858
        %860 = vrot.lane.b32.xlu0 %v669, 108
        %v861 = vpop.permute.xlu0 %860
        %862 = vrot.lane.b32.xlu0 %v670, 108
        %v863 = vpop.permute.xlu0 %862
        %vm864 = vcmask 883712
        %v865 = vsel %vm864, %v851, %v853
        %v866 = vsel %vm864, %v853, %v855
        %v867 = vsel %vm864, %v855, %v857
        %v868 = vsel %vm864, %v857, %v859
        %v869 = vsel %vm864, %v859, %v861
        %v870 = vsel %vm864, %v861, %v863
        %871 = vrot.lane.b32.xlu0 %v750, 107
        %v872 = vpop.permute.xlu0 %871
        %873 = vrot.lane.b32.xlu0 %v751, 107
        %v874 = vpop.permute.xlu0 %873
        %875 = vrot.lane.b32.xlu0 %v752, 107
        %v876 = vpop.permute.xlu0 %875
        %877 = vrot.lane.b32.xlu0 %v753, 107
        %v878 = vpop.permute.xlu0 %877
        %879 = vrot.lane.b32.xlu0 %v754, 107
        %v880 = vpop.permute.xlu0 %879
        %881 = vrot.lane.b32.xlu0 %v755, 107
        %v882 = vpop.permute.xlu0 %881
        %883 = vrot.lane.b32.xlu0 %v828, 107
        %v884 = vpop.permute.xlu0 %883
        %vm885 = vcmask 875520
        %v886 = vsel %vm885, %v872, %v874
        %v887 = vsel %vm885, %v874, %v876
        %v888 = vsel %vm885, %v876, %v878
        %v889 = vsel %vm885, %v878, %v880
        %v890 = vsel %vm885, %v880, %v882
        %v891 = vsel %vm885, %v882, %v884
        %892 = vrot.lane.b32.xlu0 0, 106
        %v893 = vpop.permute.xlu0 %892
        %894 = vrot.lane.b32.xlu0 %v659, 106
        %v895 = vpop.permute.xlu0 %894
        %896 = vrot.lane.b32.xlu0 %v660, 106
        %v897 = vpop.permute.xlu0 %896
        %898 = vrot.lane.b32.xlu0 %v664, 106
        %v899 = vpop.permute.xlu0 %898
        %900 = vrot.lane.b32.xlu0 %v665, 106
        %v901 = vpop.permute.xlu0 %900
        %902 = vrot.lane.b32.xlu0 %v669, 106
        %v903 = vpop.permute.xlu0 %902
        %904 = vrot.lane.b32.xlu0 %v670, 106
        %v905 = vpop.permute.xlu0 %904
        %vm906 = vcmask 867328
        %v907 = vsel %vm906, %v893, %v895
        %v908 = vsel %vm906, %v895, %v897
        %v909 = vsel %vm906, %v897, %v899
        %v910 = vsel %vm906, %v899, %v901
        %v911 = vsel %vm906, %v901, %v903
        %v912 = vsel %vm906, %v903, %v905
        %vm913 = vcmask 1043456
        %v916 = vsel %vm913, 0, %v757
        %v918 = vsel %vm913, 0, %v769
        %v921 = vsel %vm913, %v659, %v770
        %v924 = vsel %vm913, %v660, %v771
        %v927 = vsel %vm913, %v664, %v772
        %v930 = vsel %vm913, %v665, %v773
        %v933 = vsel %vm913, %v669, %v767
        %v936 = vsel %vm913, %v775, %v793
        %v939 = vsel %vm913, %v787, %v805
        %v942 = vsel %vm913, %v788, %v806
        %v945 = vsel %vm913, %v789, %v807
        %v948 = vsel %vm913, %v790, %v808
        %v951 = vsel %vm913, %v791, %v809
        %v954 = vsel %vm913, %v785, %v803
        %v957 = vsel %vm913, %v811, %v830
        %v960 = vsel %vm913, %v823, %v844
        %v963 = vsel %vm913, %v824, %v845
        %v966 = vsel %vm913, %v825, %v846
        %v969 = vsel %vm913, %v826, %v847
        %v972 = vsel %vm913, %v827, %v848
        %v975 = vsel %vm913, %v821, %v849
        %v978 = vsel %vm913, %v851, %v872
        %v981 = vsel %vm913, %v865, %v886
        %v984 = vsel %vm913, %v866, %v887
        %v987 = vsel %vm913, %v867, %v888
        %v990 = vsel %vm913, %v868, %v889
        %v993 = vsel %vm913, %v869, %v890
        %v996 = vsel %vm913, %v870, %v891
        %v997 = vld [vmem:[%s6] sm:$0xf]
        %v998 = vld [vmem:[%s6 + $0x4] sm:$0xf]
        %999 = vrot.lane.b32.xlu0 %v828, 127
        %v1000 = vpop.permute.xlu0 %999
        %v1001 = vsel %vm768, %v767, %v1000
        %1002 = vrot.lane.b32.xlu0 %v670, 126
        %v1003 = vpop.permute.xlu0 %1002
        %v1004 = vsel %vm786, %v785, %v1003
        %1005 = vrot.lane.b32.xlu0 %v828, 118
        %v1006 = vpop.permute.xlu0 %1005
        %v1007 = vsel %vm804, %v803, %v1006
        %1008 = vrot.lane.b32.xlu0 %v670, 117
        %v1009 = vpop.permute.xlu0 %1008
        %v1010 = vsel %vm822, %v821, %v1009
        %v1011 = vsel %vm843, %v842, %v830
        %v1012 = vsel %vm864, %v863, %v851
        %v1013 = vsel %vm885, %v884, %v872
        %v1014 = vsel %vm906, %v905, %v893
        %v1016 = vsel %vm913, %v669, %v1001
        %v1019 = vsel %vm913, %v670, %v1000
        %v1022 = vsel %vm913, %v1004, %v1007
        %v1025 = vsel %vm913, %v1003, %v1006
        %v1028 = vsel %vm913, %v813, %v832
        %v1030 = vsel %vm913, %v1010, %v849
        %v1033 = vsel %vm913, %v1009, %v1011
        %v1036 = vsel %vm913, %v853, %v874
        %v1039 = vsel %vm913, %v1012, %v1013
        %s1040 = scalar_lea.vmem %s6, 8
        %v1041 = vld [vmem:[%s1040] sm:$0xf]
        %v1042 = vld [vmem:[%s1040 + $0x4] sm:$0xf]
        %v1045 = vunpack.c.l.b16 %v1041
        %v1046 = vunpack.c.l.b16 %v1042
        %v1047 = vpack.c.b16 %v1046, %v1045
        %1076 = vrot.lane.b32.xlu0 %v918, 11
        %v1077 = vpop.permute.xlu0 %1076
        %1078 = vrot.lane.b32.xlu0 %v921, 11
        %v1079 = vpop.permute.xlu0 %1078
        %1080 = vrot.lane.b32.xlu0 %v924, 11
        %v1081 = vpop.permute.xlu0 %1080
        %1082 = vrot.lane.b32.xlu0 %v927, 11
        %v1083 = vpop.permute.xlu0 %1082
        %1084 = vrot.lane.b32.xlu0 %v930, 11
        %v1085 = vpop.permute.xlu0 %1084
        %1086 = vrot.lane.b32.xlu0 %v1016, 11
        %v1087 = vpop.permute.xlu0 %1086
        %1088 = vrot.lane.b32.xlu0 %v1019, 11
        %v1089 = vpop.permute.xlu0 %1088
        %1090 = vrot.lane.b32.xlu0 %v939, 11
        %v1091 = vpop.permute.xlu0 %1090
        %1092 = vrot.lane.b32.xlu0 %v942, 11
        %v1093 = vpop.permute.xlu0 %1092
        %1094 = vrot.lane.b32.xlu0 %v945, 11
        %v1095 = vpop.permute.xlu0 %1094
        %1096 = vrot.lane.b32.xlu0 %v948, 11
        %v1097 = vpop.permute.xlu0 %1096
        %1098 = vrot.lane.b32.xlu0 %v951, 11
        %v1099 = vpop.permute.xlu0 %1098
        %1100 = vrot.lane.b32.xlu0 %v1022, 11
        %v1101 = vpop.permute.xlu0 %1100
        %1102 = vrot.lane.b32.xlu0 %v1025, 11
        %v1103 = vpop.permute.xlu0 %1102
        %1104 = vrot.lane.b32.xlu0 %v1028, 11
        %v1105 = vpop.permute.xlu0 %1104
        %1106 = vrot.lane.b32.xlu0 %v963, 11
        %v1107 = vpop.permute.xlu0 %1106
        %1108 = vrot.lane.b32.xlu0 %v966, 11
        %v1109 = vpop.permute.xlu0 %1108
        %1110 = vrot.lane.b32.xlu0 %v969, 11
        %v1111 = vpop.permute.xlu0 %1110
        %1112 = vrot.lane.b32.xlu0 %v972, 11
        %v1113 = vpop.permute.xlu0 %1112
        %1114 = vrot.lane.b32.xlu0 %v1030, 11
        %v1115 = vpop.permute.xlu0 %1114
        %1116 = vrot.lane.b32.xlu0 %v1033, 11
        %v1117 = vpop.permute.xlu0 %1116
        %1118 = vrot.lane.b32.xlu0 %v1036, 11
        %v1119 = vpop.permute.xlu0 %1118
        %1120 = vrot.lane.b32.xlu0 %v984, 11
        %v1121 = vpop.permute.xlu0 %1120
        %1122 = vrot.lane.b32.xlu0 %v987, 11
        %v1123 = vpop.permute.xlu0 %1122
        %1124 = vrot.lane.b32.xlu0 %v990, 11
        %v1125 = vpop.permute.xlu0 %1124
        %1126 = vrot.lane.b32.xlu0 %v993, 11
        %v1127 = vpop.permute.xlu0 %1126
        %1128 = vrot.lane.b32.xlu0 %v996, 11
        %v1129 = vpop.permute.xlu0 %1128
        %1130 = vrot.lane.b32.xlu0 %v1039, 11
        %v1131 = vpop.permute.xlu0 %1130
        %1132 = vrot.lane.b32.xlu0 %v895, 11
        %v1133 = vpop.permute.xlu0 %1132
        %1134 = vrot.lane.b32.xlu0 %v908, 11
        %v1135 = vpop.permute.xlu0 %1134
        %1136 = vrot.lane.b32.xlu0 %v909, 11
        %v1137 = vpop.permute.xlu0 %1136
        %1138 = vrot.lane.b32.xlu0 %v910, 11
        %v1139 = vpop.permute.xlu0 %1138
        %1140 = vrot.lane.b32.xlu0 %v911, 11
        %v1141 = vpop.permute.xlu0 %1140
        %1142 = vrot.lane.b32.xlu0 %v912, 11
        %v1143 = vpop.permute.xlu0 %1142
        %1144 = vrot.lane.b32.xlu0 %v1014, 11
        %v1145 = vpop.permute.xlu0 %1144
        %vm1146 = vcmask 89088
        %v1147 = vsel %vm1146, %v1077, %v1079
        %v1148 = vsel %vm1146, %v1079, %v1081
        %v1149 = vsel %vm1146, %v1081, %v1083
        %v1150 = vsel %vm1146, %v1083, %v1085
        %v1151 = vsel %vm1146, %v1085, %v1087
        %v1152 = vsel %vm1146, %v1087, %v1089
        %v1153 = vsel %vm1146, %v1091, %v1093
        %v1154 = vsel %vm1146, %v1093, %v1095
        %v1155 = vsel %vm1146, %v1095, %v1097
        %v1156 = vsel %vm1146, %v1097, %v1099
        %v1157 = vsel %vm1146, %v1099, %v1101
        %v1158 = vsel %vm1146, %v1101, %v1103
        %v1159 = vsel %vm1146, %v1105, %v1107
        %v1160 = vsel %vm1146, %v1107, %v1109
        %v1161 = vsel %vm1146, %v1109, %v1111
        %v1162 = vsel %vm1146, %v1111, %v1113
        %v1163 = vsel %vm1146, %v1113, %v1115
        %v1164 = vsel %vm1146, %v1115, %v1117
        %v1165 = vsel %vm1146, %v1119, %v1121
        %v1166 = vsel %vm1146, %v1121, %v1123
        %v1167 = vsel %vm1146, %v1123, %v1125
        %v1168 = vsel %vm1146, %v1125, %v1127
        %v1169 = vsel %vm1146, %v1127, %v1129
        %v1170 = vsel %vm1146, %v1129, %v1131
        %v1171 = vsel %vm1146, %v1133, %v1135
        %v1172 = vsel %vm1146, %v1135, %v1137
        %v1173 = vsel %vm1146, %v1137, %v1139
        %v1174 = vsel %vm1146, %v1139, %v1141
        %v1175 = vsel %vm1146, %v1141, %v1143
        %v1176 = vsel %vm1146, %v1143, %v1145
        %vm1201 = vcmask 588800
        %v1203 = vsel %vm1201, %v1047, 0
        %v1206 = vsel %vm913, %v1171, 0
        %v1209 = vsel %vm913, %v1172, 0
        %v1212 = vsel %vm913, %v1173, 0
        %v1215 = vsel %vm913, %v1174, 0
        %v1218 = vsel %vm913, %v1175, 0
        %v1221 = vsel %vm913, %v1176, 0
        %1223 = vmatprep.subr.bf16.mxu0 %v1148
        %1224 = vmatpush1.bf16.msra.mxu0 %v1147
        %1225 = vmatprep.subr.bf16.mxu0 %v1154
        %1226 = vmatpush1.bf16.msra.mxu0 %v1153
        %1227 = vmatprep.subr.bf16.mxu0 %v1160
        %1228 = vmatpush1.bf16.msra.mxu0 %v1159
        %1229 = vmatprep.subr.bf16.mxu0 %v1166
        %1230 = vmatpush1.bf16.msra.mxu0 %v1165
        %1231 = vmatprep.subr.bf16.mxu0 %v1209
        %1232 = vmatpush1.bf16.msra.mxu0 %v1206
        %1233 = vmatprep.subr.bf16.mxu0 0
        %1234 = vmatpush1.bf16.msra.mxu0 0
        %1235 = vmatprep.subr.bf16.mxu0 0
        %1236 = vmatpush1.bf16.msra.mxu0 0
        %1237 = vmatprep.subr.bf16.mxu0 0
        %1238 = vmatpush1.bf16.msra.mxu0 0
        %1239 = vmatprep.subr.bf16.mxu0 0
        %1240 = vmatpush1.bf16.msra.mxu0 0
        %1241 = vmatprep.subr.bf16.mxu0 0
        %1242 = vmatpush1.bf16.msra.mxu0 0
        %1243 = vmatprep.subr.bf16.mxu0 0
        %1244 = vmatpush1.bf16.msra.mxu0 0
        %1245 = vmatprep.subr.bf16.mxu0 0
        %1246 = vmatpush1.bf16.msra.mxu0 0
        %1247 = vmatprep.subr.bf16.mxu0 0
        %1248 = vmatpush1.bf16.msra.mxu0 0
        %1249 = vmatprep.subr.bf16.mxu0 0
        %1250 = vmatpush1.bf16.msra.mxu0 0
        %1251 = vmatprep.subr.bf16.mxu0 0
        %1252 = vmatpush1.bf16.msra.mxu0 0
        %1253 = vmatprep.subr.bf16.mxu0 0
        %1254 = vmatpush1.bf16.msra.mxu0 0
        %1255 = vmatprep.mubr.bf16.mxu0 0
        %1256 = vmatmul.mubr.bf16.gmra.mrb[0].mxu0 %v1203
        %v1257 = vpop.f32.mrb[0].mxu0
        %v1258 = vadd.f32 0.0, %v1257
        %v1259 = vpop.f32.mrb[0].mxu0
        %v1260 = vadd.f32 0.0, %v1259
        %v1261 = vpop.f32.mrb[0].mxu0
        %v1262 = vadd.f32 0.0, %v1261
        %v1263 = vpop.f32.mrb[0].mxu0
        %v1264 = vadd.f32 0.0, %v1263
        %1265 = vdwg.mxu0
        %1266 = vmatprep.subr.bf16.mxu0 %v1150
        %1267 = vmatpush1.bf16.msra.mxu0 %v1149
        %1268 = vmatprep.subr.bf16.mxu0 %v1156
        %1269 = vmatpush1.bf16.msra.mxu0 %v1155
        %1270 = vmatprep.subr.bf16.mxu0 %v1162
        %1271 = vmatpush1.bf16.msra.mxu0 %v1161
        %1272 = vmatprep.subr.bf16.mxu0 %v1168
        %1273 = vmatpush1.bf16.msra.mxu0 %v1167
        %1274 = vmatprep.subr.bf16.mxu0 %v1215
        %1275 = vmatpush1.bf16.msra.mxu0 %v1212
        %1276 = vmatprep.subr.bf16.mxu0 0
        %1277 = vmatpush1.bf16.msra.mxu0 0
        %1278 = vmatprep.subr.bf16.mxu0 0
        %1279 = vmatpush1.bf16.msra.mxu0 0
        %1280 = vmatprep.subr.bf16.mxu0 0
        %1281 = vmatpush1.bf16.msra.mxu0 0
        %1282 = vmatprep.subr.bf16.mxu0 0
        %1283 = vmatpush1.bf16.msra.mxu0 0
        %1284 = vmatprep.subr.bf16.mxu0 0
        %1285 = vmatpush1.bf16.msra.mxu0 0
        %1286 = vmatprep.subr.bf16.mxu0 0
        %1287 = vmatpush1.bf16.msra.mxu0 0
        %1288 = vmatprep.subr.bf16.mxu0 0
        %1289 = vmatpush1.bf16.msra.mxu0 0
        %1290 = vmatprep.subr.bf16.mxu0 0
        %1291 = vmatpush1.bf16.msra.mxu0 0
        %1292 = vmatprep.subr.bf16.mxu0 0
        %1293 = vmatpush1.bf16.msra.mxu0 0
        %1294 = vmatprep.subr.bf16.mxu0 0
        %1295 = vmatpush1.bf16.msra.mxu0 0
        %1296 = vmatprep.subr.bf16.mxu0 0
        %1297 = vmatpush1.bf16.msra.mxu0 0
        %1298 = vmatprep.mubr.bf16.mxu0 0
        %1299 = vmatmul.mubr.bf16.gmra.mrb[0].mxu0 %v1203
        %v1300 = vpop.f32.mrb[0].mxu0
        %v1301 = vadd.f32 0.0, %v1300
        %v1302 = vpop.f32.mrb[0].mxu0
        %v1303 = vadd.f32 0.0, %v1302
        %v1304 = vpop.f32.mrb[0].mxu0
        %v1305 = vadd.f32 0.0, %v1304
        %v1306 = vpop.f32.mrb[0].mxu0
        %v1307 = vadd.f32 0.0, %v1306
        %1308 = vdwg.mxu0
        %1309 = vmatprep.subr.bf16.mxu0 %v1152
        %1310 = vmatpush1.bf16.msra.mxu0 %v1151
        %1311 = vmatprep.subr.bf16.mxu0 %v1158
        %1312 = vmatpush1.bf16.msra.mxu0 %v1157
        %1313 = vmatprep.subr.bf16.mxu0 %v1164
        %1314 = vmatpush1.bf16.msra.mxu0 %v1163
        %1315 = vmatprep.subr.bf16.mxu0 %v1170
        %1316 = vmatpush1.bf16.msra.mxu0 %v1169
        %1317 = vmatprep.subr.bf16.mxu0 %v1221
        %1318 = vmatpush1.bf16.msra.mxu0 %v1218
        %1319 = vmatprep.subr.bf16.mxu0 0
        %1320 = vmatpush1.bf16.msra.mxu0 0
        %1321 = vmatprep.subr.bf16.mxu0 0
        %1322 = vmatpush1.bf16.msra.mxu0 0
        %1323 = vmatprep.subr.bf16.mxu0 0
        %1324 = vmatpush1.bf16.msra.mxu0 0
        %1325 = vmatprep.subr.bf16.mxu0 0
        %1326 = vmatpush1.bf16.msra.mxu0 0
        %1327 = vmatprep.subr.bf16.mxu0 0
        %1328 = vmatpush1.bf16.msra.mxu0 0
        %1329 = vmatprep.subr.bf16.mxu0 0
        %1330 = vmatpush1.bf16.msra.mxu0 0
        %1331 = vmatprep.subr.bf16.mxu0 0
        %1332 = vmatpush1.bf16.msra.mxu0 0
        %1333 = vmatprep.subr.bf16.mxu0 0
        %1334 = vmatpush1.bf16.msra.mxu0 0
        %1335 = vmatprep.subr.bf16.mxu0 0
        %1336 = vmatpush1.bf16.msra.mxu0 0
        %1337 = vmatprep.subr.bf16.mxu0 0
        %1338 = vmatpush1.bf16.msra.mxu0 0
        %1339 = vmatprep.subr.bf16.mxu0 0
        %1340 = vmatpush1.bf16.msra.mxu0 0
        %1341 = vmatprep.mubr.bf16.mxu0 0
        %1342 = vmatmul.mubr.bf16.gmra.mrb[0].mxu0 %v1203
        %v1343 = vpop.f32.mrb[0].mxu0
        %v1344 = vadd.f32 0.0, %v1343
        %v1345 = vpop.f32.mrb[0].mxu0
        %v1346 = vadd.f32 0.0, %v1345
        %v1347 = vpop.f32.mrb[0].mxu0
        %v1348 = vadd.f32 0.0, %v1347
        %v1349 = vpop.f32.mrb[0].mxu0
        %v1350 = vadd.f32 0.0, %v1349
        %1351 = vdwg.mxu0
        %v1354 = vunpack.c.l.b16 %v997
        %v1355 = vunpack.c.l.b16 %v998
        %v1356 = vpack.c.b16 %v1355, %v1354
        %1366 = vrot.lane.b32.xlu0 %v916, 11
        %v1367 = vpop.permute.xlu0 %1366
        %1368 = vrot.lane.b32.xlu0 %v933, 11
        %v1369 = vpop.permute.xlu0 %1368
        %1370 = vrot.lane.b32.xlu0 %v936, 11
        %v1371 = vpop.permute.xlu0 %1370
        %1372 = vrot.lane.b32.xlu0 %v954, 11
        %v1373 = vpop.permute.xlu0 %1372
        %1374 = vrot.lane.b32.xlu0 %v957, 11
        %v1375 = vpop.permute.xlu0 %1374
        %1376 = vrot.lane.b32.xlu0 %v960, 11
        %v1377 = vpop.permute.xlu0 %1376
        %1378 = vrot.lane.b32.xlu0 %v975, 11
        %v1379 = vpop.permute.xlu0 %1378
        %1380 = vrot.lane.b32.xlu0 %v978, 11
        %v1381 = vpop.permute.xlu0 %1380
        %1382 = vrot.lane.b32.xlu0 %v981, 11
        %v1383 = vpop.permute.xlu0 %1382
        %1384 = vrot.lane.b32.xlu0 %v893, 11
        %v1385 = vpop.permute.xlu0 %1384
        %1386 = vrot.lane.b32.xlu0 %v907, 11
        %v1387 = vpop.permute.xlu0 %1386
        %v1388 = vsel %vm1146, %v1367, %v1077
        %v1389 = vsel %vm1146, %v1085, %v1369
        %v1390 = vsel %vm1146, %v1371, %v1091
        %v1391 = vsel %vm1146, %v1099, %v1373
        %v1392 = vsel %vm1146, %v1375, %v1377
        %v1393 = vsel %vm1146, %v1377, %v1107
        %v1394 = vsel %vm1146, %v1113, %v1379
        %v1395 = vsel %vm1146, %v1381, %v1383
        %v1396 = vsel %vm1146, %v1383, %v1121
        %v1397 = vsel %vm1146, %v1385, %v1387
        %v1398 = vsel %vm1146, %v1387, %v1135
        %v1409 = vsel %vm1201, %v1356, 0
        %v1412 = vsel %vm913, %v1397, 0
        %v1415 = vsel %vm913, %v1398, 0
        %1417 = vmatprep.subr.bf16.mxu0 %v1147
        %1418 = vmatpush1.bf16.msra.mxu0 %v1388
        %1419 = vmatprep.subr.bf16.mxu0 %v1153
        %1420 = vmatpush1.bf16.msra.mxu0 %v1390
        %1421 = vmatprep.subr.bf16.mxu0 %v1393
        %1422 = vmatpush1.bf16.msra.mxu0 %v1392
        %1423 = vmatprep.subr.bf16.mxu0 %v1396
        %1424 = vmatpush1.bf16.msra.mxu0 %v1395
        %1425 = vmatprep.subr.bf16.mxu0 %v1415
        %1426 = vmatpush1.bf16.msra.mxu0 %v1412
        %1427 = vmatprep.subr.bf16.mxu0 0
        %1428 = vmatpush1.bf16.msra.mxu0 0
        %1429 = vmatprep.subr.bf16.mxu0 0
        %1430 = vmatpush1.bf16.msra.mxu0 0
        %1431 = vmatprep.subr.bf16.mxu0 0
        %1432 = vmatpush1.bf16.msra.mxu0 0
        %1433 = vmatprep.subr.bf16.mxu0 0
        %1434 = vmatpush1.bf16.msra.mxu0 0
        %1435 = vmatprep.subr.bf16.mxu0 0
        %1436 = vmatpush1.bf16.msra.mxu0 0
        %1437 = vmatprep.subr.bf16.mxu0 0
        %1438 = vmatpush1.bf16.msra.mxu0 0
        %1439 = vmatprep.subr.bf16.mxu0 0
        %1440 = vmatpush1.bf16.msra.mxu0 0
        %1441 = vmatprep.subr.bf16.mxu0 0
        %1442 = vmatpush1.bf16.msra.mxu0 0
        %1443 = vmatprep.subr.bf16.mxu0 0
        %1444 = vmatpush1.bf16.msra.mxu0 0
        %1445 = vmatprep.subr.bf16.mxu0 0
        %1446 = vmatpush1.bf16.msra.mxu0 0
        %1447 = vmatprep.subr.bf16.mxu0 0
        %1448 = vmatpush1.bf16.msra.mxu0 0
        %1449 = vmatprep.mubr.bf16.mxu0 0
        %1450 = vmatmul.mubr.bf16.gmra.mrb[0].mxu0 %v1409
        %v1451 = vpop.f32.mrb[0].mxu0
        %v1452 = vadd.f32 %v1258, %v1451
        %v1453 = vpop.f32.mrb[0].mxu0
        %v1454 = vadd.f32 %v1260, %v1453
        %v1455 = vpop.f32.mrb[0].mxu0
        %v1456 = vadd.f32 %v1262, %v1455
        %v1457 = vpop.f32.mrb[0].mxu0
        %v1458 = vadd.f32 %v1264, %v1457
        %1459 = vdwg.mxu0
        %1460 = vmatprep.subr.bf16.mxu0 %v1149
        %1461 = vmatpush1.bf16.msra.mxu0 %v1148
        %1462 = vmatprep.subr.bf16.mxu0 %v1155
        %1463 = vmatpush1.bf16.msra.mxu0 %v1154
        %1464 = vmatprep.subr.bf16.mxu0 %v1161
        %1465 = vmatpush1.bf16.msra.mxu0 %v1160
        %1466 = vmatprep.subr.bf16.mxu0 %v1167
        %1467 = vmatpush1.bf16.msra.mxu0 %v1166
        %1468 = vmatprep.subr.bf16.mxu0 %v1212
        %1469 = vmatpush1.bf16.msra.mxu0 %v1209
        %1470 = vmatprep.subr.bf16.mxu0 0
        %1471 = vmatpush1.bf16.msra.mxu0 0
        %1472 = vmatprep.subr.bf16.mxu0 0
        %1473 = vmatpush1.bf16.msra.mxu0 0
        %1474 = vmatprep.subr.bf16.mxu0 0
        %1475 = vmatpush1.bf16.msra.mxu0 0
        %1476 = vmatprep.subr.bf16.mxu0 0
        %1477 = vmatpush1.bf16.msra.mxu0 0
        %1478 = vmatprep.subr.bf16.mxu0 0
        %1479 = vmatpush1.bf16.msra.mxu0 0
        %1480 = vmatprep.subr.bf16.mxu0 0
        %1481 = vmatpush1.bf16.msra.mxu0 0
        %1482 = vmatprep.subr.bf16.mxu0 0
        %1483 = vmatpush1.bf16.msra.mxu0 0
        %1484 = vmatprep.subr.bf16.mxu0 0
        %1485 = vmatpush1.bf16.msra.mxu0 0
        %1486 = vmatprep.subr.bf16.mxu0 0
        %1487 = vmatpush1.bf16.msra.mxu0 0
        %1488 = vmatprep.subr.bf16.mxu0 0
        %1489 = vmatpush1.bf16.msra.mxu0 0
        %1490 = vmatprep.subr.bf16.mxu0 0
        %1491 = vmatpush1.bf16.msra.mxu0 0
        %1492 = vmatprep.mubr.bf16.mxu0 0
        %1493 = vmatmul.mubr.bf16.gmra.mrb[0].mxu0 %v1409
        %v1494 = vpop.f32.mrb[0].mxu0
        %v1495 = vadd.f32 %v1301, %v1494
        %v1496 = vpop.f32.mrb[0].mxu0
        %v1497 = vadd.f32 %v1303, %v1496
        %v1498 = vpop.f32.mrb[0].mxu0
        %v1499 = vadd.f32 %v1305, %v1498
        %v1500 = vpop.f32.mrb[0].mxu0
        %v1501 = vadd.f32 %v1307, %v1500
        %1502 = vdwg.mxu0
        %1503 = vmatprep.subr.bf16.mxu0 %v1389
        %1504 = vmatpush1.bf16.msra.mxu0 %v1150
        %1505 = vmatprep.subr.bf16.mxu0 %v1391
        %1506 = vmatpush1.bf16.msra.mxu0 %v1156
        %1507 = vmatprep.subr.bf16.mxu0 %v1394
        %1508 = vmatpush1.bf16.msra.mxu0 %v1162
        %1509 = vmatprep.subr.bf16.mxu0 %v1169
        %1510 = vmatpush1.bf16.msra.mxu0 %v1168
        %1511 = vmatprep.subr.bf16.mxu0 %v1218
        %1512 = vmatpush1.bf16.msra.mxu0 %v1215
        %1513 = vmatprep.subr.bf16.mxu0 0
        %1514 = vmatpush1.bf16.msra.mxu0 0
        %1515 = vmatprep.subr.bf16.mxu0 0
        %1516 = vmatpush1.bf16.msra.mxu0 0
        %1517 = vmatprep.subr.bf16.mxu0 0
        %1518 = vmatpush1.bf16.msra.mxu0 0
        %1519 = vmatprep.subr.bf16.mxu0 0
        %1520 = vmatpush1.bf16.msra.mxu0 0
        %1521 = vmatprep.subr.bf16.mxu0 0
        %1522 = vmatpush1.bf16.msra.mxu0 0
        %1523 = vmatprep.subr.bf16.mxu0 0
        %1524 = vmatpush1.bf16.msra.mxu0 0
        %1525 = vmatprep.subr.bf16.mxu0 0
        %1526 = vmatpush1.bf16.msra.mxu0 0
        %1527 = vmatprep.subr.bf16.mxu0 0
        %1528 = vmatpush1.bf16.msra.mxu0 0
        %1529 = vmatprep.subr.bf16.mxu0 0
        %1530 = vmatpush1.bf16.msra.mxu0 0
        %1531 = vmatprep.subr.bf16.mxu0 0
        %1532 = vmatpush1.bf16.msra.mxu0 0
        %1533 = vmatprep.subr.bf16.mxu0 0
        %1534 = vmatpush1.bf16.msra.mxu0 0
        %1535 = vmatprep.mubr.bf16.mxu0 0
        %1536 = vmatmul.mubr.bf16.gmra.mrb[0].mxu0 %v1409
        %v1537 = vpop.f32.mrb[0].mxu0
        %v1538 = vadd.f32 %v1344, %v1537
        %v1539 = vpop.f32.mrb[0].mxu0
        %v1540 = vadd.f32 %v1346, %v1539
        %v1541 = vpop.f32.mrb[0].mxu0
        %v1542 = vadd.f32 %v1348, %v1541
        %v1543 = vpop.f32.mrb[0].mxu0
        %v1544 = vadd.f32 %v1350, %v1543
        %1545 = vdwg.mxu0
        %v1546 = vsel %vm768, %v1000, %v757
        %v1547 = vsel %vm786, %v1003, %v775
        %v1548 = vsel %vm804, %v1006, %v793
        %v1549 = vsel %vm822, %v1009, %v811
        %v1551 = vsel %vm913, %v670, %v1546
        %v1554 = vsel %vm913, %v1547, %v1548
        %v1557 = vsel %vm913, %v815, %v834
        %v1559 = vsel %vm913, %v1549, %v1011
        %v1562 = vsel %vm913, %v855, %v876
        %s1563 = scalar_lea.vmem %s6, 16
        %v1564 = vld [vmem:[%s1563] sm:$0xf]
        %v1565 = vld [vmem:[%s1563 + $0x4] sm:$0xf]
        %v1568 = vunpack.c.l.b16 %v1564
        %v1569 = vunpack.c.l.b16 %v1565
        %v1570 = vpack.c.b16 %v1569, %v1568
        %1576 = vrot.lane.b32.xlu0 %v1551, 11
        %v1577 = vpop.permute.xlu0 %1576
        %1578 = vrot.lane.b32.xlu0 %v1554, 11
        %v1579 = vpop.permute.xlu0 %1578
        %1580 = vrot.lane.b32.xlu0 %v1557, 11
        %v1581 = vpop.permute.xlu0 %1580
        %1582 = vrot.lane.b32.xlu0 %v1559, 11
        %v1583 = vpop.permute.xlu0 %1582
        %1584 = vrot.lane.b32.xlu0 %v1562, 11
        %v1585 = vpop.permute.xlu0 %1584
        %1586 = vrot.lane.b32.xlu0 %v897, 11
        %v1587 = vpop.permute.xlu0 %1586
        %v1588 = vsel %vm1146, %v1087, %v1577
        %v1589 = vsel %vm1146, %v1577, %v1367
        %v1590 = vsel %vm1146, %v1101, %v1579
        %v1591 = vsel %vm1146, %v1579, %v1371
        %v1592 = vsel %vm1146, %v1581, %v1109
        %v1593 = vsel %vm1146, %v1115, %v1583
        %v1594 = vsel %vm1146, %v1583, %v1375
        %v1595 = vsel %vm1146, %v1585, %v1123
        %v1596 = vsel %vm1146, %v1131, %v1381
        %v1597 = vsel %vm1146, %v1587, %v1137
        %v1598 = vsel %vm1146, %v1145, %v1385
        %v1609 = vsel %vm1201, %v1570, 0
        %v1612 = vsel %vm913, %v1597, 0
        %v1615 = vsel %vm913, %v1598, 0
        %1617 = vmatprep.subr.bf16.mxu0 %v1149
        %1618 = vmatpush1.bf16.msra.mxu0 %v1148
        %1619 = vmatprep.subr.bf16.mxu0 %v1155
        %1620 = vmatpush1.bf16.msra.mxu0 %v1154
        %1621 = vmatprep.subr.bf16.mxu0 %v1161
        %1622 = vmatpush1.bf16.msra.mxu0 %v1592
        %1623 = vmatprep.subr.bf16.mxu0 %v1167
        %1624 = vmatpush1.bf16.msra.mxu0 %v1595
        %1625 = vmatprep.subr.bf16.mxu0 %v1212
        %1626 = vmatpush1.bf16.msra.mxu0 %v1612
        %1627 = vmatprep.subr.bf16.mxu0 0
        %1628 = vmatpush1.bf16.msra.mxu0 0
        %1629 = vmatprep.subr.bf16.mxu0 0
        %1630 = vmatpush1.bf16.msra.mxu0 0
        %1631 = vmatprep.subr.bf16.mxu0 0
        %1632 = vmatpush1.bf16.msra.mxu0 0
        %1633 = vmatprep.subr.bf16.mxu0 0
        %1634 = vmatpush1.bf16.msra.mxu0 0
        %1635 = vmatprep.subr.bf16.mxu0 0
        %1636 = vmatpush1.bf16.msra.mxu0 0
        %1637 = vmatprep.subr.bf16.mxu0 0
        %1638 = vmatpush1.bf16.msra.mxu0 0
        %1639 = vmatprep.subr.bf16.mxu0 0
        %1640 = vmatpush1.bf16.msra.mxu0 0
        %1641 = vmatprep.subr.bf16.mxu0 0
        %1642 = vmatpush1.bf16.msra.mxu0 0
        %1643 = vmatprep.subr.bf16.mxu0 0
        %1644 = vmatpush1.bf16.msra.mxu0 0
        %1645 = vmatprep.subr.bf16.mxu0 0
        %1646 = vmatpush1.bf16.msra.mxu0 0
        %1647 = vmatprep.subr.bf16.mxu0 0
        %1648 = vmatpush1.bf16.msra.mxu0 0
        %1649 = vmatprep.mubr.bf16.mxu0 0
        %1650 = vmatmul.mubr.bf16.gmra.mrb[0].mxu0 %v1609
        %v1651 = vpop.f32.mrb[0].mxu0
        %v1652 = vadd.f32 0.0, %v1651
        %v1653 = vpop.f32.mrb[0].mxu0
        %v1654 = vadd.f32 0.0, %v1653
        %v1655 = vpop.f32.mrb[0].mxu0
        %v1656 = vadd.f32 0.0, %v1655
        %v1657 = vpop.f32.mrb[0].mxu0
        %v1658 = vadd.f32 0.0, %v1657
        %1659 = vdwg.mxu0
        %1660 = vmatprep.subr.bf16.mxu0 %v1151
        %1661 = vmatpush1.bf16.msra.mxu0 %v1150
        %1662 = vmatprep.subr.bf16.mxu0 %v1157
        %1663 = vmatpush1.bf16.msra.mxu0 %v1156
        %1664 = vmatprep.subr.bf16.mxu0 %v1163
        %1665 = vmatpush1.bf16.msra.mxu0 %v1162
        %1666 = vmatprep.subr.bf16.mxu0 %v1169
        %1667 = vmatpush1.bf16.msra.mxu0 %v1168
        %1668 = vmatprep.subr.bf16.mxu0 %v1218
        %1669 = vmatpush1.bf16.msra.mxu0 %v1215
        %1670 = vmatprep.subr.bf16.mxu0 0
        %1671 = vmatpush1.bf16.msra.mxu0 0
        %1672 = vmatprep.subr.bf16.mxu0 0
        %1673 = vmatpush1.bf16.msra.mxu0 0
        %1674 = vmatprep.subr.bf16.mxu0 0
        %1675 = vmatpush1.bf16.msra.mxu0 0
        %1676 = vmatprep.subr.bf16.mxu0 0
        %1677 = vmatpush1.bf16.msra.mxu0 0
        %1678 = vmatprep.subr.bf16.mxu0 0
        %1679 = vmatpush1.bf16.msra.mxu0 0
        %1680 = vmatprep.subr.bf16.mxu0 0
        %1681 = vmatpush1.bf16.msra.mxu0 0
        %1682 = vmatprep.subr.bf16.mxu0 0
        %1683 = vmatpush1.bf16.msra.mxu0 0
        %1684 = vmatprep.subr.bf16.mxu0 0
        %1685 = vmatpush1.bf16.msra.mxu0 0
        %1686 = vmatprep.subr.bf16.mxu0 0
        %1687 = vmatpush1.bf16.msra.mxu0 0
        %1688 = vmatprep.subr.bf16.mxu0 0
        %1689 = vmatpush1.bf16.msra.mxu0 0
        %1690 = vmatprep.subr.bf16.mxu0 0
        %1691 = vmatpush1.bf16.msra.mxu0 0
        %1692 = vmatprep.mubr.bf16.mxu0 0
        %1693 = vmatmul.mubr.bf16.gmra.mrb[0].mxu0 %v1609
        %v1694 = vpop.f32.mrb[0].mxu0
        %v1695 = vadd.f32 0.0, %v1694
        %v1696 = vpop.f32.mrb[0].mxu0
        %v1697 = vadd.f32 0.0, %v1696
        %v1698 = vpop.f32.mrb[0].mxu0
        %v1699 = vadd.f32 0.0, %v1698
        %v1700 = vpop.f32.mrb[0].mxu0
        %v1701 = vadd.f32 0.0, %v1700
        %1702 = vdwg.mxu0
        %1703 = vmatprep.subr.bf16.mxu0 %v1589
        %1704 = vmatpush1.bf16.msra.mxu0 %v1588
        %1705 = vmatprep.subr.bf16.mxu0 %v1591
        %1706 = vmatpush1.bf16.msra.mxu0 %v1590
        %1707 = vmatprep.subr.bf16.mxu0 %v1594
        %1708 = vmatpush1.bf16.msra.mxu0 %v1593
        %1709 = vmatprep.subr.bf16.mxu0 %v1596
        %1710 = vmatpush1.bf16.msra.mxu0 %v1170
        %1711 = vmatprep.subr.bf16.mxu0 %v1615
        %1712 = vmatpush1.bf16.msra.mxu0 %v1221
        %1713 = vmatprep.subr.bf16.mxu0 0
        %1714 = vmatpush1.bf16.msra.mxu0 0
        %1715 = vmatprep.subr.bf16.mxu0 0
        %1716 = vmatpush1.bf16.msra.mxu0 0
        %1717 = vmatprep.subr.bf16.mxu0 0
        %1718 = vmatpush1.bf16.msra.mxu0 0
        %1719 = vmatprep.subr.bf16.mxu0 0
        %1720 = vmatpush1.bf16.msra.mxu0 0
        %1721 = vmatprep.subr.bf16.mxu0 0
        %1722 = vmatpush1.bf16.msra.mxu0 0
        %1723 = vmatprep.subr.bf16.mxu0 0
        %1724 = vmatpush1.bf16.msra.mxu0 0
        %1725 = vmatprep.subr.bf16.mxu0 0
        %1726 = vmatpush1.bf16.msra.mxu0 0
        %1727 = vmatprep.subr.bf16.mxu0 0
        %1728 = vmatpush1.bf16.msra.mxu0 0
        %1729 = vmatprep.subr.bf16.mxu0 0
        %1730 = vmatpush1.bf16.msra.mxu0 0
        %1731 = vmatprep.subr.bf16.mxu0 0
        %1732 = vmatpush1.bf16.msra.mxu0 0
        %1733 = vmatprep.subr.bf16.mxu0 0
        %1734 = vmatpush1.bf16.msra.mxu0 0
        %1735 = vmatprep.mubr.bf16.mxu0 0
        %1736 = vmatmul.mubr.bf16.gmra.mrb[0].mxu0 %v1609
        %v1737 = vpop.f32.mrb[0].mxu0
        %v1738 = vadd.f32 0.0, %v1737
        %v1739 = vpop.f32.mrb[0].mxu0
        %v1740 = vadd.f32 0.0, %v1739
        %v1741 = vpop.f32.mrb[0].mxu0
        %v1742 = vadd.f32 0.0, %v1741
        %v1743 = vpop.f32.mrb[0].mxu0
        %v1744 = vadd.f32 0.0, %v1743
        %1745 = vdwg.mxu0
        %v1746 = vadd.f32 %v1452, %v1652
        %v1747 = vadd.f32 %v1454, %v1654
        %v1748 = vadd.f32 %v1495, %v1695
        %v1749 = vadd.f32 %v1497, %v1697
        %v1750 = vadd.f32 %v1538, %v1738
        %v1751 = vadd.f32 %v1540, %v1740
        %v1752 = vadd.f32 %v1456, %v1656
        %v1753 = vadd.f32 %v1458, %v1658
        %v1754 = vadd.f32 %v1499, %v1699
        %v1755 = vadd.f32 %v1501, %v1701
        %v1756 = vadd.f32 %v1542, %v1742
        %v1757 = vadd.f32 %v1544, %v1744
        %v1758 = vld [vmem:[%s7] sm:$0xff]
        %v1759 = vld [vmem:[%s7 + $0x8] sm:$0xff]
        %1761 = vset.pattern.permute.xlu0 0
        %1762 = vperm.xlu0 %1761, %v1758
        %v1763 = vpop.permute.xlu0 %1762
        %1766 = vset.pattern.permute.xlu0 0
        %1767 = vperm.xlu0 %1766, %v1759
        %v1768 = vpop.permute.xlu0 %1767
        %v1770 = vadd.f32 %v1746, %v1763
        %v1771 = vadd.f32 %v1747, %v1763
        %v1772 = vadd.f32 %v1748, %v1763
        %v1773 = vadd.f32 %v1749, %v1763
        %v1774 = vadd.f32 %v1750, %v1763
        %v1775 = vadd.f32 %v1751, %v1763
        %v1776 = vadd.f32 %v1752, %v1768
        %v1777 = vadd.f32 %v1753, %v1768
        %v1778 = vadd.f32 %v1754, %v1768
        %v1779 = vadd.f32 %v1755, %v1768
        %v1780 = vadd.f32 %v1756, %v1768
        %v1781 = vadd.f32 %v1757, %v1768
        %v1782 = vmax.f32 %v1770, 0.0
        %v1783 = vmax.f32 %v1771, 0.0
        %v1784 = vmax.f32 %v1772, 0.0
        %v1785 = vmax.f32 %v1773, 0.0
        %v1786 = vmax.f32 %v1774, 0.0
        %v1787 = vmax.f32 %v1775, 0.0
        %v1788 = vmax.f32 %v1776, 0.0
        %v1789 = vmax.f32 %v1777, 0.0
        %v1790 = vmax.f32 %v1778, 0.0
        %v1791 = vmax.f32 %v1779, 0.0
        %v1792 = vmax.f32 %v1780, 0.0
        %v1793 = vmax.f32 %v1781, 0.0
        %v1794 = vunpack.c.l.bf16 %v689
        %v1795 = vunpack.c.l.bf16 %v696
        %v1796 = vunpack.c.l.bf16 %v714
        %v1797 = vunpack.c.l.bf16 %v721
        %v1798 = vunpack.c.l.bf16 %v739
        %v1799 = vunpack.c.l.bf16 %v746
        %v1800 = vlaneseq
        %v1801 = vshrl.u32 %v1800, 7
        %v1802 = vsub.s32 0, %v1801
        %v1803 = vrot.slane %v1794, %v1802
        %v1804 = vlaneseq
        %v1805 = vshrl.u32 %v1804, 7
        %v1806 = vsub.s32 0, %v1805
        %v1807 = vrot.slane %v1795, %v1806
        %v1808 = vlaneseq
        %v1809 = vshrl.u32 %v1808, 7
        %v1810 = vsub.s32 0, %v1809
        %v1811 = vrot.slane %v1796, %v1810
        %v1812 = vlaneseq
        %v1813 = vshrl.u32 %v1812, 7
        %v1814 = vsub.s32 0, %v1813
        %v1815 = vrot.slane %v1797, %v1814
        %v1816 = vlaneseq
        %v1817 = vshrl.u32 %v1816, 7
        %v1818 = vsub.s32 0, %v1817
        %v1819 = vrot.slane %v1798, %v1818
        %v1820 = vlaneseq
        %v1821 = vshrl.u32 %v1820, 7
        %v1822 = vsub.s32 0, %v1821
        %v1823 = vrot.slane %v1799, %v1822
        %v1824 = vmul.f32 %v1782, %v1803
        %v1825 = vmul.f32 %v1783, %v1807
        %v1826 = vmul.f32 %v1784, %v1811
        %v1827 = vmul.f32 %v1785, %v1815
        %v1828 = vmul.f32 %v1786, %v1819
        %v1829 = vmul.f32 %v1787, %v1823
        %v1830 = vmul.f32 %v1788, %v1803
        %v1831 = vmul.f32 %v1789, %v1807
        %v1832 = vmul.f32 %v1790, %v1811
        %v1833 = vmul.f32 %v1791, %v1815
        %v1834 = vmul.f32 %v1792, %v1819
        %v1835 = vmul.f32 %v1793, %v1823
        %v1836 = vpack.c.bf16 %v1830, %v1824
        %v1837 = vpack.c.bf16 %v1831, %v1825
        %v1838 = vpack.c.bf16 %v1832, %v1826
        %v1839 = vpack.c.bf16 %v1833, %v1827
        %v1840 = vpack.c.bf16 %v1834, %v1828
        %v1841 = vpack.c.bf16 %v1835, %v1829
        %v1842 = vld [vmem:[%s8] sm:$0xf]
        %v1843 = vld [vmem:[%s8 + $0x4] sm:$0xf]
        %v1844 = vld [vmem:[%s9] sm:$0xff]
        %v1845 = vld [vmem:[%s9 + $0x8] sm:$0xff]
        %1847 = vset.pattern.permute.xlu0 0
        %1848 = vperm.xlu0 %1847, %v1844
        %v1849 = vpop.permute.xlu0 %1848
        %1852 = vset.pattern.permute.xlu0 0
        %1853 = vperm.xlu0 %1852, %v1845
        %v1854 = vpop.permute.xlu0 %1853
        %v1858 = vunpack.c.l.b16 %v1842
        %v1859 = vunpack.c.l.b16 %v1843
        %v1860 = vpack.c.b16 %v1859, %v1858
        %vm1861 = vcmask 64512
        %v1863 = vsel %vm1861, %v1860, 0
        %v1865 = vsel %vm913, %v664, 0
        %v1867 = vsel %vm913, %v665, 0
        %1869 = vmatprep.subr.bf16.mxu0 %v1867
        %1870 = vmatpush1.bf16.msra.mxu0 %v1865
        %1871 = vmatprep.subr.bf16.mxu0 0
        %1872 = vmatpush1.bf16.msra.mxu0 0
        %1873 = vmatprep.subr.bf16.mxu0 0
        %1874 = vmatpush1.bf16.msra.mxu0 0
        %1875 = vmatprep.subr.bf16.mxu0 0
        %1876 = vmatpush1.bf16.msra.mxu0 0
        %1877 = vmatprep.subr.bf16.mxu0 0
        %1878 = vmatpush1.bf16.msra.mxu0 0
        %1879 = vmatprep.subr.bf16.mxu0 0
        %1880 = vmatpush1.bf16.msra.mxu0 0
        %1881 = vmatprep.subr.bf16.mxu0 0
        %1882 = vmatpush1.bf16.msra.mxu0 0
        %1883 = vmatprep.subr.bf16.mxu0 0
        %1884 = vmatpush1.bf16.msra.mxu0 0
        %1885 = vmatprep.subr.bf16.mxu0 0
        %1886 = vmatpush1.bf16.msra.mxu0 0
        %1887 = vmatprep.subr.bf16.mxu0 0
        %1888 = vmatpush1.bf16.msra.mxu0 0
        %1889 = vmatprep.subr.bf16.mxu0 0
        %1890 = vmatpush1.bf16.msra.mxu0 0
        %1891 = vmatprep.subr.bf16.mxu0 0
        %1892 = vmatpush1.bf16.msra.mxu0 0
        %1893 = vmatprep.subr.bf16.mxu0 0
        %1894 = vmatpush1.bf16.msra.mxu0 0
        %1895 = vmatprep.subr.bf16.mxu0 0
        %1896 = vmatpush1.bf16.msra.mxu0 0
        %1897 = vmatprep.subr.bf16.mxu0 0
        %1898 = vmatpush1.bf16.msra.mxu0 0
        %1899 = vmatprep.subr.bf16.mxu0 0
        %1900 = vmatpush1.bf16.msra.mxu0 0
        %1901 = vmatprep.mubr.bf16.mxu0 0
        %1902 = vmatmul.mubr.bf16.gmra.mrb[0].mxu0 %v1863
        %v1903 = vpop.f32.mrb[0].mxu0
        %v1904 = vadd.f32 %v1849, %v1903
        %v1905 = vpop.f32.mrb[0].mxu0
        %v1906 = vadd.f32 %v1849, %v1905
        %v1907 = vpop.f32.mrb[0].mxu0
        %v1908 = vadd.f32 %v1854, %v1907
        %v1909 = vpop.f32.mrb[0].mxu0
        %v1910 = vadd.f32 %v1854, %v1909
        %1911 = vdwg.mxu0
        %1915 = vrot.lane.b32.xlu0 %v1836, 127
        %v1916 = vpop.permute.xlu0 %1915
        %1917 = vrot.lane.b32.xlu0 %v1837, 127
        %v1918 = vpop.permute.xlu0 %1917
        %1919 = vrot.lane.b32.xlu0 %v1838, 127
        %v1920 = vpop.permute.xlu0 %1919
        %v1921 = vsel %vm768, %v1916, %v1918
        %v1922 = vsel %vm768, %v1918, %v1920
        %1923 = vrot.lane.b32.xlu0 %v1836, 126
        %v1924 = vpop.permute.xlu0 %1923
        %1925 = vrot.lane.b32.xlu0 %v1837, 126
        %v1926 = vpop.permute.xlu0 %1925
        %1927 = vrot.lane.b32.xlu0 %v1838, 126
        %v1928 = vpop.permute.xlu0 %1927
        %v1929 = vsel %vm786, %v1924, %v1926
        %v1930 = vsel %vm786, %v1926, %v1928
        %1931 = vrot.lane.b32.xlu0 %v1836, 118
        %v1932 = vpop.permute.xlu0 %1931
        %1933 = vrot.lane.b32.xlu0 %v1837, 118
        %v1934 = vpop.permute.xlu0 %1933
        %1935 = vrot.lane.b32.xlu0 %v1838, 118
        %v1936 = vpop.permute.xlu0 %1935
        %v1937 = vsel %vm804, %v1932, %v1934
        %v1938 = vsel %vm804, %v1934, %v1936
        %1939 = vrot.lane.b32.xlu0 %v1837, 117
        %v1940 = vpop.permute.xlu0 %1939
        %1941 = vrot.lane.b32.xlu0 %v1838, 117
        %v1942 = vpop.permute.xlu0 %1941
        %v1943 = vsel %vm822, %v1940, %v1942
        %1945 = vrot.lane.b32.xlu0 %v1837, 116
        %v1946 = vpop.permute.xlu0 %1945
        %1947 = vrot.lane.b32.xlu0 %v1838, 116
        %v1948 = vpop.permute.xlu0 %1947
        %1949 = vrot.lane.b32.xlu0 %v1839, 116
        %v1950 = vpop.permute.xlu0 %1949
        %v1951 = vsel %vm843, %v1946, %v1948
        %v1952 = vsel %vm843, %v1948, %v1950
        %1953 = vrot.lane.b32.xlu0 %v1837, 108
        %v1954 = vpop.permute.xlu0 %1953
        %1955 = vrot.lane.b32.xlu0 %v1838, 108
        %v1956 = vpop.permute.xlu0 %1955
        %1957 = vrot.lane.b32.xlu0 %v1839, 108
        %v1958 = vpop.permute.xlu0 %1957
        %v1959 = vsel %vm864, %v1954, %v1956
        %v1960 = vsel %vm864, %v1956, %v1958
        %1961 = vrot.lane.b32.xlu0 %v1837, 107
        %v1962 = vpop.permute.xlu0 %1961
        %1963 = vrot.lane.b32.xlu0 %v1838, 107
        %v1964 = vpop.permute.xlu0 %1963
        %1965 = vrot.lane.b32.xlu0 %v1839, 107
        %v1966 = vpop.permute.xlu0 %1965
        %v1967 = vsel %vm885, %v1962, %v1964
        %v1968 = vsel %vm885, %v1964, %v1966
        %1969 = vrot.lane.b32.xlu0 %v1837, 106
        %v1970 = vpop.permute.xlu0 %1969
        %1971 = vrot.lane.b32.xlu0 %v1838, 106
        %v1972 = vpop.permute.xlu0 %1971
        %1973 = vrot.lane.b32.xlu0 %v1839, 106
        %v1974 = vpop.permute.xlu0 %1973
        %v1975 = vsel %vm906, %v1970, %v1972
        %v1976 = vsel %vm906, %v1972, %v1974
        %v1977 = vld [vmem:[%s10] sm:$0xff]
        %v1978 = vld [vmem:[%s10 + $0x8] sm:$0xff]
        %1979 = vrot.lane.b32.xlu0 %v1839, 127
        %v1980 = vpop.permute.xlu0 %1979
        %v1981 = vsel %vm768, %v1920, %v1980
        %1982 = vrot.lane.b32.xlu0 %v1839, 126
        %v1983 = vpop.permute.xlu0 %1982
        %v1984 = vsel %vm786, %v1928, %v1983
        %1985 = vrot.lane.b32.xlu0 %v1839, 118
        %v1986 = vpop.permute.xlu0 %1985
        %v1987 = vsel %vm804, %v1936, %v1986
        %1988 = vrot.lane.b32.xlu0 %v1839, 117
        %v1989 = vpop.permute.xlu0 %1988
        %v1990 = vsel %vm822, %v1942, %v1989
        %1992 = vrot.lane.b32.xlu0 %v1840, 116
        %v1993 = vpop.permute.xlu0 %1992
        %v1994 = vsel %vm843, %v1950, %v1993
        %1995 = vrot.lane.b32.xlu0 %v1840, 108
        %v1996 = vpop.permute.xlu0 %1995
        %v1997 = vsel %vm864, %v1958, %v1996
        %1998 = vrot.lane.b32.xlu0 %v1840, 107
        %v1999 = vpop.permute.xlu0 %1998
        %v2000 = vsel %vm885, %v1966, %v1999
        %2001 = vrot.lane.b32.xlu0 %v1840, 106
        %v2002 = vpop.permute.xlu0 %2001
        %v2003 = vsel %vm906, %v1974, %v2002
        %s2004 = scalar_lea.vmem %s10, 16
        %v2005 = vld [vmem:[%s2004] sm:$0xff]
        %v2006 = vld [vmem:[%s2004 + $0x8] sm:$0xff]
        %v2009 = vunpack.c.l.b16 %v2005
        %v2010 = vunpack.c.h.b16 %v2005
        %v2011 = vunpack.c.l.b16 %v2006
        %v2012 = vunpack.c.h.b16 %v2006
        %v2013 = vpack.c.b16 %v2011, %v2009
        %v2014 = vpack.c.b16 %v2012, %v2010
        %2016 = vrot.lane.b32.xlu0 %v1837, 11
        %v2017 = vpop.permute.xlu0 %2016
        %2018 = vrot.lane.b32.xlu0 %v1838, 11
        %v2019 = vpop.permute.xlu0 %2018
        %2020 = vrot.lane.b32.xlu0 %v1839, 11
        %v2021 = vpop.permute.xlu0 %2020
        %2022 = vrot.lane.b32.xlu0 %v1922, 11
        %v2023 = vpop.permute.xlu0 %2022
        %2024 = vrot.lane.b32.xlu0 %v1981, 11
        %v2025 = vpop.permute.xlu0 %2024
        %2026 = vrot.lane.b32.xlu0 %v1980, 11
        %v2027 = vpop.permute.xlu0 %2026
        %2028 = vrot.lane.b32.xlu0 %v1930, 11
        %v2029 = vpop.permute.xlu0 %2028
        %2030 = vrot.lane.b32.xlu0 %v1984, 11
        %v2031 = vpop.permute.xlu0 %2030
        %2032 = vrot.lane.b32.xlu0 %v1983, 11
        %v2033 = vpop.permute.xlu0 %2032
        %2034 = vrot.lane.b32.xlu0 %v1938, 11
        %v2035 = vpop.permute.xlu0 %2034
        %2036 = vrot.lane.b32.xlu0 %v1987, 11
        %v2037 = vpop.permute.xlu0 %2036
        %2038 = vrot.lane.b32.xlu0 %v1986, 11
        %v2039 = vpop.permute.xlu0 %2038
        %2040 = vrot.lane.b32.xlu0 %v1942, 11
        %v2041 = vpop.permute.xlu0 %2040
        %2042 = vrot.lane.b32.xlu0 %v1990, 11
        %v2043 = vpop.permute.xlu0 %2042
        %2044 = vrot.lane.b32.xlu0 %v1989, 11
        %v2045 = vpop.permute.xlu0 %2044
        %2046 = vrot.lane.b32.xlu0 %v1948, 11
        %v2047 = vpop.permute.xlu0 %2046
        %2048 = vrot.lane.b32.xlu0 %v1952, 11
        %v2049 = vpop.permute.xlu0 %2048
        %2050 = vrot.lane.b32.xlu0 %v1994, 11
        %v2051 = vpop.permute.xlu0 %2050
        %2052 = vrot.lane.b32.xlu0 %v1956, 11
        %v2053 = vpop.permute.xlu0 %2052
        %2054 = vrot.lane.b32.xlu0 %v1960, 11
        %v2055 = vpop.permute.xlu0 %2054
        %2056 = vrot.lane.b32.xlu0 %v1997, 11
        %v2057 = vpop.permute.xlu0 %2056
        %2058 = vrot.lane.b32.xlu0 %v1964, 11
        %v2059 = vpop.permute.xlu0 %2058
        %2060 = vrot.lane.b32.xlu0 %v1968, 11
        %v2061 = vpop.permute.xlu0 %2060
        %2062 = vrot.lane.b32.xlu0 %v2000, 11
        %v2063 = vpop.permute.xlu0 %2062
        %2064 = vrot.lane.b32.xlu0 %v1972, 11
        %v2065 = vpop.permute.xlu0 %2064
        %2066 = vrot.lane.b32.xlu0 %v1976, 11
        %v2067 = vpop.permute.xlu0 %2066
        %2068 = vrot.lane.b32.xlu0 %v2003, 11
        %v2069 = vpop.permute.xlu0 %2068
        %v2070 = vsel %vm1146, %v2017, %v2019
        %v2071 = vsel %vm1146, %v2019, %v2021
        %v2072 = vsel %vm1146, %v2023, %v2025
        %v2073 = vsel %vm1146, %v2025, %v2027
        %v2074 = vsel %vm1146, %v2029, %v2031
        %v2075 = vsel %vm1146, %v2031, %v2033
        %v2076 = vsel %vm1146, %v2035, %v2037
        %v2077 = vsel %vm1146, %v2037, %v2039
        %v2078 = vsel %vm1146, %v2041, %v2043
        %v2079 = vsel %vm1146, %v2043, %v2045
        %v2080 = vsel %vm1146, %v2047, %v2049
        %v2081 = vsel %vm1146, %v2049, %v2051
        %v2082 = vsel %vm1146, %v2053, %v2055
        %v2083 = vsel %vm1146, %v2055, %v2057
        %v2084 = vsel %vm1146, %v2059, %v2061
        %v2085 = vsel %vm1146, %v2061, %v2063
        %v2086 = vsel %vm1146, %v2065, %v2067
        %v2087 = vsel %vm1146, %v2067, %v2069
        %vm2106 = vcmask 130048
        %v2108 = vsel %vm2106, %v2014, 0
        %2110 = vmatprep.subr.bf16.mxu0 %v2071
        %2111 = vmatpush1.bf16.msra.mxu0 %v2070
        %2112 = vmatprep.subr.bf16.mxu0 %v2073
        %2113 = vmatpush1.bf16.msra.mxu0 %v2072
        %2114 = vmatprep.subr.bf16.mxu0 %v2075
        %2115 = vmatpush1.bf16.msra.mxu0 %v2074
        %2116 = vmatprep.subr.bf16.mxu0 %v2077
        %2117 = vmatpush1.bf16.msra.mxu0 %v2076
        %2118 = vmatprep.subr.bf16.mxu0 %v2079
        %2119 = vmatpush1.bf16.msra.mxu0 %v2078
        %2120 = vmatprep.subr.bf16.mxu0 %v2081
        %2121 = vmatpush1.bf16.msra.mxu0 %v2080
        %2122 = vmatprep.subr.bf16.mxu0 %v2083
        %2123 = vmatpush1.bf16.msra.mxu0 %v2082
        %2124 = vmatprep.subr.bf16.mxu0 %v2085
        %2125 = vmatpush1.bf16.msra.mxu0 %v2084
        %2126 = vmatprep.subr.bf16.mxu0 %v2087
        %2127 = vmatpush1.bf16.msra.mxu0 %v2086
        %2128 = vmatprep.subr.bf16.mxu0 0
        %2129 = vmatpush1.bf16.msra.mxu0 0
        %2130 = vmatprep.subr.bf16.mxu0 0
        %2131 = vmatpush1.bf16.msra.mxu0 0
        %2132 = vmatprep.subr.bf16.mxu0 0
        %2133 = vmatpush1.bf16.msra.mxu0 0
        %2134 = vmatprep.subr.bf16.mxu0 0
        %2135 = vmatpush1.bf16.msra.mxu0 0
        %2136 = vmatprep.subr.bf16.mxu0 0
        %2137 = vmatpush1.bf16.msra.mxu0 0
        %2138 = vmatprep.subr.bf16.mxu0 0
        %2139 = vmatpush1.bf16.msra.mxu0 0
        %2140 = vmatprep.subr.bf16.mxu0 0
        %2141 = vmatpush1.bf16.msra.mxu0 0
        %2142 = vmatprep.mubr.bf16.mxu0 %v2108
        %2143 = vmatmul.mubr.bf16.gmra.mrb[0].mxu0 %v2013
        %v2144 = vpop.f32.mrb[0].mxu0
        %v2145 = vadd.f32 0.0, %v2144
        %v2146 = vpop.f32.mrb[0].mxu0
        %v2147 = vadd.f32 0.0, %v2146
        %v2148 = vpop.f32.mrb[0].mxu0
        %v2149 = vadd.f32 0.0, %v2148
        %v2150 = vpop.f32.mrb[0].mxu0
        %v2151 = vadd.f32 0.0, %v2150
        %2152 = vdwg.mxu0
        %v2155 = vunpack.c.l.b16 %v1977
        %v2156 = vunpack.c.h.b16 %v1977
        %v2157 = vunpack.c.l.b16 %v1978
        %v2158 = vunpack.c.h.b16 %v1978
        %v2159 = vpack.c.b16 %v2157, %v2155
        %v2160 = vpack.c.b16 %v2158, %v2156
        %2162 = vrot.lane.b32.xlu0 %v1836, 11
        %v2163 = vpop.permute.xlu0 %2162
        %2164 = vrot.lane.b32.xlu0 %v1921, 11
        %v2165 = vpop.permute.xlu0 %2164
        %2166 = vrot.lane.b32.xlu0 %v1920, 11
        %v2167 = vpop.permute.xlu0 %2166
        %2168 = vrot.lane.b32.xlu0 %v1929, 11
        %v2169 = vpop.permute.xlu0 %2168
        %2170 = vrot.lane.b32.xlu0 %v1928, 11
        %v2171 = vpop.permute.xlu0 %2170
        %2172 = vrot.lane.b32.xlu0 %v1937, 11
        %v2173 = vpop.permute.xlu0 %2172
        %2174 = vrot.lane.b32.xlu0 %v1936, 11
        %v2175 = vpop.permute.xlu0 %2174
        %2176 = vrot.lane.b32.xlu0 %v1940, 11
        %v2177 = vpop.permute.xlu0 %2176
        %2178 = vrot.lane.b32.xlu0 %v1943, 11
        %v2179 = vpop.permute.xlu0 %2178
        %2180 = vrot.lane.b32.xlu0 %v1946, 11
        %v2181 = vpop.permute.xlu0 %2180
        %2182 = vrot.lane.b32.xlu0 %v1951, 11
        %v2183 = vpop.permute.xlu0 %2182
        %2184 = vrot.lane.b32.xlu0 %v1954, 11
        %v2185 = vpop.permute.xlu0 %2184
        %2186 = vrot.lane.b32.xlu0 %v1959, 11
        %v2187 = vpop.permute.xlu0 %2186
        %2188 = vrot.lane.b32.xlu0 %v1962, 11
        %v2189 = vpop.permute.xlu0 %2188
        %2190 = vrot.lane.b32.xlu0 %v1967, 11
        %v2191 = vpop.permute.xlu0 %2190
        %2192 = vrot.lane.b32.xlu0 %v1970, 11
        %v2193 = vpop.permute.xlu0 %2192
        %2194 = vrot.lane.b32.xlu0 %v1975, 11
        %v2195 = vpop.permute.xlu0 %2194
        %v2196 = vsel %vm1146, %v2163, %v2017
        %v2197 = vsel %vm1146, %v2165, %v2023
        %v2198 = vsel %vm1146, %v2023, %v2167
        %v2199 = vsel %vm1146, %v2169, %v2029
        %v2200 = vsel %vm1146, %v2029, %v2171
        %v2201 = vsel %vm1146, %v2173, %v2035
        %v2202 = vsel %vm1146, %v2035, %v2175
        %v2203 = vsel %vm1146, %v2177, %v2179
        %v2204 = vsel %vm1146, %v2179, %v2041
        %v2205 = vsel %vm1146, %v2181, %v2183
        %v2206 = vsel %vm1146, %v2183, %v2049
        %v2207 = vsel %vm1146, %v2185, %v2187
        %v2208 = vsel %vm1146, %v2187, %v2055
        %v2209 = vsel %vm1146, %v2189, %v2191
        %v2210 = vsel %vm1146, %v2191, %v2061
        %v2211 = vsel %vm1146, %v2193, %v2195
        %v2212 = vsel %vm1146, %v2195, %v2067
        %v2231 = vsel %vm2106, %v2160, 0
        %2233 = vmatprep.subr.bf16.mxu0 %v2070
        %2234 = vmatpush1.bf16.msra.mxu0 %v2196
        %2235 = vmatprep.subr.bf16.mxu0 %v2198
        %2236 = vmatpush1.bf16.msra.mxu0 %v2197
        %2237 = vmatprep.subr.bf16.mxu0 %v2200
        %2238 = vmatpush1.bf16.msra.mxu0 %v2199
        %2239 = vmatprep.subr.bf16.mxu0 %v2202
        %2240 = vmatpush1.bf16.msra.mxu0 %v2201
        %2241 = vmatprep.subr.bf16.mxu0 %v2204
        %2242 = vmatpush1.bf16.msra.mxu0 %v2203
        %2243 = vmatprep.subr.bf16.mxu0 %v2206
        %2244 = vmatpush1.bf16.msra.mxu0 %v2205
        %2245 = vmatprep.subr.bf16.mxu0 %v2208
        %2246 = vmatpush1.bf16.msra.mxu0 %v2207
        %2247 = vmatprep.subr.bf16.mxu0 %v2210
        %2248 = vmatpush1.bf16.msra.mxu0 %v2209
        %2249 = vmatprep.subr.bf16.mxu0 %v2212
        %2250 = vmatpush1.bf16.msra.mxu0 %v2211
        %2251 = vmatprep.subr.bf16.mxu0 0
        %2252 = vmatpush1.bf16.msra.mxu0 0
        %2253 = vmatprep.subr.bf16.mxu0 0
        %2254 = vmatpush1.bf16.msra.mxu0 0
        %2255 = vmatprep.subr.bf16.mxu0 0
        %2256 = vmatpush1.bf16.msra.mxu0 0
        %2257 = vmatprep.subr.bf16.mxu0 0
        %2258 = vmatpush1.bf16.msra.mxu0 0
        %2259 = vmatprep.subr.bf16.mxu0 0
        %2260 = vmatpush1.bf16.msra.mxu0 0
        %2261 = vmatprep.subr.bf16.mxu0 0
        %2262 = vmatpush1.bf16.msra.mxu0 0
        %2263 = vmatprep.subr.bf16.mxu0 0
        %2264 = vmatpush1.bf16.msra.mxu0 0
        %2265 = vmatprep.mubr.bf16.mxu0 %v2231
        %2266 = vmatmul.mubr.bf16.gmra.mrb[0].mxu0 %v2159
        %v2267 = vpop.f32.mrb[0].mxu0
        %v2268 = vadd.f32 %v2145, %v2267
        %v2269 = vpop.f32.mrb[0].mxu0
        %v2270 = vadd.f32 %v2147, %v2269
        %v2271 = vpop.f32.mrb[0].mxu0
        %v2272 = vadd.f32 %v2149, %v2271
        %v2273 = vpop.f32.mrb[0].mxu0
        %v2274 = vadd.f32 %v2151, %v2273
        %2275 = vdwg.mxu0
        %2276 = vrot.lane.b32.xlu0 %v1840, 127
        %v2277 = vpop.permute.xlu0 %2276
        %v2278 = vsel %vm768, %v1980, %v2277
        %2279 = vrot.lane.b32.xlu0 %v1840, 126
        %v2280 = vpop.permute.xlu0 %2279
        %v2281 = vsel %vm786, %v1983, %v2280
        %2282 = vrot.lane.b32.xlu0 %v1840, 118
        %v2283 = vpop.permute.xlu0 %2282
        %v2284 = vsel %vm804, %v1986, %v2283
        %2285 = vrot.lane.b32.xlu0 %v1840, 117
        %v2286 = vpop.permute.xlu0 %2285
        %v2287 = vsel %vm822, %v1989, %v2286
        %2289 = vrot.lane.b32.xlu0 %v1841, 116
        %v2290 = vpop.permute.xlu0 %2289
        %v2291 = vsel %vm843, %v1993, %v2290
        %2292 = vrot.lane.b32.xlu0 %v1841, 108
        %v2293 = vpop.permute.xlu0 %2292
        %v2294 = vsel %vm864, %v1996, %v2293
        %2295 = vrot.lane.b32.xlu0 %v1841, 107
        %v2296 = vpop.permute.xlu0 %2295
        %v2297 = vsel %vm885, %v1999, %v2296
        %2298 = vrot.lane.b32.xlu0 %v1841, 106
        %v2299 = vpop.permute.xlu0 %2298
        %v2300 = vsel %vm906, %v2002, %v2299
        %s2301 = scalar_lea.vmem %s10, 32
        %v2302 = vld [vmem:[%s2301] sm:$0xff]
        %v2303 = vld [vmem:[%s2301 + $0x8] sm:$0xff]
        %v2306 = vunpack.c.l.b16 %v2302
        %v2307 = vunpack.c.h.b16 %v2302
        %v2308 = vunpack.c.l.b16 %v2303
        %v2309 = vunpack.c.h.b16 %v2303
        %v2310 = vpack.c.b16 %v2308, %v2306
        %v2311 = vpack.c.b16 %v2309, %v2307
        %2313 = vrot.lane.b32.xlu0 %v1840, 11
        %v2314 = vpop.permute.xlu0 %2313
        %2315 = vrot.lane.b32.xlu0 %v2278, 11
        %v2316 = vpop.permute.xlu0 %2315
        %2317 = vrot.lane.b32.xlu0 %v2277, 11
        %v2318 = vpop.permute.xlu0 %2317
        %2319 = vrot.lane.b32.xlu0 %v2281, 11
        %v2320 = vpop.permute.xlu0 %2319
        %2321 = vrot.lane.b32.xlu0 %v2280, 11
        %v2322 = vpop.permute.xlu0 %2321
        %2323 = vrot.lane.b32.xlu0 %v2284, 11
        %v2324 = vpop.permute.xlu0 %2323
        %2325 = vrot.lane.b32.xlu0 %v2283, 11
        %v2326 = vpop.permute.xlu0 %2325
        %2327 = vrot.lane.b32.xlu0 %v2287, 11
        %v2328 = vpop.permute.xlu0 %2327
        %2329 = vrot.lane.b32.xlu0 %v2286, 11
        %v2330 = vpop.permute.xlu0 %2329
        %2331 = vrot.lane.b32.xlu0 %v1950, 11
        %v2332 = vpop.permute.xlu0 %2331
        %2333 = vrot.lane.b32.xlu0 %v2291, 11
        %v2334 = vpop.permute.xlu0 %2333
        %2335 = vrot.lane.b32.xlu0 %v1958, 11
        %v2336 = vpop.permute.xlu0 %2335
        %2337 = vrot.lane.b32.xlu0 %v2294, 11
        %v2338 = vpop.permute.xlu0 %2337
        %2339 = vrot.lane.b32.xlu0 %v1966, 11
        %v2340 = vpop.permute.xlu0 %2339
        %2341 = vrot.lane.b32.xlu0 %v2297, 11
        %v2342 = vpop.permute.xlu0 %2341
        %2343 = vrot.lane.b32.xlu0 %v1974, 11
        %v2344 = vpop.permute.xlu0 %2343
        %2345 = vrot.lane.b32.xlu0 %v2300, 11
        %v2346 = vpop.permute.xlu0 %2345
        %v2347 = vsel %vm1146, %v2021, %v2314
        %v2348 = vsel %vm1146, %v2025, %v2316
        %v2349 = vsel %vm1146, %v2316, %v2318
        %v2350 = vsel %vm1146, %v2031, %v2320
        %v2351 = vsel %vm1146, %v2320, %v2322
        %v2352 = vsel %vm1146, %v2037, %v2324
        %v2353 = vsel %vm1146, %v2324, %v2326
        %v2354 = vsel %vm1146, %v2045, %v2328
        %v2355 = vsel %vm1146, %v2328, %v2330
        %v2356 = vsel %vm1146, %v2332, %v2051
        %v2357 = vsel %vm1146, %v2051, %v2334
        %v2358 = vsel %vm1146, %v2336, %v2057
        %v2359 = vsel %vm1146, %v2057, %v2338
        %v2360 = vsel %vm1146, %v2340, %v2063
        %v2361 = vsel %vm1146, %v2063, %v2342
        %v2362 = vsel %vm1146, %v2344, %v2069
        %v2363 = vsel %vm1146, %v2069, %v2346
        %v2382 = vsel %vm2106, %v2311, 0
        %2384 = vmatprep.subr.bf16.mxu0 %v2347
        %2385 = vmatpush1.bf16.msra.mxu0 %v2071
        %2386 = vmatprep.subr.bf16.mxu0 %v2349
        %2387 = vmatpush1.bf16.msra.mxu0 %v2348
        %2388 = vmatprep.subr.bf16.mxu0 %v2351
        %2389 = vmatpush1.bf16.msra.mxu0 %v2350
        %2390 = vmatprep.subr.bf16.mxu0 %v2353
        %2391 = vmatpush1.bf16.msra.mxu0 %v2352
        %2392 = vmatprep.subr.bf16.mxu0 %v2355
        %2393 = vmatpush1.bf16.msra.mxu0 %v2354
        %2394 = vmatprep.subr.bf16.mxu0 %v2357
        %2395 = vmatpush1.bf16.msra.mxu0 %v2356
        %2396 = vmatprep.subr.bf16.mxu0 %v2359
        %2397 = vmatpush1.bf16.msra.mxu0 %v2358
        %2398 = vmatprep.subr.bf16.mxu0 %v2361
        %2399 = vmatpush1.bf16.msra.mxu0 %v2360
        %2400 = vmatprep.subr.bf16.mxu0 %v2363
        %2401 = vmatpush1.bf16.msra.mxu0 %v2362
        %2402 = vmatprep.subr.bf16.mxu0 0
        %2403 = vmatpush1.bf16.msra.mxu0 0
        %2404 = vmatprep.subr.bf16.mxu0 0
        %2405 = vmatpush1.bf16.msra.mxu0 0
        %2406 = vmatprep.subr.bf16.mxu0 0
        %2407 = vmatpush1.bf16.msra.mxu0 0
        %2408 = vmatprep.subr.bf16.mxu0 0
        %2409 = vmatpush1.bf16.msra.mxu0 0
        %2410 = vmatprep.subr.bf16.mxu0 0
        %2411 = vmatpush1.bf16.msra.mxu0 0
        %2412 = vmatprep.subr.bf16.mxu0 0
        %2413 = vmatpush1.bf16.msra.mxu0 0
        %2414 = vmatprep.subr.bf16.mxu0 0
        %2415 = vmatpush1.bf16.msra.mxu0 0
        %2416 = vmatprep.mubr.bf16.mxu0 %v2382
        %2417 = vmatmul.mubr.bf16.gmra.mrb[0].mxu0 %v2310
        %v2418 = vpop.f32.mrb[0].mxu0
        %v2419 = vadd.f32 0.0, %v2418
        %v2420 = vpop.f32.mrb[0].mxu0
        %v2421 = vadd.f32 0.0, %v2420
        %v2422 = vpop.f32.mrb[0].mxu0
        %v2423 = vadd.f32 0.0, %v2422
        %v2424 = vpop.f32.mrb[0].mxu0
        %v2425 = vadd.f32 0.0, %v2424
        %2426 = vdwg.mxu0
        %v2427 = vadd.f32 %v2268, %v2419
        %v2428 = vadd.f32 %v2270, %v2421
        %v2429 = vadd.f32 %v2272, %v2423
        %v2430 = vadd.f32 %v2274, %v2425
        %v2431 = vld [vmem:[%s11] sm:$0xff]
        %v2432 = vld [vmem:[%s11 + $0x8] sm:$0xff]
        %2434 = vset.pattern.permute.xlu0 0
        %2435 = vperm.xlu0 %2434, %v2431
        %v2436 = vpop.permute.xlu0 %2435
        %2439 = vset.pattern.permute.xlu0 0
        %2440 = vperm.xlu0 %2439, %v2432
        %v2441 = vpop.permute.xlu0 %2440
        %v2443 = vadd.f32 %v2427, %v2436
        %v2444 = vadd.f32 %v2428, %v2436
        %v2445 = vadd.f32 %v2429, %v2441
        %v2446 = vadd.f32 %v2430, %v2441
        %v2447 = vadd.f32 %v2443, %v1904
        %v2448 = vadd.f32 %v2444, %v1906
        %v2449 = vadd.f32 %v2445, %v1908
        %v2450 = vadd.f32 %v2446, %v1910
        %v2451 = vmax.f32 %v2447, 0.0
        %v2452 = vmax.f32 %v2448, 0.0
        %v2453 = vmax.f32 %v2449, 0.0
        %v2454 = vmax.f32 %v2450, 0.0
        %v2455 = vunpack.c.l.bf16 %v672
        %v2457 = vlaneseq
        %v2458 = vshrl.u32 %v2457, 7
        %v2459 = vsub.s32 0, %v2458
        %v2460 = vrot.slane %v2455, %v2459
        %v2461 = vlaneseq
        %v2462 = vshrl.u32 %v2461, 7
        %v2463 = vsub.s32 2, %v2462
        %v2464 = vrot.slane %v2455, %v2463
        %v2467 = vlaneseq
        %v2468 = vshrl.u32 %v2467, 7
        %v2469 = vsub.s32 0, %v2468
        %v2470 = vrot.slane %v2460, %v2469
        %v2471 = vlaneseq
        %v2472 = vshrl.u32 %v2471, 7
        %v2473 = vsub.s32 0, %v2472
        %v2474 = vrot.slane %v2464, %v2473
        %v2475 = vmul.f32 %v2451, %v2470
        %v2476 = vmul.f32 %v2452, %v2474
        %v2477 = vmul.f32 %v2453, %v2470
        %v2478 = vmul.f32 %v2454, %v2474
        %v2479 = vpack.c.bf16 %v2477, %v2475
        %v2480 = vpack.c.bf16 %v2478, %v2476
        %v2483 = vunpack.c.l.b16 %v2479
        %v2484 = vunpack.c.l.b16 %v2480
        %v2485 = vunpack.c.h.b16 %v2479
        %v2486 = vunpack.c.h.b16 %v2480
        %v2487 = vpack.c.b16 %v2484, %v2483
        %v2488 = vpack.c.b16 %v2486, %v2485
        %2491 = vst [vmem:[%s581] sm:$0xff] %v2487
        %2492 = vst [vmem:[%s581 + $0x8] sm:$0xff] %v2488
        %s2493 = sand.u32 %s357, 1
        %s2494 = sand.u32 %s357, 1
        %s2495 = smul.addr %s2494, 16
        %s2496 = scalar_lea.vmem [#allocation2], %s2495
        // Predicated region
        $region69: #{fwd.5} parent=67 // pred_check
          %p2497 = pneg %p367
        $region70: #{fwd.5} parent=67 // pred_check_branch
          %2499 = sbr.rel (%p2497) target = $region72
        $region71: #{fwd.5} parent=67 // pred_region
          %s2500 = smul.u32 2, %s28
          %s2501 = smul.addr %s27, 20
          %s2502 = sadd.s32 %s2500, %s2501
          %s2503 = smul.addr %s2502, 4
          %s2504 = scalar_lea.vmem %s12, %s2503
          // Predicated region
          $region73: #{fwd.5} parent=71 // pred_check
            _
          $region74: #{fwd.5} parent=71 // pred_check_branch
            %2506 = sbr.rel (0) target = $region76
          $region75: #{fwd.5} parent=71 // pred_region
            // Predicated region
            $region77: #{fwd.5} parent=75 // pred_check
              _
            $region78: #{fwd.5} parent=75 // pred_check_branch
              %2508 = sbr.rel (0) target = $region80
            $region79: #{fwd.5} parent=75 // pred_region
              // Predicated region
              $region92: #{fwd.5} parent=79 // pred_check
                _
              $region93: #{fwd.5} parent=79 // pred_check_branch
                %2525 = sbr.rel (0) target = $region95
              $region94: #{fwd.5} parent=79 // pred_region
                loop: start=0, step=1, limit=1
                $region96: #{fwd.5} parent=94 // loop_pre_header
                  _
                $region97: #{fwd.5} parent=94 // loop_header
                  %s2527 = sphi 0, %s2531
                  %p2528 = scmp.ge.s32.totalorder %s2527, 1
                  %s2532 = sphi %s2496, %s2496
                  %s2533 = sphi %s2504, %s2504
                $region98: #{fwd.5} parent=94 // loop_header_branch
                  %2530 = sbr.rel (%p2528) target = $region102
                $region99: #{fwd.5} parent=94 // loop_body
                  %v2534 = vld [vmem:[%s2532] sm:$0xff]
                  %2535 = vst [vmem:[%s2533] sm:$0xff] %v2534
                  %v2536 = vld [vmem:[%s2532 + $0x8] sm:$0xff]
                  %2537 = vst [vmem:[%s2533 + $0x28] sm:$0xff] %v2536
                $region100: #{fwd.5} parent=94 // loop_footer
                  %s2531 = sadd.s32 1, %s2527
                $region101: #{fwd.5} parent=94 // loop_footer_branch
                  %2526 = sbr.rel target = $region97
                $region102: #{fwd.5} parent=94 // loop_exit
                  _
              $region95: #{fwd.5} parent=79 // pred_fallthru
                _
              // Predicated region
              $region103: #{fwd.5} parent=79 // pred_check
                _
              $region104: #{fwd.5} parent=79 // pred_check_branch
                %2539 = sbr.rel target = $region106
              $region105: #{fwd.5} parent=79 // pred_region
                _
              $region106: #{fwd.5} parent=79 // pred_fallthru
                _
            $region80: #{fwd.5} parent=75 // pred_fallthru
              _
            // Predicated region
            $region81: #{fwd.5} parent=75 // pred_check
              _
            $region82: #{fwd.5} parent=75 // pred_check_branch
              %2510 = sbr.rel target = $region84
            $region83: #{fwd.5} parent=75 // pred_region
              loop: start=0, step=1, limit=1
              $region85: #{fwd.5} parent=83 // loop_pre_header
                _
              $region86: #{fwd.5} parent=83 // loop_header
                %s2513 = sphi 0, %s2517
                %p2514 = scmp.ge.s32.totalorder %s2513, 1
                %s2518 = sphi %s2496, %s2496
                %s2519 = sphi %s2504, %s2504
              $region87: #{fwd.5} parent=83 // loop_header_branch
                %2516 = sbr.rel (%p2514) target = $region91
              $region88: #{fwd.5} parent=83 // loop_body
                %v2520 = vld [vmem:[%s2518] sm:$0xff]
                %2521 = vst [vmem:[%s2519] sm:$0xff] %v2520
                %v2522 = vld [vmem:[%s2518 + $0x8] sm:$0xff]
                %2523 = vst [vmem:[%s2519 + $0x28] sm:$0xff] %v2522
              $region89: #{fwd.5} parent=83 // loop_footer
                %s2517 = sadd.s32 1, %s2513
              $region90: #{fwd.5} parent=83 // loop_footer_branch
                %2512 = sbr.rel target = $region86
              $region91: #{fwd.5} parent=83 // loop_exit
                _
            $region84: #{fwd.5} parent=75 // pred_fallthru
              _
          $region76: #{fwd.5} parent=71 // pred_fallthru
            _
          %2540 = vnop
        $region72: #{fwd.5} parent=67 // pred_fallthru
          _
      $region68: #{fwd.5} parent=5 // pred_fallthru
        _
      %p2541 = scmp.le.s32.totalorder 2, %s18
      // Predicated region
      $region107: #{fwd.5} parent=5 // pred_check
        %p2542 = pneg %p2541
      $region108: #{fwd.5} parent=5 // pred_check_branch
        %2544 = sbr.rel (%p2542) target = $region110
      $region109: #{fwd.5} parent=5 // pred_region
        %s2545 = ssub.s32 %s18, 2
        // Predicated region
        $region111: #{fwd.5} parent=109 // pred_check
          %p2546 = pneg %p373
        $region112: #{fwd.5} parent=109 // pred_check_branch
          %2548 = sbr.rel (%p2546) target = $region114
        $region113: #{fwd.5} parent=109 // pred_region
          %s2549 = sand.u32 %s358, 1
          %s2550 = sand.u32 %s358, 1
          %s2551 = smul.addr %s2550, 16
          %s2552 = scalar_lea.vmem [#allocation2], %s2551
        $region114: #{fwd.5} parent=109 // pred_fallthru
          _
      $region110: #{fwd.5} parent=5 // pred_fallthru
        _
    $region6: #{fwd.5} parent=1 // loop_footer
      %s22 = sadd.s32 1, %s18
    $region7: #{fwd.5} parent=1 // loop_footer_branch
      %17 = sbr.rel target = $region3
    $region8: #{fwd.5} parent=1 // loop_exit
      _

// kernel: fwd.6
$region0: #{fwd.6}
  #allocation0 [shape = 'u32[]', space=smem, size = 0x4, offset = 0x4, fixed_abs, tag = 'smem constant byte address 0x4 - core index']
  #allocation1 [shape = 'u32[144,128]{1,0:T(1,128)}', space=vmem, size = 0x12000, scoped, tag = 'internal scratch']
  %s0 = inlined_call_operand.vmem [shape: bf16[2,16,1280], index: 0, kind: input, shape index: {}, may-alias: {0,1,2}]
  %s1 = inlined_call_operand.vmem [shape: bf16[2,16,1280], index: 1, kind: input, shape index: {}, may-alias: {0,1,2}]
  %s2 = inlined_call_operand.vmem [shape: bf16[2,16,1280], index: 2, kind: input, shape index: {}, may-alias: {0,1,2}]
  %s3 = inlined_call_operand.vmem [shape: bf16[1,1280], index: 3, kind: input, shape index: {}, may-alias: {3,4,5}]
  %s4 = inlined_call_operand.vmem [shape: bf16[1,1280], index: 4, kind: input, shape index: {}, may-alias: {3,4,5}]
  %s5 = inlined_call_operand.vmem [shape: bf16[1,1280], index: 5, kind: input, shape index: {}, may-alias: {3,4,5}]
  %s6 = inlined_call_operand.vmem [shape: bf16[3,32,144], index: 6, kind: input, shape index: {}]
  %s7 = inlined_call_operand.vmem [shape: f32[32,1], index: 7, kind: input, shape index: {}]
  %s8 = inlined_call_operand.vmem [shape: bf16[32,16], index: 8, kind: input, shape index: {}]
  %s9 = inlined_call_operand.vmem [shape: f32[32,1], index: 9, kind: input, shape index: {}]
  %s10 = inlined_call_operand.vmem [shape: bf16[3,32,288], index: 10, kind: input, shape index: {}]
  %s11 = inlined_call_operand.vmem [shape: f32[32,1], index: 11, kind: input, shape index: {}]
  %s12 = inlined_call_operand.vmem [shape: f32[8,256], index: 12, kind: input, shape index: {}]
  %s13 = inlined_call_operand.vmem [shape: f32[2,5,32,8], index: 13, kind: output, shape index: {}]
  %s14 = sld [smem:[#allocation0]]
  $region199: #{fwd.6} parent=0
    _
  %s16 = ssub.s32 1, %s14
  %s17 = scalar_select 0, %s16, %s14
  $region1: #{fwd.6} parent=0
    #allocation2 [shape = 'u8[16384]{0}', space=vmem, size = 0x4000, scoped, tag = 'input window, operand 0']
    #allocation3 [shape = 'u8[16384]{0}', space=vmem, size = 0x4000, scoped, tag = 'input window, operand 1']
    #allocation4 [shape = 'u8[16384]{0}', space=vmem, size = 0x4000, scoped, tag = 'input window, operand 2']
    loop: start=0, step=1, limit=12
    $region2: #{fwd.6} parent=1 // loop_pre_header
      _
    $region3: #{fwd.6} parent=1 // loop_header
      %s19 = sphi 0, %s23
      %p20 = scmp.ge.s32.totalorder %s19, 12
      %s26 = sphi 0, %s38
      %s27 = sphi 0, %s34
      %s28 = sphi 0, %s26
      %s29 = sphi 0, %s27
      %s30 = sphi 0, %s28
      %s31 = sphi 0, %s29
      %s49 = sphi 0, %s51
      %s52 = sphi 0, %s49
      %s53 = sphi 0, %s52
      %s69 = sphi 0, %s53
      %s77 = sphi 0, %s79
      %s80 = sphi 0, %s77
      %s81 = sphi 0, %s80
      %s97 = sphi 0, %s81
      %s111 = sphi 0, %s113
      %s114 = sphi 0, %s111
      %s115 = sphi 0, %s114
      %s131 = sphi 0, %s115
      %s143 = sphi 0, %s145
      %s146 = sphi 0, %s143
      %s147 = sphi 0, %s146
      %s163 = sphi 0, %s147
      %s169 = sphi 0, %s171
      %s172 = sphi 0, %s169
      %s173 = sphi 0, %s172
      %s189 = sphi 0, %s173
      %s201 = sphi 0, %s203
      %s204 = sphi 0, %s201
      %s205 = sphi 0, %s204
      %s221 = sphi 0, %s205
      %s225 = sphi 0, %s225
      %s227 = sphi 0, %s225
      %s228 = sphi 0, %s227
      %s242 = sphi 0, %s228
      %s246 = sphi 0, %s246
      %s248 = sphi 0, %s246
      %s249 = sphi 0, %s248
      %s263 = sphi 0, %s249
      %s267 = sphi 0, %s267
      %s269 = sphi 0, %s267
      %s270 = sphi 0, %s269
      %s284 = sphi 0, %s270
      %s288 = sphi 0, %s288
      %s290 = sphi 0, %s288
      %s291 = sphi 0, %s290
      %s305 = sphi 0, %s291
      %s309 = sphi 0, %s309
      %s311 = sphi 0, %s309
      %s312 = sphi 0, %s311
      %s326 = sphi 0, %s312
      %s330 = sphi 0, %s330
      %s332 = sphi 0, %s330
      %s333 = sphi 0, %s332
      %s347 = sphi 0, %s333
      %s351 = sphi 0, %s351
      %s353 = sphi 0, %s351
      %s354 = sphi 0, %s353
      %s368 = sphi 0, %s354
      %s376 = sphi 0, %s378
      %s379 = sphi 0, %s376
      %s380 = sphi 0, %s379
      %s396 = sphi 0, %s380
    $region4: #{fwd.6} parent=1 // loop_header_branch
      %22 = sbr.rel (%p20) target = $region8
    $region5: #{fwd.6} parent=1 // loop_body
      %s24 = ssub.s32 %s19, 1
      %s25 = ssub.s32 %s19, 2
      %s32 = sadd.s32 1, %s27
      %p33 = scmp.ge.s32.totalorder %s32, 5
      %s34 = scalar_select %p33, 0, %s32
      %s35 = sadd.s32 1, %s26
      %s36 = scalar_select %p33, %s35, %s26
      %p37 = scmp.ge.s32.totalorder %s36, 2
      %s38 = scalar_select %p37, 0, %s36
      %s39 = ssub.s32 %s27, 1
      %p40 = scmp.gt.s32.totalorder %s39, 0
      %s41 = scalar_select %p40, %s39, 0
      %s42 = ssub.s32 %s34, 1
      %p43 = scmp.gt.s32.totalorder %s42, 0
      %s44 = scalar_select %p43, %s42, 0
      %s45 = ssub.s32 %s26, %s38
      %s46 = ssub.s32 %s41, %s44
      %s47 = sor.u32 %s45, %s46
      %p48 = scmp.eq.s32.totalorder %s47, 0
      %s50 = sadd.s32 %s49, 1
      %s51 = scalar_select %p48, %s49, %s50
      %p54 = pneg %p48
      %p55 = scmp.eq.s32.totalorder %s19, 9
      %p56 = por %p54, %p55
      %p57 = scmp.ne.s32.totalorder %s49, %s52
      %p58 = scmp.eq.s32.totalorder %s19, 0
      %p59 = por %p57, %p58
      %p60 = scmp.ne.s32.totalorder %s49, %s52
      %p61 = scmp.eq.s32.totalorder %s24, 9
      %p62 = por %p60, %p61
      %p63 = scmp.ne.s32.totalorder %s52, %s53
      %p64 = scmp.eq.s32.totalorder %s24, 0
      %p65 = por %p63, %p64
      %p66 = scmp.ne.s32.totalorder %s52, %s53
      %p67 = scmp.eq.s32.totalorder %s25, 9
      %p68 = por %p66, %p67
      %p70 = scmp.ne.s32.totalorder %s53, %s69
      %p71 = scmp.eq.s32.totalorder %s25, 0
      %p72 = por %p70, %p71
      %s73 = ssub.s32 %s26, %s38
      %s74 = ssub.s32 %s27, %s34
      %s75 = sor.u32 %s73, %s74
      %p76 = scmp.eq.s32.totalorder %s75, 0
      %s78 = sadd.s32 %s77, 1
      %s79 = scalar_select %p76, %s77, %s78
      %p82 = pneg %p76
      %p83 = scmp.eq.s32.totalorder %s19, 9
      %p84 = por %p82, %p83
      %p85 = scmp.ne.s32.totalorder %s77, %s80
      %p86 = scmp.eq.s32.totalorder %s19, 0
      %p87 = por %p85, %p86
      %p88 = scmp.ne.s32.totalorder %s77, %s80
      %p89 = scmp.eq.s32.totalorder %s24, 9
      %p90 = por %p88, %p89
      %p91 = scmp.ne.s32.totalorder %s80, %s81
      %p92 = scmp.eq.s32.totalorder %s24, 0
      %p93 = por %p91, %p92
      %p94 = scmp.ne.s32.totalorder %s80, %s81
      %p95 = scmp.eq.s32.totalorder %s25, 9
      %p96 = por %p94, %p95
      %p98 = scmp.ne.s32.totalorder %s81, %s97
      %p99 = scmp.eq.s32.totalorder %s25, 0
      %p100 = por %p98, %p99
      %s101 = sadd.s32 %s27, 1
      %p102 = scmp.lt.s32.totalorder %s101, 4
      %s103 = scalar_select %p102, %s101, 4
      %s104 = sadd.s32 %s34, 1
      %p105 = scmp.lt.s32.totalorder %s104, 4
      %s106 = scalar_select %p105, %s104, 4
      %s107 = ssub.s32 %s26, %s38
      %s108 = ssub.s32 %s103, %s106
      %s109 = sor.u32 %s107, %s108
      %p110 = scmp.eq.s32.totalorder %s109, 0
      %s112 = sadd.s32 %s111, 1
      %s113 = scalar_select %p110, %s111, %s112
      %p116 = pneg %p110
      %p117 = scmp.eq.s32.totalorder %s19, 9
      %p118 = por %p116, %p117
      %p119 = scmp.ne.s32.totalorder %s111, %s114
      %p120 = scmp.eq.s32.totalorder %s19, 0
      %p121 = por %p119, %p120
      %p122 = scmp.ne.s32.totalorder %s111, %s114
      %p123 = scmp.eq.s32.totalorder %s24, 9
      %p124 = por %p122, %p123
      %p125 = scmp.ne.s32.totalorder %s114, %s115
      %p126 = scmp.eq.s32.totalorder %s24, 0
      %p127 = por %p125, %p126
      %p128 = scmp.ne.s32.totalorder %s114, %s115
      %p129 = scmp.eq.s32.totalorder %s25, 9
      %p130 = por %p128, %p129
      %p132 = scmp.ne.s32.totalorder %s115, %s131
      %p133 = scmp.eq.s32.totalorder %s25, 0
      %p134 = por %p132, %p133
      %s135 = ssub.s32 %s27, 1
      %p136 = scmp.gt.s32.totalorder %s135, 0
      %s137 = scalar_select %p136, %s135, 0
      %s138 = ssub.s32 %s34, 1
      %p139 = scmp.gt.s32.totalorder %s138, 0
      %s140 = scalar_select %p139, %s138, 0
      %s141 = ssub.s32 %s137, %s140
      %p142 = scmp.eq.s32.totalorder %s141, 0
      %s144 = sadd.s32 %s143, 1
      %s145 = scalar_select %p142, %s143, %s144
      %p148 = pneg %p142
      %p149 = scmp.eq.s32.totalorder %s19, 9
      %p150 = por %p148, %p149
      %p151 = scmp.ne.s32.totalorder %s143, %s146
      %p152 = scmp.eq.s32.totalorder %s19, 0
      %p153 = por %p151, %p152
      %p154 = scmp.ne.s32.totalorder %s143, %s146
      %p155 = scmp.eq.s32.totalorder %s24, 9
      %p156 = por %p154, %p155
      %p157 = scmp.ne.s32.totalorder %s146, %s147
      %p158 = scmp.eq.s32.totalorder %s24, 0
      %p159 = por %p157, %p158
      %p160 = scmp.ne.s32.totalorder %s146, %s147
      %p161 = scmp.eq.s32.totalorder %s25, 9
      %p162 = por %p160, %p161
      %p164 = scmp.ne.s32.totalorder %s147, %s163
      %p165 = scmp.eq.s32.totalorder %s25, 0
      %p166 = por %p164, %p165
      %s167 = ssub.s32 %s27, %s34
      %p168 = scmp.eq.s32.totalorder %s167, 0
      %s170 = sadd.s32 %s169, 1
      %s171 = scalar_select %p168, %s169, %s170
      %p174 = pneg %p168
      %p175 = scmp.eq.s32.totalorder %s19, 9
      %p176 = por %p174, %p175
      %p177 = scmp.ne.s32.totalorder %s169, %s172
      %p178 = scmp.eq.s32.totalorder %s19, 0
      %p179 = por %p177, %p178
      %p180 = scmp.ne.s32.totalorder %s169, %s172
      %p181 = scmp.eq.s32.totalorder %s24, 9
      %p182 = por %p180, %p181
      %p183 = scmp.ne.s32.totalorder %s172, %s173
      %p184 = scmp.eq.s32.totalorder %s24, 0
      %p185 = por %p183, %p184
      %p186 = scmp.ne.s32.totalorder %s172, %s173
      %p187 = scmp.eq.s32.totalorder %s25, 9
      %p188 = por %p186, %p187
      %p190 = scmp.ne.s32.totalorder %s173, %s189
      %p191 = scmp.eq.s32.totalorder %s25, 0
      %p192 = por %p190, %p191
      %s193 = sadd.s32 %s27, 1
      %p194 = scmp.lt.s32.totalorder %s193, 4
      %s195 = scalar_select %p194, %s193, 4
      %s196 = sadd.s32 %s34, 1
      %p197 = scmp.lt.s32.totalorder %s196, 4
      %s198 = scalar_select %p197, %s196, 4
      %s199 = ssub.s32 %s195, %s198
      %p200 = scmp.eq.s32.totalorder %s199, 0
      %s202 = sadd.s32 %s201, 1
      %s203 = scalar_select %p200, %s201, %s202
      %p206 = pneg %p200
      %p207 = scmp.eq.s32.totalorder %s19, 9
      %p208 = por %p206, %p207
      %p209 = scmp.ne.s32.totalorder %s201, %s204
      %p210 = scmp.eq.s32.totalorder %s19, 0
      %p211 = por %p209, %p210
      %p212 = scmp.ne.s32.totalorder %s201, %s204
      %p213 = scmp.eq.s32.totalorder %s24, 9
      %p214 = por %p212, %p213
      %p215 = scmp.ne.s32.totalorder %s204, %s205
      %p216 = scmp.eq.s32.totalorder %s24, 0
      %p217 = por %p215, %p216
      %p218 = scmp.ne.s32.totalorder %s204, %s205
      %p219 = scmp.eq.s32.totalorder %s25, 9
      %p220 = por %p218, %p219
      %p222 = scmp.ne.s32.totalorder %s205, %s221
      %p223 = scmp.eq.s32.totalorder %s25, 0
      %p224 = por %p222, %p223
      %s226 = sadd.s32 %s225, 1
      %p229 = scmp.eq.s32.totalorder %s19, 9
      %p230 = scmp.ne.s32.totalorder %s225, %s227
      %p231 = scmp.eq.s32.totalorder %s19, 0
      %p232 = por %p230, %p231
      %p233 = scmp.ne.s32.totalorder %s225, %s227
      %p234 = scmp.eq.s32.totalorder %s24, 9
      %p235 = por %p233, %p234
      %p236 = scmp.ne.s32.totalorder %s227, %s228
      %p237 = scmp.eq.s32.totalorder %s24, 0
      %p238 = por %p236, %p237
      %p239 = scmp.ne.s32.totalorder %s227, %s228
      %p240 = scmp.eq.s32.totalorder %s25, 9
      %p241 = por %p239, %p240
      %p243 = scmp.ne.s32.totalorder %s228, %s242
      %p244 = scmp.eq.s32.totalorder %s25, 0
      %p245 = por %p243, %p244
      %s247 = sadd.s32 %s246, 1
      %p250 = scmp.eq.s32.totalorder %s19, 9
      %p251 = scmp.ne.s32.totalorder %s246, %s248
      %p252 = scmp.eq.s32.totalorder %s19, 0
      %p253 = por %p251, %p252
      %p254 = scmp.ne.s32.totalorder %s246, %s248
      %p255 = scmp.eq.s32.totalorder %s24, 9
      %p256 = por %p254, %p255
      %p257 = scmp.ne.s32.totalorder %s248, %s249
      %p258 = scmp.eq.s32.totalorder %s24, 0
      %p259 = por %p257, %p258
      %p260 = scmp.ne.s32.totalorder %s248, %s249
      %p261 = scmp.eq.s32.totalorder %s25, 9
      %p262 = por %p260, %p261
      %p264 = scmp.ne.s32.totalorder %s249, %s263
      %p265 = scmp.eq.s32.totalorder %s25, 0
      %p266 = por %p264, %p265
      %s268 = sadd.s32 %s267, 1
      %p271 = scmp.eq.s32.totalorder %s19, 9
      %p272 = scmp.ne.s32.totalorder %s267, %s269
      %p273 = scmp.eq.s32.totalorder %s19, 0
      %p274 = por %p272, %p273
      %p275 = scmp.ne.s32.totalorder %s267, %s269
      %p276 = scmp.eq.s32.totalorder %s24, 9
      %p277 = por %p275, %p276
      %p278 = scmp.ne.s32.totalorder %s269, %s270
      %p279 = scmp.eq.s32.totalorder %s24, 0
      %p280 = por %p278, %p279
      %p281 = scmp.ne.s32.totalorder %s269, %s270
      %p282 = scmp.eq.s32.totalorder %s25, 9
      %p283 = por %p281, %p282
      %p285 = scmp.ne.s32.totalorder %s270, %s284
      %p286 = scmp.eq.s32.totalorder %s25, 0
      %p287 = por %p285, %p286
      %s289 = sadd.s32 %s288, 1
      %p292 = scmp.eq.s32.totalorder %s19, 9
      %p293 = scmp.ne.s32.totalorder %s288, %s290
      %p294 = scmp.eq.s32.totalorder %s19, 0
      %p295 = por %p293, %p294
      %p296 = scmp.ne.s32.totalorder %s288, %s290
      %p297 = scmp.eq.s32.totalorder %s24, 9
      %p298 = por %p296, %p297
      %p299 = scmp.ne.s32.totalorder %s290, %s291
      %p300 = scmp.eq.s32.totalorder %s24, 0
      %p301 = por %p299, %p300
      %p302 = scmp.ne.s32.totalorder %s290, %s291
      %p303 = scmp.eq.s32.totalorder %s25, 9
      %p304 = por %p302, %p303
      %p306 = scmp.ne.s32.totalorder %s291, %s305
      %p307 = scmp.eq.s32.totalorder %s25, 0
      %p308 = por %p306, %p307
      %s310 = sadd.s32 %s309, 1
      %p313 = scmp.eq.s32.totalorder %s19, 9
      %p314 = scmp.ne.s32.totalorder %s309, %s311
      %p315 = scmp.eq.s32.totalorder %s19, 0
      %p316 = por %p314, %p315
      %p317 = scmp.ne.s32.totalorder %s309, %s311
      %p318 = scmp.eq.s32.totalorder %s24, 9
      %p319 = por %p317, %p318
      %p320 = scmp.ne.s32.totalorder %s311, %s312
      %p321 = scmp.eq.s32.totalorder %s24, 0
      %p322 = por %p320, %p321
      %p323 = scmp.ne.s32.totalorder %s311, %s312
      %p324 = scmp.eq.s32.totalorder %s25, 9
      %p325 = por %p323, %p324
      %p327 = scmp.ne.s32.totalorder %s312, %s326
      %p328 = scmp.eq.s32.totalorder %s25, 0
      %p329 = por %p327, %p328
      %s331 = sadd.s32 %s330, 1
      %p334 = scmp.eq.s32.totalorder %s19, 9
      %p335 = scmp.ne.s32.totalorder %s330, %s332
      %p336 = scmp.eq.s32.totalorder %s19, 0
      %p337 = por %p335, %p336
      %p338 = scmp.ne.s32.totalorder %s330, %s332
      %p339 = scmp.eq.s32.totalorder %s24, 9
      %p340 = por %p338, %p339
      %p341 = scmp.ne.s32.totalorder %s332, %s333
      %p342 = scmp.eq.s32.totalorder %s24, 0
      %p343 = por %p341, %p342
      %p344 = scmp.ne.s32.totalorder %s332, %s333
      %p345 = scmp.eq.s32.totalorder %s25, 9
      %p346 = por %p344, %p345
      %p348 = scmp.ne.s32.totalorder %s333, %s347
      %p349 = scmp.eq.s32.totalorder %s25, 0
      %p350 = por %p348, %p349
      %s352 = sadd.s32 %s351, 1
      %p355 = scmp.eq.s32.totalorder %s19, 9
      %p356 = scmp.ne.s32.totalorder %s351, %s353
      %p357 = scmp.eq.s32.totalorder %s19, 0
      %p358 = por %p356, %p357
      %p359 = scmp.ne.s32.totalorder %s351, %s353
      %p360 = scmp.eq.s32.totalorder %s24, 9
      %p361 = por %p359, %p360
      %p362 = scmp.ne.s32.totalorder %s353, %s354
      %p363 = scmp.eq.s32.totalorder %s24, 0
      %p364 = por %p362, %p363
      %p365 = scmp.ne.s32.totalorder %s353, %s354
      %p366 = scmp.eq.s32.totalorder %s25, 9
      %p367 = por %p365, %p366
      %p369 = scmp.ne.s32.totalorder %s354, %s368
      %p370 = scmp.eq.s32.totalorder %s25, 0
      %p371 = por %p369, %p370
      %s372 = ssub.s32 %s26, %s38
      %s373 = ssub.s32 %s27, %s34
      %s374 = sor.u32 %s372, %s373
      %p375 = scmp.eq.s32.totalorder %s374, 0
      %s377 = sadd.s32 %s376, 1
      %s378 = scalar_select %p375, %s376, %s377
      %p381 = pneg %p375
      %p382 = scmp.eq.s32.totalorder %s19, 9
      %p383 = por %p381, %p382
      %p384 = scmp.ne.s32.totalorder %s376, %s379
      %p385 = scmp.eq.s32.totalorder %s19, 0
      %p386 = por %p384, %p385
      %p387 = scmp.ne.s32.totalorder %s376, %s379
      %p388 = scmp.eq.s32.totalorder %s24, 9
      %p389 = por %p387, %p388
      %p390 = scmp.ne.s32.totalorder %s379, %s380
      %p391 = scmp.eq.s32.totalorder %s24, 0
      %p392 = por %p390, %p391
      %p393 = scmp.ne.s32.totalorder %s379, %s380
      %p394 = scmp.eq.s32.totalorder %s25, 9
      %p395 = por %p393, %p394
      %p397 = scmp.ne.s32.totalorder %s380, %s396
      %p398 = scmp.eq.s32.totalorder %s25, 0
      %p399 = por %p397, %p398
      %p400 = scmp.le.s32.totalorder 1, %s19
      %p401 = scmp.lt.s32.totalorder %s19, 11
      %p402 = pnand %p400, %p401
      %p403 = pneg %p402
      // Predicated region
      $region9: #{fwd.6} parent=5 // pred_check
        _
      $region10: #{fwd.6} parent=5 // pred_check_branch
        %405 = sbr.rel (%p402) target = $region12
      $region11: #{fwd.6} parent=5 // pred_region
        %s406 = ssub.s32 %s19, 1
        // Predicated region
        $region13: #{fwd.6} parent=11 // pred_check
          %p407 = pneg %p238
        $region14: #{fwd.6} parent=11 // pred_check_branch
          %409 = sbr.rel (%p407) target = $region16
        $region15: #{fwd.6} parent=11 // pred_region
          _
        $region16: #{fwd.6} parent=11 // pred_fallthru
          _
        // Predicated region
        $region17: #{fwd.6} parent=11 // pred_check
          %p410 = pneg %p259
        $region18: #{fwd.6} parent=11 // pred_check_branch
          %412 = sbr.rel (%p410) target = $region20
        $region19: #{fwd.6} parent=11 // pred_region
          _
        $region20: #{fwd.6} parent=11 // pred_fallthru
          _
        // Predicated region
        $region21: #{fwd.6} parent=11 // pred_check
          %p413 = pneg %p280
        $region22: #{fwd.6} parent=11 // pred_check_branch
          %415 = sbr.rel (%p413) target = $region24
        $region23: #{fwd.6} parent=11 // pred_region
          _
        $region24: #{fwd.6} parent=11 // pred_fallthru
          _
        // Predicated region
        $region25: #{fwd.6} parent=11 // pred_check
          %p416 = pneg %p301
        $region26: #{fwd.6} parent=11 // pred_check_branch
          %418 = sbr.rel (%p416) target = $region28
        $region27: #{fwd.6} parent=11 // pred_region
          _
        $region28: #{fwd.6} parent=11 // pred_fallthru
          _
        // Predicated region
        $region29: #{fwd.6} parent=11 // pred_check
          %p419 = pneg %p322
        $region30: #{fwd.6} parent=11 // pred_check_branch
          %421 = sbr.rel (%p419) target = $region32
        $region31: #{fwd.6} parent=11 // pred_region
          _
        $region32: #{fwd.6} parent=11 // pred_fallthru
          _
        // Predicated region
        $region33: #{fwd.6} parent=11 // pred_check
          %p422 = pneg %p343
        $region34: #{fwd.6} parent=11 // pred_check_branch
          %424 = sbr.rel (%p422) target = $region36
        $region35: #{fwd.6} parent=11 // pred_region
          _
        $region36: #{fwd.6} parent=11 // pred_fallthru
          _
        // Predicated region
        $region37: #{fwd.6} parent=11 // pred_check
          %p425 = pneg %p364
        $region38: #{fwd.6} parent=11 // pred_check_branch
          %427 = sbr.rel (%p425) target = $region40
        $region39: #{fwd.6} parent=11 // pred_region
          _
        $region40: #{fwd.6} parent=11 // pred_fallthru
          _
      $region12: #{fwd.6} parent=5 // pred_fallthru
        _
      %p428 = scmp.lt.s32.totalorder %s19, 10
      // Predicated region
      $region41: #{fwd.6} parent=5 // pred_check
        %p429 = pneg %p428
      $region42: #{fwd.6} parent=5 // pred_check_branch
        %431 = sbr.rel (%p429) target = $region44
      $region43: #{fwd.6} parent=5 // pred_region
        // Predicated region
        $region45: #{fwd.6} parent=43 // pred_check
          %p432 = pneg %p59
        $region46: #{fwd.6} parent=43 // pred_check_branch
          %434 = sbr.rel (%p432) target = $region48
        $region47: #{fwd.6} parent=43 // pred_region
          %s435 = sand.u32 %s49, 1
          %s436 = sand.u32 %s49, 1
          %s437 = smul.addr %s436, 16
          %s438 = scalar_lea.vmem [#allocation2], %s437
          %s439 = ssub.s32 %s27, 1
          %p440 = scmp.gt.s32.totalorder %s439, 0
          %s441 = scalar_select %p440, %s439, 0
          %s442 = smul.u32 2, %s441
          %s443 = smul.addr %s26, 20
          %s444 = sadd.s32 %s442, %s443
          %s445 = smul.addr %s444, 4
          %s446 = scalar_lea.vmem %s0, %s445
          // Predicated region
          $region49: #{fwd.6} parent=47 // pred_check
            _
          $region50: #{fwd.6} parent=47 // pred_check_branch
            %448 = sbr.rel (0) target = $region52
          $region51: #{fwd.6} parent=47 // pred_region
            // Predicated region
            $region53: #{fwd.6} parent=51 // pred_check
              _
            $region54: #{fwd.6} parent=51 // pred_check_branch
              %450 = sbr.rel (0) target = $region56
            $region55: #{fwd.6} parent=51 // pred_region
              // Predicated region
              $region68: #{fwd.6} parent=55 // pred_check
                _
              $region69: #{fwd.6} parent=55 // pred_check_branch
                %467 = sbr.rel (0) target = $region71
              $region70: #{fwd.6} parent=55 // pred_region
                loop: start=0, step=1, limit=1
                $region72: #{fwd.6} parent=70 // loop_pre_header
                  _
                $region73: #{fwd.6} parent=70 // loop_header
                  %s469 = sphi 0, %s473
                  %p470 = scmp.ge.s32.totalorder %s469, 1
                  %s474 = sphi %s446, %s446
                  %s475 = sphi %s438, %s438
                $region74: #{fwd.6} parent=70 // loop_header_branch
                  %472 = sbr.rel (%p470) target = $region78
                $region75: #{fwd.6} parent=70 // loop_body
                  %v476 = vld [vmem:[%s474] sm:$0xff]
                  %477 = vst [vmem:[%s475] sm:$0xff] %v476
                  %v478 = vld [vmem:[%s474 + $0x28] sm:$0xff]
                  %479 = vst [vmem:[%s475 + $0x8] sm:$0xff] %v478
                $region76: #{fwd.6} parent=70 // loop_footer
                  %s473 = sadd.s32 1, %s469
                $region77: #{fwd.6} parent=70 // loop_footer_branch
                  %468 = sbr.rel target = $region73
                $region78: #{fwd.6} parent=70 // loop_exit
                  _
              $region71: #{fwd.6} parent=55 // pred_fallthru
                _
              // Predicated region
              $region79: #{fwd.6} parent=55 // pred_check
                _
              $region80: #{fwd.6} parent=55 // pred_check_branch
                %481 = sbr.rel target = $region82
              $region81: #{fwd.6} parent=55 // pred_region
                _
              $region82: #{fwd.6} parent=55 // pred_fallthru
                _
            $region56: #{fwd.6} parent=51 // pred_fallthru
              _
            // Predicated region
            $region57: #{fwd.6} parent=51 // pred_check
              _
            $region58: #{fwd.6} parent=51 // pred_check_branch
              %452 = sbr.rel target = $region60
            $region59: #{fwd.6} parent=51 // pred_region
              loop: start=0, step=1, limit=1
              $region61: #{fwd.6} parent=59 // loop_pre_header
                _
              $region62: #{fwd.6} parent=59 // loop_header
                %s455 = sphi 0, %s459
                %p456 = scmp.ge.s32.totalorder %s455, 1
                %s460 = sphi %s446, %s446
                %s461 = sphi %s438, %s438
              $region63: #{fwd.6} parent=59 // loop_header_branch
                %458 = sbr.rel (%p456) target = $region67
              $region64: #{fwd.6} parent=59 // loop_body
                %v462 = vld [vmem:[%s460] sm:$0xff]
                %463 = vst [vmem:[%s461] sm:$0xff] %v462
                %v464 = vld [vmem:[%s460 + $0x28] sm:$0xff]
                %465 = vst [vmem:[%s461 + $0x8] sm:$0xff] %v464
              $region65: #{fwd.6} parent=59 // loop_footer
                %s459 = sadd.s32 1, %s455
              $region66: #{fwd.6} parent=59 // loop_footer_branch
                %454 = sbr.rel target = $region62
              $region67: #{fwd.6} parent=59 // loop_exit
                _
            $region60: #{fwd.6} parent=51 // pred_fallthru
              _
          $region52: #{fwd.6} parent=47 // pred_fallthru
            _
          %482 = vnop
        $region48: #{fwd.6} parent=43 // pred_fallthru
          _
        // Predicated region
        $region83: #{fwd.6} parent=43 // pred_check
          %p483 = pneg %p87
        $region84: #{fwd.6} parent=43 // pred_check_branch
          %485 = sbr.rel (%p483) target = $region86
        $region85: #{fwd.6} parent=43 // pred_region
          %s486 = sand.u32 %s77, 1
          %s487 = sand.u32 %s77, 1
          %s488 = smul.addr %s487, 16
          %s489 = scalar_lea.vmem [#allocation3], %s488
          %s490 = smul.u32 2, %s27
          %s491 = smul.addr %s26, 20
          %s492 = sadd.s32 %s490, %s491
          %s493 = smul.addr %s492, 4
          %s494 = scalar_lea.vmem %s1, %s493
          // Predicated region
          $region87: #{fwd.6} parent=85 // pred_check
            _
          $region88: #{fwd.6} parent=85 // pred_check_branch
            %496 = sbr.rel (0) target = $region90
          $region89: #{fwd.6} parent=85 // pred_region
            // Predicated region
            $region91: #{fwd.6} parent=89 // pred_check
              _
            $region92: #{fwd.6} parent=89 // pred_check_branch
              %498 = sbr.rel (0) target = $region94
            $region93: #{fwd.6} parent=89 // pred_region
              // Predicated region
              $region106: #{fwd.6} parent=93 // pred_check
                _
              $region107: #{fwd.6} parent=93 // pred_check_branch
                %515 = sbr.rel (0) target = $region109
              $region108: #{fwd.6} parent=93 // pred_region
                loop: start=0, step=1, limit=1
                $region110: #{fwd.6} parent=108 // loop_pre_header
                  _
                $region111: #{fwd.6} parent=108 // loop_header
                  %s517 = sphi 0, %s521
                  %p518 = scmp.ge.s32.totalorder %s517, 1
                  %s522 = sphi %s494, %s494
                  %s523 = sphi %s489, %s489
                $region112: #{fwd.6} parent=108 // loop_header_branch
                  %520 = sbr.rel (%p518) target = $region116
                $region113: #{fwd.6} parent=108 // loop_body
                  %v524 = vld [vmem:[%s522] sm:$0xff]
                  %525 = vst [vmem:[%s523] sm:$0xff] %v524
                  %v526 = vld [vmem:[%s522 + $0x28] sm:$0xff]
                  %527 = vst [vmem:[%s523 + $0x8] sm:$0xff] %v526
                $region114: #{fwd.6} parent=108 // loop_footer
                  %s521 = sadd.s32 1, %s517
                $region115: #{fwd.6} parent=108 // loop_footer_branch
                  %516 = sbr.rel target = $region111
                $region116: #{fwd.6} parent=108 // loop_exit
                  _
              $region109: #{fwd.6} parent=93 // pred_fallthru
                _
              // Predicated region
              $region117: #{fwd.6} parent=93 // pred_check
                _
              $region118: #{fwd.6} parent=93 // pred_check_branch
                %529 = sbr.rel target = $region120
              $region119: #{fwd.6} parent=93 // pred_region
                _
              $region120: #{fwd.6} parent=93 // pred_fallthru
                _
            $region94: #{fwd.6} parent=89 // pred_fallthru
              _
            // Predicated region
            $region95: #{fwd.6} parent=89 // pred_check
              _
            $region96: #{fwd.6} parent=89 // pred_check_branch
              %500 = sbr.rel target = $region98
            $region97: #{fwd.6} parent=89 // pred_region
              loop: start=0, step=1, limit=1
              $region99: #{fwd.6} parent=97 // loop_pre_header
                _
              $region100: #{fwd.6} parent=97 // loop_header
                %s503 = sphi 0, %s507
                %p504 = scmp.ge.s32.totalorder %s503, 1
                %s508 = sphi %s494, %s494
                %s509 = sphi %s489, %s489
              $region101: #{fwd.6} parent=97 // loop_header_branch
                %506 = sbr.rel (%p504) target = $region105
              $region102: #{fwd.6} parent=97 // loop_body
                %v510 = vld [vmem:[%s508] sm:$0xff]
                %511 = vst [vmem:[%s509] sm:$0xff] %v510
                %v512 = vld [vmem:[%s508 + $0x28] sm:$0xff]
                %513 = vst [vmem:[%s509 + $0x8] sm:$0xff] %v512
              $region103: #{fwd.6} parent=97 // loop_footer
                %s507 = sadd.s32 1, %s503
              $region104: #{fwd.6} parent=97 // loop_footer_branch
                %502 = sbr.rel target = $region100
              $region105: #{fwd.6} parent=97 // loop_exit
                _
            $region98: #{fwd.6} parent=89 // pred_fallthru
              _
          $region90: #{fwd.6} parent=85 // pred_fallthru
            _
          %530 = vnop
        $region86: #{fwd.6} parent=43 // pred_fallthru
          _
        // Predicated region
        $region121: #{fwd.6} parent=43 // pred_check
          %p531 = pneg %p121
        $region122: #{fwd.6} parent=43 // pred_check_branch
          %533 = sbr.rel (%p531) target = $region124
        $region123: #{fwd.6} parent=43 // pred_region
          %s534 = sand.u32 %s111, 1
          %s535 = sand.u32 %s111, 1
          %s536 = smul.addr %s535, 16
          %s537 = scalar_lea.vmem [#allocation4], %s536
          %s538 = sadd.s32 %s27, 1
          %p539 = scmp.lt.s32.totalorder %s538, 4
          %s540 = scalar_select %p539, %s538, 4
          %s541 = smul.u32 2, %s540
          %s542 = smul.addr %s26, 20
          %s543 = sadd.s32 %s541, %s542
          %s544 = smul.addr %s543, 4
          %s545 = scalar_lea.vmem %s2, %s544
          // Predicated region
          $region125: #{fwd.6} parent=123 // pred_check
            _
          $region126: #{fwd.6} parent=123 // pred_check_branch
            %547 = sbr.rel (0) target = $region128
          $region127: #{fwd.6} parent=123 // pred_region
            // Predicated region
            $region129: #{fwd.6} parent=127 // pred_check
              _
            $region130: #{fwd.6} parent=127 // pred_check_branch
              %549 = sbr.rel (0) target = $region132
            $region131: #{fwd.6} parent=127 // pred_region
              // Predicated region
              $region144: #{fwd.6} parent=131 // pred_check
                _
              $region145: #{fwd.6} parent=131 // pred_check_branch
                %566 = sbr.rel (0) target = $region147
              $region146: #{fwd.6} parent=131 // pred_region
                loop: start=0, step=1, limit=1
                $region148: #{fwd.6} parent=146 // loop_pre_header
                  _
                $region149: #{fwd.6} parent=146 // loop_header
                  %s568 = sphi 0, %s572
                  %p569 = scmp.ge.s32.totalorder %s568, 1
                  %s573 = sphi %s545, %s545
                  %s574 = sphi %s537, %s537
                $region150: #{fwd.6} parent=146 // loop_header_branch
                  %571 = sbr.rel (%p569) target = $region154
                $region151: #{fwd.6} parent=146 // loop_body
                  %v575 = vld [vmem:[%s573] sm:$0xff]
                  %576 = vst [vmem:[%s574] sm:$0xff] %v575
                  %v577 = vld [vmem:[%s573 + $0x28] sm:$0xff]
                  %578 = vst [vmem:[%s574 + $0x8] sm:$0xff] %v577
                $region152: #{fwd.6} parent=146 // loop_footer
                  %s572 = sadd.s32 1, %s568
                $region153: #{fwd.6} parent=146 // loop_footer_branch
                  %567 = sbr.rel target = $region149
                $region154: #{fwd.6} parent=146 // loop_exit
                  _
              $region147: #{fwd.6} parent=131 // pred_fallthru
                _
              // Predicated region
              $region155: #{fwd.6} parent=131 // pred_check
                _
              $region156: #{fwd.6} parent=131 // pred_check_branch
                %580 = sbr.rel target = $region158
              $region157: #{fwd.6} parent=131 // pred_region
                _
              $region158: #{fwd.6} parent=131 // pred_fallthru
                _
            $region132: #{fwd.6} parent=127 // pred_fallthru
              _
            // Predicated region
            $region133: #{fwd.6} parent=127 // pred_check
              _
            $region134: #{fwd.6} parent=127 // pred_check_branch
              %551 = sbr.rel target = $region136
            $region135: #{fwd.6} parent=127 // pred_region
              loop: start=0, step=1, limit=1
              $region137: #{fwd.6} parent=135 // loop_pre_header
                _
              $region138: #{fwd.6} parent=135 // loop_header
                %s554 = sphi 0, %s558
                %p555 = scmp.ge.s32.totalorder %s554, 1
                %s559 = sphi %s545, %s545
                %s560 = sphi %s537, %s537
              $region139: #{fwd.6} parent=135 // loop_header_branch
                %557 = sbr.rel (%p555) target = $region143
              $region140: #{fwd.6} parent=135 // loop_body
                %v561 = vld [vmem:[%s559] sm:$0xff]
                %562 = vst [vmem:[%s560] sm:$0xff] %v561
                %v563 = vld [vmem:[%s559 + $0x28] sm:$0xff]
                %564 = vst [vmem:[%s560 + $0x8] sm:$0xff] %v563
              $region141: #{fwd.6} parent=135 // loop_footer
                %s558 = sadd.s32 1, %s554
              $region142: #{fwd.6} parent=135 // loop_footer_branch
                %553 = sbr.rel target = $region138
              $region143: #{fwd.6} parent=135 // loop_exit
                _
            $region136: #{fwd.6} parent=127 // pred_fallthru
              _
          $region128: #{fwd.6} parent=123 // pred_fallthru
            _
          %581 = vnop
        $region124: #{fwd.6} parent=43 // pred_fallthru
          _
        // Predicated region
        $region159: #{fwd.6} parent=43 // pred_check
          %p582 = pneg %p153
        $region160: #{fwd.6} parent=43 // pred_check_branch
          %584 = sbr.rel (%p582) target = $region162
        $region161: #{fwd.6} parent=43 // pred_region
          %s585 = ssub.s32 %s27, 1
          %p586 = scmp.gt.s32.totalorder %s585, 0
          %s587 = scalar_select %p586, %s585, 0
          %s588 = smul.u32 2, %s587
          %p589 = scmp.lt.s32.totalorder %s588, 9
          %s590 = scalar_select %p589, %s588, 9
          %s591 = scalar_lea.vmem %s3, %s590
          %s592 = ssub.s32 %s27, 1
          %p593 = scmp.gt.s32.totalorder %s592, 0
          %s594 = scalar_select %p593, %s592, 0
          %s595 = smul.u32 2, %s594
        $region162: #{fwd.6} parent=43 // pred_fallthru
          _
        // Predicated region
        $region163: #{fwd.6} parent=43 // pred_check
          %p596 = pneg %p179
        $region164: #{fwd.6} parent=43 // pred_check_branch
          %598 = sbr.rel (%p596) target = $region166
        $region165: #{fwd.6} parent=43 // pred_region
          %s599 = smul.u32 2, %s27
          %p600 = scmp.lt.s32.totalorder %s599, 9
          %s601 = scalar_select %p600, %s599, 9
          %s602 = scalar_lea.vmem %s4, %s601
          %s603 = smul.u32 2, %s27
        $region166: #{fwd.6} parent=43 // pred_fallthru
          _
        // Predicated region
        $region167: #{fwd.6} parent=43 // pred_check
          %p604 = pneg %p211
        $region168: #{fwd.6} parent=43 // pred_check_branch
          %606 = sbr.rel (%p604) target = $region170
        $region169: #{fwd.6} parent=43 // pred_region
          %s607 = sadd.s32 %s27, 1
          %p608 = scmp.lt.s32.totalorder %s607, 4
          %s609 = scalar_select %p608, %s607, 4
          %s610 = smul.u32 2, %s609
          %p611 = scmp.lt.s32.totalorder %s610, 9
          %s612 = scalar_select %p611, %s610, 9
          %s613 = scalar_lea.vmem %s5, %s612
          %s614 = sadd.s32 %s27, 1
          %p615 = scmp.lt.s32.totalorder %s614, 4
          %s616 = scalar_select %p615, %s614, 4
          %s617 = smul.u32 2, %s616
        $region170: #{fwd.6} parent=43 // pred_fallthru
          _
      $region44: #{fwd.6} parent=5 // pred_fallthru
        _
      %p618 = scmp.le.s32.totalorder 1, %s19
      %p619 = scmp.lt.s32.totalorder %s19, 11
      %p620 = pnand %p618, %p619
      %p621 = pneg %p620
      // Predicated region
      $region171: #{fwd.6} parent=5 // pred_check
        _
      $region172: #{fwd.6} parent=5 // pred_check_branch
        %623 = sbr.rel (%p620) target = $region174
      $region173: #{fwd.6} parent=5 // pred_region
        %s624 = ssub.s32 %s19, 1
        %s625 = sand.u32 %s52, 1
        %s626 = sand.u32 %s52, 1
        %s627 = smul.addr %s626, 16
        %s628 = scalar_lea.vmem [#allocation2], %s627
        // Predicated region
        $region175: #{fwd.6} parent=173 // pred_check
          %p629 = pneg %p65
        $region176: #{fwd.6} parent=173 // pred_check_branch
          %631 = sbr.rel (%p629) target = $region178
        $region177: #{fwd.6} parent=173 // pred_region
          _
        $region178: #{fwd.6} parent=173 // pred_fallthru
          _
        %s632 = sand.u32 %s80, 1
        %s633 = sand.u32 %s80, 1
        %s634 = smul.addr %s633, 16
        %s635 = scalar_lea.vmem [#allocation3], %s634
        // Predicated region
        $region179: #{fwd.6} parent=173 // pred_check
          %p636 = pneg %p93
        $region180: #{fwd.6} parent=173 // pred_check_branch
          %638 = sbr.rel (%p636) target = $region182
        $region181: #{fwd.6} parent=173 // pred_region
          _
        $region182: #{fwd.6} parent=173 // pred_fallthru
          _
        %s639 = sand.u32 %s114, 1
        %s640 = sand.u32 %s114, 1
        %s641 = smul.addr %s640, 16
        %s642 = scalar_lea.vmem [#allocation4], %s641
        // Predicated region
        $region183: #{fwd.6} parent=173 // pred_check
          %p643 = pneg %p127
        $region184: #{fwd.6} parent=173 // pred_check_branch
          %645 = sbr.rel (%p643) target = $region186
        $region185: #{fwd.6} parent=173 // pred_region
          _
        $region186: #{fwd.6} parent=173 // pred_fallthru
          _
        %s646 = sand.u32 %s52, 1
        %s647 = sand.u32 %s52, 1
        %s648 = smul.addr %s647, 16
        %s649 = scalar_lea.vmem [#allocation2], %s648
        %p650 = pneg %p65
        %p651 = pneg %p62
        %s652 = sand.u32 %s80, 1
        %s653 = sand.u32 %s80, 1
        %s654 = smul.addr %s653, 16
        %s655 = scalar_lea.vmem [#allocation3], %s654
        %p656 = pneg %p93
        %p657 = pneg %p90
        %s658 = sand.u32 %s114, 1
        %s659 = sand.u32 %s114, 1
        %s660 = smul.addr %s659, 16
        %s661 = scalar_lea.vmem [#allocation4], %s660
        %p662 = pneg %p127
        %p663 = pneg %p124
        %s664 = ssub.s32 %s29, 1
        %p665 = scmp.gt.s32.totalorder %s664, 0
        %s666 = scalar_select %p665, %s664, 0
        %s667 = smul.u32 2, %s666
        %p668 = scmp.lt.s32.totalorder %s667, 9
        %s669 = scalar_select %p668, %s667, 9
        %s670 = scalar_lea.vmem %s3, %s669
        %p671 = pneg %p159
        %p672 = pneg %p156
        %s673 = smul.u32 2, %s29
        %p674 = scmp.lt.s32.totalorder %s673, 9
        %s675 = scalar_select %p674, %s673, 9
        %s676 = scalar_lea.vmem %s4, %s675
        %p677 = pneg %p185
        %p678 = pneg %p182
        %s679 = sadd.s32 %s29, 1
        %p680 = scmp.lt.s32.totalorder %s679, 4
        %s681 = scalar_select %p680, %s679, 4
        %s682 = smul.u32 2, %s681
        %p683 = scmp.lt.s32.totalorder %s682, 9
        %s684 = scalar_select %p683, %s682, 9
        %s685 = scalar_lea.vmem %s5, %s684
        %p686 = pneg %p217
        %p687 = pneg %p214
        %p688 = pneg %p238
        %p689 = pneg %p235
        %p690 = pneg %p259
        %p691 = pneg %p256
        %p692 = pneg %p280
        %p693 = pneg %p277
        %p694 = pneg %p301
        %p695 = pneg %p298
        %p696 = pneg %p322
        %p697 = pneg %p319
        %p698 = pneg %p343
        %p699 = pneg %p340
        %p700 = pneg %p364
        %p701 = pneg %p361
        %p702 = pneg %p392
        %p703 = pneg %p389
        %p704 = scmp.lt.s32.totalorder %s28, 1
        %s705 = scalar_select %p704, %s28, 1
        %p706 = scmp.lt.s32.totalorder %s29, 4
        %s707 = scalar_select %p706, %s29, 4
        %s708 = smul.addr %s707, 4
        %s709 = smul.addr %s705, 20
        %s710 = sadd.s32 %s708, %s709
        %s711 = smul.addr %s710, 8
        %s712 = scalar_lea.vmem %s13, %s711
        %s713 = ssub.s32 %s29, 1
        %p714 = scmp.gt.s32.totalorder %s713, 0
        %s715 = scalar_select %p714, %s713, 0
        %s716 = smul.u32 2, %s715
        %s717 = smul.u32 2, %s29
        %s718 = sadd.s32 %s29, 1
        %p719 = scmp.lt.s32.totalorder %s718, 4
        %s720 = scalar_select %p719, %s718, 4
        %s721 = smul.u32 2, %s720
        %s722 = ssub.s32 %s29, 1
        %p723 = scmp.gt.s32.totalorder %s722, 0
        %s724 = scalar_select %p723, %s722, 0
        %s725 = smul.u32 2, %s724
        %p726 = scmp.lt.s32.totalorder %s725, 9
        %s727 = scalar_select %p726, %s725, 9
        %s728 = scalar_lea.vmem %s3, %s727
        %s729 = ssub.s32 %s29, 1
        %p730 = scmp.gt.s32.totalorder %s729, 0
        %s731 = scalar_select %p730, %s729, 0
        %s732 = smul.u32 2, %s731
        %s733 = smul.u32 2, %s29
        %p734 = scmp.lt.s32.totalorder %s733, 9
        %s735 = scalar_select %p734, %s733, 9
        %s736 = scalar_lea.vmem %s4, %s735
        %s737 = smul.u32 2, %s29
        %s738 = sadd.s32 %s29, 1
        %p739 = scmp.lt.s32.totalorder %s738, 4
        %s740 = scalar_select %p739, %s738, 4
        %s741 = smul.u32 2, %s740
        %p742 = scmp.lt.s32.totalorder %s741, 9
        %s743 = scalar_select %p742, %s741, 9
        %s744 = scalar_lea.vmem %s5, %s743
        %s745 = sadd.s32 %s29, 1
        %p746 = scmp.lt.s32.totalorder %s745, 4
        %s747 = scalar_select %p746, %s745, 4
        %s748 = smul.u32 2, %s747
        %p749 = scmp.lt.s32.totalorder %s28, 1
        %s750 = scalar_select %p749, %s28, 1
        %p751 = scmp.lt.s32.totalorder %s29, 4
        %s752 = scalar_select %p751, %s29, 4
        %s753 = smul.addr %s752, 4
        %s754 = smul.addr %s750, 20
        %s755 = sadd.s32 %s753, %s754
        %s756 = smul.addr %s755, 8
        %s757 = scalar_lea.vmem %s13, %s756
        %v759 = vld [vmem:[%s628] sm:$0xff]
        %v760 = vld [vmem:[%s628 + $0x8] sm:$0xff]
        %v761 = vld [vmem:[%s635] sm:$0xff]
        %v762 = vld [vmem:[%s635 + $0x8] sm:$0xff]
        %v763 = vld [vmem:[%s642] sm:$0xff]
        %v764 = vld [vmem:[%s642 + $0x8] sm:$0xff]
        %v767 = vunpack.c.l.b16 %v759
        %v768 = vunpack.c.h.b16 %v759
        %v769 = vunpack.c.l.b16 %v760
        %v770 = vunpack.c.h.b16 %v760
        %v771 = vpack.c.b16 %v769, %v767
        %v772 = vpack.c.b16 %v770, %v768
        %v775 = vunpack.c.l.b16 %v761
        %v776 = vunpack.c.h.b16 %v761
        %v777 = vunpack.c.l.b16 %v762
        %v778 = vunpack.c.h.b16 %v762
        %v779 = vpack.c.b16 %v777, %v775
        %v780 = vpack.c.b16 %v778, %v776
        %v783 = vunpack.c.l.b16 %v763
        %v784 = vunpack.c.h.b16 %v763
        %v785 = vunpack.c.l.b16 %v764
        %v786 = vunpack.c.h.b16 %v764
        %v787 = vpack.c.b16 %v785, %v783
        %v788 = vpack.c.b16 %v786, %v784
        %v789 = vld [vmem:[%s728] sm:$0x3]
        %v790 = vld [vmem:[%s736] sm:$0x3]
        %v791 = vld [vmem:[%s744] sm:$0x3]
        %v794 = vunpack.c.l.s4 1966171168
        %v795 = vunpack.c.0.s8 %v794
        %v796 = vlaneseq
        %v797 = vshrl.u32 %v796, 7
        %v798 = vsub.s32 %v795, %v797
        %v799 = vrot.slane %v789, %v798
        %v800 = vcombine.high %v799, %v799
        %v802 = vunpack.c.l.s4 1966171168
        %v803 = vunpack.c.0.s8 %v802
        %v804 = vlaneseq
        %v805 = vshrl.u32 %v804, 7
        %v806 = vsub.s32 %v803, %v805
        %v807 = vrot.slane %v799, %v806
        %v809 = vunpack.c.l.s4 1966171168
        %v810 = vunpack.c.0.s8 %v809
        %v811 = vlaneseq
        %v812 = vshrl.u32 %v811, 7
        %v813 = vsub.s32 %v810, %v812
        %v814 = vrot.slane %v800, %v813
        %v819 = vunpack.c.l.s4 1966171168
        %v820 = vunpack.c.0.s8 %v819
        %v821 = vlaneseq
        %v822 = vshrl.u32 %v821, 7
        %v823 = vsub.s32 %v820, %v822
        %v824 = vrot.slane %v790, %v823
        %v825 = vcombine.high %v824, %v824
        %v827 = vunpack.c.l.s4 1966171168
        %v828 = vunpack.c.0.s8 %v827
        %v829 = vlaneseq
        %v830 = vshrl.u32 %v829, 7
        %v831 = vsub.s32 %v828, %v830
        %v832 = vrot.slane %v824, %v831
        %v834 = vunpack.c.l.s4 1966171168
        %v835 = vunpack.c.0.s8 %v834
        %v836 = vlaneseq
        %v837 = vshrl.u32 %v836, 7
        %v838 = vsub.s32 %v835, %v837
        %v839 = vrot.slane %v825, %v838
        %v844 = vunpack.c.l.s4 1966171168
        %v845 = vunpack.c.0.s8 %v844
        %v846 = vlaneseq
        %v847 = vshrl.u32 %v846, 7
        %v848 = vsub.s32 %v845, %v847
        %v849 = vrot.slane %v791, %v848
        %v850 = vcombine.high %v849, %v849
        %v852 = vunpack.c.l.s4 1966171168
        %v853 = vunpack.c.0.s8 %v852
        %v854 = vlaneseq
        %v855 = vshrl.u32 %v854, 7
        %v856 = vsub.s32 %v853, %v855
        %v857 = vrot.slane %v849, %v856
        %v859 = vunpack.c.l.s4 1966171168
        %v860 = vunpack.c.0.s8 %v859
        %v861 = vlaneseq
        %v862 = vshrl.u32 %v861, 7
        %v863 = vsub.s32 %v860, %v862
        %v864 = vrot.slane %v850, %v863
        %868 = vrot.lane.b32.xlu0 0, 127
        %v869 = vpop.permute.xlu0 %868
        %870 = vrot.lane.b32.xlu0 %v771, 127
        %v871 = vpop.permute.xlu0 %870
        %872 = vrot.lane.b32.xlu0 %v772, 127
        %v873 = vpop.permute.xlu0 %872
        %874 = vrot.lane.b32.xlu0 %v779, 127
        %v875 = vpop.permute.xlu0 %874
        %876 = vrot.lane.b32.xlu0 %v780, 127
        %v877 = vpop.permute.xlu0 %876
        %878 = vrot.lane.b32.xlu0 %v787, 127
        %v879 = vpop.permute.xlu0 %878
        %vm880 = vcmask 1039360
        %v881 = vsel %vm880, %v869, %v871
        %v882 = vsel %vm880, %v871, %v873
        %v883 = vsel %vm880, %v873, %v875
        %v884 = vsel %vm880, %v875, %v877
        %v885 = vsel %vm880, %v877, %v879
        %886 = vrot.lane.b32.xlu0 0, 126
        %v887 = vpop.permute.xlu0 %886
        %888 = vrot.lane.b32.xlu0 %v771, 126
        %v889 = vpop.permute.xlu0 %888
        %890 = vrot.lane.b32.xlu0 %v772, 126
        %v891 = vpop.permute.xlu0 %890
        %892 = vrot.lane.b32.xlu0 %v779, 126
        %v893 = vpop.permute.xlu0 %892
        %894 = vrot.lane.b32.xlu0 %v780, 126
        %v895 = vpop.permute.xlu0 %894
        %896 = vrot.lane.b32.xlu0 %v787, 126
        %v897 = vpop.permute.xlu0 %896
        %vm898 = vcmask 1031168
        %v899 = vsel %vm898, %v887, %v889
        %v900 = vsel %vm898, %v889, %v891
        %v901 = vsel %vm898, %v891, %v893
        %v902 = vsel %vm898, %v893, %v895
        %v903 = vsel %vm898, %v895, %v897
        %904 = vrot.lane.b32.xlu0 0, 118
        %v905 = vpop.permute.xlu0 %904
        %906 = vrot.lane.b32.xlu0 %v771, 118
        %v907 = vpop.permute.xlu0 %906
        %908 = vrot.lane.b32.xlu0 %v772, 118
        %v909 = vpop.permute.xlu0 %908
        %910 = vrot.lane.b32.xlu0 %v779, 118
        %v911 = vpop.permute.xlu0 %910
        %912 = vrot.lane.b32.xlu0 %v780, 118
        %v913 = vpop.permute.xlu0 %912
        %914 = vrot.lane.b32.xlu0 %v787, 118
        %v915 = vpop.permute.xlu0 %914
        %vm916 = vcmask 965632
        %v917 = vsel %vm916, %v905, %v907
        %v918 = vsel %vm916, %v907, %v909
        %v919 = vsel %vm916, %v909, %v911
        %v920 = vsel %vm916, %v911, %v913
        %v921 = vsel %vm916, %v913, %v915
        %922 = vrot.lane.b32.xlu0 0, 117
        %v923 = vpop.permute.xlu0 %922
        %924 = vrot.lane.b32.xlu0 %v771, 117
        %v925 = vpop.permute.xlu0 %924
        %926 = vrot.lane.b32.xlu0 %v772, 117
        %v927 = vpop.permute.xlu0 %926
        %928 = vrot.lane.b32.xlu0 %v779, 117
        %v929 = vpop.permute.xlu0 %928
        %930 = vrot.lane.b32.xlu0 %v780, 117
        %v931 = vpop.permute.xlu0 %930
        %932 = vrot.lane.b32.xlu0 %v787, 117
        %v933 = vpop.permute.xlu0 %932
        %vm934 = vcmask 957440
        %v935 = vsel %vm934, %v923, %v925
        %v936 = vsel %vm934, %v925, %v927
        %v937 = vsel %vm934, %v927, %v929
        %v938 = vsel %vm934, %v929, %v931
        %v939 = vsel %vm934, %v931, %v933
        %940 = vrot.lane.b32.xlu0 0, 116
        %v941 = vpop.permute.xlu0 %940
        %942 = vrot.lane.b32.xlu0 %v771, 116
        %v943 = vpop.permute.xlu0 %942
        %944 = vrot.lane.b32.xlu0 %v772, 116
        %v945 = vpop.permute.xlu0 %944
        %946 = vrot.lane.b32.xlu0 %v779, 116
        %v947 = vpop.permute.xlu0 %946
        %948 = vrot.lane.b32.xlu0 %v780, 116
        %v949 = vpop.permute.xlu0 %948
        %950 = vrot.lane.b32.xlu0 %v787, 116
        %v951 = vpop.permute.xlu0 %950
        %952 = vrot.lane.b32.xlu0 %v788, 116
        %v953 = vpop.permute.xlu0 %952
        %vm954 = vcmask 949248
        %v955 = vsel %vm954, %v941, %v943
        %v956 = vsel %vm954, %v943, %v945
        %v957 = vsel %vm954, %v945, %v947
        %v958 = vsel %vm954, %v947, %v949
        %v959 = vsel %vm954, %v949, %v951
        %v960 = vsel %vm954, %v951, %v953
        %961 = vrot.lane.b32.xlu0 0, 108
        %v962 = vpop.permute.xlu0 %961
        %963 = vrot.lane.b32.xlu0 %v771, 108
        %v964 = vpop.permute.xlu0 %963
        %965 = vrot.lane.b32.xlu0 %v772, 108
        %v966 = vpop.permute.xlu0 %965
        %967 = vrot.lane.b32.xlu0 %v779, 108
        %v968 = vpop.permute.xlu0 %967
        %969 = vrot.lane.b32.xlu0 %v780, 108
        %v970 = vpop.permute.xlu0 %969
        %971 = vrot.lane.b32.xlu0 %v787, 108
        %v972 = vpop.permute.xlu0 %971
        %973 = vrot.lane.b32.xlu0 %v788, 108
        %v974 = vpop.permute.xlu0 %973
        %vm975 = vcmask 883712
        %v976 = vsel %vm975, %v962, %v964
        %v977 = vsel %vm975, %v964, %v966
        %v978 = vsel %vm975, %v966, %v968
        %v979 = vsel %vm975, %v968, %v970
        %v980 = vsel %vm975, %v970, %v972
        %v981 = vsel %vm975, %v972, %v974
        %982 = vrot.lane.b32.xlu0 0, 107
        %v983 = vpop.permute.xlu0 %982
        %984 = vrot.lane.b32.xlu0 %v771, 107
        %v985 = vpop.permute.xlu0 %984
        %986 = vrot.lane.b32.xlu0 %v772, 107
        %v987 = vpop.permute.xlu0 %986
        %988 = vrot.lane.b32.xlu0 %v779, 107
        %v989 = vpop.permute.xlu0 %988
        %990 = vrot.lane.b32.xlu0 %v780, 107
        %v991 = vpop.permute.xlu0 %990
        %992 = vrot.lane.b32.xlu0 %v787, 107
        %v993 = vpop.permute.xlu0 %992
        %994 = vrot.lane.b32.xlu0 %v788, 107
        %v995 = vpop.permute.xlu0 %994
        %vm996 = vcmask 875520
        %v997 = vsel %vm996, %v983, %v985
        %v998 = vsel %vm996, %v985, %v987
        %v999 = vsel %vm996, %v987, %v989
        %v1000 = vsel %vm996, %v989, %v991
        %v1001 = vsel %vm996, %v991, %v993
        %v1002 = vsel %vm996, %v993, %v995
        %1003 = vrot.lane.b32.xlu0 0, 106
        %v1004 = vpop.permute.xlu0 %1003
        %1005 = vrot.lane.b32.xlu0 %v771, 106
        %v1006 = vpop.permute.xlu0 %1005
        %1007 = vrot.lane.b32.xlu0 %v772, 106
        %v1008 = vpop.permute.xlu0 %1007
        %1009 = vrot.lane.b32.xlu0 %v779, 106
        %v1010 = vpop.permute.xlu0 %1009
        %1011 = vrot.lane.b32.xlu0 %v780, 106
        %v1012 = vpop.permute.xlu0 %1011
        %1013 = vrot.lane.b32.xlu0 %v787, 106
        %v1014 = vpop.permute.xlu0 %1013
        %1015 = vrot.lane.b32.xlu0 %v788, 106
        %v1016 = vpop.permute.xlu0 %1015
        %vm1017 = vcmask 867328
        %v1018 = vsel %vm1017, %v1004, %v1006
        %v1019 = vsel %vm1017, %v1006, %v1008
        %v1020 = vsel %vm1017, %v1008, %v1010
        %v1021 = vsel %vm1017, %v1010, %v1012
        %v1022 = vsel %vm1017, %v1012, %v1014
        %v1023 = vsel %vm1017, %v1014, %v1016
        %v1024 = vld [vmem:[%s6] sm:$0xff]
        %v1025 = vld [vmem:[%s6 + $0x8] sm:$0xff]
        %v1026 = vld [vmem:[%s6 + $0x10] sm:$0xff]
        %v1027 = vld [vmem:[%s6 + $0x18] sm:$0xff]
        %1028 = vrot.lane.b32.xlu0 %v788, 127
        %v1029 = vpop.permute.xlu0 %1028
        %v1030 = vsel %vm880, %v879, %v1029
        %1031 = vrot.lane.b32.xlu0 %v788, 126
        %v1032 = vpop.permute.xlu0 %1031
        %v1033 = vsel %vm898, %v897, %v1032
        %1034 = vrot.lane.b32.xlu0 %v788, 118
        %v1035 = vpop.permute.xlu0 %1034
        %v1036 = vsel %vm916, %v915, %v1035
        %1037 = vrot.lane.b32.xlu0 %v788, 117
        %v1038 = vpop.permute.xlu0 %1037
        %v1039 = vsel %vm934, %v933, %v1038
        %v1040 = vsel %vm954, %v953, %v941
        %v1041 = vsel %vm975, %v974, %v962
        %v1042 = vsel %vm996, %v995, %v983
        %v1043 = vsel %vm1017, %v1016, %v1004
        %s1044 = scalar_lea.vmem %s6, 32
        %v1045 = vld [vmem:[%s1044] sm:$0xff]
        %v1046 = vld [vmem:[%s1044 + $0x8] sm:$0xff]
        %v1047 = vld [vmem:[%s1044 + $0x10] sm:$0xff]
        %v1048 = vld [vmem:[%s1044 + $0x18] sm:$0xff]
        %v1053 = vunpack.c.l.b16 %v1045
        %v1054 = vunpack.c.h.b16 %v1045
        %v1055 = vunpack.c.l.b16 %v1046
        %v1056 = vunpack.c.h.b16 %v1046
        %v1057 = vunpack.c.l.b16 %v1047
        %v1058 = vunpack.c.h.b16 %v1047
        %v1059 = vunpack.c.l.b16 %v1048
        %v1060 = vunpack.c.h.b16 %v1048
        %v1061 = vpack.c.b16 %v1055, %v1053
        %v1062 = vpack.c.b16 %v1056, %v1054
        %v1063 = vpack.c.b16 %v1059, %v1057
        %v1064 = vpack.c.b16 %v1060, %v1058
        %1067 = vrot.lane.b32.xlu0 0, 11
        %v1068 = vpop.permute.xlu0 %1067
        %1069 = vrot.lane.b32.xlu0 %v771, 11
        %v1070 = vpop.permute.xlu0 %1069
        %1071 = vrot.lane.b32.xlu0 %v772, 11
        %v1072 = vpop.permute.xlu0 %1071
        %1073 = vrot.lane.b32.xlu0 %v779, 11
        %v1074 = vpop.permute.xlu0 %1073
        %1075 = vrot.lane.b32.xlu0 %v780, 11
        %v1076 = vpop.permute.xlu0 %1075
        %1077 = vrot.lane.b32.xlu0 %v787, 11
        %v1078 = vpop.permute.xlu0 %1077
        %1079 = vrot.lane.b32.xlu0 %v788, 11
        %v1080 = vpop.permute.xlu0 %1079
        %1081 = vrot.lane.b32.xlu0 %v881, 11
        %v1082 = vpop.permute.xlu0 %1081
        %1083 = vrot.lane.b32.xlu0 %v882, 11
        %v1084 = vpop.permute.xlu0 %1083
        %1085 = vrot.lane.b32.xlu0 %v883, 11
        %v1086 = vpop.permute.xlu0 %1085
        %1087 = vrot.lane.b32.xlu0 %v884, 11
        %v1088 = vpop.permute.xlu0 %1087
        %1089 = vrot.lane.b32.xlu0 %v885, 11
        %v1090 = vpop.permute.xlu0 %1089
        %1091 = vrot.lane.b32.xlu0 %v1030, 11
        %v1092 = vpop.permute.xlu0 %1091
        %1093 = vrot.lane.b32.xlu0 %v1029, 11
        %v1094 = vpop.permute.xlu0 %1093
        %1095 = vrot.lane.b32.xlu0 %v899, 11
        %v1096 = vpop.permute.xlu0 %1095
        %1097 = vrot.lane.b32.xlu0 %v900, 11
        %v1098 = vpop.permute.xlu0 %1097
        %1099 = vrot.lane.b32.xlu0 %v901, 11
        %v1100 = vpop.permute.xlu0 %1099
        %1101 = vrot.lane.b32.xlu0 %v902, 11
        %v1102 = vpop.permute.xlu0 %1101
        %1103 = vrot.lane.b32.xlu0 %v903, 11
        %v1104 = vpop.permute.xlu0 %1103
        %1105 = vrot.lane.b32.xlu0 %v1033, 11
        %v1106 = vpop.permute.xlu0 %1105
        %1107 = vrot.lane.b32.xlu0 %v1032, 11
        %v1108 = vpop.permute.xlu0 %1107
        %1109 = vrot.lane.b32.xlu0 %v917, 11
        %v1110 = vpop.permute.xlu0 %1109
        %1111 = vrot.lane.b32.xlu0 %v918, 11
        %v1112 = vpop.permute.xlu0 %1111
        %1113 = vrot.lane.b32.xlu0 %v919, 11
        %v1114 = vpop.permute.xlu0 %1113
        %1115 = vrot.lane.b32.xlu0 %v920, 11
        %v1116 = vpop.permute.xlu0 %1115
        %1117 = vrot.lane.b32.xlu0 %v921, 11
        %v1118 = vpop.permute.xlu0 %1117
        %1119 = vrot.lane.b32.xlu0 %v1036, 11
        %v1120 = vpop.permute.xlu0 %1119
        %1121 = vrot.lane.b32.xlu0 %v1035, 11
        %v1122 = vpop.permute.xlu0 %1121
        %1123 = vrot.lane.b32.xlu0 %v925, 11
        %v1124 = vpop.permute.xlu0 %1123
        %1125 = vrot.lane.b32.xlu0 %v936, 11
        %v1126 = vpop.permute.xlu0 %1125
        %1127 = vrot.lane.b32.xlu0 %v937, 11
        %v1128 = vpop.permute.xlu0 %1127
        %1129 = vrot.lane.b32.xlu0 %v938, 11
        %v1130 = vpop.permute.xlu0 %1129
        %1131 = vrot.lane.b32.xlu0 %v939, 11
        %v1132 = vpop.permute.xlu0 %1131
        %1133 = vrot.lane.b32.xlu0 %v1039, 11
        %v1134 = vpop.permute.xlu0 %1133
        %1135 = vrot.lane.b32.xlu0 %v1038, 11
        %v1136 = vpop.permute.xlu0 %1135
        %1137 = vrot.lane.b32.xlu0 %v943, 11
        %v1138 = vpop.permute.xlu0 %1137
        %1139 = vrot.lane.b32.xlu0 %v956, 11
        %v1140 = vpop.permute.xlu0 %1139
        %1141 = vrot.lane.b32.xlu0 %v957, 11
        %v1142 = vpop.permute.xlu0 %1141
        %1143 = vrot.lane.b32.xlu0 %v958, 11
        %v1144 = vpop.permute.xlu0 %1143
        %1145 = vrot.lane.b32.xlu0 %v959, 11
        %v1146 = vpop.permute.xlu0 %1145
        %1147 = vrot.lane.b32.xlu0 %v960, 11
        %v1148 = vpop.permute.xlu0 %1147
        %1149 = vrot.lane.b32.xlu0 %v1040, 11
        %v1150 = vpop.permute.xlu0 %1149
        %1151 = vrot.lane.b32.xlu0 %v964, 11
        %v1152 = vpop.permute.xlu0 %1151
        %1153 = vrot.lane.b32.xlu0 %v977, 11
        %v1154 = vpop.permute.xlu0 %1153
        %1155 = vrot.lane.b32.xlu0 %v978, 11
        %v1156 = vpop.permute.xlu0 %1155
        %1157 = vrot.lane.b32.xlu0 %v979, 11
        %v1158 = vpop.permute.xlu0 %1157
        %1159 = vrot.lane.b32.xlu0 %v980, 11
        %v1160 = vpop.permute.xlu0 %1159
        %1161 = vrot.lane.b32.xlu0 %v981, 11
        %v1162 = vpop.permute.xlu0 %1161
        %1163 = vrot.lane.b32.xlu0 %v1041, 11
        %v1164 = vpop.permute.xlu0 %1163
        %1165 = vrot.lane.b32.xlu0 %v985, 11
        %v1166 = vpop.permute.xlu0 %1165
        %1167 = vrot.lane.b32.xlu0 %v998, 11
        %v1168 = vpop.permute.xlu0 %1167
        %1169 = vrot.lane.b32.xlu0 %v999, 11
        %v1170 = vpop.permute.xlu0 %1169
        %1171 = vrot.lane.b32.xlu0 %v1000, 11
        %v1172 = vpop.permute.xlu0 %1171
        %1173 = vrot.lane.b32.xlu0 %v1001, 11
        %v1174 = vpop.permute.xlu0 %1173
        %1175 = vrot.lane.b32.xlu0 %v1002, 11
        %v1176 = vpop.permute.xlu0 %1175
        %1177 = vrot.lane.b32.xlu0 %v1042, 11
        %v1178 = vpop.permute.xlu0 %1177
        %1179 = vrot.lane.b32.xlu0 %v1006, 11
        %v1180 = vpop.permute.xlu0 %1179
        %1181 = vrot.lane.b32.xlu0 %v1019, 11
        %v1182 = vpop.permute.xlu0 %1181
        %1183 = vrot.lane.b32.xlu0 %v1020, 11
        %v1184 = vpop.permute.xlu0 %1183
        %1185 = vrot.lane.b32.xlu0 %v1021, 11
        %v1186 = vpop.permute.xlu0 %1185
        %1187 = vrot.lane.b32.xlu0 %v1022, 11
        %v1188 = vpop.permute.xlu0 %1187
        %1189 = vrot.lane.b32.xlu0 %v1023, 11
        %v1190 = vpop.permute.xlu0 %1189
        %1191 = vrot.lane.b32.xlu0 %v1043, 11
        %v1192 = vpop.permute.xlu0 %1191
        %vm1193 = vcmask 89088
        %v1194 = vsel %vm1193, %v1068, %v1070
        %v1195 = vsel %vm1193, %v1070, %v1072
        %v1196 = vsel %vm1193, %v1072, %v1074
        %v1197 = vsel %vm1193, %v1074, %v1076
        %v1198 = vsel %vm1193, %v1076, %v1078
        %v1199 = vsel %vm1193, %v1078, %v1080
        %v1200 = vsel %vm1193, %v1082, %v1084
        %v1201 = vsel %vm1193, %v1084, %v1086
        %v1202 = vsel %vm1193, %v1086, %v1088
        %v1203 = vsel %vm1193, %v1088, %v1090
        %v1204 = vsel %vm1193, %v1090, %v1092
        %v1205 = vsel %vm1193, %v1092, %v1094
        %v1206 = vsel %vm1193, %v1096, %v1098
        %v1207 = vsel %vm1193, %v1098, %v1100
        %v1208 = vsel %vm1193, %v1100, %v1102
        %v1209 = vsel %vm1193, %v1102, %v1104
        %v1210 = vsel %vm1193, %v1104, %v1106
        %v1211 = vsel %vm1193, %v1106, %v1108
        %v1212 = vsel %vm1193, %v1110, %v1112
        %v1213 = vsel %vm1193, %v1112, %v1114
        %v1214 = vsel %vm1193, %v1114, %v1116
        %v1215 = vsel %vm1193, %v1116, %v1118
        %v1216 = vsel %vm1193, %v1118, %v1120
        %v1217 = vsel %vm1193, %v1120, %v1122
        %v1218 = vsel %vm1193, %v1124, %v1126
        %v1219 = vsel %vm1193, %v1126, %v1128
        %v1220 = vsel %vm1193, %v1128, %v1130
        %v1221 = vsel %vm1193, %v1130, %v1132
        %v1222 = vsel %vm1193, %v1132, %v1134
        %v1223 = vsel %vm1193, %v1134, %v1136
        %v1224 = vsel %vm1193, %v1138, %v1140
        %v1225 = vsel %vm1193, %v1140, %v1142
        %v1226 = vsel %vm1193, %v1142, %v1144
        %v1227 = vsel %vm1193, %v1144, %v1146
        %v1228 = vsel %vm1193, %v1146, %v1148
        %v1229 = vsel %vm1193, %v1148, %v1150
        %v1230 = vsel %vm1193, %v1152, %v1154
        %v1231 = vsel %vm1193, %v1154, %v1156
        %v1232 = vsel %vm1193, %v1156, %v1158
        %v1233 = vsel %vm1193, %v1158, %v1160
        %v1234 = vsel %vm1193, %v1160, %v1162
        %v1235 = vsel %vm1193, %v1162, %v1164
        %v1236 = vsel %vm1193, %v1166, %v1168
        %v1237 = vsel %vm1193, %v1168, %v1170
        %v1238 = vsel %vm1193, %v1170, %v1172
        %v1239 = vsel %vm1193, %v1172, %v1174
        %v1240 = vsel %vm1193, %v1174, %v1176
        %v1241 = vsel %vm1193, %v1176, %v1178
        %v1242 = vsel %vm1193, %v1180, %v1182
        %v1243 = vsel %vm1193, %v1182, %v1184
        %v1244 = vsel %vm1193, %v1184, %v1186
        %v1245 = vsel %vm1193, %v1186, %v1188
        %v1246 = vsel %vm1193, %v1188, %v1190
        %v1247 = vsel %vm1193, %v1190, %v1192
        %vm1302 = vcmask 130048
        %v1304 = vsel %vm1302, %v1062, 0
        %v1307 = vsel %vm1302, %v1064, 0
        %1309 = vmatprep.subr.bf16.mxu0 %v1195
        %1310 = vmatpush1.bf16.msra.mxu0 %v1194
        %1311 = vmatprep.subr.bf16.mxu0 %v1201
        %1312 = vmatpush1.bf16.msra.mxu0 %v1200
        %1313 = vmatprep.subr.bf16.mxu0 %v1207
        %1314 = vmatpush1.bf16.msra.mxu0 %v1206
        %1315 = vmatprep.subr.bf16.mxu0 %v1213
        %1316 = vmatpush1.bf16.msra.mxu0 %v1212
        %1317 = vmatprep.subr.bf16.mxu0 %v1219
        %1318 = vmatpush1.bf16.msra.mxu0 %v1218
        %1319 = vmatprep.subr.bf16.mxu0 %v1225
        %1320 = vmatpush1.bf16.msra.mxu0 %v1224
        %1321 = vmatprep.subr.bf16.mxu0 %v1231
        %1322 = vmatpush1.bf16.msra.mxu0 %v1230
        %1323 = vmatprep.subr.bf16.mxu0 %v1237
        %1324 = vmatpush1.bf16.msra.mxu0 %v1236
        %1325 = vmatprep.subr.bf16.mxu0 %v1243
        %1326 = vmatpush1.bf16.msra.mxu0 %v1242
        %1327 = vmatprep.subr.bf16.mxu0 0
        %1328 = vmatpush1.bf16.msra.mxu0 0
        %1329 = vmatprep.subr.bf16.mxu0 0
        %1330 = vmatpush1.bf16.msra.mxu0 0
        %1331 = vmatprep.subr.bf16.mxu0 0
        %1332 = vmatpush1.bf16.msra.mxu0 0
        %1333 = vmatprep.subr.bf16.mxu0 0
        %1334 = vmatpush1.bf16.msra.mxu0 0
        %1335 = vmatprep.subr.bf16.mxu0 0
        %1336 = vmatpush1.bf16.msra.mxu0 0
        %1337 = vmatprep.subr.bf16.mxu0 0
        %1338 = vmatpush1.bf16.msra.mxu0 0
        %1339 = vmatprep.subr.bf16.mxu0 0
        %1340 = vmatpush1.bf16.msra.mxu0 0
        %1341 = vmatprep.mubr.bf16.mxu0 %v1304
        %1342 = vmatmul.mubr.bf16.gmra.mrb[0].mxu0 %v1061
        %v1343 = vpop.f32.mrb[0].mxu0
        %v1344 = vadd.f32 0.0, %v1343
        %v1345 = vpop.f32.mrb[0].mxu0
        %v1346 = vadd.f32 0.0, %v1345
        %v1347 = vpop.f32.mrb[0].mxu0
        %v1348 = vadd.f32 0.0, %v1347
        %v1349 = vpop.f32.mrb[0].mxu0
        %v1350 = vadd.f32 0.0, %v1349
        %1351 = vmatprep.mubr.bf16.mxu0 %v1307
        %1352 = vmatmul.mubr.bf16.gmra.mrb[0].mxu0 %v1063
        %v1353 = vpop.f32.mrb[0].mxu0
        %v1354 = vadd.f32 0.0, %v1353
        %v1355 = vpop.f32.mrb[0].mxu0
        %v1356 = vadd.f32 0.0, %v1355
        %v1357 = vpop.f32.mrb[0].mxu0
        %v1358 = vadd.f32 0.0, %v1357
        %v1359 = vpop.f32.mrb[0].mxu0
        %v1360 = vadd.f32 0.0, %v1359
        %1361 = vdwg.mxu0
        %1362 = vmatprep.subr.bf16.mxu0 %v1197
        %1363 = vmatpush1.bf16.msra.mxu0 %v1196
        %1364 = vmatprep.subr.bf16.mxu0 %v1203
        %1365 = vmatpush1.bf16.msra.mxu0 %v1202
        %1366 = vmatprep.subr.bf16.mxu0 %v1209
        %1367 = vmatpush1.bf16.msra.mxu0 %v1208
        %1368 = vmatprep.subr.bf16.mxu0 %v1215
        %1369 = vmatpush1.bf16.msra.mxu0 %v1214
        %1370 = vmatprep.subr.bf16.mxu0 %v1221
        %1371 = vmatpush1.bf16.msra.mxu0 %v1220
        %1372 = vmatprep.subr.bf16.mxu0 %v1227
        %1373 = vmatpush1.bf16.msra.mxu0 %v1226
        %1374 = vmatprep.subr.bf16.mxu0 %v1233
        %1375 = vmatpush1.bf16.msra.mxu0 %v1232
        %1376 = vmatprep.subr.bf16.mxu0 %v1239
        %1377 = vmatpush1.bf16.msra.mxu0 %v1238
        %1378 = vmatprep.subr.bf16.mxu0 %v1245
        %1379 = vmatpush1.bf16.msra.mxu0 %v1244
        %1380 = vmatprep.subr.bf16.mxu0 0
        %1381 = vmatpush1.bf16.msra.mxu0 0
        %1382 = vmatprep.subr.bf16.mxu0 0
        %1383 = vmatpush1.bf16.msra.mxu0 0
        %1384 = vmatprep.subr.bf16.mxu0 0
        %1385 = vmatpush1.bf16.msra.mxu0 0
        %1386 = vmatprep.subr.bf16.mxu0 0
        %1387 = vmatpush1.bf16.msra.mxu0 0
        %1388 = vmatprep.subr.bf16.mxu0 0
        %1389 = vmatpush1.bf16.msra.mxu0 0
        %1390 = vmatprep.subr.bf16.mxu0 0
        %1391 = vmatpush1.bf16.msra.mxu0 0
        %1392 = vmatprep.subr.bf16.mxu0 0
        %1393 = vmatpush1.bf16.msra.mxu0 0
        %1394 = vmatprep.mubr.bf16.mxu0 %v1304
        %1395 = vmatmul.mubr.bf16.gmra.mrb[0].mxu0 %v1061
        %v1396 = vpop.f32.mrb[0].mxu0
        %v1397 = vadd.f32 0.0, %v1396
        %v1398 = vpop.f32.mrb[0].mxu0
        %v1399 = vadd.f32 0.0, %v1398
        %v1400 = vpop.f32.mrb[0].mxu0
        %v1401 = vadd.f32 0.0, %v1400
        %v1402 = vpop.f32.mrb[0].mxu0
        %v1403 = vadd.f32 0.0, %v1402
        %1404 = vmatprep.mubr.bf16.mxu0 %v1307
        %1405 = vmatmul.mubr.bf16.gmra.mrb[0].mxu0 %v1063
        %v1406 = vpop.f32.mrb[0].mxu0
        %v1407 = vadd.f32 0.0, %v1406
        %v1408 = vpop.f32.mrb[0].mxu0
        %v1409 = vadd.f32 0.0, %v1408
        %v1410 = vpop.f32.mrb[0].mxu0
        %v1411 = vadd.f32 0.0, %v1410
        %v1412 = vpop.f32.mrb[0].mxu0
        %v1413 = vadd.f32 0.0, %v1412
        %1414 = vdwg.mxu0
        %1415 = vmatprep.subr.bf16.mxu0 %v1199
        %1416 = vmatpush1.bf16.msra.mxu0 %v1198
        %1417 = vmatprep.subr.bf16.mxu0 %v1205
        %1418 = vmatpush1.bf16.msra.mxu0 %v1204
        %1419 = vmatprep.subr.bf16.mxu0 %v1211
        %1420 = vmatpush1.bf16.msra.mxu0 %v1210
        %1421 = vmatprep.subr.bf16.mxu0 %v1217
        %1422 = vmatpush1.bf16.msra.mxu0 %v1216
        %1423 = vmatprep.subr.bf16.mxu0 %v1223
        %1424 = vmatpush1.bf16.msra.mxu0 %v1222
        %1425 = vmatprep.subr.bf16.mxu0 %v1229
        %1426 = vmatpush1.bf16.msra.mxu0 %v1228
        %1427 = vmatprep.subr.bf16.mxu0 %v1235
        %1428 = vmatpush1.bf16.msra.mxu0 %v1234
        %1429 = vmatprep.subr.bf16.mxu0 %v1241
        %1430 = vmatpush1.bf16.msra.mxu0 %v1240
        %1431 = vmatprep.subr.bf16.mxu0 %v1247
        %1432 = vmatpush1.bf16.msra.mxu0 %v1246
        %1433 = vmatprep.subr.bf16.mxu0 0
        %1434 = vmatpush1.bf16.msra.mxu0 0
        %1435 = vmatprep.subr.bf16.mxu0 0
        %1436 = vmatpush1.bf16.msra.mxu0 0
        %1437 = vmatprep.subr.bf16.mxu0 0
        %1438 = vmatpush1.bf16.msra.mxu0 0
        %1439 = vmatprep.subr.bf16.mxu0 0
        %1440 = vmatpush1.bf16.msra.mxu0 0
        %1441 = vmatprep.subr.bf16.mxu0 0
        %1442 = vmatpush1.bf16.msra.mxu0 0
        %1443 = vmatprep.subr.bf16.mxu0 0
        %1444 = vmatpush1.bf16.msra.mxu0 0
        %1445 = vmatprep.subr.bf16.mxu0 0
        %1446 = vmatpush1.bf16.msra.mxu0 0
        %1447 = vmatprep.mubr.bf16.mxu0 %v1304
        %1448 = vmatmul.mubr.bf16.gmra.mrb[0].mxu0 %v1061
        %v1449 = vpop.f32.mrb[0].mxu0
        %v1450 = vadd.f32 0.0, %v1449
        %v1451 = vpop.f32.mrb[0].mxu0
        %v1452 = vadd.f32 0.0, %v1451
        %v1453 = vpop.f32.mrb[0].mxu0
        %v1454 = vadd.f32 0.0, %v1453
        %v1455 = vpop.f32.mrb[0].mxu0
        %v1456 = vadd.f32 0.0, %v1455
        %1457 = vmatprep.mubr.bf16.mxu0 %v1307
        %1458 = vmatmul.mubr.bf16.gmra.mrb[0].mxu0 %v1063
        %v1459 = vpop.f32.mrb[0].mxu0
        %v1460 = vadd.f32 0.0, %v1459
        %v1461 = vpop.f32.mrb[0].mxu0
        %v1462 = vadd.f32 0.0, %v1461
        %v1463 = vpop.f32.mrb[0].mxu0
        %v1464 = vadd.f32 0.0, %v1463
        %v1465 = vpop.f32.mrb[0].mxu0
        %v1466 = vadd.f32 0.0, %v1465
        %1467 = vdwg.mxu0
        %v1472 = vunpack.c.l.b16 %v1024
        %v1473 = vunpack.c.h.b16 %v1024
        %v1474 = vunpack.c.l.b16 %v1025
        %v1475 = vunpack.c.h.b16 %v1025
        %v1476 = vunpack.c.l.b16 %v1026
        %v1477 = vunpack.c.h.b16 %v1026
        %v1478 = vunpack.c.l.b16 %v1027
        %v1479 = vunpack.c.h.b16 %v1027
        %v1480 = vpack.c.b16 %v1474, %v1472
        %v1481 = vpack.c.b16 %v1475, %v1473
        %v1482 = vpack.c.b16 %v1478, %v1476
        %v1483 = vpack.c.b16 %v1479, %v1477
        %1486 = vrot.lane.b32.xlu0 %v869, 11
        %v1487 = vpop.permute.xlu0 %1486
        %1488 = vrot.lane.b32.xlu0 %v879, 11
        %v1489 = vpop.permute.xlu0 %1488
        %1490 = vrot.lane.b32.xlu0 %v887, 11
        %v1491 = vpop.permute.xlu0 %1490
        %1492 = vrot.lane.b32.xlu0 %v897, 11
        %v1493 = vpop.permute.xlu0 %1492
        %1494 = vrot.lane.b32.xlu0 %v905, 11
        %v1495 = vpop.permute.xlu0 %1494
        %1496 = vrot.lane.b32.xlu0 %v915, 11
        %v1497 = vpop.permute.xlu0 %1496
        %1498 = vrot.lane.b32.xlu0 %v923, 11
        %v1499 = vpop.permute.xlu0 %1498
        %1500 = vrot.lane.b32.xlu0 %v935, 11
        %v1501 = vpop.permute.xlu0 %1500
        %1502 = vrot.lane.b32.xlu0 %v933, 11
        %v1503 = vpop.permute.xlu0 %1502
        %1504 = vrot.lane.b32.xlu0 %v941, 11
        %v1505 = vpop.permute.xlu0 %1504
        %1506 = vrot.lane.b32.xlu0 %v955, 11
        %v1507 = vpop.permute.xlu0 %1506
        %1508 = vrot.lane.b32.xlu0 %v962, 11
        %v1509 = vpop.permute.xlu0 %1508
        %1510 = vrot.lane.b32.xlu0 %v976, 11
        %v1511 = vpop.permute.xlu0 %1510
        %1512 = vrot.lane.b32.xlu0 %v983, 11
        %v1513 = vpop.permute.xlu0 %1512
        %1514 = vrot.lane.b32.xlu0 %v997, 11
        %v1515 = vpop.permute.xlu0 %1514
        %1516 = vrot.lane.b32.xlu0 %v1004, 11
        %v1517 = vpop.permute.xlu0 %1516
        %1518 = vrot.lane.b32.xlu0 %v1018, 11
        %v1519 = vpop.permute.xlu0 %1518
        %v1520 = vsel %vm1193, %v1487, %v1082
        %v1521 = vsel %vm1193, %v1090, %v1489
        %v1522 = vsel %vm1193, %v1491, %v1096
        %v1523 = vsel %vm1193, %v1104, %v1493
        %v1524 = vsel %vm1193, %v1495, %v1110
        %v1525 = vsel %vm1193, %v1118, %v1497
        %v1526 = vsel %vm1193, %v1499, %v1501
        %v1527 = vsel %vm1193, %v1501, %v1126
        %v1528 = vsel %vm1193, %v1132, %v1503
        %v1529 = vsel %vm1193, %v1505, %v1507
        %v1530 = vsel %vm1193, %v1507, %v1140
        %v1531 = vsel %vm1193, %v1509, %v1511
        %v1532 = vsel %vm1193, %v1511, %v1154
        %v1533 = vsel %vm1193, %v1513, %v1515
        %v1534 = vsel %vm1193, %v1515, %v1168
        %v1535 = vsel %vm1193, %v1517, %v1519
        %v1536 = vsel %vm1193, %v1519, %v1182
        %v1556 = vsel %vm1302, %v1481, 0
        %v1559 = vsel %vm1302, %v1483, 0
        %1561 = vmatprep.subr.bf16.mxu0 %v1194
        %1562 = vmatpush1.bf16.msra.mxu0 %v1068
        %1563 = vmatprep.subr.bf16.mxu0 %v1200
        %1564 = vmatpush1.bf16.msra.mxu0 %v1520
        %1565 = vmatprep.subr.bf16.mxu0 %v1206
        %1566 = vmatpush1.bf16.msra.mxu0 %v1522
        %1567 = vmatprep.subr.bf16.mxu0 %v1212
        %1568 = vmatpush1.bf16.msra.mxu0 %v1524
        %1569 = vmatprep.subr.bf16.mxu0 %v1527
        %1570 = vmatpush1.bf16.msra.mxu0 %v1526
        %1571 = vmatprep.subr.bf16.mxu0 %v1530
        %1572 = vmatpush1.bf16.msra.mxu0 %v1529
        %1573 = vmatprep.subr.bf16.mxu0 %v1532
        %1574 = vmatpush1.bf16.msra.mxu0 %v1531
        %1575 = vmatprep.subr.bf16.mxu0 %v1534
        %1576 = vmatpush1.bf16.msra.mxu0 %v1533
        %1577 = vmatprep.subr.bf16.mxu0 %v1536
        %1578 = vmatpush1.bf16.msra.mxu0 %v1535
        %1579 = vmatprep.subr.bf16.mxu0 0
        %1580 = vmatpush1.bf16.msra.mxu0 0
        %1581 = vmatprep.subr.bf16.mxu0 0
        %1582 = vmatpush1.bf16.msra.mxu0 0
        %1583 = vmatprep.subr.bf16.mxu0 0
        %1584 = vmatpush1.bf16.msra.mxu0 0
        %1585 = vmatprep.subr.bf16.mxu0 0
        %1586 = vmatpush1.bf16.msra.mxu0 0
        %1587 = vmatprep.subr.bf16.mxu0 0
        %1588 = vmatpush1.bf16.msra.mxu0 0
        %1589 = vmatprep.subr.bf16.mxu0 0
        %1590 = vmatpush1.bf16.msra.mxu0 0
        %1591 = vmatprep.subr.bf16.mxu0 0
        %1592 = vmatpush1.bf16.msra.mxu0 0
        %1593 = vmatprep.mubr.bf16.mxu0 %v1556
        %1594 = vmatmul.mubr.bf16.gmra.mrb[0].mxu0 %v1480
        %v1595 = vpop.f32.mrb[0].mxu0
        %v1596 = vadd.f32 %v1344, %v1595
        %v1597 = vpop.f32.mrb[0].mxu0
        %v1598 = vadd.f32 %v1346, %v1597
        %v1599 = vpop.f32.mrb[0].mxu0
        %v1600 = vadd.f32 %v1348, %v1599
        %v1601 = vpop.f32.mrb[0].mxu0
        %v1602 = vadd.f32 %v1350, %v1601
        %1603 = vmatprep.mubr.bf16.mxu0 %v1559
        %1604 = vmatmul.mubr.bf16.gmra.mrb[0].mxu0 %v1482
        %v1605 = vpop.f32.mrb[0].mxu0
        %v1606 = vadd.f32 %v1354, %v1605
        %v1607 = vpop.f32.mrb[0].mxu0
        %v1608 = vadd.f32 %v1356, %v1607
        %v1609 = vpop.f32.mrb[0].mxu0
        %v1610 = vadd.f32 %v1358, %v1609
        %v1611 = vpop.f32.mrb[0].mxu0
        %v1612 = vadd.f32 %v1360, %v1611
        %1613 = vdwg.mxu0
        %1614 = vmatprep.subr.bf16.mxu0 %v1196
        %1615 = vmatpush1.bf16.msra.mxu0 %v1195
        %1616 = vmatprep.subr.bf16.mxu0 %v1202
        %1617 = vmatpush1.bf16.msra.mxu0 %v1201
        %1618 = vmatprep.subr.bf16.mxu0 %v1208
        %1619 = vmatpush1.bf16.msra.mxu0 %v1207
        %1620 = vmatprep.subr.bf16.mxu0 %v1214
        %1621 = vmatpush1.bf16.msra.mxu0 %v1213
        %1622 = vmatprep.subr.bf16.mxu0 %v1220
        %1623 = vmatpush1.bf16.msra.mxu0 %v1219
        %1624 = vmatprep.subr.bf16.mxu0 %v1226
        %1625 = vmatpush1.bf16.msra.mxu0 %v1225
        %1626 = vmatprep.subr.bf16.mxu0 %v1232
        %1627 = vmatpush1.bf16.msra.mxu0 %v1231
        %1628 = vmatprep.subr.bf16.mxu0 %v1238
        %1629 = vmatpush1.bf16.msra.mxu0 %v1237
        %1630 = vmatprep.subr.bf16.mxu0 %v1244
        %1631 = vmatpush1.bf16.msra.mxu0 %v1243
        %1632 = vmatprep.subr.bf16.mxu0 0
        %1633 = vmatpush1.bf16.msra.mxu0 0
        %1634 = vmatprep.subr.bf16.mxu0 0
        %1635 = vmatpush1.bf16.msra.mxu0 0
        %1636 = vmatprep.subr.bf16.mxu0 0
        %1637 = vmatpush1.bf16.msra.mxu0 0
        %1638 = vmatprep.subr.bf16.mxu0 0
        %1639 = vmatpush1.bf16.msra.mxu0 0
        %1640 = vmatprep.subr.bf16.mxu0 0
        %1641 = vmatpush1.bf16.msra.mxu0 0
        %1642 = vmatprep.subr.bf16.mxu0 0
        %1643 = vmatpush1.bf16.msra.mxu0 0
        %1644 = vmatprep.subr.bf16.mxu0 0
        %1645 = vmatpush1.bf16.msra.mxu0 0
        %1646 = vmatprep.mubr.bf16.mxu0 %v1556
        %1647 = vmatmul.mubr.bf16.gmra.mrb[0].mxu0 %v1480
        %v1648 = vpop.f32.mrb[0].mxu0
        %v1649 = vadd.f32 %v1397, %v1648
        %v1650 = vpop.f32.mrb[0].mxu0
        %v1651 = vadd.f32 %v1399, %v1650
        %v1652 = vpop.f32.mrb[0].mxu0
        %v1653 = vadd.f32 %v1401, %v1652
        %v1654 = vpop.f32.mrb[0].mxu0
        %v1655 = vadd.f32 %v1403, %v1654
        %1656 = vmatprep.mubr.bf16.mxu0 %v1559
        %1657 = vmatmul.mubr.bf16.gmra.mrb[0].mxu0 %v1482
        %v1658 = vpop.f32.mrb[0].mxu0
        %v1659 = vadd.f32 %v1407, %v1658
        %v1660 = vpop.f32.mrb[0].mxu0
        %v1661 = vadd.f32 %v1409, %v1660
        %v1662 = vpop.f32.mrb[0].mxu0
        %v1663 = vadd.f32 %v1411, %v1662
        %v1664 = vpop.f32.mrb[0].mxu0
        %v1665 = vadd.f32 %v1413, %v1664
        %1666 = vdwg.mxu0
        %1667 = vmatprep.subr.bf16.mxu0 %v1198
        %1668 = vmatpush1.bf16.msra.mxu0 %v1197
        %1669 = vmatprep.subr.bf16.mxu0 %v1521
        %1670 = vmatpush1.bf16.msra.mxu0 %v1203
        %1671 = vmatprep.subr.bf16.mxu0 %v1523
        %1672 = vmatpush1.bf16.msra.mxu0 %v1209
        %1673 = vmatprep.subr.bf16.mxu0 %v1525
        %1674 = vmatpush1.bf16.msra.mxu0 %v1215
        %1675 = vmatprep.subr.bf16.mxu0 %v1528
        %1676 = vmatpush1.bf16.msra.mxu0 %v1221
        %1677 = vmatprep.subr.bf16.mxu0 %v1228
        %1678 = vmatpush1.bf16.msra.mxu0 %v1227
        %1679 = vmatprep.subr.bf16.mxu0 %v1234
        %1680 = vmatpush1.bf16.msra.mxu0 %v1233
        %1681 = vmatprep.subr.bf16.mxu0 %v1240
        %1682 = vmatpush1.bf16.msra.mxu0 %v1239
        %1683 = vmatprep.subr.bf16.mxu0 %v1246
        %1684 = vmatpush1.bf16.msra.mxu0 %v1245
        %1685 = vmatprep.subr.bf16.mxu0 0
        %1686 = vmatpush1.bf16.msra.mxu0 0
        %1687 = vmatprep.subr.bf16.mxu0 0
        %1688 = vmatpush1.bf16.msra.mxu0 0
        %1689 = vmatprep.subr.bf16.mxu0 0
        %1690 = vmatpush1.bf16.msra.mxu0 0
        %1691 = vmatprep.subr.bf16.mxu0 0
        %1692 = vmatpush1.bf16.msra.mxu0 0
        %1693 = vmatprep.subr.bf16.mxu0 0
        %1694 = vmatpush1.bf16.msra.mxu0 0
        %1695 = vmatprep.subr.bf16.mxu0 0
        %1696 = vmatpush1.bf16.msra.mxu0 0
        %1697 = vmatprep.subr.bf16.mxu0 0
        %1698 = vmatpush1.bf16.msra.mxu0 0
        %1699 = vmatprep.mubr.bf16.mxu0 %v1556
        %1700 = vmatmul.mubr.bf16.gmra.mrb[0].mxu0 %v1480
        %v1701 = vpop.f32.mrb[0].mxu0
        %v1702 = vadd.f32 %v1450, %v1701
        %v1703 = vpop.f32.mrb[0].mxu0
        %v1704 = vadd.f32 %v1452, %v1703
        %v1705 = vpop.f32.mrb[0].mxu0
        %v1706 = vadd.f32 %v1454, %v1705
        %v1707 = vpop.f32.mrb[0].mxu0
        %v1708 = vadd.f32 %v1456, %v1707
        %1709 = vmatprep.mubr.bf16.mxu0 %v1559
        %1710 = vmatmul.mubr.bf16.gmra.mrb[0].mxu0 %v1482
        %v1711 = vpop.f32.mrb[0].mxu0
        %v1712 = vadd.f32 %v1460, %v1711
        %v1713 = vpop.f32.mrb[0].mxu0
        %v1714 = vadd.f32 %v1462, %v1713
        %v1715 = vpop.f32.mrb[0].mxu0
        %v1716 = vadd.f32 %v1464, %v1715
        %v1717 = vpop.f32.mrb[0].mxu0
        %v1718 = vadd.f32 %v1466, %v1717
        %1719 = vdwg.mxu0
        %v1720 = vsel %vm880, %v1029, %v869
        %v1721 = vsel %vm898, %v1032, %v887
        %v1722 = vsel %vm916, %v1035, %v905
        %v1723 = vsel %vm934, %v1038, %v923
        %s1724 = scalar_lea.vmem %s6, 64
        %v1725 = vld [vmem:[%s1724] sm:$0xff]
        %v1726 = vld [vmem:[%s1724 + $0x8] sm:$0xff]
        %v1727 = vld [vmem:[%s1724 + $0x10] sm:$0xff]
        %v1728 = vld [vmem:[%s1724 + $0x18] sm:$0xff]
        %v1733 = vunpack.c.l.b16 %v1725
        %v1734 = vunpack.c.h.b16 %v1725
        %v1735 = vunpack.c.l.b16 %v1726
        %v1736 = vunpack.c.h.b16 %v1726
        %v1737 = vunpack.c.l.b16 %v1727
        %v1738 = vunpack.c.h.b16 %v1727
        %v1739 = vunpack.c.l.b16 %v1728
        %v1740 = vunpack.c.h.b16 %v1728
        %v1741 = vpack.c.b16 %v1735, %v1733
        %v1742 = vpack.c.b16 %v1736, %v1734
        %v1743 = vpack.c.b16 %v1739, %v1737
        %v1744 = vpack.c.b16 %v1740, %v1738
        %1747 = vrot.lane.b32.xlu0 %v1720, 11
        %v1748 = vpop.permute.xlu0 %1747
        %1749 = vrot.lane.b32.xlu0 %v1721, 11
        %v1750 = vpop.permute.xlu0 %1749
        %1751 = vrot.lane.b32.xlu0 %v1722, 11
        %v1752 = vpop.permute.xlu0 %1751
        %1753 = vrot.lane.b32.xlu0 %v927, 11
        %v1754 = vpop.permute.xlu0 %1753
        %1755 = vrot.lane.b32.xlu0 %v1723, 11
        %v1756 = vpop.permute.xlu0 %1755
        %1757 = vrot.lane.b32.xlu0 %v945, 11
        %v1758 = vpop.permute.xlu0 %1757
        %1759 = vrot.lane.b32.xlu0 %v966, 11
        %v1760 = vpop.permute.xlu0 %1759
        %1761 = vrot.lane.b32.xlu0 %v987, 11
        %v1762 = vpop.permute.xlu0 %1761
        %1763 = vrot.lane.b32.xlu0 %v1008, 11
        %v1764 = vpop.permute.xlu0 %1763
        %v1765 = vsel %vm1193, %v1080, %v1068
        %v1766 = vsel %vm1193, %v1092, %v1748
        %v1767 = vsel %vm1193, %v1748, %v1487
        %v1768 = vsel %vm1193, %v1106, %v1750
        %v1769 = vsel %vm1193, %v1750, %v1491
        %v1770 = vsel %vm1193, %v1120, %v1752
        %v1771 = vsel %vm1193, %v1752, %v1495
        %v1772 = vsel %vm1193, %v1754, %v1128
        %v1773 = vsel %vm1193, %v1134, %v1756
        %v1774 = vsel %vm1193, %v1756, %v1499
        %v1775 = vsel %vm1193, %v1758, %v1142
        %v1776 = vsel %vm1193, %v1150, %v1505
        %v1777 = vsel %vm1193, %v1760, %v1156
        %v1778 = vsel %vm1193, %v1164, %v1509
        %v1779 = vsel %vm1193, %v1762, %v1170
        %v1780 = vsel %vm1193, %v1178, %v1513
        %v1781 = vsel %vm1193, %v1764, %v1184
        %v1782 = vsel %vm1193, %v1192, %v1517
        %v1802 = vsel %vm1302, %v1742, 0
        %v1805 = vsel %vm1302, %v1744, 0
        %1807 = vmatprep.subr.bf16.mxu0 %v1196
        %1808 = vmatpush1.bf16.msra.mxu0 %v1195
        %1809 = vmatprep.subr.bf16.mxu0 %v1202
        %1810 = vmatpush1.bf16.msra.mxu0 %v1201
        %1811 = vmatprep.subr.bf16.mxu0 %v1208
        %1812 = vmatpush1.bf16.msra.mxu0 %v1207
        %1813 = vmatprep.subr.bf16.mxu0 %v1214
        %1814 = vmatpush1.bf16.msra.mxu0 %v1213
        %1815 = vmatprep.subr.bf16.mxu0 %v1220
        %1816 = vmatpush1.bf16.msra.mxu0 %v1772
        %1817 = vmatprep.subr.bf16.mxu0 %v1226
        %1818 = vmatpush1.bf16.msra.mxu0 %v1775
        %1819 = vmatprep.subr.bf16.mxu0 %v1232
        %1820 = vmatpush1.bf16.msra.mxu0 %v1777
        %1821 = vmatprep.subr.bf16.mxu0 %v1238
        %1822 = vmatpush1.bf16.msra.mxu0 %v1779
        %1823 = vmatprep.subr.bf16.mxu0 %v1244
        %1824 = vmatpush1.bf16.msra.mxu0 %v1781
        %1825 = vmatprep.subr.bf16.mxu0 0
        %1826 = vmatpush1.bf16.msra.mxu0 0
        %1827 = vmatprep.subr.bf16.mxu0 0
        %1828 = vmatpush1.bf16.msra.mxu0 0
        %1829 = vmatprep.subr.bf16.mxu0 0
        %1830 = vmatpush1.bf16.msra.mxu0 0
        %1831 = vmatprep.subr.bf16.mxu0 0
        %1832 = vmatpush1.bf16.msra.mxu0 0
        %1833 = vmatprep.subr.bf16.mxu0 0
        %1834 = vmatpush1.bf16.msra.mxu0 0
        %1835 = vmatprep.subr.bf16.mxu0 0
        %1836 = vmatpush1.bf16.msra.mxu0 0
        %1837 = vmatprep.subr.bf16.mxu0 0
        %1838 = vmatpush1.bf16.msra.mxu0 0
        %1839 = vmatprep.mubr.bf16.mxu0 %v1802
        %1840 = vmatmul.mubr.bf16.gmra.mrb[0].mxu0 %v1741
        %v1841 = vpop.f32.mrb[0].mxu0
        %v1842 = vadd.f32 0.0, %v1841
        %v1843 = vpop.f32.mrb[0].mxu0
        %v1844 = vadd.f32 0.0, %v1843
        %v1845 = vpop.f32.mrb[0].mxu0
        %v1846 = vadd.f32 0.0, %v1845
        %v1847 = vpop.f32.mrb[0].mxu0
        %v1848 = vadd.f32 0.0, %v1847
        %1849 = vmatprep.mubr.bf16.mxu0 %v1805
        %1850 = vmatmul.mubr.bf16.gmra.mrb[0].mxu0 %v1743
        %v1851 = vpop.f32.mrb[0].mxu0
        %v1852 = vadd.f32 0.0, %v1851
        %v1853 = vpop.f32.mrb[0].mxu0
        %v1854 = vadd.f32 0.0, %v1853
        %v1855 = vpop.f32.mrb[0].mxu0
        %v1856 = vadd.f32 0.0, %v1855
        %v1857 = vpop.f32.mrb[0].mxu0
        %v1858 = vadd.f32 0.0, %v1857
        %1859 = vdwg.mxu0
        %1860 = vmatprep.subr.bf16.mxu0 %v1198
        %1861 = vmatpush1.bf16.msra.mxu0 %v1197
        %1862 = vmatprep.subr.bf16.mxu0 %v1204
        %1863 = vmatpush1.bf16.msra.mxu0 %v1203
        %1864 = vmatprep.subr.bf16.mxu0 %v1210
        %1865 = vmatpush1.bf16.msra.mxu0 %v1209
        %1866 = vmatprep.subr.bf16.mxu0 %v1216
        %1867 = vmatpush1.bf16.msra.mxu0 %v1215
        %1868 = vmatprep.subr.bf16.mxu0 %v1222
        %1869 = vmatpush1.bf16.msra.mxu0 %v1221
        %1870 = vmatprep.subr.bf16.mxu0 %v1228
        %1871 = vmatpush1.bf16.msra.mxu0 %v1227
        %1872 = vmatprep.subr.bf16.mxu0 %v1234
        %1873 = vmatpush1.bf16.msra.mxu0 %v1233
        %1874 = vmatprep.subr.bf16.mxu0 %v1240
        %1875 = vmatpush1.bf16.msra.mxu0 %v1239
        %1876 = vmatprep.subr.bf16.mxu0 %v1246
        %1877 = vmatpush1.bf16.msra.mxu0 %v1245
        %1878 = vmatprep.subr.bf16.mxu0 0
        %1879 = vmatpush1.bf16.msra.mxu0 0
        %1880 = vmatprep.subr.bf16.mxu0 0
        %1881 = vmatpush1.bf16.msra.mxu0 0
        %1882 = vmatprep.subr.bf16.mxu0 0
        %1883 = vmatpush1.bf16.msra.mxu0 0
        %1884 = vmatprep.subr.bf16.mxu0 0
        %1885 = vmatpush1.bf16.msra.mxu0 0
        %1886 = vmatprep.subr.bf16.mxu0 0
        %1887 = vmatpush1.bf16.msra.mxu0 0
        %1888 = vmatprep.subr.bf16.mxu0 0
        %1889 = vmatpush1.bf16.msra.mxu0 0
        %1890 = vmatprep.subr.bf16.mxu0 0
        %1891 = vmatpush1.bf16.msra.mxu0 0
        %1892 = vmatprep.mubr.bf16.mxu0 %v1802
        %1893 = vmatmul.mubr.bf16.gmra.mrb[0].mxu0 %v1741
        %v1894 = vpop.f32.mrb[0].mxu0
        %v1895 = vadd.f32 0.0, %v1894
        %v1896 = vpop.f32.mrb[0].mxu0
        %v1897 = vadd.f32 0.0, %v1896
        %v1898 = vpop.f32.mrb[0].mxu0
        %v1899 = vadd.f32 0.0, %v1898
        %v1900 = vpop.f32.mrb[0].mxu0
        %v1901 = vadd.f32 0.0, %v1900
        %1902 = vmatprep.mubr.bf16.mxu0 %v1805
        %1903 = vmatmul.mubr.bf16.gmra.mrb[0].mxu0 %v1743
        %v1904 = vpop.f32.mrb[0].mxu0
        %v1905 = vadd.f32 0.0, %v1904
        %v1906 = vpop.f32.mrb[0].mxu0
        %v1907 = vadd.f32 0.0, %v1906
        %v1908 = vpop.f32.mrb[0].mxu0
        %v1909 = vadd.f32 0.0, %v1908
        %v1910 = vpop.f32.mrb[0].mxu0
        %v1911 = vadd.f32 0.0, %v1910
        %1912 = vdwg.mxu0
        %1913 = vmatprep.subr.bf16.mxu0 %v1765
        %1914 = vmatpush1.bf16.msra.mxu0 %v1199
        %1915 = vmatprep.subr.bf16.mxu0 %v1767
        %1916 = vmatpush1.bf16.msra.mxu0 %v1766
        %1917 = vmatprep.subr.bf16.mxu0 %v1769
        %1918 = vmatpush1.bf16.msra.mxu0 %v1768
        %1919 = vmatprep.subr.bf16.mxu0 %v1771
        %1920 = vmatpush1.bf16.msra.mxu0 %v1770
        %1921 = vmatprep.subr.bf16.mxu0 %v1774
        %1922 = vmatpush1.bf16.msra.mxu0 %v1773
        %1923 = vmatprep.subr.bf16.mxu0 %v1776
        %1924 = vmatpush1.bf16.msra.mxu0 %v1229
        %1925 = vmatprep.subr.bf16.mxu0 %v1778
        %1926 = vmatpush1.bf16.msra.mxu0 %v1235
        %1927 = vmatprep.subr.bf16.mxu0 %v1780
        %1928 = vmatpush1.bf16.msra.mxu0 %v1241
        %1929 = vmatprep.subr.bf16.mxu0 %v1782
        %1930 = vmatpush1.bf16.msra.mxu0 %v1247
        %1931 = vmatprep.subr.bf16.mxu0 0
        %1932 = vmatpush1.bf16.msra.mxu0 0
        %1933 = vmatprep.subr.bf16.mxu0 0
        %1934 = vmatpush1.bf16.msra.mxu0 0
        %1935 = vmatprep.subr.bf16.mxu0 0
        %1936 = vmatpush1.bf16.msra.mxu0 0
        %1937 = vmatprep.subr.bf16.mxu0 0
        %1938 = vmatpush1.bf16.msra.mxu0 0
        %1939 = vmatprep.subr.bf16.mxu0 0
        %1940 = vmatpush1.bf16.msra.mxu0 0
        %1941 = vmatprep.subr.bf16.mxu0 0
        %1942 = vmatpush1.bf16.msra.mxu0 0
        %1943 = vmatprep.subr.bf16.mxu0 0
        %1944 = vmatpush1.bf16.msra.mxu0 0
        %1945 = vmatprep.mubr.bf16.mxu0 %v1802
        %1946 = vmatmul.mubr.bf16.gmra.mrb[0].mxu0 %v1741
        %v1947 = vpop.f32.mrb[0].mxu0
        %v1948 = vadd.f32 0.0, %v1947
        %v1949 = vpop.f32.mrb[0].mxu0
        %v1950 = vadd.f32 0.0, %v1949
        %v1951 = vpop.f32.mrb[0].mxu0
        %v1952 = vadd.f32 0.0, %v1951
        %v1953 = vpop.f32.mrb[0].mxu0
        %v1954 = vadd.f32 0.0, %v1953
        %1955 = vmatprep.mubr.bf16.mxu0 %v1805
        %1956 = vmatmul.mubr.bf16.gmra.mrb[0].mxu0 %v1743
        %v1957 = vpop.f32.mrb[0].mxu0
        %v1958 = vadd.f32 0.0, %v1957
        %v1959 = vpop.f32.mrb[0].mxu0
        %v1960 = vadd.f32 0.0, %v1959
        %v1961 = vpop.f32.mrb[0].mxu0
        %v1962 = vadd.f32 0.0, %v1961
        %v1963 = vpop.f32.mrb[0].mxu0
        %v1964 = vadd.f32 0.0, %v1963
        %1965 = vdwg.mxu0
        %v1966 = vadd.f32 %v1596, %v1842
        %v1967 = vadd.f32 %v1598, %v1844
        %v1968 = vadd.f32 %v1649, %v1895
        %v1969 = vadd.f32 %v1651, %v1897
        %v1970 = vadd.f32 %v1702, %v1948
        %v1971 = vadd.f32 %v1704, %v1950
        %v1972 = vadd.f32 %v1600, %v1846
        %v1973 = vadd.f32 %v1602, %v1848
        %v1974 = vadd.f32 %v1653, %v1899
        %v1975 = vadd.f32 %v1655, %v1901
        %v1976 = vadd.f32 %v1706, %v1952
        %v1977 = vadd.f32 %v1708, %v1954
        %v1978 = vadd.f32 %v1606, %v1852
        %v1979 = vadd.f32 %v1608, %v1854
        %v1980 = vadd.f32 %v1659, %v1905
        %v1981 = vadd.f32 %v1661, %v1907
        %v1982 = vadd.f32 %v1712, %v1958
        %v1983 = vadd.f32 %v1714, %v1960
        %v1984 = vadd.f32 %v1610, %v1856
        %v1985 = vadd.f32 %v1612, %v1858
        %v1986 = vadd.f32 %v1663, %v1909
        %v1987 = vadd.f32 %v1665, %v1911
        %v1988 = vadd.f32 %v1716, %v1962
        %v1989 = vadd.f32 %v1718, %v1964
        %v1990 = vld [vmem:[%s7] sm:$0xff]
        %v1991 = vld [vmem:[%s7 + $0x8] sm:$0xff]
        %v1992 = vld [vmem:[%s7 + $0x10] sm:$0xff]
        %v1993 = vld [vmem:[%s7 + $0x18] sm:$0xff]
        %1995 = vset.pattern.permute.xlu0 0
        %1996 = vperm.xlu0 %1995, %v1990
        %v1997 = vpop.permute.xlu0 %1996
        %2000 = vset.pattern.permute.xlu0 0
        %2001 = vperm.xlu0 %2000, %v1991
        %v2002 = vpop.permute.xlu0 %2001
        %2005 = vset.pattern.permute.xlu0 0
        %2006 = vperm.xlu0 %2005, %v1992
        %v2007 = vpop.permute.xlu0 %2006
        %2010 = vset.pattern.permute.xlu0 0
        %2011 = vperm.xlu0 %2010, %v1993
        %v2012 = vpop.permute.xlu0 %2011
        %v2014 = vadd.f32 %v1966, %v1997
        %v2015 = vadd.f32 %v1967, %v1997
        %v2016 = vadd.f32 %v1968, %v1997
        %v2017 = vadd.f32 %v1969, %v1997
        %v2018 = vadd.f32 %v1970, %v1997
        %v2019 = vadd.f32 %v1971, %v1997
        %v2020 = vadd.f32 %v1972, %v2002
        %v2021 = vadd.f32 %v1973, %v2002
        %v2022 = vadd.f32 %v1974, %v2002
        %v2023 = vadd.f32 %v1975, %v2002
        %v2024 = vadd.f32 %v1976, %v2002
        %v2025 = vadd.f32 %v1977, %v2002
        %v2026 = vadd.f32 %v1978, %v2007
        %v2027 = vadd.f32 %v1979, %v2007
        %v2028 = vadd.f32 %v1980, %v2007
        %v2029 = vadd.f32 %v1981, %v2007
        %v2030 = vadd.f32 %v1982, %v2007
        %v2031 = vadd.f32 %v1983, %v2007
        %v2032 = vadd.f32 %v1984, %v2012
        %v2033 = vadd.f32 %v1985, %v2012
        %v2034 = vadd.f32 %v1986, %v2012
        %v2035 = vadd.f32 %v1987, %v2012
        %v2036 = vadd.f32 %v1988, %v2012
        %v2037 = vadd.f32 %v1989, %v2012
        %v2038 = vmax.f32 %v2014, 0.0
        %v2039 = vmax.f32 %v2015, 0.0
        %v2040 = vmax.f32 %v2016, 0.0
        %v2041 = vmax.f32 %v2017, 0.0
        %v2042 = vmax.f32 %v2018, 0.0
        %v2043 = vmax.f32 %v2019, 0.0
        %v2044 = vmax.f32 %v2020, 0.0
        %v2045 = vmax.f32 %v2021, 0.0
        %v2046 = vmax.f32 %v2022, 0.0
        %v2047 = vmax.f32 %v2023, 0.0
        %v2048 = vmax.f32 %v2024, 0.0
        %v2049 = vmax.f32 %v2025, 0.0
        %v2050 = vmax.f32 %v2026, 0.0
        %v2051 = vmax.f32 %v2027, 0.0
        %v2052 = vmax.f32 %v2028, 0.0
        %v2053 = vmax.f32 %v2029, 0.0
        %v2054 = vmax.f32 %v2030, 0.0
        %v2055 = vmax.f32 %v2031, 0.0
        %v2056 = vmax.f32 %v2032, 0.0
        %v2057 = vmax.f32 %v2033, 0.0
        %v2058 = vmax.f32 %v2034, 0.0
        %v2059 = vmax.f32 %v2035, 0.0
        %v2060 = vmax.f32 %v2036, 0.0
        %v2061 = vmax.f32 %v2037, 0.0
        %v2062 = vunpack.c.l.bf16 %v807
        %v2063 = vunpack.c.l.bf16 %v814
        %v2064 = vunpack.c.l.bf16 %v832
        %v2065 = vunpack.c.l.bf16 %v839
        %v2066 = vunpack.c.l.bf16 %v857
        %v2067 = vunpack.c.l.bf16 %v864
        %v2068 = vlaneseq
        %v2069 = vshrl.u32 %v2068, 7
        %v2070 = vsub.s32 0, %v2069
        %v2071 = vrot.slane %v2062, %v2070
        %v2072 = vlaneseq
        %v2073 = vshrl.u32 %v2072, 7
        %v2074 = vsub.s32 0, %v2073
        %v2075 = vrot.slane %v2063, %v2074
        %v2076 = vlaneseq
        %v2077 = vshrl.u32 %v2076, 7
        %v2078 = vsub.s32 0, %v2077
        %v2079 = vrot.slane %v2064, %v2078
        %v2080 = vlaneseq
        %v2081 = vshrl.u32 %v2080, 7
        %v2082 = vsub.s32 0, %v2081
        %v2083 = vrot.slane %v2065, %v2082
        %v2084 = vlaneseq
        %v2085 = vshrl.u32 %v2084, 7
        %v2086 = vsub.s32 0, %v2085
        %v2087 = vrot.slane %v2066, %v2086
        %v2088 = vlaneseq
        %v2089 = vshrl.u32 %v2088, 7
        %v2090 = vsub.s32 0, %v2089
        %v2091 = vrot.slane %v2067, %v2090
        %v2092 = vmul.f32 %v2038, %v2071
        %v2093 = vmul.f32 %v2039, %v2075
        %v2094 = vmul.f32 %v2040, %v2079
        %v2095 = vmul.f32 %v2041, %v2083
        %v2096 = vmul.f32 %v2042, %v2087
        %v2097 = vmul.f32 %v2043, %v2091
        %v2098 = vmul.f32 %v2044, %v2071
        %v2099 = vmul.f32 %v2045, %v2075
        %v2100 = vmul.f32 %v2046, %v2079
        %v2101 = vmul.f32 %v2047, %v2083
        %v2102 = vmul.f32 %v2048, %v2087
        %v2103 = vmul.f32 %v2049, %v2091
        %v2104 = vmul.f32 %v2050, %v2071
        %v2105 = vmul.f32 %v2051, %v2075
        %v2106 = vmul.f32 %v2052, %v2079
        %v2107 = vmul.f32 %v2053, %v2083
        %v2108 = vmul.f32 %v2054, %v2087
        %v2109 = vmul.f32 %v2055, %v2091
        %v2110 = vmul.f32 %v2056, %v2071
        %v2111 = vmul.f32 %v2057, %v2075
        %v2112 = vmul.f32 %v2058, %v2079
        %v2113 = vmul.f32 %v2059, %v2083
        %v2114 = vmul.f32 %v2060, %v2087
        %v2115 = vmul.f32 %v2061, %v2091
        %v2116 = vpack.c.bf16 %v2098, %v2092
        %v2117 = vpack.c.bf16 %v2099, %v2093
        %v2118 = vpack.c.bf16 %v2100, %v2094
        %v2119 = vpack.c.bf16 %v2101, %v2095
        %v2120 = vpack.c.bf16 %v2102, %v2096
        %v2121 = vpack.c.bf16 %v2103, %v2097
        %v2122 = vpack.c.bf16 %v2110, %v2104
        %v2123 = vpack.c.bf16 %v2111, %v2105
        %v2124 = vpack.c.bf16 %v2112, %v2106
        %v2125 = vpack.c.bf16 %v2113, %v2107
        %v2126 = vpack.c.bf16 %v2114, %v2108
        %v2127 = vpack.c.bf16 %v2115, %v2109
        %v2128 = vld [vmem:[%s8] sm:$0xf]
        %v2129 = vld [vmem:[%s8 + $0x4] sm:$0xf]
        %v2130 = vld [vmem:[%s8 + $0x8] sm:$0xf]
        %v2131 = vld [vmem:[%s8 + $0xc] sm:$0xf]
        %v2132 = vld [vmem:[%s9] sm:$0xff]
        %v2133 = vld [vmem:[%s9 + $0x8] sm:$0xff]
        %v2134 = vld [vmem:[%s9 + $0x10] sm:$0xff]
        %v2135 = vld [vmem:[%s9 + $0x18] sm:$0xff]
        %2137 = vset.pattern.permute.xlu0 0
        %2138 = vperm.xlu0 %2137, %v2132
        %v2139 = vpop.permute.xlu0 %2138
        %2142 = vset.pattern.permute.xlu0 0
        %2143 = vperm.xlu0 %2142, %v2133
        %v2144 = vpop.permute.xlu0 %2143
        %2147 = vset.pattern.permute.xlu0 0
        %2148 = vperm.xlu0 %2147, %v2134
        %v2149 = vpop.permute.xlu0 %2148
        %2152 = vset.pattern.permute.xlu0 0
        %2153 = vperm.xlu0 %2152, %v2135
        %v2154 = vpop.permute.xlu0 %2153
        %v2160 = vunpack.c.l.b16 %v2128
        %v2161 = vunpack.c.l.b16 %v2129
        %v2162 = vunpack.c.l.b16 %v2130
        %v2163 = vunpack.c.l.b16 %v2131
        %v2164 = vpack.c.b16 %v2161, %v2160
        %v2165 = vpack.c.b16 %v2163, %v2162
        %v2169 = vsel %vm1302, %v2164, 0
        %v2172 = vsel %vm1302, %v2165, 0
        %2174 = vmatprep.subr.bf16.mxu0 %v780
        %2175 = vmatpush1.bf16.msra.mxu0 %v779
        %2176 = vmatprep.subr.bf16.mxu0 0
        %2177 = vmatpush1.bf16.msra.mxu0 0
        %2178 = vmatprep.subr.bf16.mxu0 0
        %2179 = vmatpush1.bf16.msra.mxu0 0
        %2180 = vmatprep.subr.bf16.mxu0 0
        %2181 = vmatpush1.bf16.msra.mxu0 0
        %2182 = vmatprep.subr.bf16.mxu0 0
        %2183 = vmatpush1.bf16.msra.mxu0 0
        %2184 = vmatprep.subr.bf16.mxu0 0
        %2185 = vmatpush1.bf16.msra.mxu0 0
        %2186 = vmatprep.subr.bf16.mxu0 0
        %2187 = vmatpush1.bf16.msra.mxu0 0
        %2188 = vmatprep.subr.bf16.mxu0 0
        %2189 = vmatpush1.bf16.msra.mxu0 0
        %2190 = vmatprep.subr.bf16.mxu0 0
        %2191 = vmatpush1.bf16.msra.mxu0 0
        %2192 = vmatprep.subr.bf16.mxu0 0
        %2193 = vmatpush1.bf16.msra.mxu0 0
        %2194 = vmatprep.subr.bf16.mxu0 0
        %2195 = vmatpush1.bf16.msra.mxu0 0
        %2196 = vmatprep.subr.bf16.mxu0 0
        %2197 = vmatpush1.bf16.msra.mxu0 0
        %2198 = vmatprep.subr.bf16.mxu0 0
        %2199 = vmatpush1.bf16.msra.mxu0 0
        %2200 = vmatprep.subr.bf16.mxu0 0
        %2201 = vmatpush1.bf16.msra.mxu0 0
        %2202 = vmatprep.subr.bf16.mxu0 0
        %2203 = vmatpush1.bf16.msra.mxu0 0
        %2204 = vmatprep.subr.bf16.mxu0 0
        %2205 = vmatpush1.bf16.msra.mxu0 0
        %2206 = vmatprep.mubr.bf16.mxu0 0
        %2207 = vmatmul.mubr.bf16.gmra.mrb[0].mxu0 %v2169
        %v2208 = vpop.f32.mrb[0].mxu0
        %v2209 = vadd.f32 %v2139, %v2208
        %v2210 = vpop.f32.mrb[0].mxu0
        %v2211 = vadd.f32 %v2139, %v2210
        %v2212 = vpop.f32.mrb[0].mxu0
        %v2213 = vadd.f32 %v2144, %v2212
        %v2214 = vpop.f32.mrb[0].mxu0
        %v2215 = vadd.f32 %v2144, %v2214
        %2216 = vmatprep.mubr.bf16.mxu0 0
        %2217 = vmatmul.mubr.bf16.gmra.mrb[0].mxu0 %v2172
        %v2218 = vpop.f32.mrb[0].mxu0
        %v2219 = vadd.f32 %v2149, %v2218
        %v2220 = vpop.f32.mrb[0].mxu0
        %v2221 = vadd.f32 %v2149, %v2220
        %v2222 = vpop.f32.mrb[0].mxu0
        %v2223 = vadd.f32 %v2154, %v2222
        %v2224 = vpop.f32.mrb[0].mxu0
        %v2225 = vadd.f32 %v2154, %v2224
        %2226 = vdwg.mxu0
        %2233 = vrot.lane.b32.xlu0 %v2116, 127
        %v2234 = vpop.permute.xlu0 %2233
        %2235 = vrot.lane.b32.xlu0 %v2117, 127
        %v2236 = vpop.permute.xlu0 %2235
        %2237 = vrot.lane.b32.xlu0 %v2118, 127
        %v2238 = vpop.permute.xlu0 %2237
        %2239 = vrot.lane.b32.xlu0 %v2122, 127
        %v2240 = vpop.permute.xlu0 %2239
        %2241 = vrot.lane.b32.xlu0 %v2123, 127
        %v2242 = vpop.permute.xlu0 %2241
        %2243 = vrot.lane.b32.xlu0 %v2124, 127
        %v2244 = vpop.permute.xlu0 %2243
        %v2245 = vsel %vm880, %v2234, %v2236
        %v2246 = vsel %vm880, %v2236, %v2238
        %v2247 = vsel %vm880, %v2240, %v2242
        %v2248 = vsel %vm880, %v2242, %v2244
        %2249 = vrot.lane.b32.xlu0 %v2116, 126
        %v2250 = vpop.permute.xlu0 %2249
        %2251 = vrot.lane.b32.xlu0 %v2117, 126
        %v2252 = vpop.permute.xlu0 %2251
        %2253 = vrot.lane.b32.xlu0 %v2118, 126
        %v2254 = vpop.permute.xlu0 %2253
        %2255 = vrot.lane.b32.xlu0 %v2122, 126
        %v2256 = vpop.permute.xlu0 %2255
        %2257 = vrot.lane.b32.xlu0 %v2123, 126
        %v2258 = vpop.permute.xlu0 %2257
        %2259 = vrot.lane.b32.xlu0 %v2124, 126
        %v2260 = vpop.permute.xlu0 %2259
        %v2261 = vsel %vm898, %v2250, %v2252
        %v2262 = vsel %vm898, %v2252, %v2254
        %v2263 = vsel %vm898, %v2256, %v2258
        %v2264 = vsel %vm898, %v2258, %v2260
        %2265 = vrot.lane.b32.xlu0 %v2116, 118
        %v2266 = vpop.permute.xlu0 %2265
        %2267 = vrot.lane.b32.xlu0 %v2117, 118
        %v2268 = vpop.permute.xlu0 %2267
        %2269 = vrot.lane.b32.xlu0 %v2118, 118
        %v2270 = vpop.permute.xlu0 %2269
        %2271 = vrot.lane.b32.xlu0 %v2122, 118
        %v2272 = vpop.permute.xlu0 %2271
        %2273 = vrot.lane.b32.xlu0 %v2123, 118
        %v2274 = vpop.permute.xlu0 %2273
        %2275 = vrot.lane.b32.xlu0 %v2124, 118
        %v2276 = vpop.permute.xlu0 %2275
        %v2277 = vsel %vm916, %v2266, %v2268
        %v2278 = vsel %vm916, %v2268, %v2270
        %v2279 = vsel %vm916, %v2272, %v2274
        %v2280 = vsel %vm916, %v2274, %v2276
        %2281 = vrot.lane.b32.xlu0 %v2117, 117
        %v2282 = vpop.permute.xlu0 %2281
        %2283 = vrot.lane.b32.xlu0 %v2118, 117
        %v2284 = vpop.permute.xlu0 %2283
        %2285 = vrot.lane.b32.xlu0 %v2123, 117
        %v2286 = vpop.permute.xlu0 %2285
        %2287 = vrot.lane.b32.xlu0 %v2124, 117
        %v2288 = vpop.permute.xlu0 %2287
        %v2289 = vsel %vm934, %v2282, %v2284
        %v2290 = vsel %vm934, %v2286, %v2288
        %2293 = vrot.lane.b32.xlu0 %v2117, 116
        %v2294 = vpop.permute.xlu0 %2293
        %2295 = vrot.lane.b32.xlu0 %v2118, 116
        %v2296 = vpop.permute.xlu0 %2295
        %2297 = vrot.lane.b32.xlu0 %v2119, 116
        %v2298 = vpop.permute.xlu0 %2297
        %2299 = vrot.lane.b32.xlu0 %v2123, 116
        %v2300 = vpop.permute.xlu0 %2299
        %2301 = vrot.lane.b32.xlu0 %v2124, 116
        %v2302 = vpop.permute.xlu0 %2301
        %2303 = vrot.lane.b32.xlu0 %v2125, 116
        %v2304 = vpop.permute.xlu0 %2303
        %v2305 = vsel %vm954, %v2294, %v2296
        %v2306 = vsel %vm954, %v2296, %v2298
        %v2307 = vsel %vm954, %v2300, %v2302
        %v2308 = vsel %vm954, %v2302, %v2304
        %2309 = vrot.lane.b32.xlu0 %v2117, 108
        %v2310 = vpop.permute.xlu0 %2309
        %2311 = vrot.lane.b32.xlu0 %v2118, 108
        %v2312 = vpop.permute.xlu0 %2311
        %2313 = vrot.lane.b32.xlu0 %v2119, 108
        %v2314 = vpop.permute.xlu0 %2313
        %2315 = vrot.lane.b32.xlu0 %v2123, 108
        %v2316 = vpop.permute.xlu0 %2315
        %2317 = vrot.lane.b32.xlu0 %v2124, 108
        %v2318 = vpop.permute.xlu0 %2317
        %2319 = vrot.lane.b32.xlu0 %v2125, 108
        %v2320 = vpop.permute.xlu0 %2319
        %v2321 = vsel %vm975, %v2310, %v2312
        %v2322 = vsel %vm975, %v2312, %v2314
        %v2323 = vsel %vm975, %v2316, %v2318
        %v2324 = vsel %vm975, %v2318, %v2320
        %2325 = vrot.lane.b32.xlu0 %v2117, 107
        %v2326 = vpop.permute.xlu0 %2325
        %2327 = vrot.lane.b32.xlu0 %v2118, 107
        %v2328 = vpop.permute.xlu0 %2327
        %2329 = vrot.lane.b32.xlu0 %v2119, 107
        %v2330 = vpop.permute.xlu0 %2329
        %2331 = vrot.lane.b32.xlu0 %v2123, 107
        %v2332 = vpop.permute.xlu0 %2331
        %2333 = vrot.lane.b32.xlu0 %v2124, 107
        %v2334 = vpop.permute.xlu0 %2333
        %2335 = vrot.lane.b32.xlu0 %v2125, 107
        %v2336 = vpop.permute.xlu0 %2335
        %v2337 = vsel %vm996, %v2326, %v2328
        %v2338 = vsel %vm996, %v2328, %v2330
        %v2339 = vsel %vm996, %v2332, %v2334
        %v2340 = vsel %vm996, %v2334, %v2336
        %2341 = vrot.lane.b32.xlu0 %v2117, 106
        %v2342 = vpop.permute.xlu0 %2341
        %2343 = vrot.lane.b32.xlu0 %v2118, 106
        %v2344 = vpop.permute.xlu0 %2343
        %2345 = vrot.lane.b32.xlu0 %v2119, 106
        %v2346 = vpop.permute.xlu0 %2345
        %2347 = vrot.lane.b32.xlu0 %v2123, 106
        %v2348 = vpop.permute.xlu0 %2347
        %2349 = vrot.lane.b32.xlu0 %v2124, 106
        %v2350 = vpop.permute.xlu0 %2349
        %2351 = vrot.lane.b32.xlu0 %v2125, 106
        %v2352 = vpop.permute.xlu0 %2351
        %v2353 = vsel %vm1017, %v2342, %v2344
        %v2354 = vsel %vm1017, %v2344, %v2346
        %v2355 = vsel %vm1017, %v2348, %v2350
        %v2356 = vsel %vm1017, %v2350, %v2352
        %v2357 = vld [vmem:[%s10] sm:$0xff]
        %v2358 = vld [vmem:[%s10 + $0x8] sm:$0xf]
        %v2359 = vld [vmem:[%s10 + $0xc] sm:$0xff]
        %v2360 = vld [vmem:[%s10 + $0x14] sm:$0xf]
        %v2361 = vld [vmem:[%s10 + $0x18] sm:$0xff]
        %v2362 = vld [vmem:[%s10 + $0x20] sm:$0xf]
        %v2363 = vld [vmem:[%s10 + $0x24] sm:$0xff]
        %v2364 = vld [vmem:[%s10 + $0x2c] sm:$0xf]
        %2365 = vrot.lane.b32.xlu0 %v2119, 127
        %v2366 = vpop.permute.xlu0 %2365
        %2367 = vrot.lane.b32.xlu0 %v2125, 127
        %v2368 = vpop.permute.xlu0 %2367
        %v2369 = vsel %vm880, %v2238, %v2366
        %v2370 = vsel %vm880, %v2244, %v2368
        %2371 = vrot.lane.b32.xlu0 %v2119, 126
        %v2372 = vpop.permute.xlu0 %2371
        %2373 = vrot.lane.b32.xlu0 %v2125, 126
        %v2374 = vpop.permute.xlu0 %2373
        %v2375 = vsel %vm898, %v2254, %v2372
        %v2376 = vsel %vm898, %v2260, %v2374
        %2377 = vrot.lane.b32.xlu0 %v2119, 118
        %v2378 = vpop.permute.xlu0 %2377
        %2379 = vrot.lane.b32.xlu0 %v2125, 118
        %v2380 = vpop.permute.xlu0 %2379
        %v2381 = vsel %vm916, %v2270, %v2378
        %v2382 = vsel %vm916, %v2276, %v2380
        %2383 = vrot.lane.b32.xlu0 %v2119, 117
        %v2384 = vpop.permute.xlu0 %2383
        %2385 = vrot.lane.b32.xlu0 %v2125, 117
        %v2386 = vpop.permute.xlu0 %2385
        %v2387 = vsel %vm934, %v2284, %v2384
        %v2388 = vsel %vm934, %v2288, %v2386
        %2391 = vrot.lane.b32.xlu0 %v2120, 116
        %v2392 = vpop.permute.xlu0 %2391
        %2393 = vrot.lane.b32.xlu0 %v2126, 116
        %v2394 = vpop.permute.xlu0 %2393
        %v2395 = vsel %vm954, %v2298, %v2392
        %v2396 = vsel %vm954, %v2304, %v2394
        %2397 = vrot.lane.b32.xlu0 %v2120, 108
        %v2398 = vpop.permute.xlu0 %2397
        %2399 = vrot.lane.b32.xlu0 %v2126, 108
        %v2400 = vpop.permute.xlu0 %2399
        %v2401 = vsel %vm975, %v2314, %v2398
        %v2402 = vsel %vm975, %v2320, %v2400
        %2403 = vrot.lane.b32.xlu0 %v2120, 107
        %v2404 = vpop.permute.xlu0 %2403
        %2405 = vrot.lane.b32.xlu0 %v2126, 107
        %v2406 = vpop.permute.xlu0 %2405
        %v2407 = vsel %vm996, %v2330, %v2404
        %v2408 = vsel %vm996, %v2336, %v2406
        %2409 = vrot.lane.b32.xlu0 %v2120, 106
        %v2410 = vpop.permute.xlu0 %2409
        %2411 = vrot.lane.b32.xlu0 %v2126, 106
        %v2412 = vpop.permute.xlu0 %2411
        %v2413 = vsel %vm1017, %v2346, %v2410
        %v2414 = vsel %vm1017, %v2352, %v2412
        %s2415 = scalar_lea.vmem %s10, 48
        %v2416 = vld [vmem:[%s2415] sm:$0xff]
        %v2417 = vld [vmem:[%s2415 + $0x8] sm:$0xf]
        %v2418 = vld [vmem:[%s2415 + $0xc] sm:$0xff]
        %v2419 = vld [vmem:[%s2415 + $0x14] sm:$0xf]
        %v2420 = vld [vmem:[%s2415 + $0x18] sm:$0xff]
        %v2421 = vld [vmem:[%s2415 + $0x20] sm:$0xf]
        %v2422 = vld [vmem:[%s2415 + $0x24] sm:$0xff]
        %v2423 = vld [vmem:[%s2415 + $0x2c] sm:$0xf]
        %v2432 = vunpack.c.l.b16 %v2416
        %v2433 = vunpack.c.h.b16 %v2416
        %v2434 = vunpack.c.l.b16 %v2417
        %v2435 = vunpack.c.l.b16 %v2418
        %v2436 = vunpack.c.h.b16 %v2418
        %v2437 = vunpack.c.l.b16 %v2419
        %v2438 = vunpack.c.l.b16 %v2420
        %v2439 = vunpack.c.h.b16 %v2420
        %v2440 = vunpack.c.l.b16 %v2421
        %v2441 = vunpack.c.l.b16 %v2422
        %v2442 = vunpack.c.h.b16 %v2422
        %v2443 = vunpack.c.l.b16 %v2423
        %v2444 = vpack.c.b16 %v2435, %v2432
        %v2445 = vpack.c.b16 %v2436, %v2433
        %v2446 = vpack.c.b16 %v2437, %v2434
        %v2447 = vpack.c.b16 %v2441, %v2438
        %v2448 = vpack.c.b16 %v2442, %v2439
        %v2449 = vpack.c.b16 %v2443, %v2440
        %2454 = vrot.lane.b32.xlu0 %v2117, 11
        %v2455 = vpop.permute.xlu0 %2454
        %2456 = vrot.lane.b32.xlu0 %v2118, 11
        %v2457 = vpop.permute.xlu0 %2456
        %2458 = vrot.lane.b32.xlu0 %v2119, 11
        %v2459 = vpop.permute.xlu0 %2458
        %2460 = vrot.lane.b32.xlu0 %v2123, 11
        %v2461 = vpop.permute.xlu0 %2460
        %2462 = vrot.lane.b32.xlu0 %v2124, 11
        %v2463 = vpop.permute.xlu0 %2462
        %2464 = vrot.lane.b32.xlu0 %v2125, 11
        %v2465 = vpop.permute.xlu0 %2464
        %2466 = vrot.lane.b32.xlu0 %v2246, 11
        %v2467 = vpop.permute.xlu0 %2466
        %2468 = vrot.lane.b32.xlu0 %v2369, 11
        %v2469 = vpop.permute.xlu0 %2468
        %2470 = vrot.lane.b32.xlu0 %v2366, 11
        %v2471 = vpop.permute.xlu0 %2470
        %2472 = vrot.lane.b32.xlu0 %v2248, 11
        %v2473 = vpop.permute.xlu0 %2472
        %2474 = vrot.lane.b32.xlu0 %v2370, 11
        %v2475 = vpop.permute.xlu0 %2474
        %2476 = vrot.lane.b32.xlu0 %v2368, 11
        %v2477 = vpop.permute.xlu0 %2476
        %2478 = vrot.lane.b32.xlu0 %v2262, 11
        %v2479 = vpop.permute.xlu0 %2478
        %2480 = vrot.lane.b32.xlu0 %v2375, 11
        %v2481 = vpop.permute.xlu0 %2480
        %2482 = vrot.lane.b32.xlu0 %v2372, 11
        %v2483 = vpop.permute.xlu0 %2482
        %2484 = vrot.lane.b32.xlu0 %v2264, 11
        %v2485 = vpop.permute.xlu0 %2484
        %2486 = vrot.lane.b32.xlu0 %v2376, 11
        %v2487 = vpop.permute.xlu0 %2486
        %2488 = vrot.lane.b32.xlu0 %v2374, 11
        %v2489 = vpop.permute.xlu0 %2488
        %2490 = vrot.lane.b32.xlu0 %v2278, 11
        %v2491 = vpop.permute.xlu0 %2490
        %2492 = vrot.lane.b32.xlu0 %v2381, 11
        %v2493 = vpop.permute.xlu0 %2492
        %2494 = vrot.lane.b32.xlu0 %v2378, 11
        %v2495 = vpop.permute.xlu0 %2494
        %2496 = vrot.lane.b32.xlu0 %v2280, 11
        %v2497 = vpop.permute.xlu0 %2496
        %2498 = vrot.lane.b32.xlu0 %v2382, 11
        %v2499 = vpop.permute.xlu0 %2498
        %2500 = vrot.lane.b32.xlu0 %v2380, 11
        %v2501 = vpop.permute.xlu0 %2500
        %2502 = vrot.lane.b32.xlu0 %v2284, 11
        %v2503 = vpop.permute.xlu0 %2502
        %2504 = vrot.lane.b32.xlu0 %v2387, 11
        %v2505 = vpop.permute.xlu0 %2504
        %2506 = vrot.lane.b32.xlu0 %v2384, 11
        %v2507 = vpop.permute.xlu0 %2506
        %2508 = vrot.lane.b32.xlu0 %v2288, 11
        %v2509 = vpop.permute.xlu0 %2508
        %2510 = vrot.lane.b32.xlu0 %v2388, 11
        %v2511 = vpop.permute.xlu0 %2510
        %2512 = vrot.lane.b32.xlu0 %v2386, 11
        %v2513 = vpop.permute.xlu0 %2512
        %2514 = vrot.lane.b32.xlu0 %v2296, 11
        %v2515 = vpop.permute.xlu0 %2514
        %2516 = vrot.lane.b32.xlu0 %v2306, 11
        %v2517 = vpop.permute.xlu0 %2516
        %2518 = vrot.lane.b32.xlu0 %v2395, 11
        %v2519 = vpop.permute.xlu0 %2518
        %2520 = vrot.lane.b32.xlu0 %v2302, 11
        %v2521 = vpop.permute.xlu0 %2520
        %2522 = vrot.lane.b32.xlu0 %v2308, 11
        %v2523 = vpop.permute.xlu0 %2522
        %2524 = vrot.lane.b32.xlu0 %v2396, 11
        %v2525 = vpop.permute.xlu0 %2524
        %2526 = vrot.lane.b32.xlu0 %v2312, 11
        %v2527 = vpop.permute.xlu0 %2526
        %2528 = vrot.lane.b32.xlu0 %v2322, 11
        %v2529 = vpop.permute.xlu0 %2528
        %2530 = vrot.lane.b32.xlu0 %v2401, 11
        %v2531 = vpop.permute.xlu0 %2530
        %2532 = vrot.lane.b32.xlu0 %v2318, 11
        %v2533 = vpop.permute.xlu0 %2532
        %2534 = vrot.lane.b32.xlu0 %v2324, 11
        %v2535 = vpop.permute.xlu0 %2534
        %2536 = vrot.lane.b32.xlu0 %v2402, 11
        %v2537 = vpop.permute.xlu0 %2536
        %2538 = vrot.lane.b32.xlu0 %v2328, 11
        %v2539 = vpop.permute.xlu0 %2538
        %2540 = vrot.lane.b32.xlu0 %v2338, 11
        %v2541 = vpop.permute.xlu0 %2540
        %2542 = vrot.lane.b32.xlu0 %v2407, 11
        %v2543 = vpop.permute.xlu0 %2542
        %2544 = vrot.lane.b32.xlu0 %v2334, 11
        %v2545 = vpop.permute.xlu0 %2544
        %2546 = vrot.lane.b32.xlu0 %v2340, 11
        %v2547 = vpop.permute.xlu0 %2546
        %2548 = vrot.lane.b32.xlu0 %v2408, 11
        %v2549 = vpop.permute.xlu0 %2548
        %2550 = vrot.lane.b32.xlu0 %v2344, 11
        %v2551 = vpop.permute.xlu0 %2550
        %2552 = vrot.lane.b32.xlu0 %v2354, 11
        %v2553 = vpop.permute.xlu0 %2552
        %2554 = vrot.lane.b32.xlu0 %v2413, 11
        %v2555 = vpop.permute.xlu0 %2554
        %2556 = vrot.lane.b32.xlu0 %v2350, 11
        %v2557 = vpop.permute.xlu0 %2556
        %2558 = vrot.lane.b32.xlu0 %v2356, 11
        %v2559 = vpop.permute.xlu0 %2558
        %2560 = vrot.lane.b32.xlu0 %v2414, 11
        %v2561 = vpop.permute.xlu0 %2560
        %v2562 = vsel %vm1193, %v2455, %v2457
        %v2563 = vsel %vm1193, %v2457, %v2459
        %v2564 = vsel %vm1193, %v2461, %v2463
        %v2565 = vsel %vm1193, %v2463, %v2465
        %v2566 = vsel %vm1193, %v2467, %v2469
        %v2567 = vsel %vm1193, %v2469, %v2471
        %v2568 = vsel %vm1193, %v2473, %v2475
        %v2569 = vsel %vm1193, %v2475, %v2477
        %v2570 = vsel %vm1193, %v2479, %v2481
        %v2571 = vsel %vm1193, %v2481, %v2483
        %v2572 = vsel %vm1193, %v2485, %v2487
        %v2573 = vsel %vm1193, %v2487, %v2489
        %v2574 = vsel %vm1193, %v2491, %v2493
        %v2575 = vsel %vm1193, %v2493, %v2495
        %v2576 = vsel %vm1193, %v2497, %v2499
        %v2577 = vsel %vm1193, %v2499, %v2501
        %v2578 = vsel %vm1193, %v2503, %v2505
        %v2579 = vsel %vm1193, %v2505, %v2507
        %v2580 = vsel %vm1193, %v2509, %v2511
        %v2581 = vsel %vm1193, %v2511, %v2513
        %v2582 = vsel %vm1193, %v2515, %v2517
        %v2583 = vsel %vm1193, %v2517, %v2519
        %v2584 = vsel %vm1193, %v2521, %v2523
        %v2585 = vsel %vm1193, %v2523, %v2525
        %v2586 = vsel %vm1193, %v2527, %v2529
        %v2587 = vsel %vm1193, %v2529, %v2531
        %v2588 = vsel %vm1193, %v2533, %v2535
        %v2589 = vsel %vm1193, %v2535, %v2537
        %v2590 = vsel %vm1193, %v2539, %v2541
        %v2591 = vsel %vm1193, %v2541, %v2543
        %v2592 = vsel %vm1193, %v2545, %v2547
        %v2593 = vsel %vm1193, %v2547, %v2549
        %v2594 = vsel %vm1193, %v2551, %v2553
        %v2595 = vsel %vm1193, %v2553, %v2555
        %v2596 = vsel %vm1193, %v2557, %v2559
        %v2597 = vsel %vm1193, %v2559, %v2561
        %vm2634 = vcmask 261120
        %v2636 = vsel %vm2634, %v2446, 0
        %v2639 = vsel %vm2634, %v2449, 0
        %2641 = vmatprep.subr.bf16.mxu0 %v2563
        %2642 = vmatpush1.bf16.msra.mxu0 %v2562
        %2643 = vmatprep.subr.bf16.mxu0 %v2565
        %2644 = vmatpush1.bf16.msra.mxu0 %v2564
        %2645 = vmatprep.subr.bf16.mxu0 %v2567
        %2646 = vmatpush1.bf16.msra.mxu0 %v2566
        %2647 = vmatprep.subr.bf16.mxu0 %v2569
        %2648 = vmatpush1.bf16.msra.mxu0 %v2568
        %2649 = vmatprep.subr.bf16.mxu0 %v2571
        %2650 = vmatpush1.bf16.msra.mxu0 %v2570
        %2651 = vmatprep.subr.bf16.mxu0 %v2573
        %2652 = vmatpush1.bf16.msra.mxu0 %v2572
        %2653 = vmatprep.subr.bf16.mxu0 %v2575
        %2654 = vmatpush1.bf16.msra.mxu0 %v2574
        %2655 = vmatprep.subr.bf16.mxu0 %v2577
        %2656 = vmatpush1.bf16.msra.mxu0 %v2576
        %2657 = vmatprep.subr.bf16.mxu0 %v2579
        %2658 = vmatpush1.bf16.msra.mxu0 %v2578
        %2659 = vmatprep.subr.bf16.mxu0 %v2581
        %2660 = vmatpush1.bf16.msra.mxu0 %v2580
        %2661 = vmatprep.subr.bf16.mxu0 %v2583
        %2662 = vmatpush1.bf16.msra.mxu0 %v2582
        %2663 = vmatprep.subr.bf16.mxu0 %v2585
        %2664 = vmatpush1.bf16.msra.mxu0 %v2584
        %2665 = vmatprep.subr.bf16.mxu0 %v2587
        %2666 = vmatpush1.bf16.msra.mxu0 %v2586
        %2667 = vmatprep.subr.bf16.mxu0 %v2589
        %2668 = vmatpush1.bf16.msra.mxu0 %v2588
        %2669 = vmatprep.subr.bf16.mxu0 %v2591
        %2670 = vmatpush1.bf16.msra.mxu0 %v2590
        %2671 = vmatprep.subr.bf16.mxu0 %v2593
        %2672 = vmatpush1.bf16.msra.mxu0 %v2592
        %2673 = vmatprep.mubr.bf16.mxu0 %v2445
        %2674 = vmatmul.mubr.bf16.gmra.mrb[0].mxu0 %v2444
        %v2675 = vpop.f32.mrb[0].mxu0
        %v2676 = vadd.f32 0.0, %v2675
        %v2677 = vpop.f32.mrb[0].mxu0
        %v2678 = vadd.f32 0.0, %v2677
        %v2679 = vpop.f32.mrb[0].mxu0
        %v2680 = vadd.f32 0.0, %v2679
        %v2681 = vpop.f32.mrb[0].mxu0
        %v2682 = vadd.f32 0.0, %v2681
        %2683 = vmatprep.mubr.bf16.mxu0 %v2448
        %2684 = vmatmul.mubr.bf16.gmra.mrb[0].mxu0 %v2447
        %v2685 = vpop.f32.mrb[0].mxu0
        %v2686 = vadd.f32 0.0, %v2685
        %v2687 = vpop.f32.mrb[0].mxu0
        %v2688 = vadd.f32 0.0, %v2687
        %v2689 = vpop.f32.mrb[0].mxu0
        %v2690 = vadd.f32 0.0, %v2689
        %v2691 = vpop.f32.mrb[0].mxu0
        %v2692 = vadd.f32 0.0, %v2691
        %2693 = vdwg.mxu0
        %2694 = vmatprep.subr.bf16.mxu0 %v2595
        %2695 = vmatpush1.bf16.msra.mxu0 %v2594
        %2696 = vmatprep.subr.bf16.mxu0 %v2597
        %2697 = vmatpush1.bf16.msra.mxu0 %v2596
        %2698 = vmatprep.subr.bf16.mxu0 0
        %2699 = vmatpush1.bf16.msra.mxu0 0
        %2700 = vmatprep.subr.bf16.mxu0 0
        %2701 = vmatpush1.bf16.msra.mxu0 0
        %2702 = vmatprep.subr.bf16.mxu0 0
        %2703 = vmatpush1.bf16.msra.mxu0 0
        %2704 = vmatprep.subr.bf16.mxu0 0
        %2705 = vmatpush1.bf16.msra.mxu0 0
        %2706 = vmatprep.subr.bf16.mxu0 0
        %2707 = vmatpush1.bf16.msra.mxu0 0
        %2708 = vmatprep.subr.bf16.mxu0 0
        %2709 = vmatpush1.bf16.msra.mxu0 0
        %2710 = vmatprep.subr.bf16.mxu0 0
        %2711 = vmatpush1.bf16.msra.mxu0 0
        %2712 = vmatprep.subr.bf16.mxu0 0
        %2713 = vmatpush1.bf16.msra.mxu0 0
        %2714 = vmatprep.subr.bf16.mxu0 0
        %2715 = vmatpush1.bf16.msra.mxu0 0
        %2716 = vmatprep.subr.bf16.mxu0 0
        %2717 = vmatpush1.bf16.msra.mxu0 0
        %2718 = vmatprep.subr.bf16.mxu0 0
        %2719 = vmatpush1.bf16.msra.mxu0 0
        %2720 = vmatprep.subr.bf16.mxu0 0
        %2721 = vmatpush1.bf16.msra.mxu0 0
        %2722 = vmatprep.subr.bf16.mxu0 0
        %2723 = vmatpush1.bf16.msra.mxu0 0
        %2724 = vmatprep.subr.bf16.mxu0 0
        %2725 = vmatpush1.bf16.msra.mxu0 0
        %2726 = vmatprep.mubr.bf16.mxu0 0
        %2727 = vmatmul.mubr.bf16.gmra.mrb[0].mxu0 %v2636
        %v2728 = vpop.f32.mrb[0].mxu0
        %v2729 = vadd.f32 %v2676, %v2728
        %v2730 = vpop.f32.mrb[0].mxu0
        %v2731 = vadd.f32 %v2678, %v2730
        %v2732 = vpop.f32.mrb[0].mxu0
        %v2733 = vadd.f32 %v2680, %v2732
        %v2734 = vpop.f32.mrb[0].mxu0
        %v2735 = vadd.f32 %v2682, %v2734
        %2736 = vmatprep.mubr.bf16.mxu0 0
        %2737 = vmatmul.mubr.bf16.gmra.mrb[0].mxu0 %v2639
        %v2738 = vpop.f32.mrb[0].mxu0
        %v2739 = vadd.f32 %v2686, %v2738
        %v2740 = vpop.f32.mrb[0].mxu0
        %v2741 = vadd.f32 %v2688, %v2740
        %v2742 = vpop.f32.mrb[0].mxu0
        %v2743 = vadd.f32 %v2690, %v2742
        %v2744 = vpop.f32.mrb[0].mxu0
        %v2745 = vadd.f32 %v2692, %v2744
        %2746 = vdwg.mxu0
        %v2755 = vunpack.c.l.b16 %v2357
        %v2756 = vunpack.c.h.b16 %v2357
        %v2757 = vunpack.c.l.b16 %v2358
        %v2758 = vunpack.c.l.b16 %v2359
        %v2759 = vunpack.c.h.b16 %v2359
        %v2760 = vunpack.c.l.b16 %v2360
        %v2761 = vunpack.c.l.b16 %v2361
        %v2762 = vunpack.c.h.b16 %v2361
        %v2763 = vunpack.c.l.b16 %v2362
        %v2764 = vunpack.c.l.b16 %v2363
        %v2765 = vunpack.c.h.b16 %v2363
        %v2766 = vunpack.c.l.b16 %v2364
        %v2767 = vpack.c.b16 %v2758, %v2755
        %v2768 = vpack.c.b16 %v2759, %v2756
        %v2769 = vpack.c.b16 %v2760, %v2757
        %v2770 = vpack.c.b16 %v2764, %v2761
        %v2771 = vpack.c.b16 %v2765, %v2762
        %v2772 = vpack.c.b16 %v2766, %v2763
        %2777 = vrot.lane.b32.xlu0 %v2116, 11
        %v2778 = vpop.permute.xlu0 %2777
        %2779 = vrot.lane.b32.xlu0 %v2122, 11
        %v2780 = vpop.permute.xlu0 %2779
        %2781 = vrot.lane.b32.xlu0 %v2245, 11
        %v2782 = vpop.permute.xlu0 %2781
        %2783 = vrot.lane.b32.xlu0 %v2238, 11
        %v2784 = vpop.permute.xlu0 %2783
        %2785 = vrot.lane.b32.xlu0 %v2247, 11
        %v2786 = vpop.permute.xlu0 %2785
        %2787 = vrot.lane.b32.xlu0 %v2244, 11
        %v2788 = vpop.permute.xlu0 %2787
        %2789 = vrot.lane.b32.xlu0 %v2261, 11
        %v2790 = vpop.permute.xlu0 %2789
        %2791 = vrot.lane.b32.xlu0 %v2254, 11
        %v2792 = vpop.permute.xlu0 %2791
        %2793 = vrot.lane.b32.xlu0 %v2263, 11
        %v2794 = vpop.permute.xlu0 %2793
        %2795 = vrot.lane.b32.xlu0 %v2260, 11
        %v2796 = vpop.permute.xlu0 %2795
        %2797 = vrot.lane.b32.xlu0 %v2277, 11
        %v2798 = vpop.permute.xlu0 %2797
        %2799 = vrot.lane.b32.xlu0 %v2270, 11
        %v2800 = vpop.permute.xlu0 %2799
        %2801 = vrot.lane.b32.xlu0 %v2279, 11
        %v2802 = vpop.permute.xlu0 %2801
        %2803 = vrot.lane.b32.xlu0 %v2276, 11
        %v2804 = vpop.permute.xlu0 %2803
        %2805 = vrot.lane.b32.xlu0 %v2282, 11
        %v2806 = vpop.permute.xlu0 %2805
        %2807 = vrot.lane.b32.xlu0 %v2289, 11
        %v2808 = vpop.permute.xlu0 %2807
        %2809 = vrot.lane.b32.xlu0 %v2286, 11
        %v2810 = vpop.permute.xlu0 %2809
        %2811 = vrot.lane.b32.xlu0 %v2290, 11
        %v2812 = vpop.permute.xlu0 %2811
        %2813 = vrot.lane.b32.xlu0 %v2294, 11
        %v2814 = vpop.permute.xlu0 %2813
        %2815 = vrot.lane.b32.xlu0 %v2305, 11
        %v2816 = vpop.permute.xlu0 %2815
        %2817 = vrot.lane.b32.xlu0 %v2300, 11
        %v2818 = vpop.permute.xlu0 %2817
        %2819 = vrot.lane.b32.xlu0 %v2307, 11
        %v2820 = vpop.permute.xlu0 %2819
        %2821 = vrot.lane.b32.xlu0 %v2310, 11
        %v2822 = vpop.permute.xlu0 %2821
        %2823 = vrot.lane.b32.xlu0 %v2321, 11
        %v2824 = vpop.permute.xlu0 %2823
        %2825 = vrot.lane.b32.xlu0 %v2316, 11
        %v2826 = vpop.permute.xlu0 %2825
        %2827 = vrot.lane.b32.xlu0 %v2323, 11
        %v2828 = vpop.permute.xlu0 %2827
        %2829 = vrot.lane.b32.xlu0 %v2326, 11
        %v2830 = vpop.permute.xlu0 %2829
        %2831 = vrot.lane.b32.xlu0 %v2337, 11
        %v2832 = vpop.permute.xlu0 %2831
        %2833 = vrot.lane.b32.xlu0 %v2332, 11
        %v2834 = vpop.permute.xlu0 %2833
        %2835 = vrot.lane.b32.xlu0 %v2339, 11
        %v2836 = vpop.permute.xlu0 %2835
        %2837 = vrot.lane.b32.xlu0 %v2342, 11
        %v2838 = vpop.permute.xlu0 %2837
        %2839 = vrot.lane.b32.xlu0 %v2353, 11
        %v2840 = vpop.permute.xlu0 %2839
        %2841 = vrot.lane.b32.xlu0 %v2348, 11
        %v2842 = vpop.permute.xlu0 %2841
        %2843 = vrot.lane.b32.xlu0 %v2355, 11
        %v2844 = vpop.permute.xlu0 %2843
        %v2845 = vsel %vm1193, %v2778, %v2455
        %v2846 = vsel %vm1193, %v2780, %v2461
        %v2847 = vsel %vm1193, %v2782, %v2467
        %v2848 = vsel %vm1193, %v2467, %v2784
        %v2849 = vsel %vm1193, %v2786, %v2473
        %v2850 = vsel %vm1193, %v2473, %v2788
        %v2851 = vsel %vm1193, %v2790, %v2479
        %v2852 = vsel %vm1193, %v2479, %v2792
        %v2853 = vsel %vm1193, %v2794, %v2485
        %v2854 = vsel %vm1193, %v2485, %v2796
        %v2855 = vsel %vm1193, %v2798, %v2491
        %v2856 = vsel %vm1193, %v2491, %v2800
        %v2857 = vsel %vm1193, %v2802, %v2497
        %v2858 = vsel %vm1193, %v2497, %v2804
        %v2859 = vsel %vm1193, %v2806, %v2808
        %v2860 = vsel %vm1193, %v2808, %v2503
        %v2861 = vsel %vm1193, %v2810, %v2812
        %v2862 = vsel %vm1193, %v2812, %v2509
        %v2863 = vsel %vm1193, %v2814, %v2816
        %v2864 = vsel %vm1193, %v2816, %v2517
        %v2865 = vsel %vm1193, %v2818, %v2820
        %v2866 = vsel %vm1193, %v2820, %v2523
        %v2867 = vsel %vm1193, %v2822, %v2824
        %v2868 = vsel %vm1193, %v2824, %v2529
        %v2869 = vsel %vm1193, %v2826, %v2828
        %v2870 = vsel %vm1193, %v2828, %v2535
        %v2871 = vsel %vm1193, %v2830, %v2832
        %v2872 = vsel %vm1193, %v2832, %v2541
        %v2873 = vsel %vm1193, %v2834, %v2836
        %v2874 = vsel %vm1193, %v2836, %v2547
        %v2875 = vsel %vm1193, %v2838, %v2840
        %v2876 = vsel %vm1193, %v2840, %v2553
        %v2877 = vsel %vm1193, %v2842, %v2844
        %v2878 = vsel %vm1193, %v2844, %v2559
        %v2914 = vsel %vm2634, %v2769, 0
        %v2917 = vsel %vm2634, %v2772, 0
        %2919 = vmatprep.subr.bf16.mxu0 %v2562
        %2920 = vmatpush1.bf16.msra.mxu0 %v2845
        %2921 = vmatprep.subr.bf16.mxu0 %v2564
        %2922 = vmatpush1.bf16.msra.mxu0 %v2846
        %2923 = vmatprep.subr.bf16.mxu0 %v2848
        %2924 = vmatpush1.bf16.msra.mxu0 %v2847
        %2925 = vmatprep.subr.bf16.mxu0 %v2850
        %2926 = vmatpush1.bf16.msra.mxu0 %v2849
        %2927 = vmatprep.subr.bf16.mxu0 %v2852
        %2928 = vmatpush1.bf16.msra.mxu0 %v2851
        %2929 = vmatprep.subr.bf16.mxu0 %v2854
        %2930 = vmatpush1.bf16.msra.mxu0 %v2853
        %2931 = vmatprep.subr.bf16.mxu0 %v2856
        %2932 = vmatpush1.bf16.msra.mxu0 %v2855
        %2933 = vmatprep.subr.bf16.mxu0 %v2858
        %2934 = vmatpush1.bf16.msra.mxu0 %v2857
        %2935 = vmatprep.subr.bf16.mxu0 %v2860
        %2936 = vmatpush1.bf16.msra.mxu0 %v2859
        %2937 = vmatprep.subr.bf16.mxu0 %v2862
        %2938 = vmatpush1.bf16.msra.mxu0 %v2861
        %2939 = vmatprep.subr.bf16.mxu0 %v2864
        %2940 = vmatpush1.bf16.msra.mxu0 %v2863
        %2941 = vmatprep.subr.bf16.mxu0 %v2866
        %2942 = vmatpush1.bf16.msra.mxu0 %v2865
        %2943 = vmatprep.subr.bf16.mxu0 %v2868
        %2944 = vmatpush1.bf16.msra.mxu0 %v2867
        %2945 = vmatprep.subr.bf16.mxu0 %v2870
        %2946 = vmatpush1.bf16.msra.mxu0 %v2869
        %2947 = vmatprep.subr.bf16.mxu0 %v2872
        %2948 = vmatpush1.bf16.msra.mxu0 %v2871
        %2949 = vmatprep.subr.bf16.mxu0 %v2874
        %2950 = vmatpush1.bf16.msra.mxu0 %v2873
        %2951 = vmatprep.mubr.bf16.mxu0 %v2768
        %2952 = vmatmul.mubr.bf16.gmra.mrb[0].mxu0 %v2767
        %v2953 = vpop.f32.mrb[0].mxu0
        %v2954 = vadd.f32 %v2729, %v2953
        %v2955 = vpop.f32.mrb[0].mxu0
        %v2956 = vadd.f32 %v2731, %v2955
        %v2957 = vpop.f32.mrb[0].mxu0
        %v2958 = vadd.f32 %v2733, %v2957
        %v2959 = vpop.f32.mrb[0].mxu0
        %v2960 = vadd.f32 %v2735, %v2959
        %2961 = vmatprep.mubr.bf16.mxu0 %v2771
        %2962 = vmatmul.mubr.bf16.gmra.mrb[0].mxu0 %v2770
        %v2963 = vpop.f32.mrb[0].mxu0
        %v2964 = vadd.f32 %v2739, %v2963
        %v2965 = vpop.f32.mrb[0].mxu0
        %v2966 = vadd.f32 %v2741, %v2965
        %v2967 = vpop.f32.mrb[0].mxu0
        %v2968 = vadd.f32 %v2743, %v2967
        %v2969 = vpop.f32.mrb[0].mxu0
        %v2970 = vadd.f32 %v2745, %v2969
        %2971 = vdwg.mxu0
        %2972 = vmatprep.subr.bf16.mxu0 %v2876
        %2973 = vmatpush1.bf16.msra.mxu0 %v2875
        %2974 = vmatprep.subr.bf16.mxu0 %v2878
        %2975 = vmatpush1.bf16.msra.mxu0 %v2877
        %2976 = vmatprep.subr.bf16.mxu0 0
        %2977 = vmatpush1.bf16.msra.mxu0 0
        %2978 = vmatprep.subr.bf16.mxu0 0
        %2979 = vmatpush1.bf16.msra.mxu0 0
        %2980 = vmatprep.subr.bf16.mxu0 0
        %2981 = vmatpush1.bf16.msra.mxu0 0
        %2982 = vmatprep.subr.bf16.mxu0 0
        %2983 = vmatpush1.bf16.msra.mxu0 0
        %2984 = vmatprep.subr.bf16.mxu0 0
        %2985 = vmatpush1.bf16.msra.mxu0 0
        %2986 = vmatprep.subr.bf16.mxu0 0
        %2987 = vmatpush1.bf16.msra.mxu0 0
        %2988 = vmatprep.subr.bf16.mxu0 0
        %2989 = vmatpush1.bf16.msra.mxu0 0
        %2990 = vmatprep.subr.bf16.mxu0 0
        %2991 = vmatpush1.bf16.msra.mxu0 0
        %2992 = vmatprep.subr.bf16.mxu0 0
        %2993 = vmatpush1.bf16.msra.mxu0 0
        %2994 = vmatprep.subr.bf16.mxu0 0
        %2995 = vmatpush1.bf16.msra.mxu0 0
        %2996 = vmatprep.subr.bf16.mxu0 0
        %2997 = vmatpush1.bf16.msra.mxu0 0
        %2998 = vmatprep.subr.bf16.mxu0 0
        %2999 = vmatpush1.bf16.msra.mxu0 0
        %3000 = vmatprep.subr.bf16.mxu0 0
        %3001 = vmatpush1.bf16.msra.mxu0 0
        %3002 = vmatprep.subr.bf16.mxu0 0
        %3003 = vmatpush1.bf16.msra.mxu0 0
        %3004 = vmatprep.mubr.bf16.mxu0 0
        %3005 = vmatmul.mubr.bf16.gmra.mrb[0].mxu0 %v2914
        %v3006 = vpop.f32.mrb[0].mxu0
        %v3007 = vadd.f32 %v2954, %v3006
        %v3008 = vpop.f32.mrb[0].mxu0
        %v3009 = vadd.f32 %v2956, %v3008
        %v3010 = vpop.f32.mrb[0].mxu0
        %v3011 = vadd.f32 %v2958, %v3010
        %v3012 = vpop.f32.mrb[0].mxu0
        %v3013 = vadd.f32 %v2960, %v3012
        %3014 = vmatprep.mubr.bf16.mxu0 0
        %3015 = vmatmul.mubr.bf16.gmra.mrb[0].mxu0 %v2917
        %v3016 = vpop.f32.mrb[0].mxu0
        %v3017 = vadd.f32 %v2964, %v3016
        %v3018 = vpop.f32.mrb[0].mxu0
        %v3019 = vadd.f32 %v2966, %v3018
        %v3020 = vpop.f32.mrb[0].mxu0
        %v3021 = vadd.f32 %v2968, %v3020
        %v3022 = vpop.f32.mrb[0].mxu0
        %v3023 = vadd.f32 %v2970, %v3022
        %3024 = vdwg.mxu0
        %3025 = vrot.lane.b32.xlu0 %v2120, 127
        %v3026 = vpop.permute.xlu0 %3025
        %3027 = vrot.lane.b32.xlu0 %v2126, 127
        %v3028 = vpop.permute.xlu0 %3027
        %v3029 = vsel %vm880, %v2366, %v3026
        %v3030 = vsel %vm880, %v2368, %v3028
        %3031 = vrot.lane.b32.xlu0 %v2120, 126
        %v3032 = vpop.permute.xlu0 %3031
        %3033 = vrot.lane.b32.xlu0 %v2126, 126
        %v3034 = vpop.permute.xlu0 %3033
        %v3035 = vsel %vm898, %v2372, %v3032
        %v3036 = vsel %vm898, %v2374, %v3034
        %3037 = vrot.lane.b32.xlu0 %v2120, 118
        %v3038 = vpop.permute.xlu0 %3037
        %3039 = vrot.lane.b32.xlu0 %v2126, 118
        %v3040 = vpop.permute.xlu0 %3039
        %v3041 = vsel %vm916, %v2378, %v3038
        %v3042 = vsel %vm916, %v2380, %v3040
        %3043 = vrot.lane.b32.xlu0 %v2120, 117
        %v3044 = vpop.permute.xlu0 %3043
        %3045 = vrot.lane.b32.xlu0 %v2126, 117
        %v3046 = vpop.permute.xlu0 %3045
        %v3047 = vsel %vm934, %v2384, %v3044
        %v3048 = vsel %vm934, %v2386, %v3046
        %3051 = vrot.lane.b32.xlu0 %v2121, 116
        %v3052 = vpop.permute.xlu0 %3051
        %3053 = vrot.lane.b32.xlu0 %v2127, 116
        %v3054 = vpop.permute.xlu0 %3053
        %v3055 = vsel %vm954, %v2392, %v3052
        %v3056 = vsel %vm954, %v2394, %v3054
        %3057 = vrot.lane.b32.xlu0 %v2121, 108
        %v3058 = vpop.permute.xlu0 %3057
        %3059 = vrot.lane.b32.xlu0 %v2127, 108
        %v3060 = vpop.permute.xlu0 %3059
        %v3061 = vsel %vm975, %v2398, %v3058
        %v3062 = vsel %vm975, %v2400, %v3060
        %3063 = vrot.lane.b32.xlu0 %v2121, 107
        %v3064 = vpop.permute.xlu0 %3063
        %3065 = vrot.lane.b32.xlu0 %v2127, 107
        %v3066 = vpop.permute.xlu0 %3065
        %v3067 = vsel %vm996, %v2404, %v3064
        %v3068 = vsel %vm996, %v2406, %v3066
        %3069 = vrot.lane.b32.xlu0 %v2121, 106
        %v3070 = vpop.permute.xlu0 %3069
        %3071 = vrot.lane.b32.xlu0 %v2127, 106
        %v3072 = vpop.permute.xlu0 %3071
        %v3073 = vsel %vm1017, %v2410, %v3070
        %v3074 = vsel %vm1017, %v2412, %v3072
        %s3075 = scalar_lea.vmem %s10, 96
        %v3076 = vld [vmem:[%s3075] sm:$0xff]
        %v3077 = vld [vmem:[%s3075 + $0x8] sm:$0xf]
        %v3078 = vld [vmem:[%s3075 + $0xc] sm:$0xff]
        %v3079 = vld [vmem:[%s3075 + $0x14] sm:$0xf]
        %v3080 = vld [vmem:[%s3075 + $0x18] sm:$0xff]
        %v3081 = vld [vmem:[%s3075 + $0x20] sm:$0xf]
        %v3082 = vld [vmem:[%s3075 + $0x24] sm:$0xff]
        %v3083 = vld [vmem:[%s3075 + $0x2c] sm:$0xf]
        %v3092 = vunpack.c.l.b16 %v3076
        %v3093 = vunpack.c.h.b16 %v3076
        %v3094 = vunpack.c.l.b16 %v3077
        %v3095 = vunpack.c.l.b16 %v3078
        %v3096 = vunpack.c.h.b16 %v3078
        %v3097 = vunpack.c.l.b16 %v3079
        %v3098 = vunpack.c.l.b16 %v3080
        %v3099 = vunpack.c.h.b16 %v3080
        %v3100 = vunpack.c.l.b16 %v3081
        %v3101 = vunpack.c.l.b16 %v3082
        %v3102 = vunpack.c.h.b16 %v3082
        %v3103 = vunpack.c.l.b16 %v3083
        %v3104 = vpack.c.b16 %v3095, %v3092
        %v3105 = vpack.c.b16 %v3096, %v3093
        %v3106 = vpack.c.b16 %v3097, %v3094
        %v3107 = vpack.c.b16 %v3101, %v3098
        %v3108 = vpack.c.b16 %v3102, %v3099
        %v3109 = vpack.c.b16 %v3103, %v3100
        %3114 = vrot.lane.b32.xlu0 %v2120, 11
        %v3115 = vpop.permute.xlu0 %3114
        %3116 = vrot.lane.b32.xlu0 %v2126, 11
        %v3117 = vpop.permute.xlu0 %3116
        %3118 = vrot.lane.b32.xlu0 %v3029, 11
        %v3119 = vpop.permute.xlu0 %3118
        %3120 = vrot.lane.b32.xlu0 %v3026, 11
        %v3121 = vpop.permute.xlu0 %3120
        %3122 = vrot.lane.b32.xlu0 %v3030, 11
        %v3123 = vpop.permute.xlu0 %3122
        %3124 = vrot.lane.b32.xlu0 %v3028, 11
        %v3125 = vpop.permute.xlu0 %3124
        %3126 = vrot.lane.b32.xlu0 %v3035, 11
        %v3127 = vpop.permute.xlu0 %3126
        %3128 = vrot.lane.b32.xlu0 %v3032, 11
        %v3129 = vpop.permute.xlu0 %3128
        %3130 = vrot.lane.b32.xlu0 %v3036, 11
        %v3131 = vpop.permute.xlu0 %3130
        %3132 = vrot.lane.b32.xlu0 %v3034, 11
        %v3133 = vpop.permute.xlu0 %3132
        %3134 = vrot.lane.b32.xlu0 %v3041, 11
        %v3135 = vpop.permute.xlu0 %3134
        %3136 = vrot.lane.b32.xlu0 %v3038, 11
        %v3137 = vpop.permute.xlu0 %3136
        %3138 = vrot.lane.b32.xlu0 %v3042, 11
        %v3139 = vpop.permute.xlu0 %3138
        %3140 = vrot.lane.b32.xlu0 %v3040, 11
        %v3141 = vpop.permute.xlu0 %3140
        %3142 = vrot.lane.b32.xlu0 %v3047, 11
        %v3143 = vpop.permute.xlu0 %3142
        %3144 = vrot.lane.b32.xlu0 %v3044, 11
        %v3145 = vpop.permute.xlu0 %3144
        %3146 = vrot.lane.b32.xlu0 %v3048, 11
        %v3147 = vpop.permute.xlu0 %3146
        %3148 = vrot.lane.b32.xlu0 %v3046, 11
        %v3149 = vpop.permute.xlu0 %3148
        %3150 = vrot.lane.b32.xlu0 %v2298, 11
        %v3151 = vpop.permute.xlu0 %3150
        %3152 = vrot.lane.b32.xlu0 %v3055, 11
        %v3153 = vpop.permute.xlu0 %3152
        %3154 = vrot.lane.b32.xlu0 %v2304, 11
        %v3155 = vpop.permute.xlu0 %3154
        %3156 = vrot.lane.b32.xlu0 %v3056, 11
        %v3157 = vpop.permute.xlu0 %3156
        %3158 = vrot.lane.b32.xlu0 %v2314, 11
        %v3159 = vpop.permute.xlu0 %3158
        %3160 = vrot.lane.b32.xlu0 %v3061, 11
        %v3161 = vpop.permute.xlu0 %3160
        %3162 = vrot.lane.b32.xlu0 %v2320, 11
        %v3163 = vpop.permute.xlu0 %3162
        %3164 = vrot.lane.b32.xlu0 %v3062, 11
        %v3165 = vpop.permute.xlu0 %3164
        %3166 = vrot.lane.b32.xlu0 %v2330, 11
        %v3167 = vpop.permute.xlu0 %3166
        %3168 = vrot.lane.b32.xlu0 %v3067, 11
        %v3169 = vpop.permute.xlu0 %3168
        %3170 = vrot.lane.b32.xlu0 %v2336, 11
        %v3171 = vpop.permute.xlu0 %3170
        %3172 = vrot.lane.b32.xlu0 %v3068, 11
        %v3173 = vpop.permute.xlu0 %3172
        %3174 = vrot.lane.b32.xlu0 %v2346, 11
        %v3175 = vpop.permute.xlu0 %3174
        %3176 = vrot.lane.b32.xlu0 %v3073, 11
        %v3177 = vpop.permute.xlu0 %3176
        %3178 = vrot.lane.b32.xlu0 %v2352, 11
        %v3179 = vpop.permute.xlu0 %3178
        %3180 = vrot.lane.b32.xlu0 %v3074, 11
        %v3181 = vpop.permute.xlu0 %3180
        %v3182 = vsel %vm1193, %v2459, %v3115
        %v3183 = vsel %vm1193, %v2465, %v3117
        %v3184 = vsel %vm1193, %v2469, %v3119
        %v3185 = vsel %vm1193, %v3119, %v3121
        %v3186 = vsel %vm1193, %v2475, %v3123
        %v3187 = vsel %vm1193, %v3123, %v3125
        %v3188 = vsel %vm1193, %v2481, %v3127
        %v3189 = vsel %vm1193, %v3127, %v3129
        %v3190 = vsel %vm1193, %v2487, %v3131
        %v3191 = vsel %vm1193, %v3131, %v3133
        %v3192 = vsel %vm1193, %v2493, %v3135
        %v3193 = vsel %vm1193, %v3135, %v3137
        %v3194 = vsel %vm1193, %v2499, %v3139
        %v3195 = vsel %vm1193, %v3139, %v3141
        %v3196 = vsel %vm1193, %v2507, %v3143
        %v3197 = vsel %vm1193, %v3143, %v3145
        %v3198 = vsel %vm1193, %v2513, %v3147
        %v3199 = vsel %vm1193, %v3147, %v3149
        %v3200 = vsel %vm1193, %v3151, %v2519
        %v3201 = vsel %vm1193, %v2519, %v3153
        %v3202 = vsel %vm1193, %v3155, %v2525
        %v3203 = vsel %vm1193, %v2525, %v3157
        %v3204 = vsel %vm1193, %v3159, %v2531
        %v3205 = vsel %vm1193, %v2531, %v3161
        %v3206 = vsel %vm1193, %v3163, %v2537
        %v3207 = vsel %vm1193, %v2537, %v3165
        %v3208 = vsel %vm1193, %v3167, %v2543
        %v3209 = vsel %vm1193, %v2543, %v3169
        %v3210 = vsel %vm1193, %v3171, %v2549
        %v3211 = vsel %vm1193, %v2549, %v3173
        %v3212 = vsel %vm1193, %v3175, %v2555
        %v3213 = vsel %vm1193, %v2555, %v3177
        %v3214 = vsel %vm1193, %v3179, %v2561
        %v3215 = vsel %vm1193, %v2561, %v3181
        %v3251 = vsel %vm2634, %v3106, 0
        %v3254 = vsel %vm2634, %v3109, 0
        %3256 = vmatprep.subr.bf16.mxu0 %v3182
        %3257 = vmatpush1.bf16.msra.mxu0 %v2563
        %3258 = vmatprep.subr.bf16.mxu0 %v3183
        %3259 = vmatpush1.bf16.msra.mxu0 %v2565
        %3260 = vmatprep.subr.bf16.mxu0 %v3185
        %3261 = vmatpush1.bf16.msra.mxu0 %v3184
        %3262 = vmatprep.subr.bf16.mxu0 %v3187
        %3263 = vmatpush1.bf16.msra.mxu0 %v3186
        %3264 = vmatprep.subr.bf16.mxu0 %v3189
        %3265 = vmatpush1.bf16.msra.mxu0 %v3188
        %3266 = vmatprep.subr.bf16.mxu0 %v3191
        %3267 = vmatpush1.bf16.msra.mxu0 %v3190
        %3268 = vmatprep.subr.bf16.mxu0 %v3193
        %3269 = vmatpush1.bf16.msra.mxu0 %v3192
        %3270 = vmatprep.subr.bf16.mxu0 %v3195
        %3271 = vmatpush1.bf16.msra.mxu0 %v3194
        %3272 = vmatprep.subr.bf16.mxu0 %v3197
        %3273 = vmatpush1.bf16.msra.mxu0 %v3196
        %3274 = vmatprep.subr.bf16.mxu0 %v3199
        %3275 = vmatpush1.bf16.msra.mxu0 %v3198
        %3276 = vmatprep.subr.bf16.mxu0 %v3201
        %3277 = vmatpush1.bf16.msra.mxu0 %v3200
        %3278 = vmatprep.subr.bf16.mxu0 %v3203
        %3279 = vmatpush1.bf16.msra.mxu0 %v3202
        %3280 = vmatprep.subr.bf16.mxu0 %v3205
        %3281 = vmatpush1.bf16.msra.mxu0 %v3204
        %3282 = vmatprep.subr.bf16.mxu0 %v3207
        %3283 = vmatpush1.bf16.msra.mxu0 %v3206
        %3284 = vmatprep.subr.bf16.mxu0 %v3209
        %3285 = vmatpush1.bf16.msra.mxu0 %v3208
        %3286 = vmatprep.subr.bf16.mxu0 %v3211
        %3287 = vmatpush1.bf16.msra.mxu0 %v3210
        %3288 = vmatprep.mubr.bf16.mxu0 %v3105
        %3289 = vmatmul.mubr.bf16.gmra.mrb[0].mxu0 %v3104
        %v3290 = vpop.f32.mrb[0].mxu0
        %v3291 = vadd.f32 0.0, %v3290
        %v3292 = vpop.f32.mrb[0].mxu0
        %v3293 = vadd.f32 0.0, %v3292
        %v3294 = vpop.f32.mrb[0].mxu0
        %v3295 = vadd.f32 0.0, %v3294
        %v3296 = vpop.f32.mrb[0].mxu0
        %v3297 = vadd.f32 0.0, %v3296
        %3298 = vmatprep.mubr.bf16.mxu0 %v3108
        %3299 = vmatmul.mubr.bf16.gmra.mrb[0].mxu0 %v3107
        %v3300 = vpop.f32.mrb[0].mxu0
        %v3301 = vadd.f32 0.0, %v3300
        %v3302 = vpop.f32.mrb[0].mxu0
        %v3303 = vadd.f32 0.0, %v3302
        %v3304 = vpop.f32.mrb[0].mxu0
        %v3305 = vadd.f32 0.0, %v3304
        %v3306 = vpop.f32.mrb[0].mxu0
        %v3307 = vadd.f32 0.0, %v3306
        %3308 = vdwg.mxu0
        %3309 = vmatprep.subr.bf16.mxu0 %v3213
        %3310 = vmatpush1.bf16.msra.mxu0 %v3212
        %3311 = vmatprep.subr.bf16.mxu0 %v3215
        %3312 = vmatpush1.bf16.msra.mxu0 %v3214
        %3313 = vmatprep.subr.bf16.mxu0 0
        %3314 = vmatpush1.bf16.msra.mxu0 0
        %3315 = vmatprep.subr.bf16.mxu0 0
        %3316 = vmatpush1.bf16.msra.mxu0 0
        %3317 = vmatprep.subr.bf16.mxu0 0
        %3318 = vmatpush1.bf16.msra.mxu0 0
        %3319 = vmatprep.subr.bf16.mxu0 0
        %3320 = vmatpush1.bf16.msra.mxu0 0
        %3321 = vmatprep.subr.bf16.mxu0 0
        %3322 = vmatpush1.bf16.msra.mxu0 0
        %3323 = vmatprep.subr.bf16.mxu0 0
        %3324 = vmatpush1.bf16.msra.mxu0 0
        %3325 = vmatprep.subr.bf16.mxu0 0
        %3326 = vmatpush1.bf16.msra.mxu0 0
        %3327 = vmatprep.subr.bf16.mxu0 0
        %3328 = vmatpush1.bf16.msra.mxu0 0
        %3329 = vmatprep.subr.bf16.mxu0 0
        %3330 = vmatpush1.bf16.msra.mxu0 0
        %3331 = vmatprep.subr.bf16.mxu0 0
        %3332 = vmatpush1.bf16.msra.mxu0 0
        %3333 = vmatprep.subr.bf16.mxu0 0
        %3334 = vmatpush1.bf16.msra.mxu0 0
        %3335 = vmatprep.subr.bf16.mxu0 0
        %3336 = vmatpush1.bf16.msra.mxu0 0
        %3337 = vmatprep.subr.bf16.mxu0 0
        %3338 = vmatpush1.bf16.msra.mxu0 0
        %3339 = vmatprep.subr.bf16.mxu0 0
        %3340 = vmatpush1.bf16.msra.mxu0 0
        %3341 = vmatprep.mubr.bf16.mxu0 0
        %3342 = vmatmul.mubr.bf16.gmra.mrb[0].mxu0 %v3251
        %v3343 = vpop.f32.mrb[0].mxu0
        %v3344 = vadd.f32 %v3291, %v3343
        %v3345 = vpop.f32.mrb[0].mxu0
        %v3346 = vadd.f32 %v3293, %v3345
        %v3347 = vpop.f32.mrb[0].mxu0
        %v3348 = vadd.f32 %v3295, %v3347
        %v3349 = vpop.f32.mrb[0].mxu0
        %v3350 = vadd.f32 %v3297, %v3349
        %3351 = vmatprep.mubr.bf16.mxu0 0
        %3352 = vmatmul.mubr.bf16.gmra.mrb[0].mxu0 %v3254
        %v3353 = vpop.f32.mrb[0].mxu0
        %v3354 = vadd.f32 %v3301, %v3353
        %v3355 = vpop.f32.mrb[0].mxu0
        %v3356 = vadd.f32 %v3303, %v3355
        %v3357 = vpop.f32.mrb[0].mxu0
        %v3358 = vadd.f32 %v3305, %v3357
        %v3359 = vpop.f32.mrb[0].mxu0
        %v3360 = vadd.f32 %v3307, %v3359
        %3361 = vdwg.mxu0
        %v3362 = vadd.f32 %v3007, %v3344
        %v3363 = vadd.f32 %v3009, %v3346
        %v3364 = vadd.f32 %v3011, %v3348
        %v3365 = vadd.f32 %v3013, %v3350
        %v3366 = vadd.f32 %v3017, %v3354
        %v3367 = vadd.f32 %v3019, %v3356
        %v3368 = vadd.f32 %v3021, %v3358
        %v3369 = vadd.f32 %v3023, %v3360
        %v3370 = vld [vmem:[%s11] sm:$0xff]
        %v3371 = vld [vmem:[%s11 + $0x8] sm:$0xff]
        %v3372 = vld [vmem:[%s11 + $0x10] sm:$0xff]
        %v3373 = vld [vmem:[%s11 + $0x18] sm:$0xff]
        %3375 = vset.pattern.permute.xlu0 0
        %3376 = vperm.xlu0 %3375, %v3370
        %v3377 = vpop.permute.xlu0 %3376
        %3380 = vset.pattern.permute.xlu0 0
        %3381 = vperm.xlu0 %3380, %v3371
        %v3382 = vpop.permute.xlu0 %3381
        %3385 = vset.pattern.permute.xlu0 0
        %3386 = vperm.xlu0 %3385, %v3372
        %v3387 = vpop.permute.xlu0 %3386
        %3390 = vset.pattern.permute.xlu0 0
        %3391 = vperm.xlu0 %3390, %v3373
        %v3392 = vpop.permute.xlu0 %3391
        %v3394 = vadd.f32 %v3362, %v3377
        %v3395 = vadd.f32 %v3363, %v3377
        %v3396 = vadd.f32 %v3364, %v3382
        %v3397 = vadd.f32 %v3365, %v3382
        %v3398 = vadd.f32 %v3366, %v3387
        %v3399 = vadd.f32 %v3367, %v3387
        %v3400 = vadd.f32 %v3368, %v3392
        %v3401 = vadd.f32 %v3369, %v3392
        %v3402 = vadd.f32 %v3394, %v2209
        %v3403 = vadd.f32 %v3395, %v2211
        %v3404 = vadd.f32 %v3396, %v2213
        %v3405 = vadd.f32 %v3397, %v2215
        %v3406 = vadd.f32 %v3398, %v2219
        %v3407 = vadd.f32 %v3399, %v2221
        %v3408 = vadd.f32 %v3400, %v2223
        %v3409 = vadd.f32 %v3401, %v2225
        %v3410 = vmax.f32 %v3402, 0.0
        %v3411 = vmax.f32 %v3403, 0.0
        %v3412 = vmax.f32 %v3404, 0.0
        %v3413 = vmax.f32 %v3405, 0.0
        %v3414 = vmax.f32 %v3406, 0.0
        %v3415 = vmax.f32 %v3407, 0.0
        %v3416 = vmax.f32 %v3408, 0.0
        %v3417 = vmax.f32 %v3409, 0.0
        %v3418 = vunpack.c.l.bf16 %v790
        %v3420 = vlaneseq
        %v3421 = vshrl.u32 %v3420, 7
        %v3422 = vsub.s32 0, %v3421
        %v3423 = vrot.slane %v3418, %v3422
        %v3424 = vlaneseq
        %v3425 = vshrl.u32 %v3424, 7
        %v3426 = vsub.s32 2, %v3425
        %v3427 = vrot.slane %v3418, %v3426
        %v3430 = vlaneseq
        %v3431 = vshrl.u32 %v3430, 7
        %v3432 = vsub.s32 0, %v3431
        %v3433 = vrot.slane %v3423, %v3432
        %v3434 = vlaneseq
        %v3435 = vshrl.u32 %v3434, 7
        %v3436 = vsub.s32 0, %v3435
        %v3437 = vrot.slane %v3427, %v3436
        %v3438 = vmul.f32 %v3410, %v3433
        %v3439 = vmul.f32 %v3411, %v3437
        %v3440 = vmul.f32 %v3412, %v3433
        %v3441 = vmul.f32 %v3413, %v3437
        %v3442 = vmul.f32 %v3414, %v3433
        %v3443 = vmul.f32 %v3415, %v3437
        %v3444 = vmul.f32 %v3416, %v3433
        %v3445 = vmul.f32 %v3417, %v3437
        %v3446 = vld [vmem:[%s12] sm:$0xff]
        %v3447 = vld [vmem:[%s12 + $0x8] sm:$0xff]
        %3448 = vmatprep.subr.mxu0 %v3447
        %3449 = vmatpush1.xpose.msra.mxu0 %v3446
        %3450 = vmatprep.subr.mxu0 0.0
        %3451 = vmatpush1.xpose.msra.mxu0 0.0
        %3452 = vmatprep.subr.mxu0 0.0
        %3453 = vmatpush1.xpose.msra.mxu0 0.0
        %3454 = vmatprep.subr.mxu0 0.0
        %3455 = vmatpush1.xpose.msra.mxu0 0.0
        %3456 = vmatprep.subr.mxu0 0.0
        %3457 = vmatpush1.xpose.msra.mxu0 0.0
        %3458 = vmatprep.subr.mxu0 0.0
        %3459 = vmatpush1.xpose.msra.mxu0 0.0
        %3460 = vmatprep.subr.mxu0 0.0
        %3461 = vmatpush1.xpose.msra.mxu0 0.0
        %3462 = vmatprep.subr.mxu0 0.0
        %3463 = vmatpush1.xpose.msra.mxu0 0.0
        %3464 = vmatprep.subr.mxu0 0.0
        %3465 = vmatpush1.xpose.msra.mxu0 0.0
        %3466 = vmatprep.subr.mxu0 0.0
        %3467 = vmatpush1.xpose.msra.mxu0 0.0
        %3468 = vmatprep.subr.mxu0 0.0
        %3469 = vmatpush1.xpose.msra.mxu0 0.0
        %3470 = vmatprep.subr.mxu0 0.0
        %3471 = vmatpush1.xpose.msra.mxu0 0.0
        %3472 = vmatprep.subr.mxu0 0.0
        %3473 = vmatpush1.xpose.msra.mxu0 0.0
        %3474 = vmatprep.subr.mxu0 0.0
        %3475 = vmatpush1.xpose.msra.mxu0 0.0
        %3476 = vmatprep.subr.mxu0 0.0
        %3477 = vmatpush1.xpose.msra.mxu0 0.0
        %3478 = vmatprep.subr.mxu0 0.0
        %3479 = vmatpush1.xpose.msra.mxu0 0.0
        %3480 = vmatprep.subr.mxu0 0.0
        %3481 = vmatpush1.xpose.msra.mxu0 0.0
        %3482 = vmatprep.subr.mxu0 0.0
        %3483 = vmatpush1.xpose.msra.mxu0 0.0
        %3484 = vmatprep.subr.mxu0 0.0
        %3485 = vmatpush1.xpose.msra.mxu0 0.0
        %3486 = vmatprep.subr.mxu0 0.0
        %3487 = vmatpush1.xpose.msra.mxu0 0.0
        %3488 = vmatprep.subr.mxu0 0.0
        %3489 = vmatpush1.xpose.msra.mxu0 0.0
        %3490 = vmatprep.subr.mxu0 0.0
        %3491 = vmatpush1.xpose.msra.mxu0 0.0
        %3492 = vmatprep.subr.mxu0 0.0
        %3493 = vmatpush1.xpose.msra.mxu0 0.0
        %3494 = vmatprep.subr.mxu0 0.0
        %3495 = vmatpush1.xpose.msra.mxu0 0.0
        %3496 = vmatprep.subr.mxu0 0.0
        %3497 = vmatpush1.xpose.msra.mxu0 0.0
        %3498 = vmatprep.subr.mxu0 0.0
        %3499 = vmatpush1.xpose.msra.mxu0 0.0
        %3500 = vmatprep.subr.mxu0 0.0
        %3501 = vmatpush1.xpose.msra.mxu0 0.0
        %3502 = vmatprep.subr.mxu0 0.0
        %3503 = vmatpush1.xpose.msra.mxu0 0.0
        %3504 = vmatprep.subr.mxu0 0.0
        %3505 = vmatpush1.xpose.msra.mxu0 0.0
        %3506 = vmatprep.subr.mxu0 0.0
        %3507 = vmatpush1.xpose.msra.mxu0 0.0
        %3508 = vmatprep.subr.mxu0 0.0
        %3509 = vmatpush1.xpose.msra.mxu0 0.0
        %3510 = vmatprep.subr.mxu0 0.0
        %3511 = vmatpush1.xpose.msra.mxu0 0.0
        %3512 = vmatprep.mubr.f32.mxu0 %v3439
        %3513 = vmatmul.mubr.f32.gmra.mrb[0].mxu0 %v3438
        %v3514 = vpop.f32.mrb[0].mxu0
        %v3515 = vadd.f32 0.0, %v3514
        %v3516 = vpop.f32.mrb[0].mxu0
        %3517 = vmatprep.mubr.f32.mxu0 %v3441
        %3518 = vmatmul.mubr.f32.gmra.mrb[0].mxu0 %v3440
        %v3519 = vpop.f32.mrb[0].mxu0
        %v3520 = vadd.f32 0.0, %v3519
        %v3521 = vpop.f32.mrb[0].mxu0
        %3522 = vmatprep.mubr.f32.mxu0 %v3443
        %3523 = vmatmul.mubr.f32.gmra.mrb[0].mxu0 %v3442
        %v3524 = vpop.f32.mrb[0].mxu0
        %v3525 = vadd.f32 0.0, %v3524
        %v3526 = vpop.f32.mrb[0].mxu0
        %3527 = vmatprep.mubr.f32.mxu0 %v3445
        %3528 = vmatmul.mubr.f32.gmra.mrb[0].mxu0 %v3444
        %v3529 = vpop.f32.mrb[0].mxu0
        %v3530 = vadd.f32 0.0, %v3529
        %v3531 = vpop.f32.mrb[0].mxu0
        %3532 = vdwg.mxu0
        %vm3533 = vcmask 64512
        %3534 = vst.msk [vmem:[%s757] sm:$0xff] %vm3533, %v3515
        %3535 = vst.msk [vmem:[%s757 + $0x8] sm:$0xff] %vm3533, %v3520
        %3536 = vst.msk [vmem:[%s757 + $0x10] sm:$0xff] %vm3533, %v3525
        %3537 = vst.msk [vmem:[%s757 + $0x18] sm:$0xff] %vm3533, %v3530
        %p3538 = scmp.lt.s32.totalorder %s28, 1
        %s3539 = scalar_select %p3538, %s28, 1
        %p3540 = scmp.lt.s32.totalorder %s29, 4
        %s3541 = scalar_select %p3540, %s29, 4
        %s3542 = smul.addr %s3541, 4
        %s3543 = smul.addr %s3539, 20
        %s3544 = sadd.s32 %s3542, %s3543
        %s3545 = smul.addr %s3544, 8
        %s3546 = scalar_lea.vmem %s13, %s3545
        // Predicated region
        $region187: #{fwd.6} parent=173 // pred_check
          %p3547 = pneg %p389
        $region188: #{fwd.6} parent=173 // pred_check_branch
          %3549 = sbr.rel (%p3547) target = $region190
        $region189: #{fwd.6} parent=173 // pred_region
          _
        $region190: #{fwd.6} parent=173 // pred_fallthru
          _
      $region174: #{fwd.6} parent=5 // pred_fallthru
        _
      %p3550 = scmp.le.s32.totalorder 2, %s19
      // Predicated region
      $region191: #{fwd.6} parent=5 // pred_check
        %p3551 = pneg %p3550
      $region192: #{fwd.6} parent=5 // pred_check_branch
        %3553 = sbr.rel (%p3551) target = $region194
      $region193: #{fwd.6} parent=5 // pred_region
        %s3554 = ssub.s32 %s19, 2
        // Predicated region
        $region195: #{fwd.6} parent=193 // pred_check
          %p3555 = pneg %p395
        $region196: #{fwd.6} parent=193 // pred_check_branch
          %3557 = sbr.rel (%p3555) target = $region198
        $region197: #{fwd.6} parent=193 // pred_region
          %p3558 = scmp.lt.s32.totalorder %s30, 1
          %s3559 = scalar_select %p3558, %s30, 1
          %p3560 = scmp.lt.s32.totalorder %s31, 4
          %s3561 = scalar_select %p3560, %s31, 4
          %s3562 = smul.addr %s3561, 4
          %s3563 = smul.addr %s3559, 20
          %s3564 = sadd.s32 %s3562, %s3563
          %s3565 = smul.addr %s3564, 8
          %s3566 = scalar_lea.vmem %s13, %s3565
        $region198: #{fwd.6} parent=193 // pred_fallthru
          _
      $region194: #{fwd.6} parent=5 // pred_fallthru
        _
    $region6: #{fwd.6} parent=1 // loop_footer
      %s23 = sadd.s32 1, %s19
    $region7: #{fwd.6} parent=1 // loop_footer_branch
      %18 = sbr.rel target = $region3
    $region8: #{fwd.6} parent=1 // loop_exit
      _

</llo_original>
